<compile_context>
chip_gen: v7x
topology: tpu7x:2x2x1
jax: 0.10.0
libtpu: 0.0.40
codegen_flags: <defaults>
</compile_context>

<pallas_src>
import jax
import jax.numpy as jnp
from jax.experimental import pallas as pl
from jax.experimental.pallas import tpu as pltpu


_SQRT1_2 = 0.7071067811865476
_NEG_INF = -1e30
_STRIP_ROWS = 4          # dwconv / FFN row-strip height (bounds live vregs)


def _erf_poly(x):
    """Abramowitz & Stegun 7.1.26 erf approximation, |err| <= 1.5e-7 (VPU + EUP ops only)."""
    a1, a2, a3, a4, a5 = 0.254829592, -0.284496736, 1.421413741, -1.453152027, 1.061405429
    p = 0.3275911
    ax = jnp.abs(x)
    t = pl.reciprocal(1.0 + p * ax, approx=True)          # EUP, keeps the VALU slot free
    poly = ((((a5 * t + a4) * t + a3) * t + a2) * t + a1) * t
    y = 1.0 - poly * jnp.exp(-ax * ax)
    return jnp.where(x < 0.0, -y, y)


def _gelu_exact(x):
    # F.gelu default (erf form), via the polynomial erf above.
    return 0.5 * x * (1.0 + _erf_poly(x * _SQRT1_2))


def _layernorm_withbias(x, w, b):
    # x: (rows, C); w, b: (1, C).  Matches WithBiasLayerNorm (unbiased=False variance).
    mu = jnp.mean(x, axis=-1, keepdims=True)
    xc = x - mu
    var = jnp.mean(xc * xc, axis=-1, keepdims=True)
    return xc * jax.lax.rsqrt(var + 1e-5) * w + b


def _dwconv3x3_strip(pad_ref, wdw_ref, r0, sh, w_cols):
    """Depthwise 3x3 conv taps for output rows [r0, r0+sh).

    pad_ref: (H+2, W+16, Cm) zero-bordered scratch with data at rows [1, H+1), cols [8, 8+W).
    Returns the (sh, W, Cm) f32 strip.
    """
    # TODO(synk): the kx=0/2 taps read at sublane offsets 7/9; an aligned full-width read plus
    # a pltpu.roll on the XLU would avoid Mosaic's load-path relayout — kept as slice reads
    # here for lowering robustness.
    cm = wdw_ref.shape[-1]
    acc = jnp.zeros((sh, w_cols, cm), jnp.float32)
    for ky in range(3):
        for kx in range(3):
            tap = pad_ref[pl.ds(r0 + ky, sh), pl.ds(7 + kx, w_cols), :]
            acc = acc + tap * wdw_ref[ky:ky + 1, kx:kx + 1, :]
    return acc


def _transformer_block_kernel(
    x_ref,                       # (G, H, W, C)      input batch-block
    n1w_ref, n1b_ref,            # (1, C)            norm1 weight / bias
    wqkv_ref,                    # (C, 3C)   bf16    qkv 1x1 conv weight
    wdw1_ref,                    # (3, 3, 3C) f32    qkv depthwise 3x3 weight
    tscale_ref,                  # (1, C)    f32     per-channel temperature (folded into q)
    hbias_ref,                   # (C, C)    f32     0 on-head-block / -1e30 off-block
    wproj_ref,                   # (C, C)    bf16    attention project_out weight
    n2w_ref, n2b_ref,            # (1, C)            norm2 weight / bias
    win_ref,                     # (C, 2*HD) bf16    ffn project_in weight
    wdw2_ref,                    # (3, 3, 2*HD) f32  ffn depthwise 3x3 weight
    wout_ref,                    # (HD, C)   bf16    ffn project_out weight
    o_ref,                       # (G, H, W, C)      output batch-block
    pad1_ref,                    # (H+2, W+16, 3C)   zero-bordered qkv dwconv scratch
    pad2_ref,                    # (H+2, W+16, 2HD)  zero-bordered ffn dwconv scratch
    qkvdw_ref,                   # (H*W, 3C)         dwconv'd qkv
    x1_ref,                      # (H*W, C)          attention-branch residual
):
    G, H, W, C = x_ref.shape
    HW = H * W
    C3 = wqkv_ref.shape[1]
    HD2 = win_ref.shape[1]
    HD = HD2 // 2
    SH = _STRIP_ROWS
    n_strips = H // SH
    bf16 = jnp.bfloat16

    # Zero the padded scratches once; interiors are fully rewritten every image so the
    # 1-px halo stays zero across all grid iterations (scratch persists across the grid).
    @pl.when(pl.program_id(0) == 0)
    def _init():
        pad1_ref[...] = jnp.zeros_like(pad1_ref)
        pad2_ref[...] = jnp.zeros_like(pad2_ref)

    n1w = n1w_ref[...]
    n1b = n1b_ref[...]
    n2w = n2w_ref[...]
    n2b = n2b_ref[...]
    tscale = tscale_ref[...]
    hbias = hbias_ref[...]

    for g in range(G):
        # ---------- norm1 + qkv 1x1 conv (strip-wise; bf16 MXU, f32 accumulate) ----------
        for s in range(n_strips):
            r0 = s * SH
            xs = x_ref[pl.ds(g, 1), pl.ds(r0, SH), :, :].reshape(SH * W, C)
            y1 = _layernorm_withbias(xs, n1w, n1b).astype(bf16)
            qkv = jnp.dot(y1, wqkv_ref[...], preferred_element_type=jnp.float32)
            pad1_ref[pl.ds(1 + r0, SH), pl.ds(8, W), :] = qkv.reshape(SH, W, C3)

        # ---------- qkv depthwise 3x3 (strip-wise) -> (HW, 3C) VMEM scratch ----------
        for s in range(n_strips):
            r0 = s * SH
            acc = _dwconv3x3_strip(pad1_ref, wdw1_ref, r0, SH, W)
            qkvdw_ref[pl.ds(r0 * W, SH * W), :] = acc.reshape(SH * W, C3)

        # ---------- fused block-diagonal (per-head) channel attention ----------
        q = qkvdw_ref[:, pl.ds(0, C)]                          # (HW, C) f32
        k = qkvdw_ref[:, pl.ds(C, C)]
        # F.normalize(eps=1e-12) folded in as per-channel rsqrt scales (EUP).
        rq = jax.lax.rsqrt(jnp.maximum(jnp.sum(q * q, axis=0, keepdims=True), 1e-24))
        rk = jax.lax.rsqrt(jnp.maximum(jnp.sum(k * k, axis=0, keepdims=True), 1e-24))
        qn = (q * (rq * tscale)).astype(bf16)                  # temperature folded into q
        kn = (k * rk).astype(bf16)
        attn = jax.lax.dot_general(qn, kn, (((0,), (0,)), ((), ())),
                                   preferred_element_type=jnp.float32)       # (C, C)
        attn = attn + hbias                                    # mask inter-head blocks
        attn = attn - jnp.max(attn, axis=-1, keepdims=True)
        p = jnp.exp(attn)                                      # masked entries underflow to 0
        a = (p * pl.reciprocal(jnp.sum(p, axis=-1, keepdims=True),
                               approx=True)).astype(bf16)
        v = qkvdw_ref[:, pl.ds(2 * C, C)].astype(bf16)
        o_att = jax.lax.dot_general(v, a, (((1,), (1,)), ((), ())),
                                    preferred_element_type=jnp.float32)      # (HW, C)
        proj = jnp.dot(o_att.astype(bf16), wproj_ref[...],
                       preferred_element_type=jnp.float32)
        x1_ref[...] = x_ref[pl.ds(g, 1), :, :, :].reshape(HW, C) + proj

        # ---------- norm2 + FFN project_in (strip-wise) ----------
        for s in range(n_strips):
            r0 = s * SH
            x1s = x1_ref[pl.ds(r0 * W, SH * W), :]
            y2 = _layernorm_withbias(x1s, n2w, n2b).astype(bf16)
            z = jnp.dot(y2, win_ref[...], preferred_element_type=jnp.float32)
            pad2_ref[pl.ds(1 + r0, SH), pl.ds(8, W), :] = z.reshape(SH, W, HD2)

        # ---------- FFN dwconv + GELU gate + project_out + residual (strip-wise) ----------
        for s in range(n_strips):
            r0 = s * SH
            acc = _dwconv3x3_strip(pad2_ref, wdw2_ref, r0, SH, W).reshape(SH * W, HD2)
            gate = _gelu_exact(acc[:, :HD]) * acc[:, HD:]
            outp = jnp.dot(gate.astype(bf16), wout_ref[...],
                           preferred_element_type=jnp.float32)               # (SH*W, C)
            res = x1_ref[pl.ds(r0 * W, SH * W), :] + outp
            o_ref[pl.ds(g, 1), pl.ds(r0, SH), :, :] = (
                res.reshape(1, SH, W, C).astype(o_ref.dtype))


def _pick_vmem_limit(footprint_bytes):
    """Footprint-derived VMEM budget, clamped to the chip's physical VMEM (v7x: 64 MiB)."""
    cap = None
    try:
        cap = getattr(pltpu.get_tpu_info(), "vmem_capacity_bytes", None)
    except Exception:
        cap = None
    if not cap:
        cap = 64 * 1024 * 1024          # conservative default (fits every generation)
    want = max(16 * 1024 * 1024, 2 * int(footprint_bytes))
    return int(min(want, (int(cap) * 9) // 10))


def transformer_block(x_nchw, n1w, n1b, wqkv, wdw1, temp, wproj, n2w, n2b, win, wdw2, wout,
                      *, images_per_step=1):
    """Forward pass of TransformerBlock (bias=False, LayerNorm_type='WithBias').

    x_nchw: (B, C, H, W) float32.  Weight layouts (matmul-friendly):
      n1w/n1b/n2w/n2b: (1, C);  wqkv: (C, 3C);  wdw1: (3, 3, 3C);  temp: (1, num_heads);
      wproj: (C, C);  win: (C, 2*hidden);  wdw2: (3, 3, 2*hidden);  wout: (hidden, C).
    """
    B, C, H, W = x_nchw.shape
    NH = temp.shape[-1]
    CH = C // NH
    C3 = wqkv.shape[1]
    HD2 = win.shape[1]
    G = images_per_step

    assert B % G == 0, "images_per_step must divide the batch"
    assert W % 8 == 0, "W must be a multiple of 8 (sublane) for layout-compatible reshapes"
    assert H % _STRIP_ROWS == 0, "H must be a multiple of the dwconv strip height"
    assert C % NH == 0

    # Single relayout pass in (NCHW -> NHWC) and a single one out.
    x_nhwc = jnp.transpose(x_nchw, (0, 2, 3, 1))

    # bf16 weights for the MXU (f32 accumulation); VPU-path weights (dwconv, LN) stay f32.
    wqkv_b = wqkv.astype(jnp.bfloat16)
    wproj_b = wproj.astype(jnp.bfloat16)
    win_b = win.astype(jnp.bfloat16)
    wout_b = wout.astype(jnp.bfloat16)

    # Per-channel temperature row (folded into q) and the block-diagonal head mask bias.
    tscale = jnp.repeat(temp.reshape(NH), CH).reshape(1, C).astype(jnp.float32)
    hid = jnp.arange(C, dtype=jnp.int32) // CH
    hbias = jnp.where(hid[:, None] == hid[None, :], 0.0, _NEG_INF).astype(jnp.float32)

    def _resident(arr):
        nd = arr.ndim
        return pl.BlockSpec(arr.shape, lambda b, nd=nd: (0,) * nd)

    residents = [n1w, n1b, wqkv_b, wdw1, tscale, hbias, wproj_b,
                 n2w, n2b, win_b, wdw2, wout_b]

    grid_spec = pltpu.PrefetchScalarGridSpec(
        num_scalar_prefetch=0,
        grid=(B // G,),
        in_specs=[pl.BlockSpec((G, H, W, C), lambda b: (b, 0, 0, 0))]
                + [_resident(a) for a in residents],
        out_specs=pl.BlockSpec((G, H, W, C), lambda b: (b, 0, 0, 0)),
        scratch_shapes=[
            pltpu.VMEM((H + 2, W + 16, C3), jnp.float32),    # padded qkv (dwconv 1)
            pltpu.VMEM((H + 2, W + 16, HD2), jnp.float32),   # padded ffn slab (dwconv 2)
            pltpu.VMEM((H * W, C3), jnp.float32),            # dwconv'd qkv
            pltpu.VMEM((H * W, C), jnp.float32),             # attention-branch residual
        ],
    )

    # Generation-aware VMEM budget: scratch + resident weights + double-buffered I/O tiles.
    scratch_bytes = 4 * ((H + 2) * (W + 16) * (C3 + HD2) + H * W * (C3 + C))
    weight_bytes = sum(int(a.size) * a.dtype.itemsize for a in residents)
    io_bytes = 2 * 2 * G * H * W * C * x_nhwc.dtype.itemsize
    vmem_limit = _pick_vmem_limit(scratch_bytes + weight_bytes + io_bytes)

    out_nhwc = pl.pallas_call(
        _transformer_block_kernel,
        out_shape=jax.ShapeDtypeStruct((B, H, W, C), x_nchw.dtype),
        grid_spec=grid_spec,
        compiler_params=pltpu.CompilerParams(
            dimension_semantics=("parallel",),
            vmem_limit_bytes=vmem_limit,
        ),
    )(x_nhwc, n1w, n1b, wqkv_b, wdw1, tscale, hbias, wproj_b,
      n2w, n2b, win_b, wdw2, wout_b)

    return jnp.transpose(out_nhwc, (0, 3, 1, 2))


# ----------------------------- pure-JAX reference -----------------------------
def _ref_transformer_block(x, n1w, n1b, wqkv, wdw1, temp, wproj, n2w, n2b, win, wdw2, wout,
                           num_heads):
    B, C, H, W = x.shape

    def conv1x1(t, w_io):                                       # w_io: (Cin, Cout)
        w = jnp.transpose(w_io)[:, :, None, None]               # OIHW
        return jax.lax.conv_general_dilated(
            t, w, (1, 1), "VALID", dimension_numbers=("NCHW", "OIHW", "NCHW"))

    def dwconv3x3(t, w_hwc):                                    # w_hwc: (3, 3, Cm)
        Cm = w_hwc.shape[-1]
        w = jnp.transpose(w_hwc, (2, 0, 1))[:, None, :, :]      # (Cm, 1, 3, 3)
        return jax.lax.conv_general_dilated(
            t, w, (1, 1), ((1, 1), (1, 1)),
            dimension_numbers=("NCHW", "OIHW", "NCHW"),
            feature_group_count=Cm)

    def layernorm(t, w, b):
        th = jnp.transpose(t, (0, 2, 3, 1))
        mu = jnp.mean(th, axis=-1, keepdims=True)
        var = jnp.mean((th - mu) ** 2, axis=-1, keepdims=True)
        y = (th - mu) / jnp.sqrt(var + 1e-5) * w.reshape(-1) + b.reshape(-1)
        return jnp.transpose(y, (0, 3, 1, 2))

    def attention(t):
        qkv = dwconv3x3(conv1x1(t, wqkv), wdw1)
        q, k, v = jnp.split(qkv, 3, axis=1)
        to_heads = lambda u: u.reshape(B, num_heads, C // num_heads, H * W)
        q, k, v = to_heads(q), to_heads(k), to_heads(v)
        l2n = lambda u: u / jnp.maximum(
            jnp.sqrt(jnp.sum(u * u, axis=-1, keepdims=True)), 1e-12)
        q, k = l2n(q), l2n(k)
        attn = jnp.einsum("bhcs,bhds->bhcd", q, k) * temp.reshape(1, num_heads, 1, 1)
        attn = jax.nn.softmax(attn, axis=-1)
        o = jnp.einsum("bhcd,bhds->bhcs", attn, v).reshape(B, C, H, W)
        return conv1x1(o, wproj)

    def ffn(t):
        z = dwconv3x3(conv1x1(t, win), wdw2)
        z1, z2 = jnp.split(z, 2, axis=1)
        return conv1x1(jax.nn.gelu(z1, approximate=False) * z2, wout)

    x1 = x + attention(layernorm(x, n1w, n1b))
    x2 = x1 + ffn(layernorm(x1, n2w, n2b))
    return x2


if __name__ == "__main__":
    key = jax.random.PRNGKey(0)
    ks = jax.random.split(key, 12)

    # Small TransformerBlock config: dim=32, num_heads=4, ffn_expansion_factor=2.0,
    # bias=False, LayerNorm_type='WithBias'.
    # TODO(synk): conv biases (bias=True) and the 'BiasFree' LayerNorm variant are not wired
    # into this demo; they are a few extra broadcast adds in the same kernel.
    B, C, H, W = 2, 32, 16, 16
    NUM_HEADS = 4
    HIDDEN = int(C * 2.0)          # 64 ;  FFN inner width = 2*HIDDEN = 128 (lane-dense)

    x = jax.random.normal(ks[0], (B, C, H, W), dtype=jnp.float32)

    n1w = 1.0 + 0.1 * jax.random.normal(ks[1], (1, C), dtype=jnp.float32)
    n1b = 0.1 * jax.random.normal(ks[2], (1, C), dtype=jnp.float32)
    wqkv = 0.15 * jax.random.normal(ks[3], (C, 3 * C), dtype=jnp.float32)
    wdw1 = 0.25 * jax.random.normal(ks[4], (3, 3, 3 * C), dtype=jnp.float32)
    temp = 1.0 + 0.1 * jax.random.normal(ks[5], (1, NUM_HEADS), dtype=jnp.float32)
    wproj = 0.15 * jax.random.normal(ks[6], (C, C), dtype=jnp.float32)
    n2w = 1.0 + 0.1 * jax.random.normal(ks[7], (1, C), dtype=jnp.float32)
    n2b = 0.1 * jax.random.normal(ks[8], (1, C), dtype=jnp.float32)
    win = 0.15 * jax.random.normal(ks[9], (C, 2 * HIDDEN), dtype=jnp.float32)
    wdw2 = 0.25 * jax.random.normal(ks[10], (3, 3, 2 * HIDDEN), dtype=jnp.float32)
    wout = 0.15 * jax.random.normal(ks[11], (HIDDEN, C), dtype=jnp.float32)

    out = transformer_block(x, n1w, n1b, wqkv, wdw1, temp, wproj,
                            n2w, n2b, win, wdw2, wout)
    out = jax.block_until_ready(out)

    with jax.default_matmul_precision("highest"):
        ref = _ref_transformer_block(x, n1w, n1b, wqkv, wdw1, temp, wproj,
                                     n2w, n2b, win, wdw2, wout, NUM_HEADS)
    ref = jax.block_until_ready(ref)

    assert out.shape == (B, C, H, W)
    max_err = float(jnp.max(jnp.abs(out - ref)))
    # bf16 MXU operands (f32 accumulate) + approx-EUP reciprocals -> a few e-3 deviation
    # from the f32 "highest" reference is expected.
    assert jnp.allclose(out, ref, atol=3e-2, rtol=3e-2), f"max abs err = {max_err}"

    print("KERNEL_OK")
</pallas_src>

<mosaic_0001>
module attributes {stable_mosaic.version = 11 : i64} {
  func.func @_transformer_block_kernel(%arg0: i32, %arg1: memref<1x16x16x32xf32, #tpu.memory_space<vmem>>, %arg2: memref<1x32xf32, #tpu.memory_space<vmem>>, %arg3: memref<1x32xf32, #tpu.memory_space<vmem>>, %arg4: memref<32x96xbf16, #tpu.memory_space<vmem>>, %arg5: memref<3x3x96xf32, #tpu.memory_space<vmem>>, %arg6: memref<1x32xf32, #tpu.memory_space<vmem>>, %arg7: memref<32x32xf32, #tpu.memory_space<vmem>>, %arg8: memref<32x32xbf16, #tpu.memory_space<vmem>>, %arg9: memref<1x32xf32, #tpu.memory_space<vmem>>, %arg10: memref<1x32xf32, #tpu.memory_space<vmem>>, %arg11: memref<32x128xbf16, #tpu.memory_space<vmem>>, %arg12: memref<3x3x128xf32, #tpu.memory_space<vmem>>, %arg13: memref<64x32xbf16, #tpu.memory_space<vmem>>, %arg14: memref<1x16x16x32xf32, #tpu.memory_space<vmem>>, %arg15: memref<18x32x96xf32, #tpu.memory_space<vmem>>, %arg16: memref<18x32x128xf32, #tpu.memory_space<vmem>>, %arg17: memref<256x96xf32, #tpu.memory_space<vmem>>, %arg18: memref<256x32xf32, #tpu.memory_space<vmem>>) attributes {dimension_semantics = [#tpu.dimension_semantics<parallel>], iteration_bounds = array<i64: 2>, scalar_prefetch = 0 : i64, scratch_operands = 4 : i64, tpu.core_type = #tpu.core_type<tc>, window_params = [{transform_indices = @transform_0, window_bounds = array<i64: 1, 16, 16, 32>}, {pipeline_mode = #tpu.pipeline_mode<synchronous>, transform_indices = @transform_1, window_bounds = array<i64: 1, 32>}, {pipeline_mode = #tpu.pipeline_mode<synchronous>, transform_indices = @transform_2, window_bounds = array<i64: 1, 32>}, {pipeline_mode = #tpu.pipeline_mode<synchronous>, transform_indices = @transform_3, window_bounds = array<i64: 32, 96>}, {pipeline_mode = #tpu.pipeline_mode<synchronous>, transform_indices = @transform_4, window_bounds = array<i64: 3, 3, 96>}, {pipeline_mode = #tpu.pipeline_mode<synchronous>, transform_indices = @transform_5, window_bounds = array<i64: 1, 32>}, {pipeline_mode = #tpu.pipeline_mode<synchronous>, transform_indices = @transform_6, window_bounds = array<i64: 32, 32>}, {pipeline_mode = #tpu.pipeline_mode<synchronous>, transform_indices = @transform_7, window_bounds = array<i64: 32, 32>}, {pipeline_mode = #tpu.pipeline_mode<synchronous>, transform_indices = @transform_8, window_bounds = array<i64: 1, 32>}, {pipeline_mode = #tpu.pipeline_mode<synchronous>, transform_indices = @transform_9, window_bounds = array<i64: 1, 32>}, {pipeline_mode = #tpu.pipeline_mode<synchronous>, transform_indices = @transform_10, window_bounds = array<i64: 32, 128>}, {pipeline_mode = #tpu.pipeline_mode<synchronous>, transform_indices = @transform_11, window_bounds = array<i64: 3, 3, 128>}, {pipeline_mode = #tpu.pipeline_mode<synchronous>, transform_indices = @transform_12, window_bounds = array<i64: 64, 32>}, {transform_indices = @transform_13, window_bounds = array<i64: 1, 16, 16, 32>}]} {
    %c0_i32 = arith.constant 0 : i32
    %0 = arith.cmpi eq, %arg0, %c0_i32 : i32
    %1 = arith.extui %0 : i1 to i32
    %c0_i32_0 = arith.constant 0 : i32
    %2 = arith.cmpi ne, %1, %c0_i32_0 : i32
    scf.if %2 {
      %cst_670 = arith.constant 0.000000e+00 : f32
      %841 = vector.broadcast %cst_670 : f32 to vector<18x32x96xf32>
      %c0_671 = arith.constant 0 : index
      %c0_672 = arith.constant 0 : index
      %c0_673 = arith.constant 0 : index
      %842 = vector.load %arg15[%c0_671, %c0_672, %c0_673] : memref<18x32x96xf32, #tpu.memory_space<vmem>>, vector<18x32x96xf32>
      tpu.vector_store %arg15[%c0_671, %c0_672, %c0_673], %841 {strides = array<i32>} : memref<18x32x96xf32, #tpu.memory_space<vmem>>, vector<18x32x96xf32>,
      %cst_674 = arith.constant 0.000000e+00 : f32
      %843 = vector.broadcast %cst_674 : f32 to vector<18x32x128xf32>
      %c0_675 = arith.constant 0 : index
      %c0_676 = arith.constant 0 : index
      %c0_677 = arith.constant 0 : index
      %844 = vector.load %arg16[%c0_675, %c0_676, %c0_677] : memref<18x32x128xf32, #tpu.memory_space<vmem>>, vector<18x32x128xf32>
      tpu.vector_store %arg16[%c0_675, %c0_676, %c0_677], %843 {strides = array<i32>} : memref<18x32x128xf32, #tpu.memory_space<vmem>>, vector<18x32x128xf32>,
    } else {
    }
    %c0 = arith.constant 0 : index
    %c0_1 = arith.constant 0 : index
    %3 = vector.load %arg2[%c0, %c0_1] : memref<1x32xf32, #tpu.memory_space<vmem>>, vector<1x32xf32>
    %c0_2 = arith.constant 0 : index
    %c0_3 = arith.constant 0 : index
    %4 = vector.load %arg3[%c0_2, %c0_3] : memref<1x32xf32, #tpu.memory_space<vmem>>, vector<1x32xf32>
    %c0_4 = arith.constant 0 : index
    %c0_5 = arith.constant 0 : index
    %5 = vector.load %arg9[%c0_4, %c0_5] : memref<1x32xf32, #tpu.memory_space<vmem>>, vector<1x32xf32>
    %c0_6 = arith.constant 0 : index
    %c0_7 = arith.constant 0 : index
    %6 = vector.load %arg10[%c0_6, %c0_7] : memref<1x32xf32, #tpu.memory_space<vmem>>, vector<1x32xf32>
    %c0_8 = arith.constant 0 : index
    %c0_9 = arith.constant 0 : index
    %7 = vector.load %arg6[%c0_8, %c0_9] : memref<1x32xf32, #tpu.memory_space<vmem>>, vector<1x32xf32>
    %c0_10 = arith.constant 0 : index
    %c0_11 = arith.constant 0 : index
    %8 = vector.load %arg7[%c0_10, %c0_11] : memref<32x32xf32, #tpu.memory_space<vmem>>, vector<32x32xf32>
    %c0_12 = arith.constant 0 : index
    %c0_13 = arith.constant 0 : index
    %c0_14 = arith.constant 0 : index
    %c0_15 = arith.constant 0 : index
    %9 = vector.load %arg1[%c0_12, %c0_13, %c0_14, %c0_15] : memref<1x16x16x32xf32, #tpu.memory_space<vmem>>, vector<1x4x16x32xf32>
    %10 = vector.shape_cast %9 : vector<1x4x16x32xf32> to vector<64x32xf32>
    %cst = arith.constant dense<0.000000e+00> : vector<64xf32>
    %11 = vector.multi_reduction <add>, %10, %cst [1] : vector<64x32xf32> to vector<64xf32>
    %12 = vector.shape_cast %11 : vector<64xf32> to vector<64x1xf32>
    %cst_16 = arith.constant 3.200000e+01 : f32
    %13 = vector.broadcast %cst_16 : f32 to vector<64x1xf32>
    %14 = arith.divf %12, %13 : vector<64x1xf32>
    %15 = vector.broadcast %14 : vector<64x1xf32> to vector<64x32xf32>
    %16 = arith.subf %10, %15 : vector<64x32xf32>
    %17 = arith.mulf %16, %16 : vector<64x32xf32>
    %cst_17 = arith.constant dense<0.000000e+00> : vector<64xf32>
    %18 = vector.multi_reduction <add>, %17, %cst_17 [1] : vector<64x32xf32> to vector<64xf32>
    %19 = vector.shape_cast %18 : vector<64xf32> to vector<64x1xf32>
    %cst_18 = arith.constant 3.200000e+01 : f32
    %20 = vector.broadcast %cst_18 : f32 to vector<64x1xf32>
    %21 = arith.divf %19, %20 : vector<64x1xf32>
    %cst_19 = arith.constant 9.99999974E-6 : f32
    %22 = vector.broadcast %cst_19 : f32 to vector<64x1xf32>
    %23 = arith.addf %21, %22 : vector<64x1xf32>
    %24 = math.rsqrt %23 : vector<64x1xf32>
    %25 = vector.broadcast %24 : vector<64x1xf32> to vector<64x32xf32>
    %26 = arith.mulf %16, %25 : vector<64x32xf32>
    %27 = vector.broadcast %3 : vector<1x32xf32> to vector<64x32xf32>
    %28 = arith.mulf %26, %27 : vector<64x32xf32>
    %29 = vector.broadcast %4 : vector<1x32xf32> to vector<64x32xf32>
    %30 = arith.addf %28, %29 : vector<64x32xf32>
    %31 = arith.truncf %30 : vector<64x32xf32> to vector<64x32xbf16>
    %c0_20 = arith.constant 0 : index
    %c0_21 = arith.constant 0 : index
    %32 = vector.load %arg4[%c0_20, %c0_21] : memref<32x96xbf16, #tpu.memory_space<vmem>>, vector<32x96xbf16>
    %cst_22 = arith.constant dense<0.000000e+00> : vector<64x96xf32>
    %33 = tpu.matmul %31, %32, %cst_22 {dimension_numbers = #tpu.dot_dimension_numbers<[1], [0], [0], [1], [0, 0, 1, 1], [], []>} : vector<64x32xbf16>, vector<32x96xbf16>, vector<64x96xf32> -> vector<64x96xf32>
    %34 = vector.shape_cast %33 : vector<64x96xf32> to vector<4x16x96xf32>
    %c1 = arith.constant 1 : index
    %c8 = arith.constant 8 : index
    %c0_23 = arith.constant 0 : index
    %35 = vector.load %arg15[%c1, %c8, %c0_23] : memref<18x32x96xf32, #tpu.memory_space<vmem>>, vector<4x16x96xf32>
    tpu.vector_store %arg15[%c1, %c8, %c0_23], %34 {strides = array<i32>} : memref<18x32x96xf32, #tpu.memory_space<vmem>>, vector<4x16x96xf32>,
    %c0_24 = arith.constant 0 : index
    %c4 = arith.constant 4 : index
    %c0_25 = arith.constant 0 : index
    %c0_26 = arith.constant 0 : index
    %36 = vector.load %arg1[%c0_24, %c4, %c0_25, %c0_26] : memref<1x16x16x32xf32, #tpu.memory_space<vmem>>, vector<1x4x16x32xf32>
    %37 = vector.shape_cast %36 : vector<1x4x16x32xf32> to vector<64x32xf32>
    %cst_27 = arith.constant dense<0.000000e+00> : vector<64xf32>
    %38 = vector.multi_reduction <add>, %37, %cst_27 [1] : vector<64x32xf32> to vector<64xf32>
    %39 = vector.shape_cast %38 : vector<64xf32> to vector<64x1xf32>
    %cst_28 = arith.constant 3.200000e+01 : f32
    %40 = vector.broadcast %cst_28 : f32 to vector<64x1xf32>
    %41 = arith.divf %39, %40 : vector<64x1xf32>
    %42 = vector.broadcast %41 : vector<64x1xf32> to vector<64x32xf32>
    %43 = arith.subf %37, %42 : vector<64x32xf32>
    %44 = arith.mulf %43, %43 : vector<64x32xf32>
    %cst_29 = arith.constant dense<0.000000e+00> : vector<64xf32>
    %45 = vector.multi_reduction <add>, %44, %cst_29 [1] : vector<64x32xf32> to vector<64xf32>
    %46 = vector.shape_cast %45 : vector<64xf32> to vector<64x1xf32>
    %cst_30 = arith.constant 3.200000e+01 : f32
    %47 = vector.broadcast %cst_30 : f32 to vector<64x1xf32>
    %48 = arith.divf %46, %47 : vector<64x1xf32>
    %cst_31 = arith.constant 9.99999974E-6 : f32
    %49 = vector.broadcast %cst_31 : f32 to vector<64x1xf32>
    %50 = arith.addf %48, %49 : vector<64x1xf32>
    %51 = math.rsqrt %50 : vector<64x1xf32>
    %52 = vector.broadcast %51 : vector<64x1xf32> to vector<64x32xf32>
    %53 = arith.mulf %43, %52 : vector<64x32xf32>
    %54 = vector.broadcast %3 : vector<1x32xf32> to vector<64x32xf32>
    %55 = arith.mulf %53, %54 : vector<64x32xf32>
    %56 = vector.broadcast %4 : vector<1x32xf32> to vector<64x32xf32>
    %57 = arith.addf %55, %56 : vector<64x32xf32>
    %58 = arith.truncf %57 : vector<64x32xf32> to vector<64x32xbf16>
    %c0_32 = arith.constant 0 : index
    %c0_33 = arith.constant 0 : index
    %59 = vector.load %arg4[%c0_32, %c0_33] : memref<32x96xbf16, #tpu.memory_space<vmem>>, vector<32x96xbf16>
    %cst_34 = arith.constant dense<0.000000e+00> : vector<64x96xf32>
    %60 = tpu.matmul %58, %59, %cst_34 {dimension_numbers = #tpu.dot_dimension_numbers<[1], [0], [0], [1], [0, 0, 1, 1], [], []>} : vector<64x32xbf16>, vector<32x96xbf16>, vector<64x96xf32> -> vector<64x96xf32>
    %61 = vector.shape_cast %60 : vector<64x96xf32> to vector<4x16x96xf32>
    %c5 = arith.constant 5 : index
    %c8_35 = arith.constant 8 : index
    %c0_36 = arith.constant 0 : index
    %62 = vector.load %arg15[%c5, %c8_35, %c0_36] : memref<18x32x96xf32, #tpu.memory_space<vmem>>, vector<4x16x96xf32>
    tpu.vector_store %arg15[%c5, %c8_35, %c0_36], %61 {strides = array<i32>} : memref<18x32x96xf32, #tpu.memory_space<vmem>>, vector<4x16x96xf32>,
    %c0_37 = arith.constant 0 : index
    %c8_38 = arith.constant 8 : index
    %c0_39 = arith.constant 0 : index
    %c0_40 = arith.constant 0 : index
    %63 = vector.load %arg1[%c0_37, %c8_38, %c0_39, %c0_40] : memref<1x16x16x32xf32, #tpu.memory_space<vmem>>, vector<1x4x16x32xf32>
    %64 = vector.shape_cast %63 : vector<1x4x16x32xf32> to vector<64x32xf32>
    %cst_41 = arith.constant dense<0.000000e+00> : vector<64xf32>
    %65 = vector.multi_reduction <add>, %64, %cst_41 [1] : vector<64x32xf32> to vector<64xf32>
    %66 = vector.shape_cast %65 : vector<64xf32> to vector<64x1xf32>
    %cst_42 = arith.constant 3.200000e+01 : f32
    %67 = vector.broadcast %cst_42 : f32 to vector<64x1xf32>
    %68 = arith.divf %66, %67 : vector<64x1xf32>
    %69 = vector.broadcast %68 : vector<64x1xf32> to vector<64x32xf32>
    %70 = arith.subf %64, %69 : vector<64x32xf32>
    %71 = arith.mulf %70, %70 : vector<64x32xf32>
    %cst_43 = arith.constant dense<0.000000e+00> : vector<64xf32>
    %72 = vector.multi_reduction <add>, %71, %cst_43 [1] : vector<64x32xf32> to vector<64xf32>
    %73 = vector.shape_cast %72 : vector<64xf32> to vector<64x1xf32>
    %cst_44 = arith.constant 3.200000e+01 : f32
    %74 = vector.broadcast %cst_44 : f32 to vector<64x1xf32>
    %75 = arith.divf %73, %74 : vector<64x1xf32>
    %cst_45 = arith.constant 9.99999974E-6 : f32
    %76 = vector.broadcast %cst_45 : f32 to vector<64x1xf32>
    %77 = arith.addf %75, %76 : vector<64x1xf32>
    %78 = math.rsqrt %77 : vector<64x1xf32>
    %79 = vector.broadcast %78 : vector<64x1xf32> to vector<64x32xf32>
    %80 = arith.mulf %70, %79 : vector<64x32xf32>
    %81 = vector.broadcast %3 : vector<1x32xf32> to vector<64x32xf32>
    %82 = arith.mulf %80, %81 : vector<64x32xf32>
    %83 = vector.broadcast %4 : vector<1x32xf32> to vector<64x32xf32>
    %84 = arith.addf %82, %83 : vector<64x32xf32>
    %85 = arith.truncf %84 : vector<64x32xf32> to vector<64x32xbf16>
    %c0_46 = arith.constant 0 : index
    %c0_47 = arith.constant 0 : index
    %86 = vector.load %arg4[%c0_46, %c0_47] : memref<32x96xbf16, #tpu.memory_space<vmem>>, vector<32x96xbf16>
    %cst_48 = arith.constant dense<0.000000e+00> : vector<64x96xf32>
    %87 = tpu.matmul %85, %86, %cst_48 {dimension_numbers = #tpu.dot_dimension_numbers<[1], [0], [0], [1], [0, 0, 1, 1], [], []>} : vector<64x32xbf16>, vector<32x96xbf16>, vector<64x96xf32> -> vector<64x96xf32>
    %88 = vector.shape_cast %87 : vector<64x96xf32> to vector<4x16x96xf32>
    %c9 = arith.constant 9 : index
    %c8_49 = arith.constant 8 : index
    %c0_50 = arith.constant 0 : index
    %89 = vector.load %arg15[%c9, %c8_49, %c0_50] : memref<18x32x96xf32, #tpu.memory_space<vmem>>, vector<4x16x96xf32>
    tpu.vector_store %arg15[%c9, %c8_49, %c0_50], %88 {strides = array<i32>} : memref<18x32x96xf32, #tpu.memory_space<vmem>>, vector<4x16x96xf32>,
    %c0_51 = arith.constant 0 : index
    %c12 = arith.constant 12 : index
    %c0_52 = arith.constant 0 : index
    %c0_53 = arith.constant 0 : index
    %90 = vector.load %arg1[%c0_51, %c12, %c0_52, %c0_53] : memref<1x16x16x32xf32, #tpu.memory_space<vmem>>, vector<1x4x16x32xf32>
    %91 = vector.shape_cast %90 : vector<1x4x16x32xf32> to vector<64x32xf32>
    %cst_54 = arith.constant dense<0.000000e+00> : vector<64xf32>
    %92 = vector.multi_reduction <add>, %91, %cst_54 [1] : vector<64x32xf32> to vector<64xf32>
    %93 = vector.shape_cast %92 : vector<64xf32> to vector<64x1xf32>
    %cst_55 = arith.constant 3.200000e+01 : f32
    %94 = vector.broadcast %cst_55 : f32 to vector<64x1xf32>
    %95 = arith.divf %93, %94 : vector<64x1xf32>
    %96 = vector.broadcast %95 : vector<64x1xf32> to vector<64x32xf32>
    %97 = arith.subf %91, %96 : vector<64x32xf32>
    %98 = arith.mulf %97, %97 : vector<64x32xf32>
    %cst_56 = arith.constant dense<0.000000e+00> : vector<64xf32>
    %99 = vector.multi_reduction <add>, %98, %cst_56 [1] : vector<64x32xf32> to vector<64xf32>
    %100 = vector.shape_cast %99 : vector<64xf32> to vector<64x1xf32>
    %cst_57 = arith.constant 3.200000e+01 : f32
    %101 = vector.broadcast %cst_57 : f32 to vector<64x1xf32>
    %102 = arith.divf %100, %101 : vector<64x1xf32>
    %cst_58 = arith.constant 9.99999974E-6 : f32
    %103 = vector.broadcast %cst_58 : f32 to vector<64x1xf32>
    %104 = arith.addf %102, %103 : vector<64x1xf32>
    %105 = math.rsqrt %104 : vector<64x1xf32>
    %106 = vector.broadcast %105 : vector<64x1xf32> to vector<64x32xf32>
    %107 = arith.mulf %97, %106 : vector<64x32xf32>
    %108 = vector.broadcast %3 : vector<1x32xf32> to vector<64x32xf32>
    %109 = arith.mulf %107, %108 : vector<64x32xf32>
    %110 = vector.broadcast %4 : vector<1x32xf32> to vector<64x32xf32>
    %111 = arith.addf %109, %110 : vector<64x32xf32>
    %112 = arith.truncf %111 : vector<64x32xf32> to vector<64x32xbf16>
    %c0_59 = arith.constant 0 : index
    %c0_60 = arith.constant 0 : index
    %113 = vector.load %arg4[%c0_59, %c0_60] : memref<32x96xbf16, #tpu.memory_space<vmem>>, vector<32x96xbf16>
    %cst_61 = arith.constant dense<0.000000e+00> : vector<64x96xf32>
    %114 = tpu.matmul %112, %113, %cst_61 {dimension_numbers = #tpu.dot_dimension_numbers<[1], [0], [0], [1], [0, 0, 1, 1], [], []>} : vector<64x32xbf16>, vector<32x96xbf16>, vector<64x96xf32> -> vector<64x96xf32>
    %115 = vector.shape_cast %114 : vector<64x96xf32> to vector<4x16x96xf32>
    %c13 = arith.constant 13 : index
    %c8_62 = arith.constant 8 : index
    %c0_63 = arith.constant 0 : index
    %116 = vector.load %arg15[%c13, %c8_62, %c0_63] : memref<18x32x96xf32, #tpu.memory_space<vmem>>, vector<4x16x96xf32>
    tpu.vector_store %arg15[%c13, %c8_62, %c0_63], %115 {strides = array<i32>} : memref<18x32x96xf32, #tpu.memory_space<vmem>>, vector<4x16x96xf32>,
    %cst_64 = arith.constant 0.000000e+00 : f32
    %117 = vector.broadcast %cst_64 : f32 to vector<4x16x96xf32>
    %c0_65 = arith.constant 0 : index
    %c7 = arith.constant 7 : index
    %c0_66 = arith.constant 0 : index
    %118 = vector.load %arg15[%c0_65, %c7, %c0_66] : memref<18x32x96xf32, #tpu.memory_space<vmem>>, vector<4x16x96xf32>
    %c0_67 = arith.constant 0 : index
    %c0_68 = arith.constant 0 : index
    %c0_69 = arith.constant 0 : index
    %119 = vector.load %arg5[%c0_67, %c0_68, %c0_69] : memref<3x3x96xf32, #tpu.memory_space<vmem>>, vector<1x1x96xf32>
    %120 = vector.broadcast %119 : vector<1x1x96xf32> to vector<4x16x96xf32>
    %121 = arith.mulf %118, %120 : vector<4x16x96xf32>
    %122 = arith.addf %117, %121 : vector<4x16x96xf32>
    %c0_70 = arith.constant 0 : index
    %c8_71 = arith.constant 8 : index
    %c0_72 = arith.constant 0 : index
    %123 = vector.load %arg15[%c0_70, %c8_71, %c0_72] : memref<18x32x96xf32, #tpu.memory_space<vmem>>, vector<4x16x96xf32>
    %c0_73 = arith.constant 0 : index
    %c1_74 = arith.constant 1 : index
    %c0_75 = arith.constant 0 : index
    %124 = vector.load %arg5[%c0_73, %c1_74, %c0_75] : memref<3x3x96xf32, #tpu.memory_space<vmem>>, vector<1x1x96xf32>
    %125 = vector.broadcast %124 : vector<1x1x96xf32> to vector<4x16x96xf32>
    %126 = arith.mulf %123, %125 : vector<4x16x96xf32>
    %127 = arith.addf %122, %126 : vector<4x16x96xf32>
    %c0_76 = arith.constant 0 : index
    %c9_77 = arith.constant 9 : index
    %c0_78 = arith.constant 0 : index
    %128 = vector.load %arg15[%c0_76, %c9_77, %c0_78] : memref<18x32x96xf32, #tpu.memory_space<vmem>>, vector<4x16x96xf32>
    %c0_79 = arith.constant 0 : index
    %c2 = arith.constant 2 : index
    %c0_80 = arith.constant 0 : index
    %129 = vector.load %arg5[%c0_79, %c2, %c0_80] : memref<3x3x96xf32, #tpu.memory_space<vmem>>, vector<1x1x96xf32>
    %130 = vector.broadcast %129 : vector<1x1x96xf32> to vector<4x16x96xf32>
    %131 = arith.mulf %128, %130 : vector<4x16x96xf32>
    %132 = arith.addf %127, %131 : vector<4x16x96xf32>
    %c1_81 = arith.constant 1 : index
    %c7_82 = arith.constant 7 : index
    %c0_83 = arith.constant 0 : index
    %133 = vector.load %arg15[%c1_81, %c7_82, %c0_83] : memref<18x32x96xf32, #tpu.memory_space<vmem>>, vector<4x16x96xf32>
    %c1_84 = arith.constant 1 : index
    %c0_85 = arith.constant 0 : index
    %c0_86 = arith.constant 0 : index
    %134 = vector.load %arg5[%c1_84, %c0_85, %c0_86] : memref<3x3x96xf32, #tpu.memory_space<vmem>>, vector<1x1x96xf32>
    %135 = vector.broadcast %134 : vector<1x1x96xf32> to vector<4x16x96xf32>
    %136 = arith.mulf %133, %135 : vector<4x16x96xf32>
    %137 = arith.addf %132, %136 : vector<4x16x96xf32>
    %c1_87 = arith.constant 1 : index
    %c8_88 = arith.constant 8 : index
    %c0_89 = arith.constant 0 : index
    %138 = vector.load %arg15[%c1_87, %c8_88, %c0_89] : memref<18x32x96xf32, #tpu.memory_space<vmem>>, vector<4x16x96xf32>
    %c1_90 = arith.constant 1 : index
    %c1_91 = arith.constant 1 : index
    %c0_92 = arith.constant 0 : index
    %139 = vector.load %arg5[%c1_90, %c1_91, %c0_92] : memref<3x3x96xf32, #tpu.memory_space<vmem>>, vector<1x1x96xf32>
    %140 = vector.broadcast %139 : vector<1x1x96xf32> to vector<4x16x96xf32>
    %141 = arith.mulf %138, %140 : vector<4x16x96xf32>
    %142 = arith.addf %137, %141 : vector<4x16x96xf32>
    %c1_93 = arith.constant 1 : index
    %c9_94 = arith.constant 9 : index
    %c0_95 = arith.constant 0 : index
    %143 = vector.load %arg15[%c1_93, %c9_94, %c0_95] : memref<18x32x96xf32, #tpu.memory_space<vmem>>, vector<4x16x96xf32>
    %c1_96 = arith.constant 1 : index
    %c2_97 = arith.constant 2 : index
    %c0_98 = arith.constant 0 : index
    %144 = vector.load %arg5[%c1_96, %c2_97, %c0_98] : memref<3x3x96xf32, #tpu.memory_space<vmem>>, vector<1x1x96xf32>
    %145 = vector.broadcast %144 : vector<1x1x96xf32> to vector<4x16x96xf32>
    %146 = arith.mulf %143, %145 : vector<4x16x96xf32>
    %147 = arith.addf %142, %146 : vector<4x16x96xf32>
    %c2_99 = arith.constant 2 : index
    %c7_100 = arith.constant 7 : index
    %c0_101 = arith.constant 0 : index
    %148 = vector.load %arg15[%c2_99, %c7_100, %c0_101] : memref<18x32x96xf32, #tpu.memory_space<vmem>>, vector<4x16x96xf32>
    %c2_102 = arith.constant 2 : index
    %c0_103 = arith.constant 0 : index
    %c0_104 = arith.constant 0 : index
    %149 = vector.load %arg5[%c2_102, %c0_103, %c0_104] : memref<3x3x96xf32, #tpu.memory_space<vmem>>, vector<1x1x96xf32>
    %150 = vector.broadcast %149 : vector<1x1x96xf32> to vector<4x16x96xf32>
    %151 = arith.mulf %148, %150 : vector<4x16x96xf32>
    %152 = arith.addf %147, %151 : vector<4x16x96xf32>
    %c2_105 = arith.constant 2 : index
    %c8_106 = arith.constant 8 : index
    %c0_107 = arith.constant 0 : index
    %153 = vector.load %arg15[%c2_105, %c8_106, %c0_107] : memref<18x32x96xf32, #tpu.memory_space<vmem>>, vector<4x16x96xf32>
    %c2_108 = arith.constant 2 : index
    %c1_109 = arith.constant 1 : index
    %c0_110 = arith.constant 0 : index
    %154 = vector.load %arg5[%c2_108, %c1_109, %c0_110] : memref<3x3x96xf32, #tpu.memory_space<vmem>>, vector<1x1x96xf32>
    %155 = vector.broadcast %154 : vector<1x1x96xf32> to vector<4x16x96xf32>
    %156 = arith.mulf %153, %155 : vector<4x16x96xf32>
    %157 = arith.addf %152, %156 : vector<4x16x96xf32>
    %c2_111 = arith.constant 2 : index
    %c9_112 = arith.constant 9 : index
    %c0_113 = arith.constant 0 : index
    %158 = vector.load %arg15[%c2_111, %c9_112, %c0_113] : memref<18x32x96xf32, #tpu.memory_space<vmem>>, vector<4x16x96xf32>
    %c2_114 = arith.constant 2 : index
    %c2_115 = arith.constant 2 : index
    %c0_116 = arith.constant 0 : index
    %159 = vector.load %arg5[%c2_114, %c2_115, %c0_116] : memref<3x3x96xf32, #tpu.memory_space<vmem>>, vector<1x1x96xf32>
    %160 = vector.broadcast %159 : vector<1x1x96xf32> to vector<4x16x96xf32>
    %161 = arith.mulf %158, %160 : vector<4x16x96xf32>
    %162 = arith.addf %157, %161 : vector<4x16x96xf32>
    %163 = vector.shape_cast %162 : vector<4x16x96xf32> to vector<64x96xf32>
    %c0_117 = arith.constant 0 : index
    %c0_118 = arith.constant 0 : index
    %164 = vector.load %arg17[%c0_117, %c0_118] : memref<256x96xf32, #tpu.memory_space<vmem>>, vector<64x96xf32>
    tpu.vector_store %arg17[%c0_117, %c0_118], %163 {strides = array<i32>} : memref<256x96xf32, #tpu.memory_space<vmem>>, vector<64x96xf32>,
    %cst_119 = arith.constant 0.000000e+00 : f32
    %165 = vector.broadcast %cst_119 : f32 to vector<4x16x96xf32>
    %c4_120 = arith.constant 4 : index
    %c7_121 = arith.constant 7 : index
    %c0_122 = arith.constant 0 : index
    %166 = vector.load %arg15[%c4_120, %c7_121, %c0_122] : memref<18x32x96xf32, #tpu.memory_space<vmem>>, vector<4x16x96xf32>
    %c0_123 = arith.constant 0 : index
    %c0_124 = arith.constant 0 : index
    %c0_125 = arith.constant 0 : index
    %167 = vector.load %arg5[%c0_123, %c0_124, %c0_125] : memref<3x3x96xf32, #tpu.memory_space<vmem>>, vector<1x1x96xf32>
    %168 = vector.broadcast %167 : vector<1x1x96xf32> to vector<4x16x96xf32>
    %169 = arith.mulf %166, %168 : vector<4x16x96xf32>
    %170 = arith.addf %165, %169 : vector<4x16x96xf32>
    %c4_126 = arith.constant 4 : index
    %c8_127 = arith.constant 8 : index
    %c0_128 = arith.constant 0 : index
    %171 = vector.load %arg15[%c4_126, %c8_127, %c0_128] : memref<18x32x96xf32, #tpu.memory_space<vmem>>, vector<4x16x96xf32>
    %c0_129 = arith.constant 0 : index
    %c1_130 = arith.constant 1 : index
    %c0_131 = arith.constant 0 : index
    %172 = vector.load %arg5[%c0_129, %c1_130, %c0_131] : memref<3x3x96xf32, #tpu.memory_space<vmem>>, vector<1x1x96xf32>
    %173 = vector.broadcast %172 : vector<1x1x96xf32> to vector<4x16x96xf32>
    %174 = arith.mulf %171, %173 : vector<4x16x96xf32>
    %175 = arith.addf %170, %174 : vector<4x16x96xf32>
    %c4_132 = arith.constant 4 : index
    %c9_133 = arith.constant 9 : index
    %c0_134 = arith.constant 0 : index
    %176 = vector.load %arg15[%c4_132, %c9_133, %c0_134] : memref<18x32x96xf32, #tpu.memory_space<vmem>>, vector<4x16x96xf32>
    %c0_135 = arith.constant 0 : index
    %c2_136 = arith.constant 2 : index
    %c0_137 = arith.constant 0 : index
    %177 = vector.load %arg5[%c0_135, %c2_136, %c0_137] : memref<3x3x96xf32, #tpu.memory_space<vmem>>, vector<1x1x96xf32>
    %178 = vector.broadcast %177 : vector<1x1x96xf32> to vector<4x16x96xf32>
    %179 = arith.mulf %176, %178 : vector<4x16x96xf32>
    %180 = arith.addf %175, %179 : vector<4x16x96xf32>
    %c5_138 = arith.constant 5 : index
    %c7_139 = arith.constant 7 : index
    %c0_140 = arith.constant 0 : index
    %181 = vector.load %arg15[%c5_138, %c7_139, %c0_140] : memref<18x32x96xf32, #tpu.memory_space<vmem>>, vector<4x16x96xf32>
    %c1_141 = arith.constant 1 : index
    %c0_142 = arith.constant 0 : index
    %c0_143 = arith.constant 0 : index
    %182 = vector.load %arg5[%c1_141, %c0_142, %c0_143] : memref<3x3x96xf32, #tpu.memory_space<vmem>>, vector<1x1x96xf32>
    %183 = vector.broadcast %182 : vector<1x1x96xf32> to vector<4x16x96xf32>
    %184 = arith.mulf %181, %183 : vector<4x16x96xf32>
    %185 = arith.addf %180, %184 : vector<4x16x96xf32>
    %c5_144 = arith.constant 5 : index
    %c8_145 = arith.constant 8 : index
    %c0_146 = arith.constant 0 : index
    %186 = vector.load %arg15[%c5_144, %c8_145, %c0_146] : memref<18x32x96xf32, #tpu.memory_space<vmem>>, vector<4x16x96xf32>
    %c1_147 = arith.constant 1 : index
    %c1_148 = arith.constant 1 : index
    %c0_149 = arith.constant 0 : index
    %187 = vector.load %arg5[%c1_147, %c1_148, %c0_149] : memref<3x3x96xf32, #tpu.memory_space<vmem>>, vector<1x1x96xf32>
    %188 = vector.broadcast %187 : vector<1x1x96xf32> to vector<4x16x96xf32>
    %189 = arith.mulf %186, %188 : vector<4x16x96xf32>
    %190 = arith.addf %185, %189 : vector<4x16x96xf32>
    %c5_150 = arith.constant 5 : index
    %c9_151 = arith.constant 9 : index
    %c0_152 = arith.constant 0 : index
    %191 = vector.load %arg15[%c5_150, %c9_151, %c0_152] : memref<18x32x96xf32, #tpu.memory_space<vmem>>, vector<4x16x96xf32>
    %c1_153 = arith.constant 1 : index
    %c2_154 = arith.constant 2 : index
    %c0_155 = arith.constant 0 : index
    %192 = vector.load %arg5[%c1_153, %c2_154, %c0_155] : memref<3x3x96xf32, #tpu.memory_space<vmem>>, vector<1x1x96xf32>
    %193 = vector.broadcast %192 : vector<1x1x96xf32> to vector<4x16x96xf32>
    %194 = arith.mulf %191, %193 : vector<4x16x96xf32>
    %195 = arith.addf %190, %194 : vector<4x16x96xf32>
    %c6 = arith.constant 6 : index
    %c7_156 = arith.constant 7 : index
    %c0_157 = arith.constant 0 : index
    %196 = vector.load %arg15[%c6, %c7_156, %c0_157] : memref<18x32x96xf32, #tpu.memory_space<vmem>>, vector<4x16x96xf32>
    %c2_158 = arith.constant 2 : index
    %c0_159 = arith.constant 0 : index
    %c0_160 = arith.constant 0 : index
    %197 = vector.load %arg5[%c2_158, %c0_159, %c0_160] : memref<3x3x96xf32, #tpu.memory_space<vmem>>, vector<1x1x96xf32>
    %198 = vector.broadcast %197 : vector<1x1x96xf32> to vector<4x16x96xf32>
    %199 = arith.mulf %196, %198 : vector<4x16x96xf32>
    %200 = arith.addf %195, %199 : vector<4x16x96xf32>
    %c6_161 = arith.constant 6 : index
    %c8_162 = arith.constant 8 : index
    %c0_163 = arith.constant 0 : index
    %201 = vector.load %arg15[%c6_161, %c8_162, %c0_163] : memref<18x32x96xf32, #tpu.memory_space<vmem>>, vector<4x16x96xf32>
    %c2_164 = arith.constant 2 : index
    %c1_165 = arith.constant 1 : index
    %c0_166 = arith.constant 0 : index
    %202 = vector.load %arg5[%c2_164, %c1_165, %c0_166] : memref<3x3x96xf32, #tpu.memory_space<vmem>>, vector<1x1x96xf32>
    %203 = vector.broadcast %202 : vector<1x1x96xf32> to vector<4x16x96xf32>
    %204 = arith.mulf %201, %203 : vector<4x16x96xf32>
    %205 = arith.addf %200, %204 : vector<4x16x96xf32>
    %c6_167 = arith.constant 6 : index
    %c9_168 = arith.constant 9 : index
    %c0_169 = arith.constant 0 : index
    %206 = vector.load %arg15[%c6_167, %c9_168, %c0_169] : memref<18x32x96xf32, #tpu.memory_space<vmem>>, vector<4x16x96xf32>
    %c2_170 = arith.constant 2 : index
    %c2_171 = arith.constant 2 : index
    %c0_172 = arith.constant 0 : index
    %207 = vector.load %arg5[%c2_170, %c2_171, %c0_172] : memref<3x3x96xf32, #tpu.memory_space<vmem>>, vector<1x1x96xf32>
    %208 = vector.broadcast %207 : vector<1x1x96xf32> to vector<4x16x96xf32>
    %209 = arith.mulf %206, %208 : vector<4x16x96xf32>
    %210 = arith.addf %205, %209 : vector<4x16x96xf32>
    %211 = vector.shape_cast %210 : vector<4x16x96xf32> to vector<64x96xf32>
    %c64 = arith.constant 64 : index
    %c0_173 = arith.constant 0 : index
    %212 = vector.load %arg17[%c64, %c0_173] : memref<256x96xf32, #tpu.memory_space<vmem>>, vector<64x96xf32>
    tpu.vector_store %arg17[%c64, %c0_173], %211 {strides = array<i32>} : memref<256x96xf32, #tpu.memory_space<vmem>>, vector<64x96xf32>,
    %cst_174 = arith.constant 0.000000e+00 : f32
    %213 = vector.broadcast %cst_174 : f32 to vector<4x16x96xf32>
    %c8_175 = arith.constant 8 : index
    %c7_176 = arith.constant 7 : index
    %c0_177 = arith.constant 0 : index
    %214 = vector.load %arg15[%c8_175, %c7_176, %c0_177] : memref<18x32x96xf32, #tpu.memory_space<vmem>>, vector<4x16x96xf32>
    %c0_178 = arith.constant 0 : index
    %c0_179 = arith.constant 0 : index
    %c0_180 = arith.constant 0 : index
    %215 = vector.load %arg5[%c0_178, %c0_179, %c0_180] : memref<3x3x96xf32, #tpu.memory_space<vmem>>, vector<1x1x96xf32>
    %216 = vector.broadcast %215 : vector<1x1x96xf32> to vector<4x16x96xf32>
    %217 = arith.mulf %214, %216 : vector<4x16x96xf32>
    %218 = arith.addf %213, %217 : vector<4x16x96xf32>
    %c8_181 = arith.constant 8 : index
    %c8_182 = arith.constant 8 : index
    %c0_183 = arith.constant 0 : index
    %219 = vector.load %arg15[%c8_181, %c8_182, %c0_183] : memref<18x32x96xf32, #tpu.memory_space<vmem>>, vector<4x16x96xf32>
    %c0_184 = arith.constant 0 : index
    %c1_185 = arith.constant 1 : index
    %c0_186 = arith.constant 0 : index
    %220 = vector.load %arg5[%c0_184, %c1_185, %c0_186] : memref<3x3x96xf32, #tpu.memory_space<vmem>>, vector<1x1x96xf32>
    %221 = vector.broadcast %220 : vector<1x1x96xf32> to vector<4x16x96xf32>
    %222 = arith.mulf %219, %221 : vector<4x16x96xf32>
    %223 = arith.addf %218, %222 : vector<4x16x96xf32>
    %c8_187 = arith.constant 8 : index
    %c9_188 = arith.constant 9 : index
    %c0_189 = arith.constant 0 : index
    %224 = vector.load %arg15[%c8_187, %c9_188, %c0_189] : memref<18x32x96xf32, #tpu.memory_space<vmem>>, vector<4x16x96xf32>
    %c0_190 = arith.constant 0 : index
    %c2_191 = arith.constant 2 : index
    %c0_192 = arith.constant 0 : index
    %225 = vector.load %arg5[%c0_190, %c2_191, %c0_192] : memref<3x3x96xf32, #tpu.memory_space<vmem>>, vector<1x1x96xf32>
    %226 = vector.broadcast %225 : vector<1x1x96xf32> to vector<4x16x96xf32>
    %227 = arith.mulf %224, %226 : vector<4x16x96xf32>
    %228 = arith.addf %223, %227 : vector<4x16x96xf32>
    %c9_193 = arith.constant 9 : index
    %c7_194 = arith.constant 7 : index
    %c0_195 = arith.constant 0 : index
    %229 = vector.load %arg15[%c9_193, %c7_194, %c0_195] : memref<18x32x96xf32, #tpu.memory_space<vmem>>, vector<4x16x96xf32>
    %c1_196 = arith.constant 1 : index
    %c0_197 = arith.constant 0 : index
    %c0_198 = arith.constant 0 : index
    %230 = vector.load %arg5[%c1_196, %c0_197, %c0_198] : memref<3x3x96xf32, #tpu.memory_space<vmem>>, vector<1x1x96xf32>
    %231 = vector.broadcast %230 : vector<1x1x96xf32> to vector<4x16x96xf32>
    %232 = arith.mulf %229, %231 : vector<4x16x96xf32>
    %233 = arith.addf %228, %232 : vector<4x16x96xf32>
    %c9_199 = arith.constant 9 : index
    %c8_200 = arith.constant 8 : index
    %c0_201 = arith.constant 0 : index
    %234 = vector.load %arg15[%c9_199, %c8_200, %c0_201] : memref<18x32x96xf32, #tpu.memory_space<vmem>>, vector<4x16x96xf32>
    %c1_202 = arith.constant 1 : index
    %c1_203 = arith.constant 1 : index
    %c0_204 = arith.constant 0 : index
    %235 = vector.load %arg5[%c1_202, %c1_203, %c0_204] : memref<3x3x96xf32, #tpu.memory_space<vmem>>, vector<1x1x96xf32>
    %236 = vector.broadcast %235 : vector<1x1x96xf32> to vector<4x16x96xf32>
    %237 = arith.mulf %234, %236 : vector<4x16x96xf32>
    %238 = arith.addf %233, %237 : vector<4x16x96xf32>
    %c9_205 = arith.constant 9 : index
    %c9_206 = arith.constant 9 : index
    %c0_207 = arith.constant 0 : index
    %239 = vector.load %arg15[%c9_205, %c9_206, %c0_207] : memref<18x32x96xf32, #tpu.memory_space<vmem>>, vector<4x16x96xf32>
    %c1_208 = arith.constant 1 : index
    %c2_209 = arith.constant 2 : index
    %c0_210 = arith.constant 0 : index
    %240 = vector.load %arg5[%c1_208, %c2_209, %c0_210] : memref<3x3x96xf32, #tpu.memory_space<vmem>>, vector<1x1x96xf32>
    %241 = vector.broadcast %240 : vector<1x1x96xf32> to vector<4x16x96xf32>
    %242 = arith.mulf %239, %241 : vector<4x16x96xf32>
    %243 = arith.addf %238, %242 : vector<4x16x96xf32>
    %c10 = arith.constant 10 : index
    %c7_211 = arith.constant 7 : index
    %c0_212 = arith.constant 0 : index
    %244 = vector.load %arg15[%c10, %c7_211, %c0_212] : memref<18x32x96xf32, #tpu.memory_space<vmem>>, vector<4x16x96xf32>
    %c2_213 = arith.constant 2 : index
    %c0_214 = arith.constant 0 : index
    %c0_215 = arith.constant 0 : index
    %245 = vector.load %arg5[%c2_213, %c0_214, %c0_215] : memref<3x3x96xf32, #tpu.memory_space<vmem>>, vector<1x1x96xf32>
    %246 = vector.broadcast %245 : vector<1x1x96xf32> to vector<4x16x96xf32>
    %247 = arith.mulf %244, %246 : vector<4x16x96xf32>
    %248 = arith.addf %243, %247 : vector<4x16x96xf32>
    %c10_216 = arith.constant 10 : index
    %c8_217 = arith.constant 8 : index
    %c0_218 = arith.constant 0 : index
    %249 = vector.load %arg15[%c10_216, %c8_217, %c0_218] : memref<18x32x96xf32, #tpu.memory_space<vmem>>, vector<4x16x96xf32>
    %c2_219 = arith.constant 2 : index
    %c1_220 = arith.constant 1 : index
    %c0_221 = arith.constant 0 : index
    %250 = vector.load %arg5[%c2_219, %c1_220, %c0_221] : memref<3x3x96xf32, #tpu.memory_space<vmem>>, vector<1x1x96xf32>
    %251 = vector.broadcast %250 : vector<1x1x96xf32> to vector<4x16x96xf32>
    %252 = arith.mulf %249, %251 : vector<4x16x96xf32>
    %253 = arith.addf %248, %252 : vector<4x16x96xf32>
    %c10_222 = arith.constant 10 : index
    %c9_223 = arith.constant 9 : index
    %c0_224 = arith.constant 0 : index
    %254 = vector.load %arg15[%c10_222, %c9_223, %c0_224] : memref<18x32x96xf32, #tpu.memory_space<vmem>>, vector<4x16x96xf32>
    %c2_225 = arith.constant 2 : index
    %c2_226 = arith.constant 2 : index
    %c0_227 = arith.constant 0 : index
    %255 = vector.load %arg5[%c2_225, %c2_226, %c0_227] : memref<3x3x96xf32, #tpu.memory_space<vmem>>, vector<1x1x96xf32>
    %256 = vector.broadcast %255 : vector<1x1x96xf32> to vector<4x16x96xf32>
    %257 = arith.mulf %254, %256 : vector<4x16x96xf32>
    %258 = arith.addf %253, %257 : vector<4x16x96xf32>
    %259 = vector.shape_cast %258 : vector<4x16x96xf32> to vector<64x96xf32>
    %c128 = arith.constant 128 : index
    %c0_228 = arith.constant 0 : index
    %260 = vector.load %arg17[%c128, %c0_228] : memref<256x96xf32, #tpu.memory_space<vmem>>, vector<64x96xf32>
    tpu.vector_store %arg17[%c128, %c0_228], %259 {strides = array<i32>} : memref<256x96xf32, #tpu.memory_space<vmem>>, vector<64x96xf32>,
    %cst_229 = arith.constant 0.000000e+00 : f32
    %261 = vector.broadcast %cst_229 : f32 to vector<4x16x96xf32>
    %c12_230 = arith.constant 12 : index
    %c7_231 = arith.constant 7 : index
    %c0_232 = arith.constant 0 : index
    %262 = vector.load %arg15[%c12_230, %c7_231, %c0_232] : memref<18x32x96xf32, #tpu.memory_space<vmem>>, vector<4x16x96xf32>
    %c0_233 = arith.constant 0 : index
    %c0_234 = arith.constant 0 : index
    %c0_235 = arith.constant 0 : index
    %263 = vector.load %arg5[%c0_233, %c0_234, %c0_235] : memref<3x3x96xf32, #tpu.memory_space<vmem>>, vector<1x1x96xf32>
    %264 = vector.broadcast %263 : vector<1x1x96xf32> to vector<4x16x96xf32>
    %265 = arith.mulf %262, %264 : vector<4x16x96xf32>
    %266 = arith.addf %261, %265 : vector<4x16x96xf32>
    %c12_236 = arith.constant 12 : index
    %c8_237 = arith.constant 8 : index
    %c0_238 = arith.constant 0 : index
    %267 = vector.load %arg15[%c12_236, %c8_237, %c0_238] : memref<18x32x96xf32, #tpu.memory_space<vmem>>, vector<4x16x96xf32>
    %c0_239 = arith.constant 0 : index
    %c1_240 = arith.constant 1 : index
    %c0_241 = arith.constant 0 : index
    %268 = vector.load %arg5[%c0_239, %c1_240, %c0_241] : memref<3x3x96xf32, #tpu.memory_space<vmem>>, vector<1x1x96xf32>
    %269 = vector.broadcast %268 : vector<1x1x96xf32> to vector<4x16x96xf32>
    %270 = arith.mulf %267, %269 : vector<4x16x96xf32>
    %271 = arith.addf %266, %270 : vector<4x16x96xf32>
    %c12_242 = arith.constant 12 : index
    %c9_243 = arith.constant 9 : index
    %c0_244 = arith.constant 0 : index
    %272 = vector.load %arg15[%c12_242, %c9_243, %c0_244] : memref<18x32x96xf32, #tpu.memory_space<vmem>>, vector<4x16x96xf32>
    %c0_245 = arith.constant 0 : index
    %c2_246 = arith.constant 2 : index
    %c0_247 = arith.constant 0 : index
    %273 = vector.load %arg5[%c0_245, %c2_246, %c0_247] : memref<3x3x96xf32, #tpu.memory_space<vmem>>, vector<1x1x96xf32>
    %274 = vector.broadcast %273 : vector<1x1x96xf32> to vector<4x16x96xf32>
    %275 = arith.mulf %272, %274 : vector<4x16x96xf32>
    %276 = arith.addf %271, %275 : vector<4x16x96xf32>
    %c13_248 = arith.constant 13 : index
    %c7_249 = arith.constant 7 : index
    %c0_250 = arith.constant 0 : index
    %277 = vector.load %arg15[%c13_248, %c7_249, %c0_250] : memref<18x32x96xf32, #tpu.memory_space<vmem>>, vector<4x16x96xf32>
    %c1_251 = arith.constant 1 : index
    %c0_252 = arith.constant 0 : index
    %c0_253 = arith.constant 0 : index
    %278 = vector.load %arg5[%c1_251, %c0_252, %c0_253] : memref<3x3x96xf32, #tpu.memory_space<vmem>>, vector<1x1x96xf32>
    %279 = vector.broadcast %278 : vector<1x1x96xf32> to vector<4x16x96xf32>
    %280 = arith.mulf %277, %279 : vector<4x16x96xf32>
    %281 = arith.addf %276, %280 : vector<4x16x96xf32>
    %c13_254 = arith.constant 13 : index
    %c8_255 = arith.constant 8 : index
    %c0_256 = arith.constant 0 : index
    %282 = vector.load %arg15[%c13_254, %c8_255, %c0_256] : memref<18x32x96xf32, #tpu.memory_space<vmem>>, vector<4x16x96xf32>
    %c1_257 = arith.constant 1 : index
    %c1_258 = arith.constant 1 : index
    %c0_259 = arith.constant 0 : index
    %283 = vector.load %arg5[%c1_257, %c1_258, %c0_259] : memref<3x3x96xf32, #tpu.memory_space<vmem>>, vector<1x1x96xf32>
    %284 = vector.broadcast %283 : vector<1x1x96xf32> to vector<4x16x96xf32>
    %285 = arith.mulf %282, %284 : vector<4x16x96xf32>
    %286 = arith.addf %281, %285 : vector<4x16x96xf32>
    %c13_260 = arith.constant 13 : index
    %c9_261 = arith.constant 9 : index
    %c0_262 = arith.constant 0 : index
    %287 = vector.load %arg15[%c13_260, %c9_261, %c0_262] : memref<18x32x96xf32, #tpu.memory_space<vmem>>, vector<4x16x96xf32>
    %c1_263 = arith.constant 1 : index
    %c2_264 = arith.constant 2 : index
    %c0_265 = arith.constant 0 : index
    %288 = vector.load %arg5[%c1_263, %c2_264, %c0_265] : memref<3x3x96xf32, #tpu.memory_space<vmem>>, vector<1x1x96xf32>
    %289 = vector.broadcast %288 : vector<1x1x96xf32> to vector<4x16x96xf32>
    %290 = arith.mulf %287, %289 : vector<4x16x96xf32>
    %291 = arith.addf %286, %290 : vector<4x16x96xf32>
    %c14 = arith.constant 14 : index
    %c7_266 = arith.constant 7 : index
    %c0_267 = arith.constant 0 : index
    %292 = vector.load %arg15[%c14, %c7_266, %c0_267] : memref<18x32x96xf32, #tpu.memory_space<vmem>>, vector<4x16x96xf32>
    %c2_268 = arith.constant 2 : index
    %c0_269 = arith.constant 0 : index
    %c0_270 = arith.constant 0 : index
    %293 = vector.load %arg5[%c2_268, %c0_269, %c0_270] : memref<3x3x96xf32, #tpu.memory_space<vmem>>, vector<1x1x96xf32>
    %294 = vector.broadcast %293 : vector<1x1x96xf32> to vector<4x16x96xf32>
    %295 = arith.mulf %292, %294 : vector<4x16x96xf32>
    %296 = arith.addf %291, %295 : vector<4x16x96xf32>
    %c14_271 = arith.constant 14 : index
    %c8_272 = arith.constant 8 : index
    %c0_273 = arith.constant 0 : index
    %297 = vector.load %arg15[%c14_271, %c8_272, %c0_273] : memref<18x32x96xf32, #tpu.memory_space<vmem>>, vector<4x16x96xf32>
    %c2_274 = arith.constant 2 : index
    %c1_275 = arith.constant 1 : index
    %c0_276 = arith.constant 0 : index
    %298 = vector.load %arg5[%c2_274, %c1_275, %c0_276] : memref<3x3x96xf32, #tpu.memory_space<vmem>>, vector<1x1x96xf32>
    %299 = vector.broadcast %298 : vector<1x1x96xf32> to vector<4x16x96xf32>
    %300 = arith.mulf %297, %299 : vector<4x16x96xf32>
    %301 = arith.addf %296, %300 : vector<4x16x96xf32>
    %c14_277 = arith.constant 14 : index
    %c9_278 = arith.constant 9 : index
    %c0_279 = arith.constant 0 : index
    %302 = vector.load %arg15[%c14_277, %c9_278, %c0_279] : memref<18x32x96xf32, #tpu.memory_space<vmem>>, vector<4x16x96xf32>
    %c2_280 = arith.constant 2 : index
    %c2_281 = arith.constant 2 : index
    %c0_282 = arith.constant 0 : index
    %303 = vector.load %arg5[%c2_280, %c2_281, %c0_282] : memref<3x3x96xf32, #tpu.memory_space<vmem>>, vector<1x1x96xf32>
    %304 = vector.broadcast %303 : vector<1x1x96xf32> to vector<4x16x96xf32>
    %305 = arith.mulf %302, %304 : vector<4x16x96xf32>
    %306 = arith.addf %301, %305 : vector<4x16x96xf32>
    %307 = vector.shape_cast %306 : vector<4x16x96xf32> to vector<64x96xf32>
    %c192 = arith.constant 192 : index
    %c0_283 = arith.constant 0 : index
    %308 = vector.load %arg17[%c192, %c0_283] : memref<256x96xf32, #tpu.memory_space<vmem>>, vector<64x96xf32>
    tpu.vector_store %arg17[%c192, %c0_283], %307 {strides = array<i32>} : memref<256x96xf32, #tpu.memory_space<vmem>>, vector<64x96xf32>,
    %c0_284 = arith.constant 0 : index
    %c0_285 = arith.constant 0 : index
    %309 = vector.load %arg17[%c0_284, %c0_285] : memref<256x96xf32, #tpu.memory_space<vmem>>, vector<256x32xf32>
    %c0_286 = arith.constant 0 : index
    %c32 = arith.constant 32 : index
    %310 = vector.load %arg17[%c0_286, %c32] : memref<256x96xf32, #tpu.memory_space<vmem>>, vector<256x32xf32>
    %311 = arith.mulf %309, %309 : vector<256x32xf32>
    %cst_287 = arith.constant dense<0.000000e+00> : vector<32xf32>
    %312 = vector.multi_reduction <add>, %311, %cst_287 [0] : vector<256x32xf32> to vector<32xf32>
    %313 = vector.shape_cast %312 : vector<32xf32> to vector<1x32xf32>
    %cst_288 = arith.constant 1.000000e-24 : f32
    %314 = vector.broadcast %cst_288 : f32 to vector<1x32xf32>
    %315 = arith.maximumf %313, %314 : vector<1x32xf32>
    %316 = math.rsqrt %315 : vector<1x32xf32>
    %317 = arith.mulf %310, %310 : vector<256x32xf32>
    %cst_289 = arith.constant dense<0.000000e+00> : vector<32xf32>
    %318 = vector.multi_reduction <add>, %317, %cst_289 [0] : vector<256x32xf32> to vector<32xf32>
    %319 = vector.shape_cast %318 : vector<32xf32> to vector<1x32xf32>
    %cst_290 = arith.constant 1.000000e-24 : f32
    %320 = vector.broadcast %cst_290 : f32 to vector<1x32xf32>
    %321 = arith.maximumf %319, %320 : vector<1x32xf32>
    %322 = math.rsqrt %321 : vector<1x32xf32>
    %323 = arith.mulf %316, %7 : vector<1x32xf32>
    %324 = vector.broadcast %323 : vector<1x32xf32> to vector<256x32xf32>
    %325 = arith.mulf %309, %324 : vector<256x32xf32>
    %326 = arith.truncf %325 : vector<256x32xf32> to vector<256x32xbf16>
    %327 = vector.broadcast %322 : vector<1x32xf32> to vector<256x32xf32>
    %328 = arith.mulf %310, %327 : vector<256x32xf32>
    %329 = arith.truncf %328 : vector<256x32xf32> to vector<256x32xbf16>
    %cst_291 = arith.constant dense<0.000000e+00> : vector<32x32xf32>
    %330 = tpu.matmul %326, %329, %cst_291 {dimension_numbers = #tpu.dot_dimension_numbers<[0], [0], [1], [1], [0, 1, 1, 1], [], []>} : vector<256x32xbf16>, vector<256x32xbf16>, vector<32x32xf32> -> vector<32x32xf32>
    %331 = arith.addf %330, %8 : vector<32x32xf32>
    %cst_292 = arith.constant dense<0xFF800000> : vector<32xf32>
    %332 = vector.multi_reduction <maximumf>, %331, %cst_292 [1] : vector<32x32xf32> to vector<32xf32>
    %333 = vector.shape_cast %332 : vector<32xf32> to vector<32x1xf32>
    %334 = vector.broadcast %333 : vector<32x1xf32> to vector<32x32xf32>
    %335 = arith.subf %331, %334 : vector<32x32xf32>
    %336 = math.exp %335 : vector<32x32xf32>
    %cst_293 = arith.constant dense<0.000000e+00> : vector<32xf32>
    %337 = vector.multi_reduction <add>, %336, %cst_293 [1] : vector<32x32xf32> to vector<32xf32>
    %338 = vector.shape_cast %337 : vector<32xf32> to vector<32x1xf32>
    %339 = tpu.reciprocal %338 {approx = true} : vector<32x1xf32> -> vector<32x1xf32>
    %340 = vector.broadcast %339 : vector<32x1xf32> to vector<32x32xf32>
    %341 = arith.mulf %336, %340 : vector<32x32xf32>
    %342 = arith.truncf %341 : vector<32x32xf32> to vector<32x32xbf16>
    %c0_294 = arith.constant 0 : index
    %c64_295 = arith.constant 64 : index
    %343 = vector.load %arg17[%c0_294, %c64_295] : memref<256x96xf32, #tpu.memory_space<vmem>>, vector<256x32xf32>
    %344 = arith.truncf %343 : vector<256x32xf32> to vector<256x32xbf16>
    %cst_296 = arith.constant dense<0.000000e+00> : vector<256x32xf32>
    %345 = tpu.matmul %344, %342, %cst_296 {dimension_numbers = #tpu.dot_dimension_numbers<[1], [1], [0], [0], [0, 0, 1, 0], [], []>} : vector<256x32xbf16>, vector<32x32xbf16>, vector<256x32xf32> -> vector<256x32xf32>
    %346 = arith.truncf %345 : vector<256x32xf32> to vector<256x32xbf16>
    %c0_297 = arith.constant 0 : index
    %c0_298 = arith.constant 0 : index
    %347 = vector.load %arg8[%c0_297, %c0_298] : memref<32x32xbf16, #tpu.memory_space<vmem>>, vector<32x32xbf16>
    %cst_299 = arith.constant dense<0.000000e+00> : vector<256x32xf32>
    %348 = tpu.matmul %346, %347, %cst_299 {dimension_numbers = #tpu.dot_dimension_numbers<[1], [0], [0], [1], [0, 0, 1, 1], [], []>} : vector<256x32xbf16>, vector<32x32xbf16>, vector<256x32xf32> -> vector<256x32xf32>
    %c0_300 = arith.constant 0 : index
    %c0_301 = arith.constant 0 : index
    %c0_302 = arith.constant 0 : index
    %c0_303 = arith.constant 0 : index
    %349 = vector.load %arg1[%c0_300, %c0_301, %c0_302, %c0_303] : memref<1x16x16x32xf32, #tpu.memory_space<vmem>>, vector<1x16x16x32xf32>
    %350 = vector.shape_cast %349 : vector<1x16x16x32xf32> to vector<256x32xf32>
    %351 = arith.addf %350, %348 : vector<256x32xf32>
    %c0_304 = arith.constant 0 : index
    %c0_305 = arith.constant 0 : index
    %352 = vector.load %arg18[%c0_304, %c0_305] : memref<256x32xf32, #tpu.memory_space<vmem>>, vector<256x32xf32>
    tpu.vector_store %arg18[%c0_304, %c0_305], %351 {strides = array<i32>} : memref<256x32xf32, #tpu.memory_space<vmem>>, vector<256x32xf32>,
    %c0_306 = arith.constant 0 : index
    %c0_307 = arith.constant 0 : index
    %353 = vector.load %arg18[%c0_306, %c0_307] : memref<256x32xf32, #tpu.memory_space<vmem>>, vector<64x32xf32>
    %cst_308 = arith.constant dense<0.000000e+00> : vector<64xf32>
    %354 = vector.multi_reduction <add>, %353, %cst_308 [1] : vector<64x32xf32> to vector<64xf32>
    %355 = vector.shape_cast %354 : vector<64xf32> to vector<64x1xf32>
    %cst_309 = arith.constant 3.200000e+01 : f32
    %356 = vector.broadcast %cst_309 : f32 to vector<64x1xf32>
    %357 = arith.divf %355, %356 : vector<64x1xf32>
    %358 = vector.broadcast %357 : vector<64x1xf32> to vector<64x32xf32>
    %359 = arith.subf %353, %358 : vector<64x32xf32>
    %360 = arith.mulf %359, %359 : vector<64x32xf32>
    %cst_310 = arith.constant dense<0.000000e+00> : vector<64xf32>
    %361 = vector.multi_reduction <add>, %360, %cst_310 [1] : vector<64x32xf32> to vector<64xf32>
    %362 = vector.shape_cast %361 : vector<64xf32> to vector<64x1xf32>
    %cst_311 = arith.constant 3.200000e+01 : f32
    %363 = vector.broadcast %cst_311 : f32 to vector<64x1xf32>
    %364 = arith.divf %362, %363 : vector<64x1xf32>
    %cst_312 = arith.constant 9.99999974E-6 : f32
    %365 = vector.broadcast %cst_312 : f32 to vector<64x1xf32>
    %366 = arith.addf %364, %365 : vector<64x1xf32>
    %367 = math.rsqrt %366 : vector<64x1xf32>
    %368 = vector.broadcast %367 : vector<64x1xf32> to vector<64x32xf32>
    %369 = arith.mulf %359, %368 : vector<64x32xf32>
    %370 = vector.broadcast %5 : vector<1x32xf32> to vector<64x32xf32>
    %371 = arith.mulf %369, %370 : vector<64x32xf32>
    %372 = vector.broadcast %6 : vector<1x32xf32> to vector<64x32xf32>
    %373 = arith.addf %371, %372 : vector<64x32xf32>
    %374 = arith.truncf %373 : vector<64x32xf32> to vector<64x32xbf16>
    %c0_313 = arith.constant 0 : index
    %c0_314 = arith.constant 0 : index
    %375 = vector.load %arg11[%c0_313, %c0_314] : memref<32x128xbf16, #tpu.memory_space<vmem>>, vector<32x128xbf16>
    %cst_315 = arith.constant dense<0.000000e+00> : vector<64x128xf32>
    %376 = tpu.matmul %374, %375, %cst_315 {dimension_numbers = #tpu.dot_dimension_numbers<[1], [0], [0], [1], [0, 0, 1, 1], [], []>} : vector<64x32xbf16>, vector<32x128xbf16>, vector<64x128xf32> -> vector<64x128xf32>
    %377 = vector.shape_cast %376 : vector<64x128xf32> to vector<4x16x128xf32>
    %c1_316 = arith.constant 1 : index
    %c8_317 = arith.constant 8 : index
    %c0_318 = arith.constant 0 : index
    %378 = vector.load %arg16[%c1_316, %c8_317, %c0_318] : memref<18x32x128xf32, #tpu.memory_space<vmem>>, vector<4x16x128xf32>
    tpu.vector_store %arg16[%c1_316, %c8_317, %c0_318], %377 {strides = array<i32>} : memref<18x32x128xf32, #tpu.memory_space<vmem>>, vector<4x16x128xf32>,
    %c64_319 = arith.constant 64 : index
    %c0_320 = arith.constant 0 : index
    %379 = vector.load %arg18[%c64_319, %c0_320] : memref<256x32xf32, #tpu.memory_space<vmem>>, vector<64x32xf32>
    %cst_321 = arith.constant dense<0.000000e+00> : vector<64xf32>
    %380 = vector.multi_reduction <add>, %379, %cst_321 [1] : vector<64x32xf32> to vector<64xf32>
    %381 = vector.shape_cast %380 : vector<64xf32> to vector<64x1xf32>
    %cst_322 = arith.constant 3.200000e+01 : f32
    %382 = vector.broadcast %cst_322 : f32 to vector<64x1xf32>
    %383 = arith.divf %381, %382 : vector<64x1xf32>
    %384 = vector.broadcast %383 : vector<64x1xf32> to vector<64x32xf32>
    %385 = arith.subf %379, %384 : vector<64x32xf32>
    %386 = arith.mulf %385, %385 : vector<64x32xf32>
    %cst_323 = arith.constant dense<0.000000e+00> : vector<64xf32>
    %387 = vector.multi_reduction <add>, %386, %cst_323 [1] : vector<64x32xf32> to vector<64xf32>
    %388 = vector.shape_cast %387 : vector<64xf32> to vector<64x1xf32>
    %cst_324 = arith.constant 3.200000e+01 : f32
    %389 = vector.broadcast %cst_324 : f32 to vector<64x1xf32>
    %390 = arith.divf %388, %389 : vector<64x1xf32>
    %cst_325 = arith.constant 9.99999974E-6 : f32
    %391 = vector.broadcast %cst_325 : f32 to vector<64x1xf32>
    %392 = arith.addf %390, %391 : vector<64x1xf32>
    %393 = math.rsqrt %392 : vector<64x1xf32>
    %394 = vector.broadcast %393 : vector<64x1xf32> to vector<64x32xf32>
    %395 = arith.mulf %385, %394 : vector<64x32xf32>
    %396 = vector.broadcast %5 : vector<1x32xf32> to vector<64x32xf32>
    %397 = arith.mulf %395, %396 : vector<64x32xf32>
    %398 = vector.broadcast %6 : vector<1x32xf32> to vector<64x32xf32>
    %399 = arith.addf %397, %398 : vector<64x32xf32>
    %400 = arith.truncf %399 : vector<64x32xf32> to vector<64x32xbf16>
    %c0_326 = arith.constant 0 : index
    %c0_327 = arith.constant 0 : index
    %401 = vector.load %arg11[%c0_326, %c0_327] : memref<32x128xbf16, #tpu.memory_space<vmem>>, vector<32x128xbf16>
    %cst_328 = arith.constant dense<0.000000e+00> : vector<64x128xf32>
    %402 = tpu.matmul %400, %401, %cst_328 {dimension_numbers = #tpu.dot_dimension_numbers<[1], [0], [0], [1], [0, 0, 1, 1], [], []>} : vector<64x32xbf16>, vector<32x128xbf16>, vector<64x128xf32> -> vector<64x128xf32>
    %403 = vector.shape_cast %402 : vector<64x128xf32> to vector<4x16x128xf32>
    %c5_329 = arith.constant 5 : index
    %c8_330 = arith.constant 8 : index
    %c0_331 = arith.constant 0 : index
    %404 = vector.load %arg16[%c5_329, %c8_330, %c0_331] : memref<18x32x128xf32, #tpu.memory_space<vmem>>, vector<4x16x128xf32>
    tpu.vector_store %arg16[%c5_329, %c8_330, %c0_331], %403 {strides = array<i32>} : memref<18x32x128xf32, #tpu.memory_space<vmem>>, vector<4x16x128xf32>,
    %c128_332 = arith.constant 128 : index
    %c0_333 = arith.constant 0 : index
    %405 = vector.load %arg18[%c128_332, %c0_333] : memref<256x32xf32, #tpu.memory_space<vmem>>, vector<64x32xf32>
    %cst_334 = arith.constant dense<0.000000e+00> : vector<64xf32>
    %406 = vector.multi_reduction <add>, %405, %cst_334 [1] : vector<64x32xf32> to vector<64xf32>
    %407 = vector.shape_cast %406 : vector<64xf32> to vector<64x1xf32>
    %cst_335 = arith.constant 3.200000e+01 : f32
    %408 = vector.broadcast %cst_335 : f32 to vector<64x1xf32>
    %409 = arith.divf %407, %408 : vector<64x1xf32>
    %410 = vector.broadcast %409 : vector<64x1xf32> to vector<64x32xf32>
    %411 = arith.subf %405, %410 : vector<64x32xf32>
    %412 = arith.mulf %411, %411 : vector<64x32xf32>
    %cst_336 = arith.constant dense<0.000000e+00> : vector<64xf32>
    %413 = vector.multi_reduction <add>, %412, %cst_336 [1] : vector<64x32xf32> to vector<64xf32>
    %414 = vector.shape_cast %413 : vector<64xf32> to vector<64x1xf32>
    %cst_337 = arith.constant 3.200000e+01 : f32
    %415 = vector.broadcast %cst_337 : f32 to vector<64x1xf32>
    %416 = arith.divf %414, %415 : vector<64x1xf32>
    %cst_338 = arith.constant 9.99999974E-6 : f32
    %417 = vector.broadcast %cst_338 : f32 to vector<64x1xf32>
    %418 = arith.addf %416, %417 : vector<64x1xf32>
    %419 = math.rsqrt %418 : vector<64x1xf32>
    %420 = vector.broadcast %419 : vector<64x1xf32> to vector<64x32xf32>
    %421 = arith.mulf %411, %420 : vector<64x32xf32>
    %422 = vector.broadcast %5 : vector<1x32xf32> to vector<64x32xf32>
    %423 = arith.mulf %421, %422 : vector<64x32xf32>
    %424 = vector.broadcast %6 : vector<1x32xf32> to vector<64x32xf32>
    %425 = arith.addf %423, %424 : vector<64x32xf32>
    %426 = arith.truncf %425 : vector<64x32xf32> to vector<64x32xbf16>
    %c0_339 = arith.constant 0 : index
    %c0_340 = arith.constant 0 : index
    %427 = vector.load %arg11[%c0_339, %c0_340] : memref<32x128xbf16, #tpu.memory_space<vmem>>, vector<32x128xbf16>
    %cst_341 = arith.constant dense<0.000000e+00> : vector<64x128xf32>
    %428 = tpu.matmul %426, %427, %cst_341 {dimension_numbers = #tpu.dot_dimension_numbers<[1], [0], [0], [1], [0, 0, 1, 1], [], []>} : vector<64x32xbf16>, vector<32x128xbf16>, vector<64x128xf32> -> vector<64x128xf32>
    %429 = vector.shape_cast %428 : vector<64x128xf32> to vector<4x16x128xf32>
    %c9_342 = arith.constant 9 : index
    %c8_343 = arith.constant 8 : index
    %c0_344 = arith.constant 0 : index
    %430 = vector.load %arg16[%c9_342, %c8_343, %c0_344] : memref<18x32x128xf32, #tpu.memory_space<vmem>>, vector<4x16x128xf32>
    tpu.vector_store %arg16[%c9_342, %c8_343, %c0_344], %429 {strides = array<i32>} : memref<18x32x128xf32, #tpu.memory_space<vmem>>, vector<4x16x128xf32>,
    %c192_345 = arith.constant 192 : index
    %c0_346 = arith.constant 0 : index
    %431 = vector.load %arg18[%c192_345, %c0_346] : memref<256x32xf32, #tpu.memory_space<vmem>>, vector<64x32xf32>
    %cst_347 = arith.constant dense<0.000000e+00> : vector<64xf32>
    %432 = vector.multi_reduction <add>, %431, %cst_347 [1] : vector<64x32xf32> to vector<64xf32>
    %433 = vector.shape_cast %432 : vector<64xf32> to vector<64x1xf32>
    %cst_348 = arith.constant 3.200000e+01 : f32
    %434 = vector.broadcast %cst_348 : f32 to vector<64x1xf32>
    %435 = arith.divf %433, %434 : vector<64x1xf32>
    %436 = vector.broadcast %435 : vector<64x1xf32> to vector<64x32xf32>
    %437 = arith.subf %431, %436 : vector<64x32xf32>
    %438 = arith.mulf %437, %437 : vector<64x32xf32>
    %cst_349 = arith.constant dense<0.000000e+00> : vector<64xf32>
    %439 = vector.multi_reduction <add>, %438, %cst_349 [1] : vector<64x32xf32> to vector<64xf32>
    %440 = vector.shape_cast %439 : vector<64xf32> to vector<64x1xf32>
    %cst_350 = arith.constant 3.200000e+01 : f32
    %441 = vector.broadcast %cst_350 : f32 to vector<64x1xf32>
    %442 = arith.divf %440, %441 : vector<64x1xf32>
    %cst_351 = arith.constant 9.99999974E-6 : f32
    %443 = vector.broadcast %cst_351 : f32 to vector<64x1xf32>
    %444 = arith.addf %442, %443 : vector<64x1xf32>
    %445 = math.rsqrt %444 : vector<64x1xf32>
    %446 = vector.broadcast %445 : vector<64x1xf32> to vector<64x32xf32>
    %447 = arith.mulf %437, %446 : vector<64x32xf32>
    %448 = vector.broadcast %5 : vector<1x32xf32> to vector<64x32xf32>
    %449 = arith.mulf %447, %448 : vector<64x32xf32>
    %450 = vector.broadcast %6 : vector<1x32xf32> to vector<64x32xf32>
    %451 = arith.addf %449, %450 : vector<64x32xf32>
    %452 = arith.truncf %451 : vector<64x32xf32> to vector<64x32xbf16>
    %c0_352 = arith.constant 0 : index
    %c0_353 = arith.constant 0 : index
    %453 = vector.load %arg11[%c0_352, %c0_353] : memref<32x128xbf16, #tpu.memory_space<vmem>>, vector<32x128xbf16>
    %cst_354 = arith.constant dense<0.000000e+00> : vector<64x128xf32>
    %454 = tpu.matmul %452, %453, %cst_354 {dimension_numbers = #tpu.dot_dimension_numbers<[1], [0], [0], [1], [0, 0, 1, 1], [], []>} : vector<64x32xbf16>, vector<32x128xbf16>, vector<64x128xf32> -> vector<64x128xf32>
    %455 = vector.shape_cast %454 : vector<64x128xf32> to vector<4x16x128xf32>
    %c13_355 = arith.constant 13 : index
    %c8_356 = arith.constant 8 : index
    %c0_357 = arith.constant 0 : index
    %456 = vector.load %arg16[%c13_355, %c8_356, %c0_357] : memref<18x32x128xf32, #tpu.memory_space<vmem>>, vector<4x16x128xf32>
    tpu.vector_store %arg16[%c13_355, %c8_356, %c0_357], %455 {strides = array<i32>} : memref<18x32x128xf32, #tpu.memory_space<vmem>>, vector<4x16x128xf32>,
    %cst_358 = arith.constant 0.000000e+00 : f32
    %457 = vector.broadcast %cst_358 : f32 to vector<4x16x128xf32>
    %c0_359 = arith.constant 0 : index
    %c7_360 = arith.constant 7 : index
    %c0_361 = arith.constant 0 : index
    %458 = vector.load %arg16[%c0_359, %c7_360, %c0_361] : memref<18x32x128xf32, #tpu.memory_space<vmem>>, vector<4x16x128xf32>
    %c0_362 = arith.constant 0 : index
    %c0_363 = arith.constant 0 : index
    %c0_364 = arith.constant 0 : index
    %459 = vector.load %arg12[%c0_362, %c0_363, %c0_364] : memref<3x3x128xf32, #tpu.memory_space<vmem>>, vector<1x1x128xf32>
    %460 = vector.broadcast %459 : vector<1x1x128xf32> to vector<4x16x128xf32>
    %461 = arith.mulf %458, %460 : vector<4x16x128xf32>
    %462 = arith.addf %457, %461 : vector<4x16x128xf32>
    %c0_365 = arith.constant 0 : index
    %c8_366 = arith.constant 8 : index
    %c0_367 = arith.constant 0 : index
    %463 = vector.load %arg16[%c0_365, %c8_366, %c0_367] : memref<18x32x128xf32, #tpu.memory_space<vmem>>, vector<4x16x128xf32>
    %c0_368 = arith.constant 0 : index
    %c1_369 = arith.constant 1 : index
    %c0_370 = arith.constant 0 : index
    %464 = vector.load %arg12[%c0_368, %c1_369, %c0_370] : memref<3x3x128xf32, #tpu.memory_space<vmem>>, vector<1x1x128xf32>
    %465 = vector.broadcast %464 : vector<1x1x128xf32> to vector<4x16x128xf32>
    %466 = arith.mulf %463, %465 : vector<4x16x128xf32>
    %467 = arith.addf %462, %466 : vector<4x16x128xf32>
    %c0_371 = arith.constant 0 : index
    %c9_372 = arith.constant 9 : index
    %c0_373 = arith.constant 0 : index
    %468 = vector.load %arg16[%c0_371, %c9_372, %c0_373] : memref<18x32x128xf32, #tpu.memory_space<vmem>>, vector<4x16x128xf32>
    %c0_374 = arith.constant 0 : index
    %c2_375 = arith.constant 2 : index
    %c0_376 = arith.constant 0 : index
    %469 = vector.load %arg12[%c0_374, %c2_375, %c0_376] : memref<3x3x128xf32, #tpu.memory_space<vmem>>, vector<1x1x128xf32>
    %470 = vector.broadcast %469 : vector<1x1x128xf32> to vector<4x16x128xf32>
    %471 = arith.mulf %468, %470 : vector<4x16x128xf32>
    %472 = arith.addf %467, %471 : vector<4x16x128xf32>
    %c1_377 = arith.constant 1 : index
    %c7_378 = arith.constant 7 : index
    %c0_379 = arith.constant 0 : index
    %473 = vector.load %arg16[%c1_377, %c7_378, %c0_379] : memref<18x32x128xf32, #tpu.memory_space<vmem>>, vector<4x16x128xf32>
    %c1_380 = arith.constant 1 : index
    %c0_381 = arith.constant 0 : index
    %c0_382 = arith.constant 0 : index
    %474 = vector.load %arg12[%c1_380, %c0_381, %c0_382] : memref<3x3x128xf32, #tpu.memory_space<vmem>>, vector<1x1x128xf32>
    %475 = vector.broadcast %474 : vector<1x1x128xf32> to vector<4x16x128xf32>
    %476 = arith.mulf %473, %475 : vector<4x16x128xf32>
    %477 = arith.addf %472, %476 : vector<4x16x128xf32>
    %c1_383 = arith.constant 1 : index
    %c8_384 = arith.constant 8 : index
    %c0_385 = arith.constant 0 : index
    %478 = vector.load %arg16[%c1_383, %c8_384, %c0_385] : memref<18x32x128xf32, #tpu.memory_space<vmem>>, vector<4x16x128xf32>
    %c1_386 = arith.constant 1 : index
    %c1_387 = arith.constant 1 : index
    %c0_388 = arith.constant 0 : index
    %479 = vector.load %arg12[%c1_386, %c1_387, %c0_388] : memref<3x3x128xf32, #tpu.memory_space<vmem>>, vector<1x1x128xf32>
    %480 = vector.broadcast %479 : vector<1x1x128xf32> to vector<4x16x128xf32>
    %481 = arith.mulf %478, %480 : vector<4x16x128xf32>
    %482 = arith.addf %477, %481 : vector<4x16x128xf32>
    %c1_389 = arith.constant 1 : index
    %c9_390 = arith.constant 9 : index
    %c0_391 = arith.constant 0 : index
    %483 = vector.load %arg16[%c1_389, %c9_390, %c0_391] : memref<18x32x128xf32, #tpu.memory_space<vmem>>, vector<4x16x128xf32>
    %c1_392 = arith.constant 1 : index
    %c2_393 = arith.constant 2 : index
    %c0_394 = arith.constant 0 : index
    %484 = vector.load %arg12[%c1_392, %c2_393, %c0_394] : memref<3x3x128xf32, #tpu.memory_space<vmem>>, vector<1x1x128xf32>
    %485 = vector.broadcast %484 : vector<1x1x128xf32> to vector<4x16x128xf32>
    %486 = arith.mulf %483, %485 : vector<4x16x128xf32>
    %487 = arith.addf %482, %486 : vector<4x16x128xf32>
    %c2_395 = arith.constant 2 : index
    %c7_396 = arith.constant 7 : index
    %c0_397 = arith.constant 0 : index
    %488 = vector.load %arg16[%c2_395, %c7_396, %c0_397] : memref<18x32x128xf32, #tpu.memory_space<vmem>>, vector<4x16x128xf32>
    %c2_398 = arith.constant 2 : index
    %c0_399 = arith.constant 0 : index
    %c0_400 = arith.constant 0 : index
    %489 = vector.load %arg12[%c2_398, %c0_399, %c0_400] : memref<3x3x128xf32, #tpu.memory_space<vmem>>, vector<1x1x128xf32>
    %490 = vector.broadcast %489 : vector<1x1x128xf32> to vector<4x16x128xf32>
    %491 = arith.mulf %488, %490 : vector<4x16x128xf32>
    %492 = arith.addf %487, %491 : vector<4x16x128xf32>
    %c2_401 = arith.constant 2 : index
    %c8_402 = arith.constant 8 : index
    %c0_403 = arith.constant 0 : index
    %493 = vector.load %arg16[%c2_401, %c8_402, %c0_403] : memref<18x32x128xf32, #tpu.memory_space<vmem>>, vector<4x16x128xf32>
    %c2_404 = arith.constant 2 : index
    %c1_405 = arith.constant 1 : index
    %c0_406 = arith.constant 0 : index
    %494 = vector.load %arg12[%c2_404, %c1_405, %c0_406] : memref<3x3x128xf32, #tpu.memory_space<vmem>>, vector<1x1x128xf32>
    %495 = vector.broadcast %494 : vector<1x1x128xf32> to vector<4x16x128xf32>
    %496 = arith.mulf %493, %495 : vector<4x16x128xf32>
    %497 = arith.addf %492, %496 : vector<4x16x128xf32>
    %c2_407 = arith.constant 2 : index
    %c9_408 = arith.constant 9 : index
    %c0_409 = arith.constant 0 : index
    %498 = vector.load %arg16[%c2_407, %c9_408, %c0_409] : memref<18x32x128xf32, #tpu.memory_space<vmem>>, vector<4x16x128xf32>
    %c2_410 = arith.constant 2 : index
    %c2_411 = arith.constant 2 : index
    %c0_412 = arith.constant 0 : index
    %499 = vector.load %arg12[%c2_410, %c2_411, %c0_412] : memref<3x3x128xf32, #tpu.memory_space<vmem>>, vector<1x1x128xf32>
    %500 = vector.broadcast %499 : vector<1x1x128xf32> to vector<4x16x128xf32>
    %501 = arith.mulf %498, %500 : vector<4x16x128xf32>
    %502 = arith.addf %497, %501 : vector<4x16x128xf32>
    %503 = vector.shape_cast %502 : vector<4x16x128xf32> to vector<64x128xf32>
    %504 = vector.extract_strided_slice %503 {offsets = [0, 0], sizes = [64, 64], strides = [1, 1]} : vector<64x128xf32> to vector<64x64xf32>
    %cst_413 = arith.constant 5.000000e-01 : f32
    %505 = vector.broadcast %cst_413 : f32 to vector<64x64xf32>
    %506 = arith.mulf %505, %504 : vector<64x64xf32>
    %cst_414 = arith.constant 0.707106769 : f32
    %507 = vector.broadcast %cst_414 : f32 to vector<64x64xf32>
    %508 = arith.mulf %504, %507 : vector<64x64xf32>
    %509 = math.absf %508 : vector<64x64xf32>
    %cst_415 = arith.constant 0.327591091 : f32
    %510 = vector.broadcast %cst_415 : f32 to vector<64x64xf32>
    %511 = arith.mulf %510, %509 : vector<64x64xf32>
    %cst_416 = arith.constant 1.000000e+00 : f32
    %512 = vector.broadcast %cst_416 : f32 to vector<64x64xf32>
    %513 = arith.addf %512, %511 : vector<64x64xf32>
    %514 = tpu.reciprocal %513 {approx = true} : vector<64x64xf32> -> vector<64x64xf32>
    %cst_417 = arith.constant 1.06140542 : f32
    %515 = vector.broadcast %cst_417 : f32 to vector<64x64xf32>
    %516 = arith.mulf %515, %514 : vector<64x64xf32>
    %cst_418 = arith.constant -1.45315206 : f32
    %517 = vector.broadcast %cst_418 : f32 to vector<64x64xf32>
    %518 = arith.addf %516, %517 : vector<64x64xf32>
    %519 = arith.mulf %518, %514 : vector<64x64xf32>
    %cst_419 = arith.constant 1.42141378 : f32
    %520 = vector.broadcast %cst_419 : f32 to vector<64x64xf32>
    %521 = arith.addf %519, %520 : vector<64x64xf32>
    %522 = arith.mulf %521, %514 : vector<64x64xf32>
    %cst_420 = arith.constant -0.284496725 : f32
    %523 = vector.broadcast %cst_420 : f32 to vector<64x64xf32>
    %524 = arith.addf %522, %523 : vector<64x64xf32>
    %525 = arith.mulf %524, %514 : vector<64x64xf32>
    %cst_421 = arith.constant 0.254829586 : f32
    %526 = vector.broadcast %cst_421 : f32 to vector<64x64xf32>
    %527 = arith.addf %525, %526 : vector<64x64xf32>
    %528 = arith.mulf %527, %514 : vector<64x64xf32>
    %cst_422 = arith.constant 0.000000e+00 : f32
    %529 = vector.broadcast %cst_422 : f32 to vector<64x64xf32>
    %530 = arith.subf %529, %509 : vector<64x64xf32>
    %531 = arith.mulf %530, %509 : vector<64x64xf32>
    %532 = math.exp %531 : vector<64x64xf32>
    %533 = arith.mulf %528, %532 : vector<64x64xf32>
    %cst_423 = arith.constant 1.000000e+00 : f32
    %534 = vector.broadcast %cst_423 : f32 to vector<64x64xf32>
    %535 = arith.subf %534, %533 : vector<64x64xf32>
    %cst_424 = arith.constant 0.000000e+00 : f32
    %536 = vector.broadcast %cst_424 : f32 to vector<64x64xf32>
    %537 = arith.cmpf olt, %508, %536 : vector<64x64xf32>
    %cst_425 = arith.constant 0.000000e+00 : f32
    %538 = vector.broadcast %cst_425 : f32 to vector<64x64xf32>
    %539 = arith.subf %538, %535 : vector<64x64xf32>
    %540 = arith.select %537, %539, %535 : vector<64x64xi1>, vector<64x64xf32>
    %cst_426 = arith.constant 1.000000e+00 : f32
    %541 = vector.broadcast %cst_426 : f32 to vector<64x64xf32>
    %542 = arith.addf %541, %540 : vector<64x64xf32>
    %543 = arith.mulf %506, %542 : vector<64x64xf32>
    %544 = vector.extract_strided_slice %503 {offsets = [0, 64], sizes = [64, 64], strides = [1, 1]} : vector<64x128xf32> to vector<64x64xf32>
    %545 = arith.mulf %543, %544 : vector<64x64xf32>
    %546 = arith.truncf %545 : vector<64x64xf32> to vector<64x64xbf16>
    %c0_427 = arith.constant 0 : index
    %c0_428 = arith.constant 0 : index
    %547 = vector.load %arg13[%c0_427, %c0_428] : memref<64x32xbf16, #tpu.memory_space<vmem>>, vector<64x32xbf16>
    %cst_429 = arith.constant dense<0.000000e+00> : vector<64x32xf32>
    %548 = tpu.matmul %546, %547, %cst_429 {dimension_numbers = #tpu.dot_dimension_numbers<[1], [0], [0], [1], [0, 0, 1, 1], [], []>} : vector<64x64xbf16>, vector<64x32xbf16>, vector<64x32xf32> -> vector<64x32xf32>
    %c0_430 = arith.constant 0 : index
    %c0_431 = arith.constant 0 : index
    %549 = vector.load %arg18[%c0_430, %c0_431] : memref<256x32xf32, #tpu.memory_space<vmem>>, vector<64x32xf32>
    %550 = arith.addf %549, %548 : vector<64x32xf32>
    %551 = vector.shape_cast %550 : vector<64x32xf32> to vector<1x4x16x32xf32>
    %c0_432 = arith.constant 0 : index
    %c0_433 = arith.constant 0 : index
    %c0_434 = arith.constant 0 : index
    %c0_435 = arith.constant 0 : index
    %552 = vector.load %arg14[%c0_432, %c0_433, %c0_434, %c0_435] : memref<1x16x16x32xf32, #tpu.memory_space<vmem>>, vector<1x4x16x32xf32>
    tpu.vector_store %arg14[%c0_432, %c0_433, %c0_434, %c0_435], %551 {strides = array<i32>} : memref<1x16x16x32xf32, #tpu.memory_space<vmem>>, vector<1x4x16x32xf32>,
    %cst_436 = arith.constant 0.000000e+00 : f32
    %553 = vector.broadcast %cst_436 : f32 to vector<4x16x128xf32>
    %c4_437 = arith.constant 4 : index
    %c7_438 = arith.constant 7 : index
    %c0_439 = arith.constant 0 : index
    %554 = vector.load %arg16[%c4_437, %c7_438, %c0_439] : memref<18x32x128xf32, #tpu.memory_space<vmem>>, vector<4x16x128xf32>
    %c0_440 = arith.constant 0 : index
    %c0_441 = arith.constant 0 : index
    %c0_442 = arith.constant 0 : index
    %555 = vector.load %arg12[%c0_440, %c0_441, %c0_442] : memref<3x3x128xf32, #tpu.memory_space<vmem>>, vector<1x1x128xf32>
    %556 = vector.broadcast %555 : vector<1x1x128xf32> to vector<4x16x128xf32>
    %557 = arith.mulf %554, %556 : vector<4x16x128xf32>
    %558 = arith.addf %553, %557 : vector<4x16x128xf32>
    %c4_443 = arith.constant 4 : index
    %c8_444 = arith.constant 8 : index
    %c0_445 = arith.constant 0 : index
    %559 = vector.load %arg16[%c4_443, %c8_444, %c0_445] : memref<18x32x128xf32, #tpu.memory_space<vmem>>, vector<4x16x128xf32>
    %c0_446 = arith.constant 0 : index
    %c1_447 = arith.constant 1 : index
    %c0_448 = arith.constant 0 : index
    %560 = vector.load %arg12[%c0_446, %c1_447, %c0_448] : memref<3x3x128xf32, #tpu.memory_space<vmem>>, vector<1x1x128xf32>
    %561 = vector.broadcast %560 : vector<1x1x128xf32> to vector<4x16x128xf32>
    %562 = arith.mulf %559, %561 : vector<4x16x128xf32>
    %563 = arith.addf %558, %562 : vector<4x16x128xf32>
    %c4_449 = arith.constant 4 : index
    %c9_450 = arith.constant 9 : index
    %c0_451 = arith.constant 0 : index
    %564 = vector.load %arg16[%c4_449, %c9_450, %c0_451] : memref<18x32x128xf32, #tpu.memory_space<vmem>>, vector<4x16x128xf32>
    %c0_452 = arith.constant 0 : index
    %c2_453 = arith.constant 2 : index
    %c0_454 = arith.constant 0 : index
    %565 = vector.load %arg12[%c0_452, %c2_453, %c0_454] : memref<3x3x128xf32, #tpu.memory_space<vmem>>, vector<1x1x128xf32>
    %566 = vector.broadcast %565 : vector<1x1x128xf32> to vector<4x16x128xf32>
    %567 = arith.mulf %564, %566 : vector<4x16x128xf32>
    %568 = arith.addf %563, %567 : vector<4x16x128xf32>
    %c5_455 = arith.constant 5 : index
    %c7_456 = arith.constant 7 : index
    %c0_457 = arith.constant 0 : index
    %569 = vector.load %arg16[%c5_455, %c7_456, %c0_457] : memref<18x32x128xf32, #tpu.memory_space<vmem>>, vector<4x16x128xf32>
    %c1_458 = arith.constant 1 : index
    %c0_459 = arith.constant 0 : index
    %c0_460 = arith.constant 0 : index
    %570 = vector.load %arg12[%c1_458, %c0_459, %c0_460] : memref<3x3x128xf32, #tpu.memory_space<vmem>>, vector<1x1x128xf32>
    %571 = vector.broadcast %570 : vector<1x1x128xf32> to vector<4x16x128xf32>
    %572 = arith.mulf %569, %571 : vector<4x16x128xf32>
    %573 = arith.addf %568, %572 : vector<4x16x128xf32>
    %c5_461 = arith.constant 5 : index
    %c8_462 = arith.constant 8 : index
    %c0_463 = arith.constant 0 : index
    %574 = vector.load %arg16[%c5_461, %c8_462, %c0_463] : memref<18x32x128xf32, #tpu.memory_space<vmem>>, vector<4x16x128xf32>
    %c1_464 = arith.constant 1 : index
    %c1_465 = arith.constant 1 : index
    %c0_466 = arith.constant 0 : index
    %575 = vector.load %arg12[%c1_464, %c1_465, %c0_466] : memref<3x3x128xf32, #tpu.memory_space<vmem>>, vector<1x1x128xf32>
    %576 = vector.broadcast %575 : vector<1x1x128xf32> to vector<4x16x128xf32>
    %577 = arith.mulf %574, %576 : vector<4x16x128xf32>
    %578 = arith.addf %573, %577 : vector<4x16x128xf32>
    %c5_467 = arith.constant 5 : index
    %c9_468 = arith.constant 9 : index
    %c0_469 = arith.constant 0 : index
    %579 = vector.load %arg16[%c5_467, %c9_468, %c0_469] : memref<18x32x128xf32, #tpu.memory_space<vmem>>, vector<4x16x128xf32>
    %c1_470 = arith.constant 1 : index
    %c2_471 = arith.constant 2 : index
    %c0_472 = arith.constant 0 : index
    %580 = vector.load %arg12[%c1_470, %c2_471, %c0_472] : memref<3x3x128xf32, #tpu.memory_space<vmem>>, vector<1x1x128xf32>
    %581 = vector.broadcast %580 : vector<1x1x128xf32> to vector<4x16x128xf32>
    %582 = arith.mulf %579, %581 : vector<4x16x128xf32>
    %583 = arith.addf %578, %582 : vector<4x16x128xf32>
    %c6_473 = arith.constant 6 : index
    %c7_474 = arith.constant 7 : index
    %c0_475 = arith.constant 0 : index
    %584 = vector.load %arg16[%c6_473, %c7_474, %c0_475] : memref<18x32x128xf32, #tpu.memory_space<vmem>>, vector<4x16x128xf32>
    %c2_476 = arith.constant 2 : index
    %c0_477 = arith.constant 0 : index
    %c0_478 = arith.constant 0 : index
    %585 = vector.load %arg12[%c2_476, %c0_477, %c0_478] : memref<3x3x128xf32, #tpu.memory_space<vmem>>, vector<1x1x128xf32>
    %586 = vector.broadcast %585 : vector<1x1x128xf32> to vector<4x16x128xf32>
    %587 = arith.mulf %584, %586 : vector<4x16x128xf32>
    %588 = arith.addf %583, %587 : vector<4x16x128xf32>
    %c6_479 = arith.constant 6 : index
    %c8_480 = arith.constant 8 : index
    %c0_481 = arith.constant 0 : index
    %589 = vector.load %arg16[%c6_479, %c8_480, %c0_481] : memref<18x32x128xf32, #tpu.memory_space<vmem>>, vector<4x16x128xf32>
    %c2_482 = arith.constant 2 : index
    %c1_483 = arith.constant 1 : index
    %c0_484 = arith.constant 0 : index
    %590 = vector.load %arg12[%c2_482, %c1_483, %c0_484] : memref<3x3x128xf32, #tpu.memory_space<vmem>>, vector<1x1x128xf32>
    %591 = vector.broadcast %590 : vector<1x1x128xf32> to vector<4x16x128xf32>
    %592 = arith.mulf %589, %591 : vector<4x16x128xf32>
    %593 = arith.addf %588, %592 : vector<4x16x128xf32>
    %c6_485 = arith.constant 6 : index
    %c9_486 = arith.constant 9 : index
    %c0_487 = arith.constant 0 : index
    %594 = vector.load %arg16[%c6_485, %c9_486, %c0_487] : memref<18x32x128xf32, #tpu.memory_space<vmem>>, vector<4x16x128xf32>
    %c2_488 = arith.constant 2 : index
    %c2_489 = arith.constant 2 : index
    %c0_490 = arith.constant 0 : index
    %595 = vector.load %arg12[%c2_488, %c2_489, %c0_490] : memref<3x3x128xf32, #tpu.memory_space<vmem>>, vector<1x1x128xf32>
    %596 = vector.broadcast %595 : vector<1x1x128xf32> to vector<4x16x128xf32>
    %597 = arith.mulf %594, %596 : vector<4x16x128xf32>
    %598 = arith.addf %593, %597 : vector<4x16x128xf32>
    %599 = vector.shape_cast %598 : vector<4x16x128xf32> to vector<64x128xf32>
    %600 = vector.extract_strided_slice %599 {offsets = [0, 0], sizes = [64, 64], strides = [1, 1]} : vector<64x128xf32> to vector<64x64xf32>
    %cst_491 = arith.constant 5.000000e-01 : f32
    %601 = vector.broadcast %cst_491 : f32 to vector<64x64xf32>
    %602 = arith.mulf %601, %600 : vector<64x64xf32>
    %cst_492 = arith.constant 0.707106769 : f32
    %603 = vector.broadcast %cst_492 : f32 to vector<64x64xf32>
    %604 = arith.mulf %600, %603 : vector<64x64xf32>
    %605 = math.absf %604 : vector<64x64xf32>
    %cst_493 = arith.constant 0.327591091 : f32
    %606 = vector.broadcast %cst_493 : f32 to vector<64x64xf32>
    %607 = arith.mulf %606, %605 : vector<64x64xf32>
    %cst_494 = arith.constant 1.000000e+00 : f32
    %608 = vector.broadcast %cst_494 : f32 to vector<64x64xf32>
    %609 = arith.addf %608, %607 : vector<64x64xf32>
    %610 = tpu.reciprocal %609 {approx = true} : vector<64x64xf32> -> vector<64x64xf32>
    %cst_495 = arith.constant 1.06140542 : f32
    %611 = vector.broadcast %cst_495 : f32 to vector<64x64xf32>
    %612 = arith.mulf %611, %610 : vector<64x64xf32>
    %cst_496 = arith.constant -1.45315206 : f32
    %613 = vector.broadcast %cst_496 : f32 to vector<64x64xf32>
    %614 = arith.addf %612, %613 : vector<64x64xf32>
    %615 = arith.mulf %614, %610 : vector<64x64xf32>
    %cst_497 = arith.constant 1.42141378 : f32
    %616 = vector.broadcast %cst_497 : f32 to vector<64x64xf32>
    %617 = arith.addf %615, %616 : vector<64x64xf32>
    %618 = arith.mulf %617, %610 : vector<64x64xf32>
    %cst_498 = arith.constant -0.284496725 : f32
    %619 = vector.broadcast %cst_498 : f32 to vector<64x64xf32>
    %620 = arith.addf %618, %619 : vector<64x64xf32>
    %621 = arith.mulf %620, %610 : vector<64x64xf32>
    %cst_499 = arith.constant 0.254829586 : f32
    %622 = vector.broadcast %cst_499 : f32 to vector<64x64xf32>
    %623 = arith.addf %621, %622 : vector<64x64xf32>
    %624 = arith.mulf %623, %610 : vector<64x64xf32>
    %cst_500 = arith.constant 0.000000e+00 : f32
    %625 = vector.broadcast %cst_500 : f32 to vector<64x64xf32>
    %626 = arith.subf %625, %605 : vector<64x64xf32>
    %627 = arith.mulf %626, %605 : vector<64x64xf32>
    %628 = math.exp %627 : vector<64x64xf32>
    %629 = arith.mulf %624, %628 : vector<64x64xf32>
    %cst_501 = arith.constant 1.000000e+00 : f32
    %630 = vector.broadcast %cst_501 : f32 to vector<64x64xf32>
    %631 = arith.subf %630, %629 : vector<64x64xf32>
    %cst_502 = arith.constant 0.000000e+00 : f32
    %632 = vector.broadcast %cst_502 : f32 to vector<64x64xf32>
    %633 = arith.cmpf olt, %604, %632 : vector<64x64xf32>
    %cst_503 = arith.constant 0.000000e+00 : f32
    %634 = vector.broadcast %cst_503 : f32 to vector<64x64xf32>
    %635 = arith.subf %634, %631 : vector<64x64xf32>
    %636 = arith.select %633, %635, %631 : vector<64x64xi1>, vector<64x64xf32>
    %cst_504 = arith.constant 1.000000e+00 : f32
    %637 = vector.broadcast %cst_504 : f32 to vector<64x64xf32>
    %638 = arith.addf %637, %636 : vector<64x64xf32>
    %639 = arith.mulf %602, %638 : vector<64x64xf32>
    %640 = vector.extract_strided_slice %599 {offsets = [0, 64], sizes = [64, 64], strides = [1, 1]} : vector<64x128xf32> to vector<64x64xf32>
    %641 = arith.mulf %639, %640 : vector<64x64xf32>
    %642 = arith.truncf %641 : vector<64x64xf32> to vector<64x64xbf16>
    %c0_505 = arith.constant 0 : index
    %c0_506 = arith.constant 0 : index
    %643 = vector.load %arg13[%c0_505, %c0_506] : memref<64x32xbf16, #tpu.memory_space<vmem>>, vector<64x32xbf16>
    %cst_507 = arith.constant dense<0.000000e+00> : vector<64x32xf32>
    %644 = tpu.matmul %642, %643, %cst_507 {dimension_numbers = #tpu.dot_dimension_numbers<[1], [0], [0], [1], [0, 0, 1, 1], [], []>} : vector<64x64xbf16>, vector<64x32xbf16>, vector<64x32xf32> -> vector<64x32xf32>
    %c64_508 = arith.constant 64 : index
    %c0_509 = arith.constant 0 : index
    %645 = vector.load %arg18[%c64_508, %c0_509] : memref<256x32xf32, #tpu.memory_space<vmem>>, vector<64x32xf32>
    %646 = arith.addf %645, %644 : vector<64x32xf32>
    %647 = vector.shape_cast %646 : vector<64x32xf32> to vector<1x4x16x32xf32>
    %c0_510 = arith.constant 0 : index
    %c4_511 = arith.constant 4 : index
    %c0_512 = arith.constant 0 : index
    %c0_513 = arith.constant 0 : index
    %648 = vector.load %arg14[%c0_510, %c4_511, %c0_512, %c0_513] : memref<1x16x16x32xf32, #tpu.memory_space<vmem>>, vector<1x4x16x32xf32>
    tpu.vector_store %arg14[%c0_510, %c4_511, %c0_512, %c0_513], %647 {strides = array<i32>} : memref<1x16x16x32xf32, #tpu.memory_space<vmem>>, vector<1x4x16x32xf32>,
    %cst_514 = arith.constant 0.000000e+00 : f32
    %649 = vector.broadcast %cst_514 : f32 to vector<4x16x128xf32>
    %c8_515 = arith.constant 8 : index
    %c7_516 = arith.constant 7 : index
    %c0_517 = arith.constant 0 : index
    %650 = vector.load %arg16[%c8_515, %c7_516, %c0_517] : memref<18x32x128xf32, #tpu.memory_space<vmem>>, vector<4x16x128xf32>
    %c0_518 = arith.constant 0 : index
    %c0_519 = arith.constant 0 : index
    %c0_520 = arith.constant 0 : index
    %651 = vector.load %arg12[%c0_518, %c0_519, %c0_520] : memref<3x3x128xf32, #tpu.memory_space<vmem>>, vector<1x1x128xf32>
    %652 = vector.broadcast %651 : vector<1x1x128xf32> to vector<4x16x128xf32>
    %653 = arith.mulf %650, %652 : vector<4x16x128xf32>
    %654 = arith.addf %649, %653 : vector<4x16x128xf32>
    %c8_521 = arith.constant 8 : index
    %c8_522 = arith.constant 8 : index
    %c0_523 = arith.constant 0 : index
    %655 = vector.load %arg16[%c8_521, %c8_522, %c0_523] : memref<18x32x128xf32, #tpu.memory_space<vmem>>, vector<4x16x128xf32>
    %c0_524 = arith.constant 0 : index
    %c1_525 = arith.constant 1 : index
    %c0_526 = arith.constant 0 : index
    %656 = vector.load %arg12[%c0_524, %c1_525, %c0_526] : memref<3x3x128xf32, #tpu.memory_space<vmem>>, vector<1x1x128xf32>
    %657 = vector.broadcast %656 : vector<1x1x128xf32> to vector<4x16x128xf32>
    %658 = arith.mulf %655, %657 : vector<4x16x128xf32>
    %659 = arith.addf %654, %658 : vector<4x16x128xf32>
    %c8_527 = arith.constant 8 : index
    %c9_528 = arith.constant 9 : index
    %c0_529 = arith.constant 0 : index
    %660 = vector.load %arg16[%c8_527, %c9_528, %c0_529] : memref<18x32x128xf32, #tpu.memory_space<vmem>>, vector<4x16x128xf32>
    %c0_530 = arith.constant 0 : index
    %c2_531 = arith.constant 2 : index
    %c0_532 = arith.constant 0 : index
    %661 = vector.load %arg12[%c0_530, %c2_531, %c0_532] : memref<3x3x128xf32, #tpu.memory_space<vmem>>, vector<1x1x128xf32>
    %662 = vector.broadcast %661 : vector<1x1x128xf32> to vector<4x16x128xf32>
    %663 = arith.mulf %660, %662 : vector<4x16x128xf32>
    %664 = arith.addf %659, %663 : vector<4x16x128xf32>
    %c9_533 = arith.constant 9 : index
    %c7_534 = arith.constant 7 : index
    %c0_535 = arith.constant 0 : index
    %665 = vector.load %arg16[%c9_533, %c7_534, %c0_535] : memref<18x32x128xf32, #tpu.memory_space<vmem>>, vector<4x16x128xf32>
    %c1_536 = arith.constant 1 : index
    %c0_537 = arith.constant 0 : index
    %c0_538 = arith.constant 0 : index
    %666 = vector.load %arg12[%c1_536, %c0_537, %c0_538] : memref<3x3x128xf32, #tpu.memory_space<vmem>>, vector<1x1x128xf32>
    %667 = vector.broadcast %666 : vector<1x1x128xf32> to vector<4x16x128xf32>
    %668 = arith.mulf %665, %667 : vector<4x16x128xf32>
    %669 = arith.addf %664, %668 : vector<4x16x128xf32>
    %c9_539 = arith.constant 9 : index
    %c8_540 = arith.constant 8 : index
    %c0_541 = arith.constant 0 : index
    %670 = vector.load %arg16[%c9_539, %c8_540, %c0_541] : memref<18x32x128xf32, #tpu.memory_space<vmem>>, vector<4x16x128xf32>
    %c1_542 = arith.constant 1 : index
    %c1_543 = arith.constant 1 : index
    %c0_544 = arith.constant 0 : index
    %671 = vector.load %arg12[%c1_542, %c1_543, %c0_544] : memref<3x3x128xf32, #tpu.memory_space<vmem>>, vector<1x1x128xf32>
    %672 = vector.broadcast %671 : vector<1x1x128xf32> to vector<4x16x128xf32>
    %673 = arith.mulf %670, %672 : vector<4x16x128xf32>
    %674 = arith.addf %669, %673 : vector<4x16x128xf32>
    %c9_545 = arith.constant 9 : index
    %c9_546 = arith.constant 9 : index
    %c0_547 = arith.constant 0 : index
    %675 = vector.load %arg16[%c9_545, %c9_546, %c0_547] : memref<18x32x128xf32, #tpu.memory_space<vmem>>, vector<4x16x128xf32>
    %c1_548 = arith.constant 1 : index
    %c2_549 = arith.constant 2 : index
    %c0_550 = arith.constant 0 : index
    %676 = vector.load %arg12[%c1_548, %c2_549, %c0_550] : memref<3x3x128xf32, #tpu.memory_space<vmem>>, vector<1x1x128xf32>
    %677 = vector.broadcast %676 : vector<1x1x128xf32> to vector<4x16x128xf32>
    %678 = arith.mulf %675, %677 : vector<4x16x128xf32>
    %679 = arith.addf %674, %678 : vector<4x16x128xf32>
    %c10_551 = arith.constant 10 : index
    %c7_552 = arith.constant 7 : index
    %c0_553 = arith.constant 0 : index
    %680 = vector.load %arg16[%c10_551, %c7_552, %c0_553] : memref<18x32x128xf32, #tpu.memory_space<vmem>>, vector<4x16x128xf32>
    %c2_554 = arith.constant 2 : index
    %c0_555 = arith.constant 0 : index
    %c0_556 = arith.constant 0 : index
    %681 = vector.load %arg12[%c2_554, %c0_555, %c0_556] : memref<3x3x128xf32, #tpu.memory_space<vmem>>, vector<1x1x128xf32>
    %682 = vector.broadcast %681 : vector<1x1x128xf32> to vector<4x16x128xf32>
    %683 = arith.mulf %680, %682 : vector<4x16x128xf32>
    %684 = arith.addf %679, %683 : vector<4x16x128xf32>
    %c10_557 = arith.constant 10 : index
    %c8_558 = arith.constant 8 : index
    %c0_559 = arith.constant 0 : index
    %685 = vector.load %arg16[%c10_557, %c8_558, %c0_559] : memref<18x32x128xf32, #tpu.memory_space<vmem>>, vector<4x16x128xf32>
    %c2_560 = arith.constant 2 : index
    %c1_561 = arith.constant 1 : index
    %c0_562 = arith.constant 0 : index
    %686 = vector.load %arg12[%c2_560, %c1_561, %c0_562] : memref<3x3x128xf32, #tpu.memory_space<vmem>>, vector<1x1x128xf32>
    %687 = vector.broadcast %686 : vector<1x1x128xf32> to vector<4x16x128xf32>
    %688 = arith.mulf %685, %687 : vector<4x16x128xf32>
    %689 = arith.addf %684, %688 : vector<4x16x128xf32>
    %c10_563 = arith.constant 10 : index
    %c9_564 = arith.constant 9 : index
    %c0_565 = arith.constant 0 : index
    %690 = vector.load %arg16[%c10_563, %c9_564, %c0_565] : memref<18x32x128xf32, #tpu.memory_space<vmem>>, vector<4x16x128xf32>
    %c2_566 = arith.constant 2 : index
    %c2_567 = arith.constant 2 : index
    %c0_568 = arith.constant 0 : index
    %691 = vector.load %arg12[%c2_566, %c2_567, %c0_568] : memref<3x3x128xf32, #tpu.memory_space<vmem>>, vector<1x1x128xf32>
    %692 = vector.broadcast %691 : vector<1x1x128xf32> to vector<4x16x128xf32>
    %693 = arith.mulf %690, %692 : vector<4x16x128xf32>
    %694 = arith.addf %689, %693 : vector<4x16x128xf32>
    %695 = vector.shape_cast %694 : vector<4x16x128xf32> to vector<64x128xf32>
    %696 = vector.extract_strided_slice %695 {offsets = [0, 0], sizes = [64, 64], strides = [1, 1]} : vector<64x128xf32> to vector<64x64xf32>
    %cst_569 = arith.constant 5.000000e-01 : f32
    %697 = vector.broadcast %cst_569 : f32 to vector<64x64xf32>
    %698 = arith.mulf %697, %696 : vector<64x64xf32>
    %cst_570 = arith.constant 0.707106769 : f32
    %699 = vector.broadcast %cst_570 : f32 to vector<64x64xf32>
    %700 = arith.mulf %696, %699 : vector<64x64xf32>
    %701 = math.absf %700 : vector<64x64xf32>
    %cst_571 = arith.constant 0.327591091 : f32
    %702 = vector.broadcast %cst_571 : f32 to vector<64x64xf32>
    %703 = arith.mulf %702, %701 : vector<64x64xf32>
    %cst_572 = arith.constant 1.000000e+00 : f32
    %704 = vector.broadcast %cst_572 : f32 to vector<64x64xf32>
    %705 = arith.addf %704, %703 : vector<64x64xf32>
    %706 = tpu.reciprocal %705 {approx = true} : vector<64x64xf32> -> vector<64x64xf32>
    %cst_573 = arith.constant 1.06140542 : f32
    %707 = vector.broadcast %cst_573 : f32 to vector<64x64xf32>
    %708 = arith.mulf %707, %706 : vector<64x64xf32>
    %cst_574 = arith.constant -1.45315206 : f32
    %709 = vector.broadcast %cst_574 : f32 to vector<64x64xf32>
    %710 = arith.addf %708, %709 : vector<64x64xf32>
    %711 = arith.mulf %710, %706 : vector<64x64xf32>
    %cst_575 = arith.constant 1.42141378 : f32
    %712 = vector.broadcast %cst_575 : f32 to vector<64x64xf32>
    %713 = arith.addf %711, %712 : vector<64x64xf32>
    %714 = arith.mulf %713, %706 : vector<64x64xf32>
    %cst_576 = arith.constant -0.284496725 : f32
    %715 = vector.broadcast %cst_576 : f32 to vector<64x64xf32>
    %716 = arith.addf %714, %715 : vector<64x64xf32>
    %717 = arith.mulf %716, %706 : vector<64x64xf32>
    %cst_577 = arith.constant 0.254829586 : f32
    %718 = vector.broadcast %cst_577 : f32 to vector<64x64xf32>
    %719 = arith.addf %717, %718 : vector<64x64xf32>
    %720 = arith.mulf %719, %706 : vector<64x64xf32>
    %cst_578 = arith.constant 0.000000e+00 : f32
    %721 = vector.broadcast %cst_578 : f32 to vector<64x64xf32>
    %722 = arith.subf %721, %701 : vector<64x64xf32>
    %723 = arith.mulf %722, %701 : vector<64x64xf32>
    %724 = math.exp %723 : vector<64x64xf32>
    %725 = arith.mulf %720, %724 : vector<64x64xf32>
    %cst_579 = arith.constant 1.000000e+00 : f32
    %726 = vector.broadcast %cst_579 : f32 to vector<64x64xf32>
    %727 = arith.subf %726, %725 : vector<64x64xf32>
    %cst_580 = arith.constant 0.000000e+00 : f32
    %728 = vector.broadcast %cst_580 : f32 to vector<64x64xf32>
    %729 = arith.cmpf olt, %700, %728 : vector<64x64xf32>
    %cst_581 = arith.constant 0.000000e+00 : f32
    %730 = vector.broadcast %cst_581 : f32 to vector<64x64xf32>
    %731 = arith.subf %730, %727 : vector<64x64xf32>
    %732 = arith.select %729, %731, %727 : vector<64x64xi1>, vector<64x64xf32>
    %cst_582 = arith.constant 1.000000e+00 : f32
    %733 = vector.broadcast %cst_582 : f32 to vector<64x64xf32>
    %734 = arith.addf %733, %732 : vector<64x64xf32>
    %735 = arith.mulf %698, %734 : vector<64x64xf32>
    %736 = vector.extract_strided_slice %695 {offsets = [0, 64], sizes = [64, 64], strides = [1, 1]} : vector<64x128xf32> to vector<64x64xf32>
    %737 = arith.mulf %735, %736 : vector<64x64xf32>
    %738 = arith.truncf %737 : vector<64x64xf32> to vector<64x64xbf16>
    %c0_583 = arith.constant 0 : index
    %c0_584 = arith.constant 0 : index
    %739 = vector.load %arg13[%c0_583, %c0_584] : memref<64x32xbf16, #tpu.memory_space<vmem>>, vector<64x32xbf16>
    %cst_585 = arith.constant dense<0.000000e+00> : vector<64x32xf32>
    %740 = tpu.matmul %738, %739, %cst_585 {dimension_numbers = #tpu.dot_dimension_numbers<[1], [0], [0], [1], [0, 0, 1, 1], [], []>} : vector<64x64xbf16>, vector<64x32xbf16>, vector<64x32xf32> -> vector<64x32xf32>
    %c128_586 = arith.constant 128 : index
    %c0_587 = arith.constant 0 : index
    %741 = vector.load %arg18[%c128_586, %c0_587] : memref<256x32xf32, #tpu.memory_space<vmem>>, vector<64x32xf32>
    %742 = arith.addf %741, %740 : vector<64x32xf32>
    %743 = vector.shape_cast %742 : vector<64x32xf32> to vector<1x4x16x32xf32>
    %c0_588 = arith.constant 0 : index
    %c8_589 = arith.constant 8 : index
    %c0_590 = arith.constant 0 : index
    %c0_591 = arith.constant 0 : index
    %744 = vector.load %arg14[%c0_588, %c8_589, %c0_590, %c0_591] : memref<1x16x16x32xf32, #tpu.memory_space<vmem>>, vector<1x4x16x32xf32>
    tpu.vector_store %arg14[%c0_588, %c8_589, %c0_590, %c0_591], %743 {strides = array<i32>} : memref<1x16x16x32xf32, #tpu.memory_space<vmem>>, vector<1x4x16x32xf32>,
    %cst_592 = arith.constant 0.000000e+00 : f32
    %745 = vector.broadcast %cst_592 : f32 to vector<4x16x128xf32>
    %c12_593 = arith.constant 12 : index
    %c7_594 = arith.constant 7 : index
    %c0_595 = arith.constant 0 : index
    %746 = vector.load %arg16[%c12_593, %c7_594, %c0_595] : memref<18x32x128xf32, #tpu.memory_space<vmem>>, vector<4x16x128xf32>
    %c0_596 = arith.constant 0 : index
    %c0_597 = arith.constant 0 : index
    %c0_598 = arith.constant 0 : index
    %747 = vector.load %arg12[%c0_596, %c0_597, %c0_598] : memref<3x3x128xf32, #tpu.memory_space<vmem>>, vector<1x1x128xf32>
    %748 = vector.broadcast %747 : vector<1x1x128xf32> to vector<4x16x128xf32>
    %749 = arith.mulf %746, %748 : vector<4x16x128xf32>
    %750 = arith.addf %745, %749 : vector<4x16x128xf32>
    %c12_599 = arith.constant 12 : index
    %c8_600 = arith.constant 8 : index
    %c0_601 = arith.constant 0 : index
    %751 = vector.load %arg16[%c12_599, %c8_600, %c0_601] : memref<18x32x128xf32, #tpu.memory_space<vmem>>, vector<4x16x128xf32>
    %c0_602 = arith.constant 0 : index
    %c1_603 = arith.constant 1 : index
    %c0_604 = arith.constant 0 : index
    %752 = vector.load %arg12[%c0_602, %c1_603, %c0_604] : memref<3x3x128xf32, #tpu.memory_space<vmem>>, vector<1x1x128xf32>
    %753 = vector.broadcast %752 : vector<1x1x128xf32> to vector<4x16x128xf32>
    %754 = arith.mulf %751, %753 : vector<4x16x128xf32>
    %755 = arith.addf %750, %754 : vector<4x16x128xf32>
    %c12_605 = arith.constant 12 : index
    %c9_606 = arith.constant 9 : index
    %c0_607 = arith.constant 0 : index
    %756 = vector.load %arg16[%c12_605, %c9_606, %c0_607] : memref<18x32x128xf32, #tpu.memory_space<vmem>>, vector<4x16x128xf32>
    %c0_608 = arith.constant 0 : index
    %c2_609 = arith.constant 2 : index
    %c0_610 = arith.constant 0 : index
    %757 = vector.load %arg12[%c0_608, %c2_609, %c0_610] : memref<3x3x128xf32, #tpu.memory_space<vmem>>, vector<1x1x128xf32>
    %758 = vector.broadcast %757 : vector<1x1x128xf32> to vector<4x16x128xf32>
    %759 = arith.mulf %756, %758 : vector<4x16x128xf32>
    %760 = arith.addf %755, %759 : vector<4x16x128xf32>
    %c13_611 = arith.constant 13 : index
    %c7_612 = arith.constant 7 : index
    %c0_613 = arith.constant 0 : index
    %761 = vector.load %arg16[%c13_611, %c7_612, %c0_613] : memref<18x32x128xf32, #tpu.memory_space<vmem>>, vector<4x16x128xf32>
    %c1_614 = arith.constant 1 : index
    %c0_615 = arith.constant 0 : index
    %c0_616 = arith.constant 0 : index
    %762 = vector.load %arg12[%c1_614, %c0_615, %c0_616] : memref<3x3x128xf32, #tpu.memory_space<vmem>>, vector<1x1x128xf32>
    %763 = vector.broadcast %762 : vector<1x1x128xf32> to vector<4x16x128xf32>
    %764 = arith.mulf %761, %763 : vector<4x16x128xf32>
    %765 = arith.addf %760, %764 : vector<4x16x128xf32>
    %c13_617 = arith.constant 13 : index
    %c8_618 = arith.constant 8 : index
    %c0_619 = arith.constant 0 : index
    %766 = vector.load %arg16[%c13_617, %c8_618, %c0_619] : memref<18x32x128xf32, #tpu.memory_space<vmem>>, vector<4x16x128xf32>
    %c1_620 = arith.constant 1 : index
    %c1_621 = arith.constant 1 : index
    %c0_622 = arith.constant 0 : index
    %767 = vector.load %arg12[%c1_620, %c1_621, %c0_622] : memref<3x3x128xf32, #tpu.memory_space<vmem>>, vector<1x1x128xf32>
    %768 = vector.broadcast %767 : vector<1x1x128xf32> to vector<4x16x128xf32>
    %769 = arith.mulf %766, %768 : vector<4x16x128xf32>
    %770 = arith.addf %765, %769 : vector<4x16x128xf32>
    %c13_623 = arith.constant 13 : index
    %c9_624 = arith.constant 9 : index
    %c0_625 = arith.constant 0 : index
    %771 = vector.load %arg16[%c13_623, %c9_624, %c0_625] : memref<18x32x128xf32, #tpu.memory_space<vmem>>, vector<4x16x128xf32>
    %c1_626 = arith.constant 1 : index
    %c2_627 = arith.constant 2 : index
    %c0_628 = arith.constant 0 : index
    %772 = vector.load %arg12[%c1_626, %c2_627, %c0_628] : memref<3x3x128xf32, #tpu.memory_space<vmem>>, vector<1x1x128xf32>
    %773 = vector.broadcast %772 : vector<1x1x128xf32> to vector<4x16x128xf32>
    %774 = arith.mulf %771, %773 : vector<4x16x128xf32>
    %775 = arith.addf %770, %774 : vector<4x16x128xf32>
    %c14_629 = arith.constant 14 : index
    %c7_630 = arith.constant 7 : index
    %c0_631 = arith.constant 0 : index
    %776 = vector.load %arg16[%c14_629, %c7_630, %c0_631] : memref<18x32x128xf32, #tpu.memory_space<vmem>>, vector<4x16x128xf32>
    %c2_632 = arith.constant 2 : index
    %c0_633 = arith.constant 0 : index
    %c0_634 = arith.constant 0 : index
    %777 = vector.load %arg12[%c2_632, %c0_633, %c0_634] : memref<3x3x128xf32, #tpu.memory_space<vmem>>, vector<1x1x128xf32>
    %778 = vector.broadcast %777 : vector<1x1x128xf32> to vector<4x16x128xf32>
    %779 = arith.mulf %776, %778 : vector<4x16x128xf32>
    %780 = arith.addf %775, %779 : vector<4x16x128xf32>
    %c14_635 = arith.constant 14 : index
    %c8_636 = arith.constant 8 : index
    %c0_637 = arith.constant 0 : index
    %781 = vector.load %arg16[%c14_635, %c8_636, %c0_637] : memref<18x32x128xf32, #tpu.memory_space<vmem>>, vector<4x16x128xf32>
    %c2_638 = arith.constant 2 : index
    %c1_639 = arith.constant 1 : index
    %c0_640 = arith.constant 0 : index
    %782 = vector.load %arg12[%c2_638, %c1_639, %c0_640] : memref<3x3x128xf32, #tpu.memory_space<vmem>>, vector<1x1x128xf32>
    %783 = vector.broadcast %782 : vector<1x1x128xf32> to vector<4x16x128xf32>
    %784 = arith.mulf %781, %783 : vector<4x16x128xf32>
    %785 = arith.addf %780, %784 : vector<4x16x128xf32>
    %c14_641 = arith.constant 14 : index
    %c9_642 = arith.constant 9 : index
    %c0_643 = arith.constant 0 : index
    %786 = vector.load %arg16[%c14_641, %c9_642, %c0_643] : memref<18x32x128xf32, #tpu.memory_space<vmem>>, vector<4x16x128xf32>
    %c2_644 = arith.constant 2 : index
    %c2_645 = arith.constant 2 : index
    %c0_646 = arith.constant 0 : index
    %787 = vector.load %arg12[%c2_644, %c2_645, %c0_646] : memref<3x3x128xf32, #tpu.memory_space<vmem>>, vector<1x1x128xf32>
    %788 = vector.broadcast %787 : vector<1x1x128xf32> to vector<4x16x128xf32>
    %789 = arith.mulf %786, %788 : vector<4x16x128xf32>
    %790 = arith.addf %785, %789 : vector<4x16x128xf32>
    %791 = vector.shape_cast %790 : vector<4x16x128xf32> to vector<64x128xf32>
    %792 = vector.extract_strided_slice %791 {offsets = [0, 0], sizes = [64, 64], strides = [1, 1]} : vector<64x128xf32> to vector<64x64xf32>
    %cst_647 = arith.constant 5.000000e-01 : f32
    %793 = vector.broadcast %cst_647 : f32 to vector<64x64xf32>
    %794 = arith.mulf %793, %792 : vector<64x64xf32>
    %cst_648 = arith.constant 0.707106769 : f32
    %795 = vector.broadcast %cst_648 : f32 to vector<64x64xf32>
    %796 = arith.mulf %792, %795 : vector<64x64xf32>
    %797 = math.absf %796 : vector<64x64xf32>
    %cst_649 = arith.constant 0.327591091 : f32
    %798 = vector.broadcast %cst_649 : f32 to vector<64x64xf32>
    %799 = arith.mulf %798, %797 : vector<64x64xf32>
    %cst_650 = arith.constant 1.000000e+00 : f32
    %800 = vector.broadcast %cst_650 : f32 to vector<64x64xf32>
    %801 = arith.addf %800, %799 : vector<64x64xf32>
    %802 = tpu.reciprocal %801 {approx = true} : vector<64x64xf32> -> vector<64x64xf32>
    %cst_651 = arith.constant 1.06140542 : f32
    %803 = vector.broadcast %cst_651 : f32 to vector<64x64xf32>
    %804 = arith.mulf %803, %802 : vector<64x64xf32>
    %cst_652 = arith.constant -1.45315206 : f32
    %805 = vector.broadcast %cst_652 : f32 to vector<64x64xf32>
    %806 = arith.addf %804, %805 : vector<64x64xf32>
    %807 = arith.mulf %806, %802 : vector<64x64xf32>
    %cst_653 = arith.constant 1.42141378 : f32
    %808 = vector.broadcast %cst_653 : f32 to vector<64x64xf32>
    %809 = arith.addf %807, %808 : vector<64x64xf32>
    %810 = arith.mulf %809, %802 : vector<64x64xf32>
    %cst_654 = arith.constant -0.284496725 : f32
    %811 = vector.broadcast %cst_654 : f32 to vector<64x64xf32>
    %812 = arith.addf %810, %811 : vector<64x64xf32>
    %813 = arith.mulf %812, %802 : vector<64x64xf32>
    %cst_655 = arith.constant 0.254829586 : f32
    %814 = vector.broadcast %cst_655 : f32 to vector<64x64xf32>
    %815 = arith.addf %813, %814 : vector<64x64xf32>
    %816 = arith.mulf %815, %802 : vector<64x64xf32>
    %cst_656 = arith.constant 0.000000e+00 : f32
    %817 = vector.broadcast %cst_656 : f32 to vector<64x64xf32>
    %818 = arith.subf %817, %797 : vector<64x64xf32>
    %819 = arith.mulf %818, %797 : vector<64x64xf32>
    %820 = math.exp %819 : vector<64x64xf32>
    %821 = arith.mulf %816, %820 : vector<64x64xf32>
    %cst_657 = arith.constant 1.000000e+00 : f32
    %822 = vector.broadcast %cst_657 : f32 to vector<64x64xf32>
    %823 = arith.subf %822, %821 : vector<64x64xf32>
    %cst_658 = arith.constant 0.000000e+00 : f32
    %824 = vector.broadcast %cst_658 : f32 to vector<64x64xf32>
    %825 = arith.cmpf olt, %796, %824 : vector<64x64xf32>
    %cst_659 = arith.constant 0.000000e+00 : f32
    %826 = vector.broadcast %cst_659 : f32 to vector<64x64xf32>
    %827 = arith.subf %826, %823 : vector<64x64xf32>
    %828 = arith.select %825, %827, %823 : vector<64x64xi1>, vector<64x64xf32>
    %cst_660 = arith.constant 1.000000e+00 : f32
    %829 = vector.broadcast %cst_660 : f32 to vector<64x64xf32>
    %830 = arith.addf %829, %828 : vector<64x64xf32>
    %831 = arith.mulf %794, %830 : vector<64x64xf32>
    %832 = vector.extract_strided_slice %791 {offsets = [0, 64], sizes = [64, 64], strides = [1, 1]} : vector<64x128xf32> to vector<64x64xf32>
    %833 = arith.mulf %831, %832 : vector<64x64xf32>
    %834 = arith.truncf %833 : vector<64x64xf32> to vector<64x64xbf16>
    %c0_661 = arith.constant 0 : index
    %c0_662 = arith.constant 0 : index
    %835 = vector.load %arg13[%c0_661, %c0_662] : memref<64x32xbf16, #tpu.memory_space<vmem>>, vector<64x32xbf16>
    %cst_663 = arith.constant dense<0.000000e+00> : vector<64x32xf32>
    %836 = tpu.matmul %834, %835, %cst_663 {dimension_numbers = #tpu.dot_dimension_numbers<[1], [0], [0], [1], [0, 0, 1, 1], [], []>} : vector<64x64xbf16>, vector<64x32xbf16>, vector<64x32xf32> -> vector<64x32xf32>
    %c192_664 = arith.constant 192 : index
    %c0_665 = arith.constant 0 : index
    %837 = vector.load %arg18[%c192_664, %c0_665] : memref<256x32xf32, #tpu.memory_space<vmem>>, vector<64x32xf32>
    %838 = arith.addf %837, %836 : vector<64x32xf32>
    %839 = vector.shape_cast %838 : vector<64x32xf32> to vector<1x4x16x32xf32>
    %c0_666 = arith.constant 0 : index
    %c12_667 = arith.constant 12 : index
    %c0_668 = arith.constant 0 : index
    %c0_669 = arith.constant 0 : index
    %840 = vector.load %arg14[%c0_666, %c12_667, %c0_668, %c0_669] : memref<1x16x16x32xf32, #tpu.memory_space<vmem>>, vector<1x4x16x32xf32>
    tpu.vector_store %arg14[%c0_666, %c12_667, %c0_668, %c0_669], %839 {strides = array<i32>} : memref<1x16x16x32xf32, #tpu.memory_space<vmem>>, vector<1x4x16x32xf32>,
    return
  }
  func.func @transform_0(%arg0: i32) -> (i32, i32, i32, i32) {
    %c0_i32 = arith.constant 0 : i32
    %c0_i32_0 = arith.constant 0 : i32
    %c0_i32_1 = arith.constant 0 : i32
    %c0_i32_2 = arith.constant 0 : i32
    return %arg0, %c0_i32, %c0_i32_0, %c0_i32_1 : i32, i32, i32, i32
  }
  func.func @transform_1(%arg0: i32) -> (i32, i32) {
    %c0_i32 = arith.constant 0 : i32
    %c0_i32_0 = arith.constant 0 : i32
    %c0_i32_1 = arith.constant 0 : i32
    return %c0_i32, %c0_i32_0 : i32, i32
  }
  func.func @transform_2(%arg0: i32) -> (i32, i32) {
    %c0_i32 = arith.constant 0 : i32
    %c0_i32_0 = arith.constant 0 : i32
    %c0_i32_1 = arith.constant 0 : i32
    return %c0_i32, %c0_i32_0 : i32, i32
  }
  func.func @transform_3(%arg0: i32) -> (i32, i32) {
    %c0_i32 = arith.constant 0 : i32
    %c0_i32_0 = arith.constant 0 : i32
    %c0_i32_1 = arith.constant 0 : i32
    return %c0_i32, %c0_i32_0 : i32, i32
  }
  func.func @transform_4(%arg0: i32) -> (i32, i32, i32) {
    %c0_i32 = arith.constant 0 : i32
    %c0_i32_0 = arith.constant 0 : i32
    %c0_i32_1 = arith.constant 0 : i32
    %c0_i32_2 = arith.constant 0 : i32
    return %c0_i32, %c0_i32_0, %c0_i32_1 : i32, i32, i32
  }
  func.func @transform_5(%arg0: i32) -> (i32, i32) {
    %c0_i32 = arith.constant 0 : i32
    %c0_i32_0 = arith.constant 0 : i32
    %c0_i32_1 = arith.constant 0 : i32
    return %c0_i32, %c0_i32_0 : i32, i32
  }
  func.func @transform_6(%arg0: i32) -> (i32, i32) {
    %c0_i32 = arith.constant 0 : i32
    %c0_i32_0 = arith.constant 0 : i32
    %c0_i32_1 = arith.constant 0 : i32
    return %c0_i32, %c0_i32_0 : i32, i32
  }
  func.func @transform_7(%arg0: i32) -> (i32, i32) {
    %c0_i32 = arith.constant 0 : i32
    %c0_i32_0 = arith.constant 0 : i32
    %c0_i32_1 = arith.constant 0 : i32
    return %c0_i32, %c0_i32_0 : i32, i32
  }
  func.func @transform_8(%arg0: i32) -> (i32, i32) {
    %c0_i32 = arith.constant 0 : i32
    %c0_i32_0 = arith.constant 0 : i32
    %c0_i32_1 = arith.constant 0 : i32
    return %c0_i32, %c0_i32_0 : i32, i32
  }
  func.func @transform_9(%arg0: i32) -> (i32, i32) {
    %c0_i32 = arith.constant 0 : i32
    %c0_i32_0 = arith.constant 0 : i32
    %c0_i32_1 = arith.constant 0 : i32
    return %c0_i32, %c0_i32_0 : i32, i32
  }
  func.func @transform_10(%arg0: i32) -> (i32, i32) {
    %c0_i32 = arith.constant 0 : i32
    %c0_i32_0 = arith.constant 0 : i32
    %c0_i32_1 = arith.constant 0 : i32
    return %c0_i32, %c0_i32_0 : i32, i32
  }
  func.func @transform_11(%arg0: i32) -> (i32, i32, i32) {
    %c0_i32 = arith.constant 0 : i32
    %c0_i32_0 = arith.constant 0 : i32
    %c0_i32_1 = arith.constant 0 : i32
    %c0_i32_2 = arith.constant 0 : i32
    return %c0_i32, %c0_i32_0, %c0_i32_1 : i32, i32, i32
  }
  func.func @transform_12(%arg0: i32) -> (i32, i32) {
    %c0_i32 = arith.constant 0 : i32
    %c0_i32_0 = arith.constant 0 : i32
    %c0_i32_1 = arith.constant 0 : i32
    return %c0_i32, %c0_i32_0 : i32, i32
  }
  func.func @transform_13(%arg0: i32) -> (i32, i32, i32, i32) {
    %c0_i32 = arith.constant 0 : i32
    %c0_i32_0 = arith.constant 0 : i32
    %c0_i32_1 = arith.constant 0 : i32
    %c0_i32_2 = arith.constant 0 : i32
    return %arg0, %c0_i32, %c0_i32_0, %c0_i32_1 : i32, i32, i32, i32
  }
}

</mosaic_0001>

<llo_original>
// kernel: tpu_custom_call.1
$region0: #{tpu_custom_call.1}
  #allocation0 [shape = 'u32[]', space=smem, size = 0x4, offset = 0x4, fixed_abs, tag = 'smem constant byte address 0x4 - core index']
  #allocation1 [shape = 'u32[144,128]{1,0:T(1,128)}', space=vmem, size = 0x12000, scoped, tag = 'internal scratch']
  #allocation2 [shape = 'f32[18,32,96]{2,1,0:T(8,128)}', space=vmem, size = 0x48000, scoped, tag = 'scratch operand']
  #allocation3 [shape = 'f32[18,32,128]{2,1,0:T(8,128)}', space=vmem, size = 0x48000, scoped, tag = 'scratch operand']
  #allocation4 [shape = 'f32[256,96]{1,0:T(8,128)}', space=vmem, size = 0x20000, scoped, tag = 'scratch operand']
  #allocation5 [shape = 'f32[256,32]{1,0:T(8,128)}', space=vmem, size = 0x20000, scoped, tag = 'scratch operand']
  %s0 = inlined_call_operand.hbm [shape: f32[2,16,16,32], index: 0, kind: input, shape index: {}]
  %s1 = inlined_call_operand.vmem [shape: f32[1,32], index: 1, kind: input, shape index: {}]
  %s2 = inlined_call_operand.vmem [shape: f32[1,32], index: 2, kind: input, shape index: {}]
  %s3 = inlined_call_operand.vmem [shape: bf16[32,96], index: 3, kind: input, shape index: {}]
  %s4 = inlined_call_operand.hbm [shape: f32[3,3,96], index: 4, kind: input, shape index: {}]
  %s5 = inlined_call_operand.hbm [shape: f32[1,32], index: 5, kind: input, shape index: {}]
  %s6 = inlined_call_operand.vmem [shape: f32[32,32], index: 6, kind: input, shape index: {}]
  %s7 = inlined_call_operand.vmem [shape: bf16[32,32], index: 7, kind: input, shape index: {}]
  %s8 = inlined_call_operand.hbm [shape: f32[1,32], index: 8, kind: input, shape index: {}]
  %s9 = inlined_call_operand.hbm [shape: f32[1,32], index: 9, kind: input, shape index: {}]
  %s10 = inlined_call_operand.vmem [shape: bf16[32,128], index: 10, kind: input, shape index: {}]
  %s11 = inlined_call_operand.hbm [shape: f32[3,3,128], index: 11, kind: input, shape index: {}]
  %s12 = inlined_call_operand.vmem [shape: bf16[64,32], index: 12, kind: input, shape index: {}]
  %s13 = inlined_call_operand.hbm [shape: f32[2,16,16,32], index: 13, kind: output, shape index: {}]
  %s14 = sld [smem:[#allocation0]]
  $region113: #{tpu_custom_call.1} parent=0
    _
  %s16 = ssub.s32 1, %s14
  %s17 = scalar_select 0, %s16, %s14
  $region1: #{tpu_custom_call.1} parent=0
    #allocation6 [shape = 'u8[262144]{0}', space=vmem, size = 0x40000, scoped, tag = 'input window, operand 0']
    #allocation7 [shape = 's32[2]{0}', space=sflag, size = 0x8, scoped, tag = 'scoped memory for tpu_custom_call.1']
    #allocation8 [shape = 's32[2]{0}', space=sflag, size = 0x8, scoped, tag = 'scoped memory for tpu_custom_call.1']
    #allocation9 [shape = 'u8[6144]{0}', space=vmem, size = 0x1800, scoped, tag = 'input window, operand 4, single buffered']
    #allocation10 [shape = 's32[1]{0}', space=sflag, size = 0x4, scoped, tag = 'scoped memory for tpu_custom_call.1']
    #allocation11 [shape = 'u8[512]{0}', space=vmem, size = 0x400, scoped, tag = 'input window, operand 5, single buffered']
    #allocation12 [shape = 'u8[512]{0}', space=vmem, size = 0x400, scoped, tag = 'input window, operand 8, single buffered']
    #allocation13 [shape = 's32[1]{0}', space=sflag, size = 0x4, scoped, tag = 'scoped memory for tpu_custom_call.1']
    #allocation14 [shape = 'u8[512]{0}', space=vmem, size = 0x400, scoped, tag = 'input window, operand 9, single buffered']
    #allocation15 [shape = 'u8[6144]{0}', space=vmem, size = 0x1800, scoped, tag = 'input window, operand 11, single buffered']
    #allocation16 [shape = 's32[1]{0}', space=sflag, size = 0x4, scoped, tag = 'scoped memory for tpu_custom_call.1']
    #allocation17 [shape = 'u8[262144]{0}', space=vmem, size = 0x40000, scoped, tag = 'output window, operand 0']
    %18 = vsyncpa [#allocation7], 0
    %s19 = scalar_lea.sflag [#allocation7], 1
    %20 = vsyncpa %s19, 0
    %21 = vsyncpa [#allocation10], 0
    %22 = vsyncpa [#allocation13], 0
    %23 = vsyncpa [#allocation16], 0
    %24 = vsyncpa [#allocation8], 0
    %s25 = scalar_lea.sflag [#allocation8], 1
    %26 = vsyncpa %s25, 0
    loop: start=0, step=1, limit=4
    $region2: #{tpu_custom_call.1} parent=1 // loop_pre_header
      _
    $region3: #{tpu_custom_call.1} parent=1 // loop_header
      %s28 = sphi 0, %s32
      %p29 = scmp.ge.s32.totalorder %s28, 4
      %s38 = sphi 0, %s40
      %s41 = sphi 0, %s38
      %s42 = sphi 0, %s41
      %s58 = sphi 0, %s42
      %s62 = sphi 0, %s62
      %s64 = sphi 0, %s62
      %s65 = sphi 0, %s64
      %s79 = sphi 0, %s65
      %s83 = sphi 0, %s83
      %s85 = sphi 0, %s83
      %s86 = sphi 0, %s85
      %s100 = sphi 0, %s86
      %s104 = sphi 0, %s104
      %s106 = sphi 0, %s104
      %s107 = sphi 0, %s106
      %s121 = sphi 0, %s107
      %s125 = sphi 0, %s125
      %s127 = sphi 0, %s125
      %s128 = sphi 0, %s127
      %s142 = sphi 0, %s128
      %s146 = sphi 0, %s146
      %s148 = sphi 0, %s146
      %s149 = sphi 0, %s148
      %s163 = sphi 0, %s149
      %s167 = sphi 0, %s167
      %s169 = sphi 0, %s167
      %s170 = sphi 0, %s169
      %s184 = sphi 0, %s170
      %s188 = sphi 0, %s188
      %s190 = sphi 0, %s188
      %s191 = sphi 0, %s190
      %s205 = sphi 0, %s191
      %s209 = sphi 0, %s209
      %s211 = sphi 0, %s209
      %s212 = sphi 0, %s211
      %s226 = sphi 0, %s212
      %s230 = sphi 0, %s230
      %s232 = sphi 0, %s230
      %s233 = sphi 0, %s232
      %s247 = sphi 0, %s233
      %s251 = sphi 0, %s251
      %s253 = sphi 0, %s251
      %s254 = sphi 0, %s253
      %s268 = sphi 0, %s254
      %s272 = sphi 0, %s272
      %s274 = sphi 0, %s272
      %s275 = sphi 0, %s274
      %s289 = sphi 0, %s275
      %s293 = sphi 0, %s293
      %s295 = sphi 0, %s293
      %s296 = sphi 0, %s295
      %s310 = sphi 0, %s296
      %s316 = sphi 0, %s318
      %s319 = sphi 0, %s316
      %s320 = sphi 0, %s319
      %s336 = sphi 0, %s320
    $region4: #{tpu_custom_call.1} parent=1 // loop_header_branch
      %31 = sbr.rel (%p29) target = $region8
    $region5: #{tpu_custom_call.1} parent=1 // loop_body
      %s33 = ssub.s32 %s28, 1
      %s34 = ssub.s32 %s28, 2
      %s35 = sadd.s32 %s28, 1
      %s36 = ssub.s32 %s28, %s35
      %p37 = scmp.eq.s32.totalorder %s36, 0
      %s39 = sadd.s32 %s38, 1
      %s40 = scalar_select %p37, %s38, %s39
      %p43 = pneg %p37
      %p44 = scmp.eq.s32.totalorder %s28, 1
      %p45 = por %p43, %p44
      %p46 = scmp.ne.s32.totalorder %s38, %s41
      %p47 = scmp.eq.s32.totalorder %s28, 0
      %p48 = por %p46, %p47
      %p49 = scmp.ne.s32.totalorder %s38, %s41
      %p50 = scmp.eq.s32.totalorder %s33, 1
      %p51 = por %p49, %p50
      %p52 = scmp.ne.s32.totalorder %s41, %s42
      %p53 = scmp.eq.s32.totalorder %s33, 0
      %p54 = por %p52, %p53
      %p55 = scmp.ne.s32.totalorder %s41, %s42
      %p56 = scmp.eq.s32.totalorder %s34, 1
      %p57 = por %p55, %p56
      %p59 = scmp.ne.s32.totalorder %s42, %s58
      %p60 = scmp.eq.s32.totalorder %s34, 0
      %p61 = por %p59, %p60
      %s63 = sadd.s32 %s62, 1
      %p66 = scmp.eq.s32.totalorder %s28, 1
      %p67 = scmp.ne.s32.totalorder %s62, %s64
      %p68 = scmp.eq.s32.totalorder %s28, 0
      %p69 = por %p67, %p68
      %p70 = scmp.ne.s32.totalorder %s62, %s64
      %p71 = scmp.eq.s32.totalorder %s33, 1
      %p72 = por %p70, %p71
      %p73 = scmp.ne.s32.totalorder %s64, %s65
      %p74 = scmp.eq.s32.totalorder %s33, 0
      %p75 = por %p73, %p74
      %p76 = scmp.ne.s32.totalorder %s64, %s65
      %p77 = scmp.eq.s32.totalorder %s34, 1
      %p78 = por %p76, %p77
      %p80 = scmp.ne.s32.totalorder %s65, %s79
      %p81 = scmp.eq.s32.totalorder %s34, 0
      %p82 = por %p80, %p81
      %s84 = sadd.s32 %s83, 1
      %p87 = scmp.eq.s32.totalorder %s28, 1
      %p88 = scmp.ne.s32.totalorder %s83, %s85
      %p89 = scmp.eq.s32.totalorder %s28, 0
      %p90 = por %p88, %p89
      %p91 = scmp.ne.s32.totalorder %s83, %s85
      %p92 = scmp.eq.s32.totalorder %s33, 1
      %p93 = por %p91, %p92
      %p94 = scmp.ne.s32.totalorder %s85, %s86
      %p95 = scmp.eq.s32.totalorder %s33, 0
      %p96 = por %p94, %p95
      %p97 = scmp.ne.s32.totalorder %s85, %s86
      %p98 = scmp.eq.s32.totalorder %s34, 1
      %p99 = por %p97, %p98
      %p101 = scmp.ne.s32.totalorder %s86, %s100
      %p102 = scmp.eq.s32.totalorder %s34, 0
      %p103 = por %p101, %p102
      %s105 = sadd.s32 %s104, 1
      %p108 = scmp.eq.s32.totalorder %s28, 1
      %p109 = scmp.ne.s32.totalorder %s104, %s106
      %p110 = scmp.eq.s32.totalorder %s28, 0
      %p111 = por %p109, %p110
      %p112 = scmp.ne.s32.totalorder %s104, %s106
      %p113 = scmp.eq.s32.totalorder %s33, 1
      %p114 = por %p112, %p113
      %p115 = scmp.ne.s32.totalorder %s106, %s107
      %p116 = scmp.eq.s32.totalorder %s33, 0
      %p117 = por %p115, %p116
      %p118 = scmp.ne.s32.totalorder %s106, %s107
      %p119 = scmp.eq.s32.totalorder %s34, 1
      %p120 = por %p118, %p119
      %p122 = scmp.ne.s32.totalorder %s107, %s121
      %p123 = scmp.eq.s32.totalorder %s34, 0
      %p124 = por %p122, %p123
      %s126 = sadd.s32 %s125, 1
      %p129 = scmp.eq.s32.totalorder %s28, 1
      %p130 = scmp.ne.s32.totalorder %s125, %s127
      %p131 = scmp.eq.s32.totalorder %s28, 0
      %p132 = por %p130, %p131
      %p133 = scmp.ne.s32.totalorder %s125, %s127
      %p134 = scmp.eq.s32.totalorder %s33, 1
      %p135 = por %p133, %p134
      %p136 = scmp.ne.s32.totalorder %s127, %s128
      %p137 = scmp.eq.s32.totalorder %s33, 0
      %p138 = por %p136, %p137
      %p139 = scmp.ne.s32.totalorder %s127, %s128
      %p140 = scmp.eq.s32.totalorder %s34, 1
      %p141 = por %p139, %p140
      %p143 = scmp.ne.s32.totalorder %s128, %s142
      %p144 = scmp.eq.s32.totalorder %s34, 0
      %p145 = por %p143, %p144
      %s147 = sadd.s32 %s146, 1
      %p150 = scmp.eq.s32.totalorder %s28, 1
      %p151 = scmp.ne.s32.totalorder %s146, %s148
      %p152 = scmp.eq.s32.totalorder %s28, 0
      %p153 = por %p151, %p152
      %p154 = scmp.ne.s32.totalorder %s146, %s148
      %p155 = scmp.eq.s32.totalorder %s33, 1
      %p156 = por %p154, %p155
      %p157 = scmp.ne.s32.totalorder %s148, %s149
      %p158 = scmp.eq.s32.totalorder %s33, 0
      %p159 = por %p157, %p158
      %p160 = scmp.ne.s32.totalorder %s148, %s149
      %p161 = scmp.eq.s32.totalorder %s34, 1
      %p162 = por %p160, %p161
      %p164 = scmp.ne.s32.totalorder %s149, %s163
      %p165 = scmp.eq.s32.totalorder %s34, 0
      %p166 = por %p164, %p165
      %s168 = sadd.s32 %s167, 1
      %p171 = scmp.eq.s32.totalorder %s28, 1
      %p172 = scmp.ne.s32.totalorder %s167, %s169
      %p173 = scmp.eq.s32.totalorder %s28, 0
      %p174 = por %p172, %p173
      %p175 = scmp.ne.s32.totalorder %s167, %s169
      %p176 = scmp.eq.s32.totalorder %s33, 1
      %p177 = por %p175, %p176
      %p178 = scmp.ne.s32.totalorder %s169, %s170
      %p179 = scmp.eq.s32.totalorder %s33, 0
      %p180 = por %p178, %p179
      %p181 = scmp.ne.s32.totalorder %s169, %s170
      %p182 = scmp.eq.s32.totalorder %s34, 1
      %p183 = por %p181, %p182
      %p185 = scmp.ne.s32.totalorder %s170, %s184
      %p186 = scmp.eq.s32.totalorder %s34, 0
      %p187 = por %p185, %p186
      %s189 = sadd.s32 %s188, 1
      %p192 = scmp.eq.s32.totalorder %s28, 1
      %p193 = scmp.ne.s32.totalorder %s188, %s190
      %p194 = scmp.eq.s32.totalorder %s28, 0
      %p195 = por %p193, %p194
      %p196 = scmp.ne.s32.totalorder %s188, %s190
      %p197 = scmp.eq.s32.totalorder %s33, 1
      %p198 = por %p196, %p197
      %p199 = scmp.ne.s32.totalorder %s190, %s191
      %p200 = scmp.eq.s32.totalorder %s33, 0
      %p201 = por %p199, %p200
      %p202 = scmp.ne.s32.totalorder %s190, %s191
      %p203 = scmp.eq.s32.totalorder %s34, 1
      %p204 = por %p202, %p203
      %p206 = scmp.ne.s32.totalorder %s191, %s205
      %p207 = scmp.eq.s32.totalorder %s34, 0
      %p208 = por %p206, %p207
      %s210 = sadd.s32 %s209, 1
      %p213 = scmp.eq.s32.totalorder %s28, 1
      %p214 = scmp.ne.s32.totalorder %s209, %s211
      %p215 = scmp.eq.s32.totalorder %s28, 0
      %p216 = por %p214, %p215
      %p217 = scmp.ne.s32.totalorder %s209, %s211
      %p218 = scmp.eq.s32.totalorder %s33, 1
      %p219 = por %p217, %p218
      %p220 = scmp.ne.s32.totalorder %s211, %s212
      %p221 = scmp.eq.s32.totalorder %s33, 0
      %p222 = por %p220, %p221
      %p223 = scmp.ne.s32.totalorder %s211, %s212
      %p224 = scmp.eq.s32.totalorder %s34, 1
      %p225 = por %p223, %p224
      %p227 = scmp.ne.s32.totalorder %s212, %s226
      %p228 = scmp.eq.s32.totalorder %s34, 0
      %p229 = por %p227, %p228
      %s231 = sadd.s32 %s230, 1
      %p234 = scmp.eq.s32.totalorder %s28, 1
      %p235 = scmp.ne.s32.totalorder %s230, %s232
      %p236 = scmp.eq.s32.totalorder %s28, 0
      %p237 = por %p235, %p236
      %p238 = scmp.ne.s32.totalorder %s230, %s232
      %p239 = scmp.eq.s32.totalorder %s33, 1
      %p240 = por %p238, %p239
      %p241 = scmp.ne.s32.totalorder %s232, %s233
      %p242 = scmp.eq.s32.totalorder %s33, 0
      %p243 = por %p241, %p242
      %p244 = scmp.ne.s32.totalorder %s232, %s233
      %p245 = scmp.eq.s32.totalorder %s34, 1
      %p246 = por %p244, %p245
      %p248 = scmp.ne.s32.totalorder %s233, %s247
      %p249 = scmp.eq.s32.totalorder %s34, 0
      %p250 = por %p248, %p249
      %s252 = sadd.s32 %s251, 1
      %p255 = scmp.eq.s32.totalorder %s28, 1
      %p256 = scmp.ne.s32.totalorder %s251, %s253
      %p257 = scmp.eq.s32.totalorder %s28, 0
      %p258 = por %p256, %p257
      %p259 = scmp.ne.s32.totalorder %s251, %s253
      %p260 = scmp.eq.s32.totalorder %s33, 1
      %p261 = por %p259, %p260
      %p262 = scmp.ne.s32.totalorder %s253, %s254
      %p263 = scmp.eq.s32.totalorder %s33, 0
      %p264 = por %p262, %p263
      %p265 = scmp.ne.s32.totalorder %s253, %s254
      %p266 = scmp.eq.s32.totalorder %s34, 1
      %p267 = por %p265, %p266
      %p269 = scmp.ne.s32.totalorder %s254, %s268
      %p270 = scmp.eq.s32.totalorder %s34, 0
      %p271 = por %p269, %p270
      %s273 = sadd.s32 %s272, 1
      %p276 = scmp.eq.s32.totalorder %s28, 1
      %p277 = scmp.ne.s32.totalorder %s272, %s274
      %p278 = scmp.eq.s32.totalorder %s28, 0
      %p279 = por %p277, %p278
      %p280 = scmp.ne.s32.totalorder %s272, %s274
      %p281 = scmp.eq.s32.totalorder %s33, 1
      %p282 = por %p280, %p281
      %p283 = scmp.ne.s32.totalorder %s274, %s275
      %p284 = scmp.eq.s32.totalorder %s33, 0
      %p285 = por %p283, %p284
      %p286 = scmp.ne.s32.totalorder %s274, %s275
      %p287 = scmp.eq.s32.totalorder %s34, 1
      %p288 = por %p286, %p287
      %p290 = scmp.ne.s32.totalorder %s275, %s289
      %p291 = scmp.eq.s32.totalorder %s34, 0
      %p292 = por %p290, %p291
      %s294 = sadd.s32 %s293, 1
      %p297 = scmp.eq.s32.totalorder %s28, 1
      %p298 = scmp.ne.s32.totalorder %s293, %s295
      %p299 = scmp.eq.s32.totalorder %s28, 0
      %p300 = por %p298, %p299
      %p301 = scmp.ne.s32.totalorder %s293, %s295
      %p302 = scmp.eq.s32.totalorder %s33, 1
      %p303 = por %p301, %p302
      %p304 = scmp.ne.s32.totalorder %s295, %s296
      %p305 = scmp.eq.s32.totalorder %s33, 0
      %p306 = por %p304, %p305
      %p307 = scmp.ne.s32.totalorder %s295, %s296
      %p308 = scmp.eq.s32.totalorder %s34, 1
      %p309 = por %p307, %p308
      %p311 = scmp.ne.s32.totalorder %s296, %s310
      %p312 = scmp.eq.s32.totalorder %s34, 0
      %p313 = por %p311, %p312
      %s314 = ssub.s32 %s28, %s35
      %p315 = scmp.eq.s32.totalorder %s314, 0
      %s317 = sadd.s32 %s316, 1
      %s318 = scalar_select %p315, %s316, %s317
      %p321 = pneg %p315
      %p322 = scmp.eq.s32.totalorder %s28, 1
      %p323 = por %p321, %p322
      %p324 = scmp.ne.s32.totalorder %s316, %s319
      %p325 = scmp.eq.s32.totalorder %s28, 0
      %p326 = por %p324, %p325
      %p327 = scmp.ne.s32.totalorder %s316, %s319
      %p328 = scmp.eq.s32.totalorder %s33, 1
      %p329 = por %p327, %p328
      %p330 = scmp.ne.s32.totalorder %s319, %s320
      %p331 = scmp.eq.s32.totalorder %s33, 0
      %p332 = por %p330, %p331
      %p333 = scmp.ne.s32.totalorder %s319, %s320
      %p334 = scmp.eq.s32.totalorder %s34, 1
      %p335 = por %p333, %p334
      %p337 = scmp.ne.s32.totalorder %s320, %s336
      %p338 = scmp.eq.s32.totalorder %s34, 0
      %p339 = por %p337, %p338
      %p340 = scmp.le.s32.totalorder 1, %s28
      %p341 = scmp.lt.s32.totalorder %s28, 3
      %p342 = pnand %p340, %p341
      %p343 = pneg %p342
      // Predicated region
      $region9: #{tpu_custom_call.1} parent=5 // pred_check
        _
      $region10: #{tpu_custom_call.1} parent=5 // pred_check_branch
        %345 = sbr.rel (%p342) target = $region12
      $region11: #{tpu_custom_call.1} parent=5 // pred_region
        %s346 = ssub.s32 %s28, 1
        // Predicated region
        $region13: #{tpu_custom_call.1} parent=11 // pred_check
          %p347 = pneg %p75
        $region14: #{tpu_custom_call.1} parent=11 // pred_check_branch
          %349 = sbr.rel (%p347) target = $region16
        $region15: #{tpu_custom_call.1} parent=11 // pred_region
          _
        $region16: #{tpu_custom_call.1} parent=11 // pred_fallthru
          _
        // Predicated region
        $region17: #{tpu_custom_call.1} parent=11 // pred_check
          %p350 = pneg %p96
        $region18: #{tpu_custom_call.1} parent=11 // pred_check_branch
          %352 = sbr.rel (%p350) target = $region20
        $region19: #{tpu_custom_call.1} parent=11 // pred_region
          _
        $region20: #{tpu_custom_call.1} parent=11 // pred_fallthru
          _
        // Predicated region
        $region21: #{tpu_custom_call.1} parent=11 // pred_check
          %p353 = pneg %p117
        $region22: #{tpu_custom_call.1} parent=11 // pred_check_branch
          %355 = sbr.rel (%p353) target = $region24
        $region23: #{tpu_custom_call.1} parent=11 // pred_region
          _
        $region24: #{tpu_custom_call.1} parent=11 // pred_fallthru
          _
        // Predicated region
        $region25: #{tpu_custom_call.1} parent=11 // pred_check
          %p356 = pneg %p138
        $region26: #{tpu_custom_call.1} parent=11 // pred_check_branch
          %358 = sbr.rel (%p356) target = $region28
        $region27: #{tpu_custom_call.1} parent=11 // pred_region
          %s360 = ssub.s32 192, 192
          %361 = vsyncadd [#allocation10], %s360
          %s362 = sshll.u32 [#allocation9], 4
          %s363 = int_to_ptr.vmem [resolvable:$true] %s362
          %368 = dma.hbm_to_vmem [thread:$0]  %s4, 192, %s363, [#allocation10], 64, 64, 4
        $region28: #{tpu_custom_call.1} parent=11 // pred_fallthru
          _
        // Predicated region
        $region29: #{tpu_custom_call.1} parent=11 // pred_check
          %p369 = pneg %p159
        $region30: #{tpu_custom_call.1} parent=11 // pred_check_branch
          %371 = sbr.rel (%p369) target = $region32
        $region31: #{tpu_custom_call.1} parent=11 // pred_region
          %s373 = ssub.s32 16, 16
          %374 = vsyncadd [#allocation10], %s373
          %s376 = sshll.u32 [#allocation11], 4
          %s377 = int_to_ptr.vmem [resolvable:$true] %s376
          %379 = dma.hbm_to_vmem [thread:$0]  %s5, 16, %s377, [#allocation10]
        $region32: #{tpu_custom_call.1} parent=11 // pred_fallthru
          _
        // Predicated region
        $region33: #{tpu_custom_call.1} parent=11 // pred_check
          %p380 = pneg %p180
        $region34: #{tpu_custom_call.1} parent=11 // pred_check_branch
          %382 = sbr.rel (%p380) target = $region36
        $region35: #{tpu_custom_call.1} parent=11 // pred_region
          _
        $region36: #{tpu_custom_call.1} parent=11 // pred_fallthru
          _
        // Predicated region
        $region37: #{tpu_custom_call.1} parent=11 // pred_check
          %p383 = pneg %p201
        $region38: #{tpu_custom_call.1} parent=11 // pred_check_branch
          %385 = sbr.rel (%p383) target = $region40
        $region39: #{tpu_custom_call.1} parent=11 // pred_region
          _
        $region40: #{tpu_custom_call.1} parent=11 // pred_fallthru
          _
        // Predicated region
        $region41: #{tpu_custom_call.1} parent=11 // pred_check
          %p386 = pneg %p222
        $region42: #{tpu_custom_call.1} parent=11 // pred_check_branch
          %388 = sbr.rel (%p386) target = $region44
        $region43: #{tpu_custom_call.1} parent=11 // pred_region
          %s390 = ssub.s32 16, 16
          %391 = vsyncadd [#allocation13], %s390
          %s393 = sshll.u32 [#allocation12], 4
          %s394 = int_to_ptr.vmem [resolvable:$true] %s393
          %396 = dma.hbm_to_vmem [thread:$0]  %s8, 16, %s394, [#allocation13]
        $region44: #{tpu_custom_call.1} parent=11 // pred_fallthru
          _
        // Predicated region
        $region45: #{tpu_custom_call.1} parent=11 // pred_check
          %p397 = pneg %p243
        $region46: #{tpu_custom_call.1} parent=11 // pred_check_branch
          %399 = sbr.rel (%p397) target = $region48
        $region47: #{tpu_custom_call.1} parent=11 // pred_region
          %s401 = ssub.s32 16, 16
          %402 = vsyncadd [#allocation13], %s401
          %s404 = sshll.u32 [#allocation14], 4
          %s405 = int_to_ptr.vmem [resolvable:$true] %s404
          %407 = dma.hbm_to_vmem [thread:$0]  %s9, 16, %s405, [#allocation13]
        $region48: #{tpu_custom_call.1} parent=11 // pred_fallthru
          _
        // Predicated region
        $region49: #{tpu_custom_call.1} parent=11 // pred_check
          %p408 = pneg %p264
        $region50: #{tpu_custom_call.1} parent=11 // pred_check_branch
          %410 = sbr.rel (%p408) target = $region52
        $region51: #{tpu_custom_call.1} parent=11 // pred_region
          _
        $region52: #{tpu_custom_call.1} parent=11 // pred_fallthru
          _
        // Predicated region
        $region53: #{tpu_custom_call.1} parent=11 // pred_check
          %p411 = pneg %p285
        $region54: #{tpu_custom_call.1} parent=11 // pred_check_branch
          %413 = sbr.rel (%p411) target = $region56
        $region55: #{tpu_custom_call.1} parent=11 // pred_region
          %s415 = ssub.s32 192, 192
          %416 = vsyncadd [#allocation16], %s415
          %s417 = sshll.u32 [#allocation15], 4
          %s418 = int_to_ptr.vmem [resolvable:$true] %s417
          %423 = dma.hbm_to_vmem [thread:$0]  %s11, 192, %s418, [#allocation16], 64, 64, 4
        $region56: #{tpu_custom_call.1} parent=11 // pred_fallthru
          _
        // Predicated region
        $region57: #{tpu_custom_call.1} parent=11 // pred_check
          %p424 = pneg %p306
        $region58: #{tpu_custom_call.1} parent=11 // pred_check_branch
          %426 = sbr.rel (%p424) target = $region60
        $region59: #{tpu_custom_call.1} parent=11 // pred_region
          _
        $region60: #{tpu_custom_call.1} parent=11 // pred_fallthru
          _
      $region12: #{tpu_custom_call.1} parent=5 // pred_fallthru
        _
      %p427 = scmp.lt.s32.totalorder %s28, 2
      // Predicated region
      $region61: #{tpu_custom_call.1} parent=5 // pred_check
        %p428 = pneg %p427
      $region62: #{tpu_custom_call.1} parent=5 // pred_check_branch
        %430 = sbr.rel (%p428) target = $region64
      $region63: #{tpu_custom_call.1} parent=5 // pred_region
        // Predicated region
        $region65: #{tpu_custom_call.1} parent=63 // pred_check
          %p431 = pneg %p48
        $region66: #{tpu_custom_call.1} parent=63 // pred_check_branch
          %433 = sbr.rel (%p431) target = $region68
        $region67: #{tpu_custom_call.1} parent=63 // pred_region
          %s434 = sand.u32 %s38, 1
          %s435 = scalar_lea.sflag [#allocation7], %s434
          %s436 = sand.u32 %s38, 1
          %s437 = smul.addr %s436, 256
          %s438 = scalar_lea.vmem [#allocation6], %s437
          %s440 = ssub.s32 4096, 4096
          %441 = vsyncadd %s435, %s440
          %s442 = smul.addr %s28, 32
          %s443 = smul.addr %s442, 128
          %s444 = scalar_lea.hbm %s0, %s443
          %s445 = sshll.u32 %s438, 4
          %s446 = int_to_ptr.vmem [resolvable:$true] %s445
          %451 = dma.hbm_to_vmem [thread:$0]  %s444, 4096, %s446, %s435, 128, 128, 8
        $region68: #{tpu_custom_call.1} parent=63 // pred_fallthru
          _
      $region64: #{tpu_custom_call.1} parent=5 // pred_fallthru
        _
      %p452 = scmp.le.s32.totalorder 1, %s28
      %p453 = scmp.lt.s32.totalorder %s28, 3
      %p454 = pnand %p452, %p453
      %p455 = pneg %p454
      // Predicated region
      $region69: #{tpu_custom_call.1} parent=5 // pred_check
        _
      $region70: #{tpu_custom_call.1} parent=5 // pred_check_branch
        %457 = sbr.rel (%p454) target = $region72
      $region71: #{tpu_custom_call.1} parent=5 // pred_region
        %s458 = ssub.s32 %s28, 1
        %s459 = sand.u32 %s41, 1
        %s460 = scalar_lea.sflag [#allocation7], %s459
        %s461 = sand.u32 %s41, 1
        %s462 = smul.addr %s461, 256
        %s463 = scalar_lea.vmem [#allocation6], %s462
        // Predicated region
        $region73: #{tpu_custom_call.1} parent=71 // pred_check
          %p464 = pneg %p54
        $region74: #{tpu_custom_call.1} parent=71 // pred_check_branch
          %466 = sbr.rel (%p464) target = $region76
        $region75: #{tpu_custom_call.1} parent=71 // pred_region
          %467 = dma.done %s460, 4096
        $region76: #{tpu_custom_call.1} parent=71 // pred_fallthru
          _
        // Predicated region
        $region77: #{tpu_custom_call.1} parent=71 // pred_check
          %p468 = pneg %p138
        $region78: #{tpu_custom_call.1} parent=71 // pred_check_branch
          %470 = sbr.rel (%p468) target = $region80
        $region79: #{tpu_custom_call.1} parent=71 // pred_region
          %471 = dma.done [#allocation10], 192
        $region80: #{tpu_custom_call.1} parent=71 // pred_fallthru
          _
        // Predicated region
        $region81: #{tpu_custom_call.1} parent=71 // pred_check
          %p472 = pneg %p159
        $region82: #{tpu_custom_call.1} parent=71 // pred_check_branch
          %474 = sbr.rel (%p472) target = $region84
        $region83: #{tpu_custom_call.1} parent=71 // pred_region
          %475 = dma.done [#allocation10], 16
        $region84: #{tpu_custom_call.1} parent=71 // pred_fallthru
          _
        // Predicated region
        $region85: #{tpu_custom_call.1} parent=71 // pred_check
          %p476 = pneg %p222
        $region86: #{tpu_custom_call.1} parent=71 // pred_check_branch
          %478 = sbr.rel (%p476) target = $region88
        $region87: #{tpu_custom_call.1} parent=71 // pred_region
          %479 = dma.done [#allocation13], 16
        $region88: #{tpu_custom_call.1} parent=71 // pred_fallthru
          _
        // Predicated region
        $region89: #{tpu_custom_call.1} parent=71 // pred_check
          %p480 = pneg %p243
        $region90: #{tpu_custom_call.1} parent=71 // pred_check_branch
          %482 = sbr.rel (%p480) target = $region92
        $region91: #{tpu_custom_call.1} parent=71 // pred_region
          %483 = dma.done [#allocation13], 16
        $region92: #{tpu_custom_call.1} parent=71 // pred_fallthru
          _
        // Predicated region
        $region93: #{tpu_custom_call.1} parent=71 // pred_check
          %p484 = pneg %p285
        $region94: #{tpu_custom_call.1} parent=71 // pred_check_branch
          %486 = sbr.rel (%p484) target = $region96
        $region95: #{tpu_custom_call.1} parent=71 // pred_region
          %487 = dma.done [#allocation16], 192
        $region96: #{tpu_custom_call.1} parent=71 // pred_fallthru
          _
        %s488 = sand.u32 %s41, 1
        %s489 = scalar_lea.sflag [#allocation7], %s488
        %s490 = sand.u32 %s41, 1
        %s491 = smul.addr %s490, 256
        %s492 = scalar_lea.vmem [#allocation6], %s491
        %p493 = pneg %p54
        %p494 = pneg %p51
        %p495 = pneg %p75
        %p496 = pneg %p72
        %p497 = pneg %p96
        %p498 = pneg %p93
        %p499 = pneg %p117
        %p500 = pneg %p114
        %p501 = pneg %p138
        %p502 = pneg %p135
        %p503 = pneg %p159
        %p504 = pneg %p156
        %p505 = pneg %p180
        %p506 = pneg %p177
        %p507 = pneg %p201
        %p508 = pneg %p198
        %p509 = pneg %p222
        %p510 = pneg %p219
        %p511 = pneg %p243
        %p512 = pneg %p240
        %p513 = pneg %p264
        %p514 = pneg %p261
        %p515 = pneg %p285
        %p516 = pneg %p282
        %p517 = pneg %p306
        %p518 = pneg %p303
        %p519 = pneg %p332
        %p520 = pneg %p329
        %s521 = sand.u32 %s319, 1
        %s522 = scalar_lea.sflag [#allocation8], %s521
        %s523 = sand.u32 %s319, 1
        %s524 = smul.addr %s523, 256
        %s525 = scalar_lea.vmem [#allocation17], %s524
        %p527 = scmp.eq.s32.totalorder %s33, 0
        // Predicated region
        $region97: #{tpu_custom_call.1} parent=71 // pred_check
          %p528 = pneg %p527
        $region98: #{tpu_custom_call.1} parent=71 // pred_check_branch
          %530 = sbr.rel (%p528) target = $region100
        $region99: #{tpu_custom_call.1} parent=71 // pred_region
          %vm531 = vcmask 785408
          %532 = vst.msk [vmem:[#allocation2] sm:$0xff] %vm531, 0.0
          %533 = vst.msk [vmem:[#allocation2 + $0x8] sm:$0xff] %vm531, 0.0
          %534 = vst.msk [vmem:[#allocation2 + $0x10] sm:$0xff] %vm531, 0.0
          %535 = vst.msk [vmem:[#allocation2 + $0x18] sm:$0xff] %vm531, 0.0
          %536 = vst.msk [vmem:[#allocation2 + $0x20] sm:$0xff] %vm531, 0.0
          %537 = vst.msk [vmem:[#allocation2 + $0x28] sm:$0xff] %vm531, 0.0
          %538 = vst.msk [vmem:[#allocation2 + $0x30] sm:$0xff] %vm531, 0.0
          %539 = vst.msk [vmem:[#allocation2 + $0x38] sm:$0xff] %vm531, 0.0
          %540 = vst.msk [vmem:[#allocation2 + $0x40] sm:$0xff] %vm531, 0.0
          %541 = vst.msk [vmem:[#allocation2 + $0x48] sm:$0xff] %vm531, 0.0
          %542 = vst.msk [vmem:[#allocation2 + $0x50] sm:$0xff] %vm531, 0.0
          %543 = vst.msk [vmem:[#allocation2 + $0x58] sm:$0xff] %vm531, 0.0
          %544 = vst.msk [vmem:[#allocation2 + $0x60] sm:$0xff] %vm531, 0.0
          %545 = vst.msk [vmem:[#allocation2 + $0x68] sm:$0xff] %vm531, 0.0
          %546 = vst.msk [vmem:[#allocation2 + $0x70] sm:$0xff] %vm531, 0.0
          %547 = vst.msk [vmem:[#allocation2 + $0x78] sm:$0xff] %vm531, 0.0
          %548 = vst.msk [vmem:[#allocation2 + $0x80] sm:$0xff] %vm531, 0.0
          %549 = vst.msk [vmem:[#allocation2 + $0x88] sm:$0xff] %vm531, 0.0
          %550 = vst.msk [vmem:[#allocation2 + $0x90] sm:$0xff] %vm531, 0.0
          %551 = vst.msk [vmem:[#allocation2 + $0x98] sm:$0xff] %vm531, 0.0
          %552 = vst.msk [vmem:[#allocation2 + $0xa0] sm:$0xff] %vm531, 0.0
          %553 = vst.msk [vmem:[#allocation2 + $0xa8] sm:$0xff] %vm531, 0.0
          %554 = vst.msk [vmem:[#allocation2 + $0xb0] sm:$0xff] %vm531, 0.0
          %555 = vst.msk [vmem:[#allocation2 + $0xb8] sm:$0xff] %vm531, 0.0
          %556 = vst.msk [vmem:[#allocation2 + $0xc0] sm:$0xff] %vm531, 0.0
          %557 = vst.msk [vmem:[#allocation2 + $0xc8] sm:$0xff] %vm531, 0.0
          %558 = vst.msk [vmem:[#allocation2 + $0xd0] sm:$0xff] %vm531, 0.0
          %559 = vst.msk [vmem:[#allocation2 + $0xd8] sm:$0xff] %vm531, 0.0
          %560 = vst.msk [vmem:[#allocation2 + $0xe0] sm:$0xff] %vm531, 0.0
          %561 = vst.msk [vmem:[#allocation2 + $0xe8] sm:$0xff] %vm531, 0.0
          %562 = vst.msk [vmem:[#allocation2 + $0xf0] sm:$0xff] %vm531, 0.0
          %563 = vst.msk [vmem:[#allocation2 + $0xf8] sm:$0xff] %vm531, 0.0
          %564 = vst.msk [vmem:[#allocation2 + $0x100] sm:$0xff] %vm531, 0.0
          %565 = vst.msk [vmem:[#allocation2 + $0x108] sm:$0xff] %vm531, 0.0
          %566 = vst.msk [vmem:[#allocation2 + $0x110] sm:$0xff] %vm531, 0.0
          %567 = vst.msk [vmem:[#allocation2 + $0x118] sm:$0xff] %vm531, 0.0
          %568 = vst.msk [vmem:[#allocation2 + $0x120] sm:$0xff] %vm531, 0.0
          %569 = vst.msk [vmem:[#allocation2 + $0x128] sm:$0xff] %vm531, 0.0
          %570 = vst.msk [vmem:[#allocation2 + $0x130] sm:$0xff] %vm531, 0.0
          %571 = vst.msk [vmem:[#allocation2 + $0x138] sm:$0xff] %vm531, 0.0
          %572 = vst.msk [vmem:[#allocation2 + $0x140] sm:$0xff] %vm531, 0.0
          %573 = vst.msk [vmem:[#allocation2 + $0x148] sm:$0xff] %vm531, 0.0
          %574 = vst.msk [vmem:[#allocation2 + $0x150] sm:$0xff] %vm531, 0.0
          %575 = vst.msk [vmem:[#allocation2 + $0x158] sm:$0xff] %vm531, 0.0
          %576 = vst.msk [vmem:[#allocation2 + $0x160] sm:$0xff] %vm531, 0.0
          %577 = vst.msk [vmem:[#allocation2 + $0x168] sm:$0xff] %vm531, 0.0
          %578 = vst.msk [vmem:[#allocation2 + $0x170] sm:$0xff] %vm531, 0.0
          %579 = vst.msk [vmem:[#allocation2 + $0x178] sm:$0xff] %vm531, 0.0
          %580 = vst.msk [vmem:[#allocation2 + $0x180] sm:$0xff] %vm531, 0.0
          %581 = vst.msk [vmem:[#allocation2 + $0x188] sm:$0xff] %vm531, 0.0
          %582 = vst.msk [vmem:[#allocation2 + $0x190] sm:$0xff] %vm531, 0.0
          %583 = vst.msk [vmem:[#allocation2 + $0x198] sm:$0xff] %vm531, 0.0
          %584 = vst.msk [vmem:[#allocation2 + $0x1a0] sm:$0xff] %vm531, 0.0
          %585 = vst.msk [vmem:[#allocation2 + $0x1a8] sm:$0xff] %vm531, 0.0
          %586 = vst.msk [vmem:[#allocation2 + $0x1b0] sm:$0xff] %vm531, 0.0
          %587 = vst.msk [vmem:[#allocation2 + $0x1b8] sm:$0xff] %vm531, 0.0
          %588 = vst.msk [vmem:[#allocation2 + $0x1c0] sm:$0xff] %vm531, 0.0
          %589 = vst.msk [vmem:[#allocation2 + $0x1c8] sm:$0xff] %vm531, 0.0
          %590 = vst.msk [vmem:[#allocation2 + $0x1d0] sm:$0xff] %vm531, 0.0
          %591 = vst.msk [vmem:[#allocation2 + $0x1d8] sm:$0xff] %vm531, 0.0
          %592 = vst.msk [vmem:[#allocation2 + $0x1e0] sm:$0xff] %vm531, 0.0
          %593 = vst.msk [vmem:[#allocation2 + $0x1e8] sm:$0xff] %vm531, 0.0
          %594 = vst.msk [vmem:[#allocation2 + $0x1f0] sm:$0xff] %vm531, 0.0
          %595 = vst.msk [vmem:[#allocation2 + $0x1f8] sm:$0xff] %vm531, 0.0
          %596 = vst.msk [vmem:[#allocation2 + $0x200] sm:$0xff] %vm531, 0.0
          %597 = vst.msk [vmem:[#allocation2 + $0x208] sm:$0xff] %vm531, 0.0
          %598 = vst.msk [vmem:[#allocation2 + $0x210] sm:$0xff] %vm531, 0.0
          %599 = vst.msk [vmem:[#allocation2 + $0x218] sm:$0xff] %vm531, 0.0
          %600 = vst.msk [vmem:[#allocation2 + $0x220] sm:$0xff] %vm531, 0.0
          %601 = vst.msk [vmem:[#allocation2 + $0x228] sm:$0xff] %vm531, 0.0
          %602 = vst.msk [vmem:[#allocation2 + $0x230] sm:$0xff] %vm531, 0.0
          %603 = vst.msk [vmem:[#allocation2 + $0x238] sm:$0xff] %vm531, 0.0
          %604 = vst [vmem:[#allocation3] sm:$0xff] 0.0
          %605 = vst [vmem:[#allocation3 + $0x8] sm:$0xff] 0.0
          %606 = vst [vmem:[#allocation3 + $0x10] sm:$0xff] 0.0
          %607 = vst [vmem:[#allocation3 + $0x18] sm:$0xff] 0.0
          %608 = vst [vmem:[#allocation3 + $0x20] sm:$0xff] 0.0
          %609 = vst [vmem:[#allocation3 + $0x28] sm:$0xff] 0.0
          %610 = vst [vmem:[#allocation3 + $0x30] sm:$0xff] 0.0
          %611 = vst [vmem:[#allocation3 + $0x38] sm:$0xff] 0.0
          %612 = vst [vmem:[#allocation3 + $0x40] sm:$0xff] 0.0
          %613 = vst [vmem:[#allocation3 + $0x48] sm:$0xff] 0.0
          %614 = vst [vmem:[#allocation3 + $0x50] sm:$0xff] 0.0
          %615 = vst [vmem:[#allocation3 + $0x58] sm:$0xff] 0.0
          %616 = vst [vmem:[#allocation3 + $0x60] sm:$0xff] 0.0
          %617 = vst [vmem:[#allocation3 + $0x68] sm:$0xff] 0.0
          %618 = vst [vmem:[#allocation3 + $0x70] sm:$0xff] 0.0
          %619 = vst [vmem:[#allocation3 + $0x78] sm:$0xff] 0.0
          %620 = vst [vmem:[#allocation3 + $0x80] sm:$0xff] 0.0
          %621 = vst [vmem:[#allocation3 + $0x88] sm:$0xff] 0.0
          %622 = vst [vmem:[#allocation3 + $0x90] sm:$0xff] 0.0
          %623 = vst [vmem:[#allocation3 + $0x98] sm:$0xff] 0.0
          %624 = vst [vmem:[#allocation3 + $0xa0] sm:$0xff] 0.0
          %625 = vst [vmem:[#allocation3 + $0xa8] sm:$0xff] 0.0
          %626 = vst [vmem:[#allocation3 + $0xb0] sm:$0xff] 0.0
          %627 = vst [vmem:[#allocation3 + $0xb8] sm:$0xff] 0.0
          %628 = vst [vmem:[#allocation3 + $0xc0] sm:$0xff] 0.0
          %629 = vst [vmem:[#allocation3 + $0xc8] sm:$0xff] 0.0
          %630 = vst [vmem:[#allocation3 + $0xd0] sm:$0xff] 0.0
          %631 = vst [vmem:[#allocation3 + $0xd8] sm:$0xff] 0.0
          %632 = vst [vmem:[#allocation3 + $0xe0] sm:$0xff] 0.0
          %633 = vst [vmem:[#allocation3 + $0xe8] sm:$0xff] 0.0
          %634 = vst [vmem:[#allocation3 + $0xf0] sm:$0xff] 0.0
          %635 = vst [vmem:[#allocation3 + $0xf8] sm:$0xff] 0.0
          %636 = vst [vmem:[#allocation3 + $0x100] sm:$0xff] 0.0
          %637 = vst [vmem:[#allocation3 + $0x108] sm:$0xff] 0.0
          %638 = vst [vmem:[#allocation3 + $0x110] sm:$0xff] 0.0
          %639 = vst [vmem:[#allocation3 + $0x118] sm:$0xff] 0.0
          %640 = vst [vmem:[#allocation3 + $0x120] sm:$0xff] 0.0
          %641 = vst [vmem:[#allocation3 + $0x128] sm:$0xff] 0.0
          %642 = vst [vmem:[#allocation3 + $0x130] sm:$0xff] 0.0
          %643 = vst [vmem:[#allocation3 + $0x138] sm:$0xff] 0.0
          %644 = vst [vmem:[#allocation3 + $0x140] sm:$0xff] 0.0
          %645 = vst [vmem:[#allocation3 + $0x148] sm:$0xff] 0.0
          %646 = vst [vmem:[#allocation3 + $0x150] sm:$0xff] 0.0
          %647 = vst [vmem:[#allocation3 + $0x158] sm:$0xff] 0.0
          %648 = vst [vmem:[#allocation3 + $0x160] sm:$0xff] 0.0
          %649 = vst [vmem:[#allocation3 + $0x168] sm:$0xff] 0.0
          %650 = vst [vmem:[#allocation3 + $0x170] sm:$0xff] 0.0
          %651 = vst [vmem:[#allocation3 + $0x178] sm:$0xff] 0.0
          %652 = vst [vmem:[#allocation3 + $0x180] sm:$0xff] 0.0
          %653 = vst [vmem:[#allocation3 + $0x188] sm:$0xff] 0.0
          %654 = vst [vmem:[#allocation3 + $0x190] sm:$0xff] 0.0
          %655 = vst [vmem:[#allocation3 + $0x198] sm:$0xff] 0.0
          %656 = vst [vmem:[#allocation3 + $0x1a0] sm:$0xff] 0.0
          %657 = vst [vmem:[#allocation3 + $0x1a8] sm:$0xff] 0.0
          %658 = vst [vmem:[#allocation3 + $0x1b0] sm:$0xff] 0.0
          %659 = vst [vmem:[#allocation3 + $0x1b8] sm:$0xff] 0.0
          %660 = vst [vmem:[#allocation3 + $0x1c0] sm:$0xff] 0.0
          %661 = vst [vmem:[#allocation3 + $0x1c8] sm:$0xff] 0.0
          %662 = vst [vmem:[#allocation3 + $0x1d0] sm:$0xff] 0.0
          %663 = vst [vmem:[#allocation3 + $0x1d8] sm:$0xff] 0.0
          %664 = vst [vmem:[#allocation3 + $0x1e0] sm:$0xff] 0.0
          %665 = vst [vmem:[#allocation3 + $0x1e8] sm:$0xff] 0.0
          %666 = vst [vmem:[#allocation3 + $0x1f0] sm:$0xff] 0.0
          %667 = vst [vmem:[#allocation3 + $0x1f8] sm:$0xff] 0.0
          %668 = vst [vmem:[#allocation3 + $0x200] sm:$0xff] 0.0
          %669 = vst [vmem:[#allocation3 + $0x208] sm:$0xff] 0.0
          %670 = vst [vmem:[#allocation3 + $0x210] sm:$0xff] 0.0
          %671 = vst [vmem:[#allocation3 + $0x218] sm:$0xff] 0.0
          %672 = vst [vmem:[#allocation3 + $0x220] sm:$0xff] 0.0
          %673 = vst [vmem:[#allocation3 + $0x228] sm:$0xff] 0.0
          %674 = vst [vmem:[#allocation3 + $0x230] sm:$0xff] 0.0
          %675 = vst [vmem:[#allocation3 + $0x238] sm:$0xff] 0.0
        $region100: #{tpu_custom_call.1} parent=71 // pred_fallthru
          _
        %v676 = vld [vmem:[%s1] sm:$0x1]
        %v677 = vld [vmem:[%s2] sm:$0x1]
        %v678 = vld [vmem:[#allocation12] sm:$0x1]
        %v679 = vld [vmem:[#allocation14] sm:$0x1]
        %v680 = vld [vmem:[#allocation11] sm:$0x1]
        %v681 = vld [vmem:[%s6] sm:$0xff]
        %v682 = vld [vmem:[%s6 + $0x8] sm:$0xff]
        %v683 = vld [vmem:[%s6 + $0x10] sm:$0xff]
        %v684 = vld [vmem:[%s6 + $0x18] sm:$0xff]
        %v685 = vld [vmem:[%s463] sm:$0xff]
        %v686 = vld [vmem:[%s463 + $0x8] sm:$0xff]
        %v687 = vld [vmem:[%s463 + $0x10] sm:$0xff]
        %v688 = vld [vmem:[%s463 + $0x18] sm:$0xff]
        %v689 = vld [vmem:[%s463 + $0x20] sm:$0xff]
        %v690 = vld [vmem:[%s463 + $0x28] sm:$0xff]
        %v691 = vld [vmem:[%s463 + $0x30] sm:$0xff]
        %v692 = vld [vmem:[%s463 + $0x38] sm:$0xff]
        %vm693 = vcmask 261120
        %v694 = vsel %vm693, %v685, 0.0
        %695 = vadd.xlane.f32.xlu0 %v694
        %v696 = vpop.xlane.xlu0 %695
        %v697 = vsel %vm693, %v686, 0.0
        %698 = vadd.xlane.f32.xlu0 %v697
        %v699 = vpop.xlane.xlu0 %698
        %v700 = vsel %vm693, %v687, 0.0
        %701 = vadd.xlane.f32.xlu0 %v700
        %v702 = vpop.xlane.xlu0 %701
        %v703 = vsel %vm693, %v688, 0.0
        %704 = vadd.xlane.f32.xlu0 %v703
        %v705 = vpop.xlane.xlu0 %704
        %v706 = vsel %vm693, %v689, 0.0
        %707 = vadd.xlane.f32.xlu0 %v706
        %v708 = vpop.xlane.xlu0 %707
        %v709 = vsel %vm693, %v690, 0.0
        %710 = vadd.xlane.f32.xlu0 %v709
        %v711 = vpop.xlane.xlu0 %710
        %v712 = vsel %vm693, %v691, 0.0
        %713 = vadd.xlane.f32.xlu0 %v712
        %v714 = vpop.xlane.xlu0 %713
        %v715 = vsel %vm693, %v692, 0.0
        %716 = vadd.xlane.f32.xlu0 %v715
        %v717 = vpop.xlane.xlu0 %716
        %v718 = vrcp.pop 32.0
        %v719 = vmul.f32 %v696, %v718
        %v720 = vmul.f32 %v699, %v718
        %v721 = vmul.f32 %v702, %v718
        %v722 = vmul.f32 %v705, %v718
        %v723 = vmul.f32 %v708, %v718
        %v724 = vmul.f32 %v711, %v718
        %v725 = vmul.f32 %v714, %v718
        %v726 = vmul.f32 %v717, %v718
        %v727 = vsub.f32 %v685, %v719
        %v728 = vsub.f32 %v686, %v720
        %v729 = vsub.f32 %v687, %v721
        %v730 = vsub.f32 %v688, %v722
        %v731 = vsub.f32 %v689, %v723
        %v732 = vsub.f32 %v690, %v724
        %v733 = vsub.f32 %v691, %v725
        %v734 = vsub.f32 %v692, %v726
        %v735 = vmul.f32 %v727, %v727
        %v736 = vmul.f32 %v728, %v728
        %v737 = vmul.f32 %v729, %v729
        %v738 = vmul.f32 %v730, %v730
        %v739 = vmul.f32 %v731, %v731
        %v740 = vmul.f32 %v732, %v732
        %v741 = vmul.f32 %v733, %v733
        %v742 = vmul.f32 %v734, %v734
        %v743 = vsel %vm693, %v735, 0.0
        %744 = vadd.xlane.f32.xlu0 %v743
        %v745 = vpop.xlane.xlu0 %744
        %v746 = vsel %vm693, %v736, 0.0
        %747 = vadd.xlane.f32.xlu0 %v746
        %v748 = vpop.xlane.xlu0 %747
        %v749 = vsel %vm693, %v737, 0.0
        %750 = vadd.xlane.f32.xlu0 %v749
        %v751 = vpop.xlane.xlu0 %750
        %v752 = vsel %vm693, %v738, 0.0
        %753 = vadd.xlane.f32.xlu0 %v752
        %v754 = vpop.xlane.xlu0 %753
        %v755 = vsel %vm693, %v739, 0.0
        %756 = vadd.xlane.f32.xlu0 %v755
        %v757 = vpop.xlane.xlu0 %756
        %v758 = vsel %vm693, %v740, 0.0
        %759 = vadd.xlane.f32.xlu0 %v758
        %v760 = vpop.xlane.xlu0 %759
        %v761 = vsel %vm693, %v741, 0.0
        %762 = vadd.xlane.f32.xlu0 %v761
        %v763 = vpop.xlane.xlu0 %762
        %v764 = vsel %vm693, %v742, 0.0
        %765 = vadd.xlane.f32.xlu0 %v764
        %v766 = vpop.xlane.xlu0 %765
        %v767 = vmul.f32 %v745, %v718
        %v768 = vmul.f32 %v748, %v718
        %v769 = vmul.f32 %v751, %v718
        %v770 = vmul.f32 %v754, %v718
        %v771 = vmul.f32 %v757, %v718
        %v772 = vmul.f32 %v760, %v718
        %v773 = vmul.f32 %v763, %v718
        %v774 = vmul.f32 %v766, %v718
        %v775 = vadd.f32 %v767, 1e-05
        %v776 = vadd.f32 %v768, 1e-05
        %v777 = vadd.f32 %v769, 1e-05
        %v778 = vadd.f32 %v770, 1e-05
        %v779 = vadd.f32 %v771, 1e-05
        %v780 = vadd.f32 %v772, 1e-05
        %v781 = vadd.f32 %v773, 1e-05
        %v782 = vadd.f32 %v774, 1e-05
        %v783 = vrsqrt.pop %v775
        %v784 = vrsqrt.pop %v776
        %v785 = vrsqrt.pop %v777
        %v786 = vrsqrt.pop %v778
        %v787 = vrsqrt.pop %v779
        %v788 = vrsqrt.pop %v780
        %v789 = vrsqrt.pop %v781
        %v790 = vrsqrt.pop %v782
        %v791 = vmul.f32 %v727, %v783
        %v792 = vmul.f32 %v728, %v784
        %v793 = vmul.f32 %v729, %v785
        %v794 = vmul.f32 %v730, %v786
        %v795 = vmul.f32 %v731, %v787
        %v796 = vmul.f32 %v732, %v788
        %v797 = vmul.f32 %v733, %v789
        %v798 = vmul.f32 %v734, %v790
        %v800 = vlaneseq
        %v801 = vshrl.u32 %v800, 7
        %v802 = vsub.s32 0, %v801
        %v803 = vrot.slane %v676, %v802
        %v805 = vmul.f32 %v791, %v803
        %v806 = vmul.f32 %v792, %v803
        %v807 = vmul.f32 %v793, %v803
        %v808 = vmul.f32 %v794, %v803
        %v809 = vmul.f32 %v795, %v803
        %v810 = vmul.f32 %v796, %v803
        %v811 = vmul.f32 %v797, %v803
        %v812 = vmul.f32 %v798, %v803
        %v814 = vlaneseq
        %v815 = vshrl.u32 %v814, 7
        %v816 = vsub.s32 0, %v815
        %v817 = vrot.slane %v677, %v816
        %v819 = vadd.f32 %v805, %v817
        %v820 = vadd.f32 %v806, %v817
        %v821 = vadd.f32 %v807, %v817
        %v822 = vadd.f32 %v808, %v817
        %v823 = vadd.f32 %v809, %v817
        %v824 = vadd.f32 %v810, %v817
        %v825 = vadd.f32 %v811, %v817
        %v826 = vadd.f32 %v812, %v817
        %v827 = vpack.c.bf16 %v820, %v819
        %v828 = vpack.c.bf16 %v822, %v821
        %v829 = vpack.c.bf16 %v824, %v823
        %v830 = vpack.c.bf16 %v826, %v825
        %v831 = vld [vmem:[%s3] sm:$0xf]
        %v832 = vld [vmem:[%s3 + $0x4] sm:$0xf]
        %v833 = vld [vmem:[%s3 + $0x8] sm:$0xf]
        %v834 = vld [vmem:[%s3 + $0xc] sm:$0xf]
        %v839 = vunpack.c.l.b16 %v831
        %v840 = vunpack.c.l.b16 %v832
        %v841 = vunpack.c.l.b16 %v833
        %v842 = vunpack.c.l.b16 %v834
        %v843 = vpack.c.b16 %v840, %v839
        %v844 = vpack.c.b16 %v842, %v841
        %v848 = vsel %vm693, %v827, 0
        %v851 = vsel %vm693, %v828, 0
        %v854 = vsel %vm693, %v829, 0
        %v857 = vsel %vm693, %v830, 0
        %859 = vmatprep.subr.bf16.mxu0 0
        %860 = vmatpush1.bf16.msra.mxu0 %v843
        %861 = vmatprep.subr.bf16.mxu0 0
        %862 = vmatpush1.bf16.msra.mxu0 %v844
        %863 = vmatprep.subr.bf16.mxu0 0
        %864 = vmatpush1.bf16.msra.mxu0 0
        %865 = vmatprep.subr.bf16.mxu0 0
        %866 = vmatpush1.bf16.msra.mxu0 0
        %867 = vmatprep.subr.bf16.mxu0 0
        %868 = vmatpush1.bf16.msra.mxu0 0
        %869 = vmatprep.subr.bf16.mxu0 0
        %870 = vmatpush1.bf16.msra.mxu0 0
        %871 = vmatprep.subr.bf16.mxu0 0
        %872 = vmatpush1.bf16.msra.mxu0 0
        %873 = vmatprep.subr.bf16.mxu0 0
        %874 = vmatpush1.bf16.msra.mxu0 0
        %875 = vmatprep.subr.bf16.mxu0 0
        %876 = vmatpush1.bf16.msra.mxu0 0
        %877 = vmatprep.subr.bf16.mxu0 0
        %878 = vmatpush1.bf16.msra.mxu0 0
        %879 = vmatprep.subr.bf16.mxu0 0
        %880 = vmatpush1.bf16.msra.mxu0 0
        %881 = vmatprep.subr.bf16.mxu0 0
        %882 = vmatpush1.bf16.msra.mxu0 0
        %883 = vmatprep.subr.bf16.mxu0 0
        %884 = vmatpush1.bf16.msra.mxu0 0
        %885 = vmatprep.subr.bf16.mxu0 0
        %886 = vmatpush1.bf16.msra.mxu0 0
        %887 = vmatprep.subr.bf16.mxu0 0
        %888 = vmatpush1.bf16.msra.mxu0 0
        %889 = vmatprep.subr.bf16.mxu0 0
        %890 = vmatpush1.bf16.msra.mxu0 0
        %891 = vmatprep.mubr.bf16.mxu0 0
        %892 = vmatmul.mubr.bf16.gmra.mrb[0].mxu0 %v848
        %v893 = vpop.f32.mrb[0].mxu0
        %v894 = vadd.f32 0.0, %v893
        %v895 = vpop.f32.mrb[0].mxu0
        %v896 = vpop.f32.mrb[0].mxu0
        %v897 = vadd.f32 0.0, %v896
        %v898 = vpop.f32.mrb[0].mxu0
        %899 = vmatprep.mubr.bf16.mxu0 0
        %900 = vmatmul.mubr.bf16.gmra.mrb[0].mxu0 %v851
        %v901 = vpop.f32.mrb[0].mxu0
        %v902 = vadd.f32 0.0, %v901
        %v903 = vpop.f32.mrb[0].mxu0
        %v904 = vpop.f32.mrb[0].mxu0
        %v905 = vadd.f32 0.0, %v904
        %v906 = vpop.f32.mrb[0].mxu0
        %907 = vmatprep.mubr.bf16.mxu0 0
        %908 = vmatmul.mubr.bf16.gmra.mrb[0].mxu0 %v854
        %v909 = vpop.f32.mrb[0].mxu0
        %v910 = vadd.f32 0.0, %v909
        %v911 = vpop.f32.mrb[0].mxu0
        %v912 = vpop.f32.mrb[0].mxu0
        %v913 = vadd.f32 0.0, %v912
        %v914 = vpop.f32.mrb[0].mxu0
        %915 = vmatprep.mubr.bf16.mxu0 0
        %916 = vmatmul.mubr.bf16.gmra.mrb[0].mxu0 %v857
        %v917 = vpop.f32.mrb[0].mxu0
        %v918 = vadd.f32 0.0, %v917
        %v919 = vpop.f32.mrb[0].mxu0
        %v920 = vpop.f32.mrb[0].mxu0
        %v921 = vadd.f32 0.0, %v920
        %v922 = vpop.f32.mrb[0].mxu0
        %923 = vdwg.mxu0
        %s924 = scalar_lea.vmem [#allocation2], 32
        %vm925 = vcmask 785408
        %926 = vst.msk [vmem:[%s924 + $0x8] sm:$0xff] %vm925, %v894
        %927 = vst.msk [vmem:[%s924 + $0x10] sm:$0xff] %vm925, %v897
        %928 = vst.msk [vmem:[%s924 + $0x28] sm:$0xff] %vm925, %v902
        %929 = vst.msk [vmem:[%s924 + $0x30] sm:$0xff] %vm925, %v905
        %930 = vst.msk [vmem:[%s924 + $0x48] sm:$0xff] %vm925, %v910
        %931 = vst.msk [vmem:[%s924 + $0x50] sm:$0xff] %vm925, %v913
        %932 = vst.msk [vmem:[%s924 + $0x68] sm:$0xff] %vm925, %v918
        %933 = vst.msk [vmem:[%s924 + $0x70] sm:$0xff] %vm925, %v921
        %s934 = scalar_lea.vmem %s463, 64 [#allocation6]
        %v935 = vld [vmem:[%s934] sm:$0xff]
        %v936 = vld [vmem:[%s934 + $0x8] sm:$0xff]
        %v937 = vld [vmem:[%s934 + $0x10] sm:$0xff]
        %v938 = vld [vmem:[%s934 + $0x18] sm:$0xff]
        %v939 = vld [vmem:[%s934 + $0x20] sm:$0xff]
        %v940 = vld [vmem:[%s934 + $0x28] sm:$0xff]
        %v941 = vld [vmem:[%s934 + $0x30] sm:$0xff]
        %v942 = vld [vmem:[%s934 + $0x38] sm:$0xff]
        %v943 = vsel %vm693, %v935, 0.0
        %944 = vadd.xlane.f32.xlu0 %v943
        %v945 = vpop.xlane.xlu0 %944
        %v946 = vsel %vm693, %v936, 0.0
        %947 = vadd.xlane.f32.xlu0 %v946
        %v948 = vpop.xlane.xlu0 %947
        %v949 = vsel %vm693, %v937, 0.0
        %950 = vadd.xlane.f32.xlu0 %v949
        %v951 = vpop.xlane.xlu0 %950
        %v952 = vsel %vm693, %v938, 0.0
        %953 = vadd.xlane.f32.xlu0 %v952
        %v954 = vpop.xlane.xlu0 %953
        %v955 = vsel %vm693, %v939, 0.0
        %956 = vadd.xlane.f32.xlu0 %v955
        %v957 = vpop.xlane.xlu0 %956
        %v958 = vsel %vm693, %v940, 0.0
        %959 = vadd.xlane.f32.xlu0 %v958
        %v960 = vpop.xlane.xlu0 %959
        %v961 = vsel %vm693, %v941, 0.0
        %962 = vadd.xlane.f32.xlu0 %v961
        %v963 = vpop.xlane.xlu0 %962
        %v964 = vsel %vm693, %v942, 0.0
        %965 = vadd.xlane.f32.xlu0 %v964
        %v966 = vpop.xlane.xlu0 %965
        %v967 = vmul.f32 %v945, %v718
        %v968 = vmul.f32 %v948, %v718
        %v969 = vmul.f32 %v951, %v718
        %v970 = vmul.f32 %v954, %v718
        %v971 = vmul.f32 %v957, %v718
        %v972 = vmul.f32 %v960, %v718
        %v973 = vmul.f32 %v963, %v718
        %v974 = vmul.f32 %v966, %v718
        %v975 = vsub.f32 %v935, %v967
        %v976 = vsub.f32 %v936, %v968
        %v977 = vsub.f32 %v937, %v969
        %v978 = vsub.f32 %v938, %v970
        %v979 = vsub.f32 %v939, %v971
        %v980 = vsub.f32 %v940, %v972
        %v981 = vsub.f32 %v941, %v973
        %v982 = vsub.f32 %v942, %v974
        %v983 = vmul.f32 %v975, %v975
        %v984 = vmul.f32 %v976, %v976
        %v985 = vmul.f32 %v977, %v977
        %v986 = vmul.f32 %v978, %v978
        %v987 = vmul.f32 %v979, %v979
        %v988 = vmul.f32 %v980, %v980
        %v989 = vmul.f32 %v981, %v981
        %v990 = vmul.f32 %v982, %v982
        %v991 = vsel %vm693, %v983, 0.0
        %992 = vadd.xlane.f32.xlu0 %v991
        %v993 = vpop.xlane.xlu0 %992
        %v994 = vsel %vm693, %v984, 0.0
        %995 = vadd.xlane.f32.xlu0 %v994
        %v996 = vpop.xlane.xlu0 %995
        %v997 = vsel %vm693, %v985, 0.0
        %998 = vadd.xlane.f32.xlu0 %v997
        %v999 = vpop.xlane.xlu0 %998
        %v1000 = vsel %vm693, %v986, 0.0
        %1001 = vadd.xlane.f32.xlu0 %v1000
        %v1002 = vpop.xlane.xlu0 %1001
        %v1003 = vsel %vm693, %v987, 0.0
        %1004 = vadd.xlane.f32.xlu0 %v1003
        %v1005 = vpop.xlane.xlu0 %1004
        %v1006 = vsel %vm693, %v988, 0.0
        %1007 = vadd.xlane.f32.xlu0 %v1006
        %v1008 = vpop.xlane.xlu0 %1007
        %v1009 = vsel %vm693, %v989, 0.0
        %1010 = vadd.xlane.f32.xlu0 %v1009
        %v1011 = vpop.xlane.xlu0 %1010
        %v1012 = vsel %vm693, %v990, 0.0
        %1013 = vadd.xlane.f32.xlu0 %v1012
        %v1014 = vpop.xlane.xlu0 %1013
        %v1015 = vmul.f32 %v993, %v718
        %v1016 = vmul.f32 %v996, %v718
        %v1017 = vmul.f32 %v999, %v718
        %v1018 = vmul.f32 %v1002, %v718
        %v1019 = vmul.f32 %v1005, %v718
        %v1020 = vmul.f32 %v1008, %v718
        %v1021 = vmul.f32 %v1011, %v718
        %v1022 = vmul.f32 %v1014, %v718
        %v1023 = vadd.f32 %v1015, 1e-05
        %v1024 = vadd.f32 %v1016, 1e-05
        %v1025 = vadd.f32 %v1017, 1e-05
        %v1026 = vadd.f32 %v1018, 1e-05
        %v1027 = vadd.f32 %v1019, 1e-05
        %v1028 = vadd.f32 %v1020, 1e-05
        %v1029 = vadd.f32 %v1021, 1e-05
        %v1030 = vadd.f32 %v1022, 1e-05
        %v1031 = vrsqrt.pop %v1023
        %v1032 = vrsqrt.pop %v1024
        %v1033 = vrsqrt.pop %v1025
        %v1034 = vrsqrt.pop %v1026
        %v1035 = vrsqrt.pop %v1027
        %v1036 = vrsqrt.pop %v1028
        %v1037 = vrsqrt.pop %v1029
        %v1038 = vrsqrt.pop %v1030
        %v1039 = vmul.f32 %v975, %v1031
        %v1040 = vmul.f32 %v976, %v1032
        %v1041 = vmul.f32 %v977, %v1033
        %v1042 = vmul.f32 %v978, %v1034
        %v1043 = vmul.f32 %v979, %v1035
        %v1044 = vmul.f32 %v980, %v1036
        %v1045 = vmul.f32 %v981, %v1037
        %v1046 = vmul.f32 %v982, %v1038
        %v1047 = vmul.f32 %v1039, %v803
        %v1048 = vmul.f32 %v1040, %v803
        %v1049 = vmul.f32 %v1041, %v803
        %v1050 = vmul.f32 %v1042, %v803
        %v1051 = vmul.f32 %v1043, %v803
        %v1052 = vmul.f32 %v1044, %v803
        %v1053 = vmul.f32 %v1045, %v803
        %v1054 = vmul.f32 %v1046, %v803
        %v1055 = vadd.f32 %v1047, %v817
        %v1056 = vadd.f32 %v1048, %v817
        %v1057 = vadd.f32 %v1049, %v817
        %v1058 = vadd.f32 %v1050, %v817
        %v1059 = vadd.f32 %v1051, %v817
        %v1060 = vadd.f32 %v1052, %v817
        %v1061 = vadd.f32 %v1053, %v817
        %v1062 = vadd.f32 %v1054, %v817
        %v1063 = vpack.c.bf16 %v1056, %v1055
        %v1064 = vpack.c.bf16 %v1058, %v1057
        %v1065 = vpack.c.bf16 %v1060, %v1059
        %v1066 = vpack.c.bf16 %v1062, %v1061
        %v1067 = vld [vmem:[%s3] sm:$0xf]
        %v1068 = vld [vmem:[%s3 + $0x4] sm:$0xf]
        %v1069 = vld [vmem:[%s3 + $0x8] sm:$0xf]
        %v1070 = vld [vmem:[%s3 + $0xc] sm:$0xf]
        %v1075 = vunpack.c.l.b16 %v1067
        %v1076 = vunpack.c.l.b16 %v1068
        %v1077 = vunpack.c.l.b16 %v1069
        %v1078 = vunpack.c.l.b16 %v1070
        %v1079 = vpack.c.b16 %v1076, %v1075
        %v1080 = vpack.c.b16 %v1078, %v1077
        %v1084 = vsel %vm693, %v1063, 0
        %v1087 = vsel %vm693, %v1064, 0
        %v1090 = vsel %vm693, %v1065, 0
        %v1093 = vsel %vm693, %v1066, 0
        %1095 = vmatprep.subr.bf16.mxu0 0
        %1096 = vmatpush1.bf16.msra.mxu0 %v1079
        %1097 = vmatprep.subr.bf16.mxu0 0
        %1098 = vmatpush1.bf16.msra.mxu0 %v1080
        %1099 = vmatprep.subr.bf16.mxu0 0
        %1100 = vmatpush1.bf16.msra.mxu0 0
        %1101 = vmatprep.subr.bf16.mxu0 0
        %1102 = vmatpush1.bf16.msra.mxu0 0
        %1103 = vmatprep.subr.bf16.mxu0 0
        %1104 = vmatpush1.bf16.msra.mxu0 0
        %1105 = vmatprep.subr.bf16.mxu0 0
        %1106 = vmatpush1.bf16.msra.mxu0 0
        %1107 = vmatprep.subr.bf16.mxu0 0
        %1108 = vmatpush1.bf16.msra.mxu0 0
        %1109 = vmatprep.subr.bf16.mxu0 0
        %1110 = vmatpush1.bf16.msra.mxu0 0
        %1111 = vmatprep.subr.bf16.mxu0 0
        %1112 = vmatpush1.bf16.msra.mxu0 0
        %1113 = vmatprep.subr.bf16.mxu0 0
        %1114 = vmatpush1.bf16.msra.mxu0 0
        %1115 = vmatprep.subr.bf16.mxu0 0
        %1116 = vmatpush1.bf16.msra.mxu0 0
        %1117 = vmatprep.subr.bf16.mxu0 0
        %1118 = vmatpush1.bf16.msra.mxu0 0
        %1119 = vmatprep.subr.bf16.mxu0 0
        %1120 = vmatpush1.bf16.msra.mxu0 0
        %1121 = vmatprep.subr.bf16.mxu0 0
        %1122 = vmatpush1.bf16.msra.mxu0 0
        %1123 = vmatprep.subr.bf16.mxu0 0
        %1124 = vmatpush1.bf16.msra.mxu0 0
        %1125 = vmatprep.subr.bf16.mxu0 0
        %1126 = vmatpush1.bf16.msra.mxu0 0
        %1127 = vmatprep.mubr.bf16.mxu0 0
        %1128 = vmatmul.mubr.bf16.gmra.mrb[0].mxu0 %v1084
        %v1129 = vpop.f32.mrb[0].mxu0
        %v1130 = vadd.f32 0.0, %v1129
        %v1131 = vpop.f32.mrb[0].mxu0
        %v1132 = vpop.f32.mrb[0].mxu0
        %v1133 = vadd.f32 0.0, %v1132
        %v1134 = vpop.f32.mrb[0].mxu0
        %1135 = vmatprep.mubr.bf16.mxu0 0
        %1136 = vmatmul.mubr.bf16.gmra.mrb[0].mxu0 %v1087
        %v1137 = vpop.f32.mrb[0].mxu0
        %v1138 = vadd.f32 0.0, %v1137
        %v1139 = vpop.f32.mrb[0].mxu0
        %v1140 = vpop.f32.mrb[0].mxu0
        %v1141 = vadd.f32 0.0, %v1140
        %v1142 = vpop.f32.mrb[0].mxu0
        %1143 = vmatprep.mubr.bf16.mxu0 0
        %1144 = vmatmul.mubr.bf16.gmra.mrb[0].mxu0 %v1090
        %v1145 = vpop.f32.mrb[0].mxu0
        %v1146 = vadd.f32 0.0, %v1145
        %v1147 = vpop.f32.mrb[0].mxu0
        %v1148 = vpop.f32.mrb[0].mxu0
        %v1149 = vadd.f32 0.0, %v1148
        %v1150 = vpop.f32.mrb[0].mxu0
        %1151 = vmatprep.mubr.bf16.mxu0 0
        %1152 = vmatmul.mubr.bf16.gmra.mrb[0].mxu0 %v1093
        %v1153 = vpop.f32.mrb[0].mxu0
        %v1154 = vadd.f32 0.0, %v1153
        %v1155 = vpop.f32.mrb[0].mxu0
        %v1156 = vpop.f32.mrb[0].mxu0
        %v1157 = vadd.f32 0.0, %v1156
        %v1158 = vpop.f32.mrb[0].mxu0
        %1159 = vdwg.mxu0
        %s1160 = scalar_lea.vmem [#allocation2], 160
        %1161 = vst.msk [vmem:[%s1160 + $0x8] sm:$0xff] %vm925, %v1130
        %1162 = vst.msk [vmem:[%s1160 + $0x10] sm:$0xff] %vm925, %v1133
        %1163 = vst.msk [vmem:[%s1160 + $0x28] sm:$0xff] %vm925, %v1138
        %1164 = vst.msk [vmem:[%s1160 + $0x30] sm:$0xff] %vm925, %v1141
        %1165 = vst.msk [vmem:[%s1160 + $0x48] sm:$0xff] %vm925, %v1146
        %1166 = vst.msk [vmem:[%s1160 + $0x50] sm:$0xff] %vm925, %v1149
        %1167 = vst.msk [vmem:[%s1160 + $0x68] sm:$0xff] %vm925, %v1154
        %1168 = vst.msk [vmem:[%s1160 + $0x70] sm:$0xff] %vm925, %v1157
        %s1169 = scalar_lea.vmem %s463, 128 [#allocation6]
        %v1170 = vld [vmem:[%s1169] sm:$0xff]
        %v1171 = vld [vmem:[%s1169 + $0x8] sm:$0xff]
        %v1172 = vld [vmem:[%s1169 + $0x10] sm:$0xff]
        %v1173 = vld [vmem:[%s1169 + $0x18] sm:$0xff]
        %v1174 = vld [vmem:[%s1169 + $0x20] sm:$0xff]
        %v1175 = vld [vmem:[%s1169 + $0x28] sm:$0xff]
        %v1176 = vld [vmem:[%s1169 + $0x30] sm:$0xff]
        %v1177 = vld [vmem:[%s1169 + $0x38] sm:$0xff]
        %v1178 = vsel %vm693, %v1170, 0.0
        %1179 = vadd.xlane.f32.xlu0 %v1178
        %v1180 = vpop.xlane.xlu0 %1179
        %v1181 = vsel %vm693, %v1171, 0.0
        %1182 = vadd.xlane.f32.xlu0 %v1181
        %v1183 = vpop.xlane.xlu0 %1182
        %v1184 = vsel %vm693, %v1172, 0.0
        %1185 = vadd.xlane.f32.xlu0 %v1184
        %v1186 = vpop.xlane.xlu0 %1185
        %v1187 = vsel %vm693, %v1173, 0.0
        %1188 = vadd.xlane.f32.xlu0 %v1187
        %v1189 = vpop.xlane.xlu0 %1188
        %v1190 = vsel %vm693, %v1174, 0.0
        %1191 = vadd.xlane.f32.xlu0 %v1190
        %v1192 = vpop.xlane.xlu0 %1191
        %v1193 = vsel %vm693, %v1175, 0.0
        %1194 = vadd.xlane.f32.xlu0 %v1193
        %v1195 = vpop.xlane.xlu0 %1194
        %v1196 = vsel %vm693, %v1176, 0.0
        %1197 = vadd.xlane.f32.xlu0 %v1196
        %v1198 = vpop.xlane.xlu0 %1197
        %v1199 = vsel %vm693, %v1177, 0.0
        %1200 = vadd.xlane.f32.xlu0 %v1199
        %v1201 = vpop.xlane.xlu0 %1200
        %v1202 = vmul.f32 %v1180, %v718
        %v1203 = vmul.f32 %v1183, %v718
        %v1204 = vmul.f32 %v1186, %v718
        %v1205 = vmul.f32 %v1189, %v718
        %v1206 = vmul.f32 %v1192, %v718
        %v1207 = vmul.f32 %v1195, %v718
        %v1208 = vmul.f32 %v1198, %v718
        %v1209 = vmul.f32 %v1201, %v718
        %v1210 = vsub.f32 %v1170, %v1202
        %v1211 = vsub.f32 %v1171, %v1203
        %v1212 = vsub.f32 %v1172, %v1204
        %v1213 = vsub.f32 %v1173, %v1205
        %v1214 = vsub.f32 %v1174, %v1206
        %v1215 = vsub.f32 %v1175, %v1207
        %v1216 = vsub.f32 %v1176, %v1208
        %v1217 = vsub.f32 %v1177, %v1209
        %v1218 = vmul.f32 %v1210, %v1210
        %v1219 = vmul.f32 %v1211, %v1211
        %v1220 = vmul.f32 %v1212, %v1212
        %v1221 = vmul.f32 %v1213, %v1213
        %v1222 = vmul.f32 %v1214, %v1214
        %v1223 = vmul.f32 %v1215, %v1215
        %v1224 = vmul.f32 %v1216, %v1216
        %v1225 = vmul.f32 %v1217, %v1217
        %v1226 = vsel %vm693, %v1218, 0.0
        %1227 = vadd.xlane.f32.xlu0 %v1226
        %v1228 = vpop.xlane.xlu0 %1227
        %v1229 = vsel %vm693, %v1219, 0.0
        %1230 = vadd.xlane.f32.xlu0 %v1229
        %v1231 = vpop.xlane.xlu0 %1230
        %v1232 = vsel %vm693, %v1220, 0.0
        %1233 = vadd.xlane.f32.xlu0 %v1232
        %v1234 = vpop.xlane.xlu0 %1233
        %v1235 = vsel %vm693, %v1221, 0.0
        %1236 = vadd.xlane.f32.xlu0 %v1235
        %v1237 = vpop.xlane.xlu0 %1236
        %v1238 = vsel %vm693, %v1222, 0.0
        %1239 = vadd.xlane.f32.xlu0 %v1238
        %v1240 = vpop.xlane.xlu0 %1239
        %v1241 = vsel %vm693, %v1223, 0.0
        %1242 = vadd.xlane.f32.xlu0 %v1241
        %v1243 = vpop.xlane.xlu0 %1242
        %v1244 = vsel %vm693, %v1224, 0.0
        %1245 = vadd.xlane.f32.xlu0 %v1244
        %v1246 = vpop.xlane.xlu0 %1245
        %v1247 = vsel %vm693, %v1225, 0.0
        %1248 = vadd.xlane.f32.xlu0 %v1247
        %v1249 = vpop.xlane.xlu0 %1248
        %v1250 = vmul.f32 %v1228, %v718
        %v1251 = vmul.f32 %v1231, %v718
        %v1252 = vmul.f32 %v1234, %v718
        %v1253 = vmul.f32 %v1237, %v718
        %v1254 = vmul.f32 %v1240, %v718
        %v1255 = vmul.f32 %v1243, %v718
        %v1256 = vmul.f32 %v1246, %v718
        %v1257 = vmul.f32 %v1249, %v718
        %v1258 = vadd.f32 %v1250, 1e-05
        %v1259 = vadd.f32 %v1251, 1e-05
        %v1260 = vadd.f32 %v1252, 1e-05
        %v1261 = vadd.f32 %v1253, 1e-05
        %v1262 = vadd.f32 %v1254, 1e-05
        %v1263 = vadd.f32 %v1255, 1e-05
        %v1264 = vadd.f32 %v1256, 1e-05
        %v1265 = vadd.f32 %v1257, 1e-05
        %v1266 = vrsqrt.pop %v1258
        %v1267 = vrsqrt.pop %v1259
        %v1268 = vrsqrt.pop %v1260
        %v1269 = vrsqrt.pop %v1261
        %v1270 = vrsqrt.pop %v1262
        %v1271 = vrsqrt.pop %v1263
        %v1272 = vrsqrt.pop %v1264
        %v1273 = vrsqrt.pop %v1265
        %v1274 = vmul.f32 %v1210, %v1266
        %v1275 = vmul.f32 %v1211, %v1267
        %v1276 = vmul.f32 %v1212, %v1268
        %v1277 = vmul.f32 %v1213, %v1269
        %v1278 = vmul.f32 %v1214, %v1270
        %v1279 = vmul.f32 %v1215, %v1271
        %v1280 = vmul.f32 %v1216, %v1272
        %v1281 = vmul.f32 %v1217, %v1273
        %v1282 = vmul.f32 %v1274, %v803
        %v1283 = vmul.f32 %v1275, %v803
        %v1284 = vmul.f32 %v1276, %v803
        %v1285 = vmul.f32 %v1277, %v803
        %v1286 = vmul.f32 %v1278, %v803
        %v1287 = vmul.f32 %v1279, %v803
        %v1288 = vmul.f32 %v1280, %v803
        %v1289 = vmul.f32 %v1281, %v803
        %v1290 = vadd.f32 %v1282, %v817
        %v1291 = vadd.f32 %v1283, %v817
        %v1292 = vadd.f32 %v1284, %v817
        %v1293 = vadd.f32 %v1285, %v817
        %v1294 = vadd.f32 %v1286, %v817
        %v1295 = vadd.f32 %v1287, %v817
        %v1296 = vadd.f32 %v1288, %v817
        %v1297 = vadd.f32 %v1289, %v817
        %v1298 = vpack.c.bf16 %v1291, %v1290
        %v1299 = vpack.c.bf16 %v1293, %v1292
        %v1300 = vpack.c.bf16 %v1295, %v1294
        %v1301 = vpack.c.bf16 %v1297, %v1296
        %v1302 = vld [vmem:[%s3] sm:$0xf]
        %v1303 = vld [vmem:[%s3 + $0x4] sm:$0xf]
        %v1304 = vld [vmem:[%s3 + $0x8] sm:$0xf]
        %v1305 = vld [vmem:[%s3 + $0xc] sm:$0xf]
        %v1310 = vunpack.c.l.b16 %v1302
        %v1311 = vunpack.c.l.b16 %v1303
        %v1312 = vunpack.c.l.b16 %v1304
        %v1313 = vunpack.c.l.b16 %v1305
        %v1314 = vpack.c.b16 %v1311, %v1310
        %v1315 = vpack.c.b16 %v1313, %v1312
        %v1319 = vsel %vm693, %v1298, 0
        %v1322 = vsel %vm693, %v1299, 0
        %v1325 = vsel %vm693, %v1300, 0
        %v1328 = vsel %vm693, %v1301, 0
        %1330 = vmatprep.subr.bf16.mxu0 0
        %1331 = vmatpush1.bf16.msra.mxu0 %v1314
        %1332 = vmatprep.subr.bf16.mxu0 0
        %1333 = vmatpush1.bf16.msra.mxu0 %v1315
        %1334 = vmatprep.subr.bf16.mxu0 0
        %1335 = vmatpush1.bf16.msra.mxu0 0
        %1336 = vmatprep.subr.bf16.mxu0 0
        %1337 = vmatpush1.bf16.msra.mxu0 0
        %1338 = vmatprep.subr.bf16.mxu0 0
        %1339 = vmatpush1.bf16.msra.mxu0 0
        %1340 = vmatprep.subr.bf16.mxu0 0
        %1341 = vmatpush1.bf16.msra.mxu0 0
        %1342 = vmatprep.subr.bf16.mxu0 0
        %1343 = vmatpush1.bf16.msra.mxu0 0
        %1344 = vmatprep.subr.bf16.mxu0 0
        %1345 = vmatpush1.bf16.msra.mxu0 0
        %1346 = vmatprep.subr.bf16.mxu0 0
        %1347 = vmatpush1.bf16.msra.mxu0 0
        %1348 = vmatprep.subr.bf16.mxu0 0
        %1349 = vmatpush1.bf16.msra.mxu0 0
        %1350 = vmatprep.subr.bf16.mxu0 0
        %1351 = vmatpush1.bf16.msra.mxu0 0
        %1352 = vmatprep.subr.bf16.mxu0 0
        %1353 = vmatpush1.bf16.msra.mxu0 0
        %1354 = vmatprep.subr.bf16.mxu0 0
        %1355 = vmatpush1.bf16.msra.mxu0 0
        %1356 = vmatprep.subr.bf16.mxu0 0
        %1357 = vmatpush1.bf16.msra.mxu0 0
        %1358 = vmatprep.subr.bf16.mxu0 0
        %1359 = vmatpush1.bf16.msra.mxu0 0
        %1360 = vmatprep.subr.bf16.mxu0 0
        %1361 = vmatpush1.bf16.msra.mxu0 0
        %1362 = vmatprep.mubr.bf16.mxu0 0
        %1363 = vmatmul.mubr.bf16.gmra.mrb[0].mxu0 %v1319
        %v1364 = vpop.f32.mrb[0].mxu0
        %v1365 = vadd.f32 0.0, %v1364
        %v1366 = vpop.f32.mrb[0].mxu0
        %v1367 = vpop.f32.mrb[0].mxu0
        %v1368 = vadd.f32 0.0, %v1367
        %v1369 = vpop.f32.mrb[0].mxu0
        %1370 = vmatprep.mubr.bf16.mxu0 0
        %1371 = vmatmul.mubr.bf16.gmra.mrb[0].mxu0 %v1322
        %v1372 = vpop.f32.mrb[0].mxu0
        %v1373 = vadd.f32 0.0, %v1372
        %v1374 = vpop.f32.mrb[0].mxu0
        %v1375 = vpop.f32.mrb[0].mxu0
        %v1376 = vadd.f32 0.0, %v1375
        %v1377 = vpop.f32.mrb[0].mxu0
        %1378 = vmatprep.mubr.bf16.mxu0 0
        %1379 = vmatmul.mubr.bf16.gmra.mrb[0].mxu0 %v1325
        %v1380 = vpop.f32.mrb[0].mxu0
        %v1381 = vadd.f32 0.0, %v1380
        %v1382 = vpop.f32.mrb[0].mxu0
        %v1383 = vpop.f32.mrb[0].mxu0
        %v1384 = vadd.f32 0.0, %v1383
        %v1385 = vpop.f32.mrb[0].mxu0
        %1386 = vmatprep.mubr.bf16.mxu0 0
        %1387 = vmatmul.mubr.bf16.gmra.mrb[0].mxu0 %v1328
        %v1388 = vpop.f32.mrb[0].mxu0
        %v1389 = vadd.f32 0.0, %v1388
        %v1390 = vpop.f32.mrb[0].mxu0
        %v1391 = vpop.f32.mrb[0].mxu0
        %v1392 = vadd.f32 0.0, %v1391
        %v1393 = vpop.f32.mrb[0].mxu0
        %1394 = vdwg.mxu0
        %s1395 = scalar_lea.vmem [#allocation2], 288
        %1396 = vst.msk [vmem:[%s1395 + $0x8] sm:$0xff] %vm925, %v1365
        %1397 = vst.msk [vmem:[%s1395 + $0x10] sm:$0xff] %vm925, %v1368
        %1398 = vst.msk [vmem:[%s1395 + $0x28] sm:$0xff] %vm925, %v1373
        %1399 = vst.msk [vmem:[%s1395 + $0x30] sm:$0xff] %vm925, %v1376
        %1400 = vst.msk [vmem:[%s1395 + $0x48] sm:$0xff] %vm925, %v1381
        %1401 = vst.msk [vmem:[%s1395 + $0x50] sm:$0xff] %vm925, %v1384
        %1402 = vst.msk [vmem:[%s1395 + $0x68] sm:$0xff] %vm925, %v1389
        %1403 = vst.msk [vmem:[%s1395 + $0x70] sm:$0xff] %vm925, %v1392
        %s1404 = scalar_lea.vmem %s463, 192 [#allocation6]
        %v1405 = vld [vmem:[%s1404] sm:$0xff]
        %v1406 = vld [vmem:[%s1404 + $0x8] sm:$0xff]
        %v1407 = vld [vmem:[%s1404 + $0x10] sm:$0xff]
        %v1408 = vld [vmem:[%s1404 + $0x18] sm:$0xff]
        %v1409 = vld [vmem:[%s1404 + $0x20] sm:$0xff]
        %v1410 = vld [vmem:[%s1404 + $0x28] sm:$0xff]
        %v1411 = vld [vmem:[%s1404 + $0x30] sm:$0xff]
        %v1412 = vld [vmem:[%s1404 + $0x38] sm:$0xff]
        %v1413 = vsel %vm693, %v1405, 0.0
        %1414 = vadd.xlane.f32.xlu0 %v1413
        %v1415 = vpop.xlane.xlu0 %1414
        %v1416 = vsel %vm693, %v1406, 0.0
        %1417 = vadd.xlane.f32.xlu0 %v1416
        %v1418 = vpop.xlane.xlu0 %1417
        %v1419 = vsel %vm693, %v1407, 0.0
        %1420 = vadd.xlane.f32.xlu0 %v1419
        %v1421 = vpop.xlane.xlu0 %1420
        %v1422 = vsel %vm693, %v1408, 0.0
        %1423 = vadd.xlane.f32.xlu0 %v1422
        %v1424 = vpop.xlane.xlu0 %1423
        %v1425 = vsel %vm693, %v1409, 0.0
        %1426 = vadd.xlane.f32.xlu0 %v1425
        %v1427 = vpop.xlane.xlu0 %1426
        %v1428 = vsel %vm693, %v1410, 0.0
        %1429 = vadd.xlane.f32.xlu0 %v1428
        %v1430 = vpop.xlane.xlu0 %1429
        %v1431 = vsel %vm693, %v1411, 0.0
        %1432 = vadd.xlane.f32.xlu0 %v1431
        %v1433 = vpop.xlane.xlu0 %1432
        %v1434 = vsel %vm693, %v1412, 0.0
        %1435 = vadd.xlane.f32.xlu0 %v1434
        %v1436 = vpop.xlane.xlu0 %1435
        %v1437 = vmul.f32 %v1415, %v718
        %v1438 = vmul.f32 %v1418, %v718
        %v1439 = vmul.f32 %v1421, %v718
        %v1440 = vmul.f32 %v1424, %v718
        %v1441 = vmul.f32 %v1427, %v718
        %v1442 = vmul.f32 %v1430, %v718
        %v1443 = vmul.f32 %v1433, %v718
        %v1444 = vmul.f32 %v1436, %v718
        %v1445 = vsub.f32 %v1405, %v1437
        %v1446 = vsub.f32 %v1406, %v1438
        %v1447 = vsub.f32 %v1407, %v1439
        %v1448 = vsub.f32 %v1408, %v1440
        %v1449 = vsub.f32 %v1409, %v1441
        %v1450 = vsub.f32 %v1410, %v1442
        %v1451 = vsub.f32 %v1411, %v1443
        %v1452 = vsub.f32 %v1412, %v1444
        %v1453 = vmul.f32 %v1445, %v1445
        %v1454 = vmul.f32 %v1446, %v1446
        %v1455 = vmul.f32 %v1447, %v1447
        %v1456 = vmul.f32 %v1448, %v1448
        %v1457 = vmul.f32 %v1449, %v1449
        %v1458 = vmul.f32 %v1450, %v1450
        %v1459 = vmul.f32 %v1451, %v1451
        %v1460 = vmul.f32 %v1452, %v1452
        %v1461 = vsel %vm693, %v1453, 0.0
        %1462 = vadd.xlane.f32.xlu0 %v1461
        %v1463 = vpop.xlane.xlu0 %1462
        %v1464 = vsel %vm693, %v1454, 0.0
        %1465 = vadd.xlane.f32.xlu0 %v1464
        %v1466 = vpop.xlane.xlu0 %1465
        %v1467 = vsel %vm693, %v1455, 0.0
        %1468 = vadd.xlane.f32.xlu0 %v1467
        %v1469 = vpop.xlane.xlu0 %1468
        %v1470 = vsel %vm693, %v1456, 0.0
        %1471 = vadd.xlane.f32.xlu0 %v1470
        %v1472 = vpop.xlane.xlu0 %1471
        %v1473 = vsel %vm693, %v1457, 0.0
        %1474 = vadd.xlane.f32.xlu0 %v1473
        %v1475 = vpop.xlane.xlu0 %1474
        %v1476 = vsel %vm693, %v1458, 0.0
        %1477 = vadd.xlane.f32.xlu0 %v1476
        %v1478 = vpop.xlane.xlu0 %1477
        %v1479 = vsel %vm693, %v1459, 0.0
        %1480 = vadd.xlane.f32.xlu0 %v1479
        %v1481 = vpop.xlane.xlu0 %1480
        %v1482 = vsel %vm693, %v1460, 0.0
        %1483 = vadd.xlane.f32.xlu0 %v1482
        %v1484 = vpop.xlane.xlu0 %1483
        %v1485 = vmul.f32 %v1463, %v718
        %v1486 = vmul.f32 %v1466, %v718
        %v1487 = vmul.f32 %v1469, %v718
        %v1488 = vmul.f32 %v1472, %v718
        %v1489 = vmul.f32 %v1475, %v718
        %v1490 = vmul.f32 %v1478, %v718
        %v1491 = vmul.f32 %v1481, %v718
        %v1492 = vmul.f32 %v1484, %v718
        %v1493 = vadd.f32 %v1485, 1e-05
        %v1494 = vadd.f32 %v1486, 1e-05
        %v1495 = vadd.f32 %v1487, 1e-05
        %v1496 = vadd.f32 %v1488, 1e-05
        %v1497 = vadd.f32 %v1489, 1e-05
        %v1498 = vadd.f32 %v1490, 1e-05
        %v1499 = vadd.f32 %v1491, 1e-05
        %v1500 = vadd.f32 %v1492, 1e-05
        %v1501 = vrsqrt.pop %v1493
        %v1502 = vrsqrt.pop %v1494
        %v1503 = vrsqrt.pop %v1495
        %v1504 = vrsqrt.pop %v1496
        %v1505 = vrsqrt.pop %v1497
        %v1506 = vrsqrt.pop %v1498
        %v1507 = vrsqrt.pop %v1499
        %v1508 = vrsqrt.pop %v1500
        %v1509 = vmul.f32 %v1445, %v1501
        %v1510 = vmul.f32 %v1446, %v1502
        %v1511 = vmul.f32 %v1447, %v1503
        %v1512 = vmul.f32 %v1448, %v1504
        %v1513 = vmul.f32 %v1449, %v1505
        %v1514 = vmul.f32 %v1450, %v1506
        %v1515 = vmul.f32 %v1451, %v1507
        %v1516 = vmul.f32 %v1452, %v1508
        %v1517 = vmul.f32 %v1509, %v803
        %v1518 = vmul.f32 %v1510, %v803
        %v1519 = vmul.f32 %v1511, %v803
        %v1520 = vmul.f32 %v1512, %v803
        %v1521 = vmul.f32 %v1513, %v803
        %v1522 = vmul.f32 %v1514, %v803
        %v1523 = vmul.f32 %v1515, %v803
        %v1524 = vmul.f32 %v1516, %v803
        %v1525 = vadd.f32 %v1517, %v817
        %v1526 = vadd.f32 %v1518, %v817
        %v1527 = vadd.f32 %v1519, %v817
        %v1528 = vadd.f32 %v1520, %v817
        %v1529 = vadd.f32 %v1521, %v817
        %v1530 = vadd.f32 %v1522, %v817
        %v1531 = vadd.f32 %v1523, %v817
        %v1532 = vadd.f32 %v1524, %v817
        %v1533 = vpack.c.bf16 %v1526, %v1525
        %v1534 = vpack.c.bf16 %v1528, %v1527
        %v1535 = vpack.c.bf16 %v1530, %v1529
        %v1536 = vpack.c.bf16 %v1532, %v1531
        %v1537 = vld [vmem:[%s3] sm:$0xf]
        %v1538 = vld [vmem:[%s3 + $0x4] sm:$0xf]
        %v1539 = vld [vmem:[%s3 + $0x8] sm:$0xf]
        %v1540 = vld [vmem:[%s3 + $0xc] sm:$0xf]
        %v1545 = vunpack.c.l.b16 %v1537
        %v1546 = vunpack.c.l.b16 %v1538
        %v1547 = vunpack.c.l.b16 %v1539
        %v1548 = vunpack.c.l.b16 %v1540
        %v1549 = vpack.c.b16 %v1546, %v1545
        %v1550 = vpack.c.b16 %v1548, %v1547
        %v1554 = vsel %vm693, %v1533, 0
        %v1557 = vsel %vm693, %v1534, 0
        %v1560 = vsel %vm693, %v1535, 0
        %v1563 = vsel %vm693, %v1536, 0
        %1565 = vmatprep.subr.bf16.mxu0 0
        %1566 = vmatpush1.bf16.msra.mxu0 %v1549
        %1567 = vmatprep.subr.bf16.mxu0 0
        %1568 = vmatpush1.bf16.msra.mxu0 %v1550
        %1569 = vmatprep.subr.bf16.mxu0 0
        %1570 = vmatpush1.bf16.msra.mxu0 0
        %1571 = vmatprep.subr.bf16.mxu0 0
        %1572 = vmatpush1.bf16.msra.mxu0 0
        %1573 = vmatprep.subr.bf16.mxu0 0
        %1574 = vmatpush1.bf16.msra.mxu0 0
        %1575 = vmatprep.subr.bf16.mxu0 0
        %1576 = vmatpush1.bf16.msra.mxu0 0
        %1577 = vmatprep.subr.bf16.mxu0 0
        %1578 = vmatpush1.bf16.msra.mxu0 0
        %1579 = vmatprep.subr.bf16.mxu0 0
        %1580 = vmatpush1.bf16.msra.mxu0 0
        %1581 = vmatprep.subr.bf16.mxu0 0
        %1582 = vmatpush1.bf16.msra.mxu0 0
        %1583 = vmatprep.subr.bf16.mxu0 0
        %1584 = vmatpush1.bf16.msra.mxu0 0
        %1585 = vmatprep.subr.bf16.mxu0 0
        %1586 = vmatpush1.bf16.msra.mxu0 0
        %1587 = vmatprep.subr.bf16.mxu0 0
        %1588 = vmatpush1.bf16.msra.mxu0 0
        %1589 = vmatprep.subr.bf16.mxu0 0
        %1590 = vmatpush1.bf16.msra.mxu0 0
        %1591 = vmatprep.subr.bf16.mxu0 0
        %1592 = vmatpush1.bf16.msra.mxu0 0
        %1593 = vmatprep.subr.bf16.mxu0 0
        %1594 = vmatpush1.bf16.msra.mxu0 0
        %1595 = vmatprep.subr.bf16.mxu0 0
        %1596 = vmatpush1.bf16.msra.mxu0 0
        %1597 = vmatprep.mubr.bf16.mxu0 0
        %1598 = vmatmul.mubr.bf16.gmra.mrb[0].mxu0 %v1554
        %v1599 = vpop.f32.mrb[0].mxu0
        %v1600 = vadd.f32 0.0, %v1599
        %v1601 = vpop.f32.mrb[0].mxu0
        %v1602 = vpop.f32.mrb[0].mxu0
        %v1603 = vadd.f32 0.0, %v1602
        %v1604 = vpop.f32.mrb[0].mxu0
        %1605 = vmatprep.mubr.bf16.mxu0 0
        %1606 = vmatmul.mubr.bf16.gmra.mrb[0].mxu0 %v1557
        %v1607 = vpop.f32.mrb[0].mxu0
        %v1608 = vadd.f32 0.0, %v1607
        %v1609 = vpop.f32.mrb[0].mxu0
        %v1610 = vpop.f32.mrb[0].mxu0
        %v1611 = vadd.f32 0.0, %v1610
        %v1612 = vpop.f32.mrb[0].mxu0
        %1613 = vmatprep.mubr.bf16.mxu0 0
        %1614 = vmatmul.mubr.bf16.gmra.mrb[0].mxu0 %v1560
        %v1615 = vpop.f32.mrb[0].mxu0
        %v1616 = vadd.f32 0.0, %v1615
        %v1617 = vpop.f32.mrb[0].mxu0
        %v1618 = vpop.f32.mrb[0].mxu0
        %v1619 = vadd.f32 0.0, %v1618
        %v1620 = vpop.f32.mrb[0].mxu0
        %1621 = vmatprep.mubr.bf16.mxu0 0
        %1622 = vmatmul.mubr.bf16.gmra.mrb[0].mxu0 %v1563
        %v1623 = vpop.f32.mrb[0].mxu0
        %v1624 = vadd.f32 0.0, %v1623
        %v1625 = vpop.f32.mrb[0].mxu0
        %v1626 = vpop.f32.mrb[0].mxu0
        %v1627 = vadd.f32 0.0, %v1626
        %v1628 = vpop.f32.mrb[0].mxu0
        %1629 = vdwg.mxu0
        %s1630 = scalar_lea.vmem [#allocation2], 416
        %1631 = vst.msk [vmem:[%s1630 + $0x8] sm:$0xff] %vm925, %v1600
        %1632 = vst.msk [vmem:[%s1630 + $0x10] sm:$0xff] %vm925, %v1603
        %1633 = vst.msk [vmem:[%s1630 + $0x28] sm:$0xff] %vm925, %v1608
        %1634 = vst.msk [vmem:[%s1630 + $0x30] sm:$0xff] %vm925, %v1611
        %1635 = vst.msk [vmem:[%s1630 + $0x48] sm:$0xff] %vm925, %v1616
        %1636 = vst.msk [vmem:[%s1630 + $0x50] sm:$0xff] %vm925, %v1619
        %1637 = vst.msk [vmem:[%s1630 + $0x68] sm:$0xff] %vm925, %v1624
        %1638 = vst.msk [vmem:[%s1630 + $0x70] sm:$0xff] %vm925, %v1627
        %v1639 = vld [vmem:[#allocation2 + $0x7] sm:$0xff]
        %v1640 = vld [vmem:[#allocation2 + $0xf] sm:$0xff]
        %v1641 = vld [vmem:[#allocation2 + $0x27] sm:$0xff]
        %v1642 = vld [vmem:[#allocation2 + $0x2f] sm:$0xff]
        %v1643 = vld [vmem:[#allocation2 + $0x47] sm:$0xff]
        %v1644 = vld [vmem:[#allocation2 + $0x4f] sm:$0xff]
        %v1645 = vld [vmem:[#allocation2 + $0x67] sm:$0xff]
        %v1646 = vld [vmem:[#allocation2 + $0x6f] sm:$0xff]
        %v1647 = vld [vmem:[#allocation9] sm:$0x1]
        %v1648 = vlaneseq
        %v1649 = vshrl.u32 %v1648, 7
        %v1650 = vsub.s32 0, %v1649
        %v1651 = vrot.slane %v1647, %v1650
        %v1652 = vmul.f32 %v1639, %v1651
        %v1653 = vmul.f32 %v1640, %v1651
        %v1654 = vmul.f32 %v1641, %v1651
        %v1655 = vmul.f32 %v1642, %v1651
        %v1656 = vmul.f32 %v1643, %v1651
        %v1657 = vmul.f32 %v1644, %v1651
        %v1658 = vmul.f32 %v1645, %v1651
        %v1659 = vmul.f32 %v1646, %v1651
        %v1660 = vadd.f32 %v1652, 0.0
        %v1661 = vadd.f32 %v1653, 0.0
        %v1662 = vadd.f32 %v1654, 0.0
        %v1663 = vadd.f32 %v1655, 0.0
        %v1664 = vadd.f32 %v1656, 0.0
        %v1665 = vadd.f32 %v1657, 0.0
        %v1666 = vadd.f32 %v1658, 0.0
        %v1667 = vadd.f32 %v1659, 0.0
        %v1668 = vld [vmem:[#allocation2 + $0x8] sm:$0xff]
        %v1669 = vld [vmem:[#allocation2 + $0x10] sm:$0xff]
        %v1670 = vld [vmem:[#allocation2 + $0x28] sm:$0xff]
        %v1671 = vld [vmem:[#allocation2 + $0x30] sm:$0xff]
        %v1672 = vld [vmem:[#allocation2 + $0x48] sm:$0xff]
        %v1673 = vld [vmem:[#allocation2 + $0x50] sm:$0xff]
        %v1674 = vld [vmem:[#allocation2 + $0x68] sm:$0xff]
        %v1675 = vld [vmem:[#allocation2 + $0x70] sm:$0xff]
        %v1676 = vld [vmem:[#allocation9 + $0x1] sm:$0x1]
        %v1677 = vlaneseq
        %v1678 = vshrl.u32 %v1677, 7
        %v1679 = vsub.s32 0, %v1678
        %v1680 = vrot.slane %v1676, %v1679
        %v1681 = vmul.f32 %v1668, %v1680
        %v1682 = vmul.f32 %v1669, %v1680
        %v1683 = vmul.f32 %v1670, %v1680
        %v1684 = vmul.f32 %v1671, %v1680
        %v1685 = vmul.f32 %v1672, %v1680
        %v1686 = vmul.f32 %v1673, %v1680
        %v1687 = vmul.f32 %v1674, %v1680
        %v1688 = vmul.f32 %v1675, %v1680
        %v1689 = vadd.f32 %v1660, %v1681
        %v1690 = vadd.f32 %v1661, %v1682
        %v1691 = vadd.f32 %v1662, %v1683
        %v1692 = vadd.f32 %v1663, %v1684
        %v1693 = vadd.f32 %v1664, %v1685
        %v1694 = vadd.f32 %v1665, %v1686
        %v1695 = vadd.f32 %v1666, %v1687
        %v1696 = vadd.f32 %v1667, %v1688
        %v1697 = vld [vmem:[#allocation2 + $0x9] sm:$0xff]
        %v1698 = vld [vmem:[#allocation2 + $0x11] sm:$0xff]
        %v1699 = vld [vmem:[#allocation2 + $0x29] sm:$0xff]
        %v1700 = vld [vmem:[#allocation2 + $0x31] sm:$0xff]
        %v1701 = vld [vmem:[#allocation2 + $0x49] sm:$0xff]
        %v1702 = vld [vmem:[#allocation2 + $0x51] sm:$0xff]
        %v1703 = vld [vmem:[#allocation2 + $0x69] sm:$0xff]
        %v1704 = vld [vmem:[#allocation2 + $0x71] sm:$0xff]
        %v1705 = vld [vmem:[#allocation9 + $0x2] sm:$0x1]
        %v1706 = vlaneseq
        %v1707 = vshrl.u32 %v1706, 7
        %v1708 = vsub.s32 0, %v1707
        %v1709 = vrot.slane %v1705, %v1708
        %v1710 = vmul.f32 %v1697, %v1709
        %v1711 = vmul.f32 %v1698, %v1709
        %v1712 = vmul.f32 %v1699, %v1709
        %v1713 = vmul.f32 %v1700, %v1709
        %v1714 = vmul.f32 %v1701, %v1709
        %v1715 = vmul.f32 %v1702, %v1709
        %v1716 = vmul.f32 %v1703, %v1709
        %v1717 = vmul.f32 %v1704, %v1709
        %v1718 = vadd.f32 %v1689, %v1710
        %v1719 = vadd.f32 %v1690, %v1711
        %v1720 = vadd.f32 %v1691, %v1712
        %v1721 = vadd.f32 %v1692, %v1713
        %v1722 = vadd.f32 %v1693, %v1714
        %v1723 = vadd.f32 %v1694, %v1715
        %v1724 = vadd.f32 %v1695, %v1716
        %v1725 = vadd.f32 %v1696, %v1717
        %v1726 = vld [vmem:[%s924 + $0x7] sm:$0xff]
        %v1727 = vld [vmem:[%s924 + $0xf] sm:$0xff]
        %v1728 = vld [vmem:[%s924 + $0x27] sm:$0xff]
        %v1729 = vld [vmem:[%s924 + $0x2f] sm:$0xff]
        %v1730 = vld [vmem:[%s924 + $0x47] sm:$0xff]
        %v1731 = vld [vmem:[%s924 + $0x4f] sm:$0xff]
        %v1732 = vld [vmem:[%s924 + $0x67] sm:$0xff]
        %v1733 = vld [vmem:[%s924 + $0x6f] sm:$0xff]
        %s1734 = scalar_lea.vmem [#allocation9], 4
        %v1735 = vld [vmem:[%s1734] sm:$0x1]
        %v1736 = vlaneseq
        %v1737 = vshrl.u32 %v1736, 7
        %v1738 = vsub.s32 0, %v1737
        %v1739 = vrot.slane %v1735, %v1738
        %v1740 = vmul.f32 %v1726, %v1739
        %v1741 = vmul.f32 %v1727, %v1739
        %v1742 = vmul.f32 %v1728, %v1739
        %v1743 = vmul.f32 %v1729, %v1739
        %v1744 = vmul.f32 %v1730, %v1739
        %v1745 = vmul.f32 %v1731, %v1739
        %v1746 = vmul.f32 %v1732, %v1739
        %v1747 = vmul.f32 %v1733, %v1739
        %v1748 = vadd.f32 %v1718, %v1740
        %v1749 = vadd.f32 %v1719, %v1741
        %v1750 = vadd.f32 %v1720, %v1742
        %v1751 = vadd.f32 %v1721, %v1743
        %v1752 = vadd.f32 %v1722, %v1744
        %v1753 = vadd.f32 %v1723, %v1745
        %v1754 = vadd.f32 %v1724, %v1746
        %v1755 = vadd.f32 %v1725, %v1747
        %v1756 = vld [vmem:[%s924 + $0x8] sm:$0xff]
        %v1757 = vld [vmem:[%s924 + $0x10] sm:$0xff]
        %v1758 = vld [vmem:[%s924 + $0x28] sm:$0xff]
        %v1759 = vld [vmem:[%s924 + $0x30] sm:$0xff]
        %v1760 = vld [vmem:[%s924 + $0x48] sm:$0xff]
        %v1761 = vld [vmem:[%s924 + $0x50] sm:$0xff]
        %v1762 = vld [vmem:[%s924 + $0x68] sm:$0xff]
        %v1763 = vld [vmem:[%s924 + $0x70] sm:$0xff]
        %v1764 = vld [vmem:[%s1734 + $0x1] sm:$0x1]
        %v1765 = vlaneseq
        %v1766 = vshrl.u32 %v1765, 7
        %v1767 = vsub.s32 0, %v1766
        %v1768 = vrot.slane %v1764, %v1767
        %v1769 = vmul.f32 %v1756, %v1768
        %v1770 = vmul.f32 %v1757, %v1768
        %v1771 = vmul.f32 %v1758, %v1768
        %v1772 = vmul.f32 %v1759, %v1768
        %v1773 = vmul.f32 %v1760, %v1768
        %v1774 = vmul.f32 %v1761, %v1768
        %v1775 = vmul.f32 %v1762, %v1768
        %v1776 = vmul.f32 %v1763, %v1768
        %v1777 = vadd.f32 %v1748, %v1769
        %v1778 = vadd.f32 %v1749, %v1770
        %v1779 = vadd.f32 %v1750, %v1771
        %v1780 = vadd.f32 %v1751, %v1772
        %v1781 = vadd.f32 %v1752, %v1773
        %v1782 = vadd.f32 %v1753, %v1774
        %v1783 = vadd.f32 %v1754, %v1775
        %v1784 = vadd.f32 %v1755, %v1776
        %v1785 = vld [vmem:[%s924 + $0x9] sm:$0xff]
        %v1786 = vld [vmem:[%s924 + $0x11] sm:$0xff]
        %v1787 = vld [vmem:[%s924 + $0x29] sm:$0xff]
        %v1788 = vld [vmem:[%s924 + $0x31] sm:$0xff]
        %v1789 = vld [vmem:[%s924 + $0x49] sm:$0xff]
        %v1790 = vld [vmem:[%s924 + $0x51] sm:$0xff]
        %v1791 = vld [vmem:[%s924 + $0x69] sm:$0xff]
        %v1792 = vld [vmem:[%s924 + $0x71] sm:$0xff]
        %v1793 = vld [vmem:[%s1734 + $0x2] sm:$0x1]
        %v1794 = vlaneseq
        %v1795 = vshrl.u32 %v1794, 7
        %v1796 = vsub.s32 0, %v1795
        %v1797 = vrot.slane %v1793, %v1796
        %v1798 = vmul.f32 %v1785, %v1797
        %v1799 = vmul.f32 %v1786, %v1797
        %v1800 = vmul.f32 %v1787, %v1797
        %v1801 = vmul.f32 %v1788, %v1797
        %v1802 = vmul.f32 %v1789, %v1797
        %v1803 = vmul.f32 %v1790, %v1797
        %v1804 = vmul.f32 %v1791, %v1797
        %v1805 = vmul.f32 %v1792, %v1797
        %v1806 = vadd.f32 %v1777, %v1798
        %v1807 = vadd.f32 %v1778, %v1799
        %v1808 = vadd.f32 %v1779, %v1800
        %v1809 = vadd.f32 %v1780, %v1801
        %v1810 = vadd.f32 %v1781, %v1802
        %v1811 = vadd.f32 %v1782, %v1803
        %v1812 = vadd.f32 %v1783, %v1804
        %v1813 = vadd.f32 %v1784, %v1805
        %s1814 = scalar_lea.vmem [#allocation2], 64
        %v1815 = vld [vmem:[%s1814 + $0x7] sm:$0xff]
        %v1816 = vld [vmem:[%s1814 + $0xf] sm:$0xff]
        %v1817 = vld [vmem:[%s1814 + $0x27] sm:$0xff]
        %v1818 = vld [vmem:[%s1814 + $0x2f] sm:$0xff]
        %v1819 = vld [vmem:[%s1814 + $0x47] sm:$0xff]
        %v1820 = vld [vmem:[%s1814 + $0x4f] sm:$0xff]
        %v1821 = vld [vmem:[%s1814 + $0x67] sm:$0xff]
        %v1822 = vld [vmem:[%s1814 + $0x6f] sm:$0xff]
        %s1823 = scalar_lea.vmem [#allocation9], 8
        %v1824 = vld [vmem:[%s1823] sm:$0x1]
        %v1825 = vlaneseq
        %v1826 = vshrl.u32 %v1825, 7
        %v1827 = vsub.s32 0, %v1826
        %v1828 = vrot.slane %v1824, %v1827
        %v1829 = vmul.f32 %v1815, %v1828
        %v1830 = vmul.f32 %v1816, %v1828
        %v1831 = vmul.f32 %v1817, %v1828
        %v1832 = vmul.f32 %v1818, %v1828
        %v1833 = vmul.f32 %v1819, %v1828
        %v1834 = vmul.f32 %v1820, %v1828
        %v1835 = vmul.f32 %v1821, %v1828
        %v1836 = vmul.f32 %v1822, %v1828
        %v1837 = vadd.f32 %v1806, %v1829
        %v1838 = vadd.f32 %v1807, %v1830
        %v1839 = vadd.f32 %v1808, %v1831
        %v1840 = vadd.f32 %v1809, %v1832
        %v1841 = vadd.f32 %v1810, %v1833
        %v1842 = vadd.f32 %v1811, %v1834
        %v1843 = vadd.f32 %v1812, %v1835
        %v1844 = vadd.f32 %v1813, %v1836
        %v1845 = vld [vmem:[%s1814 + $0x8] sm:$0xff]
        %v1846 = vld [vmem:[%s1814 + $0x10] sm:$0xff]
        %v1847 = vld [vmem:[%s1814 + $0x28] sm:$0xff]
        %v1848 = vld [vmem:[%s1814 + $0x30] sm:$0xff]
        %v1849 = vld [vmem:[%s1814 + $0x48] sm:$0xff]
        %v1850 = vld [vmem:[%s1814 + $0x50] sm:$0xff]
        %v1851 = vld [vmem:[%s1814 + $0x68] sm:$0xff]
        %v1852 = vld [vmem:[%s1814 + $0x70] sm:$0xff]
        %v1853 = vld [vmem:[%s1823 + $0x1] sm:$0x1]
        %v1854 = vlaneseq
        %v1855 = vshrl.u32 %v1854, 7
        %v1856 = vsub.s32 0, %v1855
        %v1857 = vrot.slane %v1853, %v1856
        %v1858 = vmul.f32 %v1845, %v1857
        %v1859 = vmul.f32 %v1846, %v1857
        %v1860 = vmul.f32 %v1847, %v1857
        %v1861 = vmul.f32 %v1848, %v1857
        %v1862 = vmul.f32 %v1849, %v1857
        %v1863 = vmul.f32 %v1850, %v1857
        %v1864 = vmul.f32 %v1851, %v1857
        %v1865 = vmul.f32 %v1852, %v1857
        %v1866 = vadd.f32 %v1837, %v1858
        %v1867 = vadd.f32 %v1838, %v1859
        %v1868 = vadd.f32 %v1839, %v1860
        %v1869 = vadd.f32 %v1840, %v1861
        %v1870 = vadd.f32 %v1841, %v1862
        %v1871 = vadd.f32 %v1842, %v1863
        %v1872 = vadd.f32 %v1843, %v1864
        %v1873 = vadd.f32 %v1844, %v1865
        %v1874 = vld [vmem:[%s1814 + $0x9] sm:$0xff]
        %v1875 = vld [vmem:[%s1814 + $0x11] sm:$0xff]
        %v1876 = vld [vmem:[%s1814 + $0x29] sm:$0xff]
        %v1877 = vld [vmem:[%s1814 + $0x31] sm:$0xff]
        %v1878 = vld [vmem:[%s1814 + $0x49] sm:$0xff]
        %v1879 = vld [vmem:[%s1814 + $0x51] sm:$0xff]
        %v1880 = vld [vmem:[%s1814 + $0x69] sm:$0xff]
        %v1881 = vld [vmem:[%s1814 + $0x71] sm:$0xff]
        %v1882 = vld [vmem:[%s1823 + $0x2] sm:$0x1]
        %v1883 = vlaneseq
        %v1884 = vshrl.u32 %v1883, 7
        %v1885 = vsub.s32 0, %v1884
        %v1886 = vrot.slane %v1882, %v1885
        %v1887 = vmul.f32 %v1874, %v1886
        %v1888 = vmul.f32 %v1875, %v1886
        %v1889 = vmul.f32 %v1876, %v1886
        %v1890 = vmul.f32 %v1877, %v1886
        %v1891 = vmul.f32 %v1878, %v1886
        %v1892 = vmul.f32 %v1879, %v1886
        %v1893 = vmul.f32 %v1880, %v1886
        %v1894 = vmul.f32 %v1881, %v1886
        %v1895 = vadd.f32 %v1866, %v1887
        %v1896 = vadd.f32 %v1867, %v1888
        %v1897 = vadd.f32 %v1868, %v1889
        %v1898 = vadd.f32 %v1869, %v1890
        %v1899 = vadd.f32 %v1870, %v1891
        %v1900 = vadd.f32 %v1871, %v1892
        %v1901 = vadd.f32 %v1872, %v1893
        %v1902 = vadd.f32 %v1873, %v1894
        %1903 = vst.msk [vmem:[#allocation4] sm:$0xff] %vm925, %v1895
        %1904 = vst.msk [vmem:[#allocation4 + $0x8] sm:$0xff] %vm925, %v1896
        %1905 = vst.msk [vmem:[#allocation4 + $0x10] sm:$0xff] %vm925, %v1897
        %1906 = vst.msk [vmem:[#allocation4 + $0x18] sm:$0xff] %vm925, %v1898
        %1907 = vst.msk [vmem:[#allocation4 + $0x20] sm:$0xff] %vm925, %v1899
        %1908 = vst.msk [vmem:[#allocation4 + $0x28] sm:$0xff] %vm925, %v1900
        %1909 = vst.msk [vmem:[#allocation4 + $0x30] sm:$0xff] %vm925, %v1901
        %1910 = vst.msk [vmem:[#allocation4 + $0x38] sm:$0xff] %vm925, %v1902
        %s1911 = scalar_lea.vmem [#allocation2], 128
        %v1912 = vld [vmem:[%s1911 + $0x7] sm:$0xff]
        %v1913 = vld [vmem:[%s1911 + $0xf] sm:$0xff]
        %v1914 = vld [vmem:[%s1911 + $0x27] sm:$0xff]
        %v1915 = vld [vmem:[%s1911 + $0x2f] sm:$0xff]
        %v1916 = vld [vmem:[%s1911 + $0x47] sm:$0xff]
        %v1917 = vld [vmem:[%s1911 + $0x4f] sm:$0xff]
        %v1918 = vld [vmem:[%s1911 + $0x67] sm:$0xff]
        %v1919 = vld [vmem:[%s1911 + $0x6f] sm:$0xff]
        %v1920 = vld [vmem:[#allocation9] sm:$0x1]
        %v1921 = vlaneseq
        %v1922 = vshrl.u32 %v1921, 7
        %v1923 = vsub.s32 0, %v1922
        %v1924 = vrot.slane %v1920, %v1923
        %v1925 = vmul.f32 %v1912, %v1924
        %v1926 = vmul.f32 %v1913, %v1924
        %v1927 = vmul.f32 %v1914, %v1924
        %v1928 = vmul.f32 %v1915, %v1924
        %v1929 = vmul.f32 %v1916, %v1924
        %v1930 = vmul.f32 %v1917, %v1924
        %v1931 = vmul.f32 %v1918, %v1924
        %v1932 = vmul.f32 %v1919, %v1924
        %v1933 = vadd.f32 %v1925, 0.0
        %v1934 = vadd.f32 %v1926, 0.0
        %v1935 = vadd.f32 %v1927, 0.0
        %v1936 = vadd.f32 %v1928, 0.0
        %v1937 = vadd.f32 %v1929, 0.0
        %v1938 = vadd.f32 %v1930, 0.0
        %v1939 = vadd.f32 %v1931, 0.0
        %v1940 = vadd.f32 %v1932, 0.0
        %v1941 = vld [vmem:[%s1911 + $0x8] sm:$0xff]
        %v1942 = vld [vmem:[%s1911 + $0x10] sm:$0xff]
        %v1943 = vld [vmem:[%s1911 + $0x28] sm:$0xff]
        %v1944 = vld [vmem:[%s1911 + $0x30] sm:$0xff]
        %v1945 = vld [vmem:[%s1911 + $0x48] sm:$0xff]
        %v1946 = vld [vmem:[%s1911 + $0x50] sm:$0xff]
        %v1947 = vld [vmem:[%s1911 + $0x68] sm:$0xff]
        %v1948 = vld [vmem:[%s1911 + $0x70] sm:$0xff]
        %v1949 = vld [vmem:[#allocation9 + $0x1] sm:$0x1]
        %v1950 = vlaneseq
        %v1951 = vshrl.u32 %v1950, 7
        %v1952 = vsub.s32 0, %v1951
        %v1953 = vrot.slane %v1949, %v1952
        %v1954 = vmul.f32 %v1941, %v1953
        %v1955 = vmul.f32 %v1942, %v1953
        %v1956 = vmul.f32 %v1943, %v1953
        %v1957 = vmul.f32 %v1944, %v1953
        %v1958 = vmul.f32 %v1945, %v1953
        %v1959 = vmul.f32 %v1946, %v1953
        %v1960 = vmul.f32 %v1947, %v1953
        %v1961 = vmul.f32 %v1948, %v1953
        %v1962 = vadd.f32 %v1933, %v1954
        %v1963 = vadd.f32 %v1934, %v1955
        %v1964 = vadd.f32 %v1935, %v1956
        %v1965 = vadd.f32 %v1936, %v1957
        %v1966 = vadd.f32 %v1937, %v1958
        %v1967 = vadd.f32 %v1938, %v1959
        %v1968 = vadd.f32 %v1939, %v1960
        %v1969 = vadd.f32 %v1940, %v1961
        %v1970 = vld [vmem:[%s1911 + $0x9] sm:$0xff]
        %v1971 = vld [vmem:[%s1911 + $0x11] sm:$0xff]
        %v1972 = vld [vmem:[%s1911 + $0x29] sm:$0xff]
        %v1973 = vld [vmem:[%s1911 + $0x31] sm:$0xff]
        %v1974 = vld [vmem:[%s1911 + $0x49] sm:$0xff]
        %v1975 = vld [vmem:[%s1911 + $0x51] sm:$0xff]
        %v1976 = vld [vmem:[%s1911 + $0x69] sm:$0xff]
        %v1977 = vld [vmem:[%s1911 + $0x71] sm:$0xff]
        %v1978 = vld [vmem:[#allocation9 + $0x2] sm:$0x1]
        %v1979 = vlaneseq
        %v1980 = vshrl.u32 %v1979, 7
        %v1981 = vsub.s32 0, %v1980
        %v1982 = vrot.slane %v1978, %v1981
        %v1983 = vmul.f32 %v1970, %v1982
        %v1984 = vmul.f32 %v1971, %v1982
        %v1985 = vmul.f32 %v1972, %v1982
        %v1986 = vmul.f32 %v1973, %v1982
        %v1987 = vmul.f32 %v1974, %v1982
        %v1988 = vmul.f32 %v1975, %v1982
        %v1989 = vmul.f32 %v1976, %v1982
        %v1990 = vmul.f32 %v1977, %v1982
        %v1991 = vadd.f32 %v1962, %v1983
        %v1992 = vadd.f32 %v1963, %v1984
        %v1993 = vadd.f32 %v1964, %v1985
        %v1994 = vadd.f32 %v1965, %v1986
        %v1995 = vadd.f32 %v1966, %v1987
        %v1996 = vadd.f32 %v1967, %v1988
        %v1997 = vadd.f32 %v1968, %v1989
        %v1998 = vadd.f32 %v1969, %v1990
        %v1999 = vld [vmem:[%s1160 + $0x7] sm:$0xff]
        %v2000 = vld [vmem:[%s1160 + $0xf] sm:$0xff]
        %v2001 = vld [vmem:[%s1160 + $0x27] sm:$0xff]
        %v2002 = vld [vmem:[%s1160 + $0x2f] sm:$0xff]
        %v2003 = vld [vmem:[%s1160 + $0x47] sm:$0xff]
        %v2004 = vld [vmem:[%s1160 + $0x4f] sm:$0xff]
        %v2005 = vld [vmem:[%s1160 + $0x67] sm:$0xff]
        %v2006 = vld [vmem:[%s1160 + $0x6f] sm:$0xff]
        %v2007 = vld [vmem:[%s1734] sm:$0x1]
        %v2008 = vlaneseq
        %v2009 = vshrl.u32 %v2008, 7
        %v2010 = vsub.s32 0, %v2009
        %v2011 = vrot.slane %v2007, %v2010
        %v2012 = vmul.f32 %v1999, %v2011
        %v2013 = vmul.f32 %v2000, %v2011
        %v2014 = vmul.f32 %v2001, %v2011
        %v2015 = vmul.f32 %v2002, %v2011
        %v2016 = vmul.f32 %v2003, %v2011
        %v2017 = vmul.f32 %v2004, %v2011
        %v2018 = vmul.f32 %v2005, %v2011
        %v2019 = vmul.f32 %v2006, %v2011
        %v2020 = vadd.f32 %v1991, %v2012
        %v2021 = vadd.f32 %v1992, %v2013
        %v2022 = vadd.f32 %v1993, %v2014
        %v2023 = vadd.f32 %v1994, %v2015
        %v2024 = vadd.f32 %v1995, %v2016
        %v2025 = vadd.f32 %v1996, %v2017
        %v2026 = vadd.f32 %v1997, %v2018
        %v2027 = vadd.f32 %v1998, %v2019
        %v2028 = vld [vmem:[%s1160 + $0x8] sm:$0xff]
        %v2029 = vld [vmem:[%s1160 + $0x10] sm:$0xff]
        %v2030 = vld [vmem:[%s1160 + $0x28] sm:$0xff]
        %v2031 = vld [vmem:[%s1160 + $0x30] sm:$0xff]
        %v2032 = vld [vmem:[%s1160 + $0x48] sm:$0xff]
        %v2033 = vld [vmem:[%s1160 + $0x50] sm:$0xff]
        %v2034 = vld [vmem:[%s1160 + $0x68] sm:$0xff]
        %v2035 = vld [vmem:[%s1160 + $0x70] sm:$0xff]
        %v2036 = vld [vmem:[%s1734 + $0x1] sm:$0x1]
        %v2037 = vlaneseq
        %v2038 = vshrl.u32 %v2037, 7
        %v2039 = vsub.s32 0, %v2038
        %v2040 = vrot.slane %v2036, %v2039
        %v2041 = vmul.f32 %v2028, %v2040
        %v2042 = vmul.f32 %v2029, %v2040
        %v2043 = vmul.f32 %v2030, %v2040
        %v2044 = vmul.f32 %v2031, %v2040
        %v2045 = vmul.f32 %v2032, %v2040
        %v2046 = vmul.f32 %v2033, %v2040
        %v2047 = vmul.f32 %v2034, %v2040
        %v2048 = vmul.f32 %v2035, %v2040
        %v2049 = vadd.f32 %v2020, %v2041
        %v2050 = vadd.f32 %v2021, %v2042
        %v2051 = vadd.f32 %v2022, %v2043
        %v2052 = vadd.f32 %v2023, %v2044
        %v2053 = vadd.f32 %v2024, %v2045
        %v2054 = vadd.f32 %v2025, %v2046
        %v2055 = vadd.f32 %v2026, %v2047
        %v2056 = vadd.f32 %v2027, %v2048
        %v2057 = vld [vmem:[%s1160 + $0x9] sm:$0xff]
        %v2058 = vld [vmem:[%s1160 + $0x11] sm:$0xff]
        %v2059 = vld [vmem:[%s1160 + $0x29] sm:$0xff]
        %v2060 = vld [vmem:[%s1160 + $0x31] sm:$0xff]
        %v2061 = vld [vmem:[%s1160 + $0x49] sm:$0xff]
        %v2062 = vld [vmem:[%s1160 + $0x51] sm:$0xff]
        %v2063 = vld [vmem:[%s1160 + $0x69] sm:$0xff]
        %v2064 = vld [vmem:[%s1160 + $0x71] sm:$0xff]
        %v2065 = vld [vmem:[%s1734 + $0x2] sm:$0x1]
        %v2066 = vlaneseq
        %v2067 = vshrl.u32 %v2066, 7
        %v2068 = vsub.s32 0, %v2067
        %v2069 = vrot.slane %v2065, %v2068
        %v2070 = vmul.f32 %v2057, %v2069
        %v2071 = vmul.f32 %v2058, %v2069
        %v2072 = vmul.f32 %v2059, %v2069
        %v2073 = vmul.f32 %v2060, %v2069
        %v2074 = vmul.f32 %v2061, %v2069
        %v2075 = vmul.f32 %v2062, %v2069
        %v2076 = vmul.f32 %v2063, %v2069
        %v2077 = vmul.f32 %v2064, %v2069
        %v2078 = vadd.f32 %v2049, %v2070
        %v2079 = vadd.f32 %v2050, %v2071
        %v2080 = vadd.f32 %v2051, %v2072
        %v2081 = vadd.f32 %v2052, %v2073
        %v2082 = vadd.f32 %v2053, %v2074
        %v2083 = vadd.f32 %v2054, %v2075
        %v2084 = vadd.f32 %v2055, %v2076
        %v2085 = vadd.f32 %v2056, %v2077
        %s2086 = scalar_lea.vmem [#allocation2], 192
        %v2087 = vld [vmem:[%s2086 + $0x7] sm:$0xff]
        %v2088 = vld [vmem:[%s2086 + $0xf] sm:$0xff]
        %v2089 = vld [vmem:[%s2086 + $0x27] sm:$0xff]
        %v2090 = vld [vmem:[%s2086 + $0x2f] sm:$0xff]
        %v2091 = vld [vmem:[%s2086 + $0x47] sm:$0xff]
        %v2092 = vld [vmem:[%s2086 + $0x4f] sm:$0xff]
        %v2093 = vld [vmem:[%s2086 + $0x67] sm:$0xff]
        %v2094 = vld [vmem:[%s2086 + $0x6f] sm:$0xff]
        %v2095 = vld [vmem:[%s1823] sm:$0x1]
        %v2096 = vlaneseq
        %v2097 = vshrl.u32 %v2096, 7
        %v2098 = vsub.s32 0, %v2097
        %v2099 = vrot.slane %v2095, %v2098
        %v2100 = vmul.f32 %v2087, %v2099
        %v2101 = vmul.f32 %v2088, %v2099
        %v2102 = vmul.f32 %v2089, %v2099
        %v2103 = vmul.f32 %v2090, %v2099
        %v2104 = vmul.f32 %v2091, %v2099
        %v2105 = vmul.f32 %v2092, %v2099
        %v2106 = vmul.f32 %v2093, %v2099
        %v2107 = vmul.f32 %v2094, %v2099
        %v2108 = vadd.f32 %v2078, %v2100
        %v2109 = vadd.f32 %v2079, %v2101
        %v2110 = vadd.f32 %v2080, %v2102
        %v2111 = vadd.f32 %v2081, %v2103
        %v2112 = vadd.f32 %v2082, %v2104
        %v2113 = vadd.f32 %v2083, %v2105
        %v2114 = vadd.f32 %v2084, %v2106
        %v2115 = vadd.f32 %v2085, %v2107
        %v2116 = vld [vmem:[%s2086 + $0x8] sm:$0xff]
        %v2117 = vld [vmem:[%s2086 + $0x10] sm:$0xff]
        %v2118 = vld [vmem:[%s2086 + $0x28] sm:$0xff]
        %v2119 = vld [vmem:[%s2086 + $0x30] sm:$0xff]
        %v2120 = vld [vmem:[%s2086 + $0x48] sm:$0xff]
        %v2121 = vld [vmem:[%s2086 + $0x50] sm:$0xff]
        %v2122 = vld [vmem:[%s2086 + $0x68] sm:$0xff]
        %v2123 = vld [vmem:[%s2086 + $0x70] sm:$0xff]
        %v2124 = vld [vmem:[%s1823 + $0x1] sm:$0x1]
        %v2125 = vlaneseq
        %v2126 = vshrl.u32 %v2125, 7
        %v2127 = vsub.s32 0, %v2126
        %v2128 = vrot.slane %v2124, %v2127
        %v2129 = vmul.f32 %v2116, %v2128
        %v2130 = vmul.f32 %v2117, %v2128
        %v2131 = vmul.f32 %v2118, %v2128
        %v2132 = vmul.f32 %v2119, %v2128
        %v2133 = vmul.f32 %v2120, %v2128
        %v2134 = vmul.f32 %v2121, %v2128
        %v2135 = vmul.f32 %v2122, %v2128
        %v2136 = vmul.f32 %v2123, %v2128
        %v2137 = vadd.f32 %v2108, %v2129
        %v2138 = vadd.f32 %v2109, %v2130
        %v2139 = vadd.f32 %v2110, %v2131
        %v2140 = vadd.f32 %v2111, %v2132
        %v2141 = vadd.f32 %v2112, %v2133
        %v2142 = vadd.f32 %v2113, %v2134
        %v2143 = vadd.f32 %v2114, %v2135
        %v2144 = vadd.f32 %v2115, %v2136
        %v2145 = vld [vmem:[%s2086 + $0x9] sm:$0xff]
        %v2146 = vld [vmem:[%s2086 + $0x11] sm:$0xff]
        %v2147 = vld [vmem:[%s2086 + $0x29] sm:$0xff]
        %v2148 = vld [vmem:[%s2086 + $0x31] sm:$0xff]
        %v2149 = vld [vmem:[%s2086 + $0x49] sm:$0xff]
        %v2150 = vld [vmem:[%s2086 + $0x51] sm:$0xff]
        %v2151 = vld [vmem:[%s2086 + $0x69] sm:$0xff]
        %v2152 = vld [vmem:[%s2086 + $0x71] sm:$0xff]
        %v2153 = vld [vmem:[%s1823 + $0x2] sm:$0x1]
        %v2154 = vlaneseq
        %v2155 = vshrl.u32 %v2154, 7
        %v2156 = vsub.s32 0, %v2155
        %v2157 = vrot.slane %v2153, %v2156
        %v2158 = vmul.f32 %v2145, %v2157
        %v2159 = vmul.f32 %v2146, %v2157
        %v2160 = vmul.f32 %v2147, %v2157
        %v2161 = vmul.f32 %v2148, %v2157
        %v2162 = vmul.f32 %v2149, %v2157
        %v2163 = vmul.f32 %v2150, %v2157
        %v2164 = vmul.f32 %v2151, %v2157
        %v2165 = vmul.f32 %v2152, %v2157
        %v2166 = vadd.f32 %v2137, %v2158
        %v2167 = vadd.f32 %v2138, %v2159
        %v2168 = vadd.f32 %v2139, %v2160
        %v2169 = vadd.f32 %v2140, %v2161
        %v2170 = vadd.f32 %v2141, %v2162
        %v2171 = vadd.f32 %v2142, %v2163
        %v2172 = vadd.f32 %v2143, %v2164
        %v2173 = vadd.f32 %v2144, %v2165
        %2174 = vst.msk [vmem:[#allocation4 + $0x40] sm:$0xff] %vm925, %v2166
        %2175 = vst.msk [vmem:[#allocation4 + $0x48] sm:$0xff] %vm925, %v2167
        %2176 = vst.msk [vmem:[#allocation4 + $0x50] sm:$0xff] %vm925, %v2168
        %2177 = vst.msk [vmem:[#allocation4 + $0x58] sm:$0xff] %vm925, %v2169
        %2178 = vst.msk [vmem:[#allocation4 + $0x60] sm:$0xff] %vm925, %v2170
        %2179 = vst.msk [vmem:[#allocation4 + $0x68] sm:$0xff] %vm925, %v2171
        %2180 = vst.msk [vmem:[#allocation4 + $0x70] sm:$0xff] %vm925, %v2172
        %2181 = vst.msk [vmem:[#allocation4 + $0x78] sm:$0xff] %vm925, %v2173
        %s2182 = scalar_lea.vmem [#allocation2], 256
        %v2183 = vld [vmem:[%s2182 + $0x7] sm:$0xff]
        %v2184 = vld [vmem:[%s2182 + $0xf] sm:$0xff]
        %v2185 = vld [vmem:[%s2182 + $0x27] sm:$0xff]
        %v2186 = vld [vmem:[%s2182 + $0x2f] sm:$0xff]
        %v2187 = vld [vmem:[%s2182 + $0x47] sm:$0xff]
        %v2188 = vld [vmem:[%s2182 + $0x4f] sm:$0xff]
        %v2189 = vld [vmem:[%s2182 + $0x67] sm:$0xff]
        %v2190 = vld [vmem:[%s2182 + $0x6f] sm:$0xff]
        %v2191 = vld [vmem:[#allocation9] sm:$0x1]
        %v2192 = vlaneseq
        %v2193 = vshrl.u32 %v2192, 7
        %v2194 = vsub.s32 0, %v2193
        %v2195 = vrot.slane %v2191, %v2194
        %v2196 = vmul.f32 %v2183, %v2195
        %v2197 = vmul.f32 %v2184, %v2195
        %v2198 = vmul.f32 %v2185, %v2195
        %v2199 = vmul.f32 %v2186, %v2195
        %v2200 = vmul.f32 %v2187, %v2195
        %v2201 = vmul.f32 %v2188, %v2195
        %v2202 = vmul.f32 %v2189, %v2195
        %v2203 = vmul.f32 %v2190, %v2195
        %v2204 = vadd.f32 %v2196, 0.0
        %v2205 = vadd.f32 %v2197, 0.0
        %v2206 = vadd.f32 %v2198, 0.0
        %v2207 = vadd.f32 %v2199, 0.0
        %v2208 = vadd.f32 %v2200, 0.0
        %v2209 = vadd.f32 %v2201, 0.0
        %v2210 = vadd.f32 %v2202, 0.0
        %v2211 = vadd.f32 %v2203, 0.0
        %v2212 = vld [vmem:[%s2182 + $0x8] sm:$0xff]
        %v2213 = vld [vmem:[%s2182 + $0x10] sm:$0xff]
        %v2214 = vld [vmem:[%s2182 + $0x28] sm:$0xff]
        %v2215 = vld [vmem:[%s2182 + $0x30] sm:$0xff]
        %v2216 = vld [vmem:[%s2182 + $0x48] sm:$0xff]
        %v2217 = vld [vmem:[%s2182 + $0x50] sm:$0xff]
        %v2218 = vld [vmem:[%s2182 + $0x68] sm:$0xff]
        %v2219 = vld [vmem:[%s2182 + $0x70] sm:$0xff]
        %v2220 = vld [vmem:[#allocation9 + $0x1] sm:$0x1]
        %v2221 = vlaneseq
        %v2222 = vshrl.u32 %v2221, 7
        %v2223 = vsub.s32 0, %v2222
        %v2224 = vrot.slane %v2220, %v2223
        %v2225 = vmul.f32 %v2212, %v2224
        %v2226 = vmul.f32 %v2213, %v2224
        %v2227 = vmul.f32 %v2214, %v2224
        %v2228 = vmul.f32 %v2215, %v2224
        %v2229 = vmul.f32 %v2216, %v2224
        %v2230 = vmul.f32 %v2217, %v2224
        %v2231 = vmul.f32 %v2218, %v2224
        %v2232 = vmul.f32 %v2219, %v2224
        %v2233 = vadd.f32 %v2204, %v2225
        %v2234 = vadd.f32 %v2205, %v2226
        %v2235 = vadd.f32 %v2206, %v2227
        %v2236 = vadd.f32 %v2207, %v2228
        %v2237 = vadd.f32 %v2208, %v2229
        %v2238 = vadd.f32 %v2209, %v2230
        %v2239 = vadd.f32 %v2210, %v2231
        %v2240 = vadd.f32 %v2211, %v2232
        %v2241 = vld [vmem:[%s2182 + $0x9] sm:$0xff]
        %v2242 = vld [vmem:[%s2182 + $0x11] sm:$0xff]
        %v2243 = vld [vmem:[%s2182 + $0x29] sm:$0xff]
        %v2244 = vld [vmem:[%s2182 + $0x31] sm:$0xff]
        %v2245 = vld [vmem:[%s2182 + $0x49] sm:$0xff]
        %v2246 = vld [vmem:[%s2182 + $0x51] sm:$0xff]
        %v2247 = vld [vmem:[%s2182 + $0x69] sm:$0xff]
        %v2248 = vld [vmem:[%s2182 + $0x71] sm:$0xff]
        %v2249 = vld [vmem:[#allocation9 + $0x2] sm:$0x1]
        %v2250 = vlaneseq
        %v2251 = vshrl.u32 %v2250, 7
        %v2252 = vsub.s32 0, %v2251
        %v2253 = vrot.slane %v2249, %v2252
        %v2254 = vmul.f32 %v2241, %v2253
        %v2255 = vmul.f32 %v2242, %v2253
        %v2256 = vmul.f32 %v2243, %v2253
        %v2257 = vmul.f32 %v2244, %v2253
        %v2258 = vmul.f32 %v2245, %v2253
        %v2259 = vmul.f32 %v2246, %v2253
        %v2260 = vmul.f32 %v2247, %v2253
        %v2261 = vmul.f32 %v2248, %v2253
        %v2262 = vadd.f32 %v2233, %v2254
        %v2263 = vadd.f32 %v2234, %v2255
        %v2264 = vadd.f32 %v2235, %v2256
        %v2265 = vadd.f32 %v2236, %v2257
        %v2266 = vadd.f32 %v2237, %v2258
        %v2267 = vadd.f32 %v2238, %v2259
        %v2268 = vadd.f32 %v2239, %v2260
        %v2269 = vadd.f32 %v2240, %v2261
        %v2270 = vld [vmem:[%s1395 + $0x7] sm:$0xff]
        %v2271 = vld [vmem:[%s1395 + $0xf] sm:$0xff]
        %v2272 = vld [vmem:[%s1395 + $0x27] sm:$0xff]
        %v2273 = vld [vmem:[%s1395 + $0x2f] sm:$0xff]
        %v2274 = vld [vmem:[%s1395 + $0x47] sm:$0xff]
        %v2275 = vld [vmem:[%s1395 + $0x4f] sm:$0xff]
        %v2276 = vld [vmem:[%s1395 + $0x67] sm:$0xff]
        %v2277 = vld [vmem:[%s1395 + $0x6f] sm:$0xff]
        %v2278 = vld [vmem:[%s1734] sm:$0x1]
        %v2279 = vlaneseq
        %v2280 = vshrl.u32 %v2279, 7
        %v2281 = vsub.s32 0, %v2280
        %v2282 = vrot.slane %v2278, %v2281
        %v2283 = vmul.f32 %v2270, %v2282
        %v2284 = vmul.f32 %v2271, %v2282
        %v2285 = vmul.f32 %v2272, %v2282
        %v2286 = vmul.f32 %v2273, %v2282
        %v2287 = vmul.f32 %v2274, %v2282
        %v2288 = vmul.f32 %v2275, %v2282
        %v2289 = vmul.f32 %v2276, %v2282
        %v2290 = vmul.f32 %v2277, %v2282
        %v2291 = vadd.f32 %v2262, %v2283
        %v2292 = vadd.f32 %v2263, %v2284
        %v2293 = vadd.f32 %v2264, %v2285
        %v2294 = vadd.f32 %v2265, %v2286
        %v2295 = vadd.f32 %v2266, %v2287
        %v2296 = vadd.f32 %v2267, %v2288
        %v2297 = vadd.f32 %v2268, %v2289
        %v2298 = vadd.f32 %v2269, %v2290
        %v2299 = vld [vmem:[%s1395 + $0x8] sm:$0xff]
        %v2300 = vld [vmem:[%s1395 + $0x10] sm:$0xff]
        %v2301 = vld [vmem:[%s1395 + $0x28] sm:$0xff]
        %v2302 = vld [vmem:[%s1395 + $0x30] sm:$0xff]
        %v2303 = vld [vmem:[%s1395 + $0x48] sm:$0xff]
        %v2304 = vld [vmem:[%s1395 + $0x50] sm:$0xff]
        %v2305 = vld [vmem:[%s1395 + $0x68] sm:$0xff]
        %v2306 = vld [vmem:[%s1395 + $0x70] sm:$0xff]
        %v2307 = vld [vmem:[%s1734 + $0x1] sm:$0x1]
        %v2308 = vlaneseq
        %v2309 = vshrl.u32 %v2308, 7
        %v2310 = vsub.s32 0, %v2309
        %v2311 = vrot.slane %v2307, %v2310
        %v2312 = vmul.f32 %v2299, %v2311
        %v2313 = vmul.f32 %v2300, %v2311
        %v2314 = vmul.f32 %v2301, %v2311
        %v2315 = vmul.f32 %v2302, %v2311
        %v2316 = vmul.f32 %v2303, %v2311
        %v2317 = vmul.f32 %v2304, %v2311
        %v2318 = vmul.f32 %v2305, %v2311
        %v2319 = vmul.f32 %v2306, %v2311
        %v2320 = vadd.f32 %v2291, %v2312
        %v2321 = vadd.f32 %v2292, %v2313
        %v2322 = vadd.f32 %v2293, %v2314
        %v2323 = vadd.f32 %v2294, %v2315
        %v2324 = vadd.f32 %v2295, %v2316
        %v2325 = vadd.f32 %v2296, %v2317
        %v2326 = vadd.f32 %v2297, %v2318
        %v2327 = vadd.f32 %v2298, %v2319
        %v2328 = vld [vmem:[%s1395 + $0x9] sm:$0xff]
        %v2329 = vld [vmem:[%s1395 + $0x11] sm:$0xff]
        %v2330 = vld [vmem:[%s1395 + $0x29] sm:$0xff]
        %v2331 = vld [vmem:[%s1395 + $0x31] sm:$0xff]
        %v2332 = vld [vmem:[%s1395 + $0x49] sm:$0xff]
        %v2333 = vld [vmem:[%s1395 + $0x51] sm:$0xff]
        %v2334 = vld [vmem:[%s1395 + $0x69] sm:$0xff]
        %v2335 = vld [vmem:[%s1395 + $0x71] sm:$0xff]
        %v2336 = vld [vmem:[%s1734 + $0x2] sm:$0x1]
        %v2337 = vlaneseq
        %v2338 = vshrl.u32 %v2337, 7
        %v2339 = vsub.s32 0, %v2338
        %v2340 = vrot.slane %v2336, %v2339
        %v2341 = vmul.f32 %v2328, %v2340
        %v2342 = vmul.f32 %v2329, %v2340
        %v2343 = vmul.f32 %v2330, %v2340
        %v2344 = vmul.f32 %v2331, %v2340
        %v2345 = vmul.f32 %v2332, %v2340
        %v2346 = vmul.f32 %v2333, %v2340
        %v2347 = vmul.f32 %v2334, %v2340
        %v2348 = vmul.f32 %v2335, %v2340
        %v2349 = vadd.f32 %v2320, %v2341
        %v2350 = vadd.f32 %v2321, %v2342
        %v2351 = vadd.f32 %v2322, %v2343
        %v2352 = vadd.f32 %v2323, %v2344
        %v2353 = vadd.f32 %v2324, %v2345
        %v2354 = vadd.f32 %v2325, %v2346
        %v2355 = vadd.f32 %v2326, %v2347
        %v2356 = vadd.f32 %v2327, %v2348
        %s2357 = scalar_lea.vmem [#allocation2], 320
        %v2358 = vld [vmem:[%s2357 + $0x7] sm:$0xff]
        %v2359 = vld [vmem:[%s2357 + $0xf] sm:$0xff]
        %v2360 = vld [vmem:[%s2357 + $0x27] sm:$0xff]
        %v2361 = vld [vmem:[%s2357 + $0x2f] sm:$0xff]
        %v2362 = vld [vmem:[%s2357 + $0x47] sm:$0xff]
        %v2363 = vld [vmem:[%s2357 + $0x4f] sm:$0xff]
        %v2364 = vld [vmem:[%s2357 + $0x67] sm:$0xff]
        %v2365 = vld [vmem:[%s2357 + $0x6f] sm:$0xff]
        %v2366 = vld [vmem:[%s1823] sm:$0x1]
        %v2367 = vlaneseq
        %v2368 = vshrl.u32 %v2367, 7
        %v2369 = vsub.s32 0, %v2368
        %v2370 = vrot.slane %v2366, %v2369
        %v2371 = vmul.f32 %v2358, %v2370
        %v2372 = vmul.f32 %v2359, %v2370
        %v2373 = vmul.f32 %v2360, %v2370
        %v2374 = vmul.f32 %v2361, %v2370
        %v2375 = vmul.f32 %v2362, %v2370
        %v2376 = vmul.f32 %v2363, %v2370
        %v2377 = vmul.f32 %v2364, %v2370
        %v2378 = vmul.f32 %v2365, %v2370
        %v2379 = vadd.f32 %v2349, %v2371
        %v2380 = vadd.f32 %v2350, %v2372
        %v2381 = vadd.f32 %v2351, %v2373
        %v2382 = vadd.f32 %v2352, %v2374
        %v2383 = vadd.f32 %v2353, %v2375
        %v2384 = vadd.f32 %v2354, %v2376
        %v2385 = vadd.f32 %v2355, %v2377
        %v2386 = vadd.f32 %v2356, %v2378
        %v2387 = vld [vmem:[%s2357 + $0x8] sm:$0xff]
        %v2388 = vld [vmem:[%s2357 + $0x10] sm:$0xff]
        %v2389 = vld [vmem:[%s2357 + $0x28] sm:$0xff]
        %v2390 = vld [vmem:[%s2357 + $0x30] sm:$0xff]
        %v2391 = vld [vmem:[%s2357 + $0x48] sm:$0xff]
        %v2392 = vld [vmem:[%s2357 + $0x50] sm:$0xff]
        %v2393 = vld [vmem:[%s2357 + $0x68] sm:$0xff]
        %v2394 = vld [vmem:[%s2357 + $0x70] sm:$0xff]
        %v2395 = vld [vmem:[%s1823 + $0x1] sm:$0x1]
        %v2396 = vlaneseq
        %v2397 = vshrl.u32 %v2396, 7
        %v2398 = vsub.s32 0, %v2397
        %v2399 = vrot.slane %v2395, %v2398
        %v2400 = vmul.f32 %v2387, %v2399
        %v2401 = vmul.f32 %v2388, %v2399
        %v2402 = vmul.f32 %v2389, %v2399
        %v2403 = vmul.f32 %v2390, %v2399
        %v2404 = vmul.f32 %v2391, %v2399
        %v2405 = vmul.f32 %v2392, %v2399
        %v2406 = vmul.f32 %v2393, %v2399
        %v2407 = vmul.f32 %v2394, %v2399
        %v2408 = vadd.f32 %v2379, %v2400
        %v2409 = vadd.f32 %v2380, %v2401
        %v2410 = vadd.f32 %v2381, %v2402
        %v2411 = vadd.f32 %v2382, %v2403
        %v2412 = vadd.f32 %v2383, %v2404
        %v2413 = vadd.f32 %v2384, %v2405
        %v2414 = vadd.f32 %v2385, %v2406
        %v2415 = vadd.f32 %v2386, %v2407
        %v2416 = vld [vmem:[%s2357 + $0x9] sm:$0xff]
        %v2417 = vld [vmem:[%s2357 + $0x11] sm:$0xff]
        %v2418 = vld [vmem:[%s2357 + $0x29] sm:$0xff]
        %v2419 = vld [vmem:[%s2357 + $0x31] sm:$0xff]
        %v2420 = vld [vmem:[%s2357 + $0x49] sm:$0xff]
        %v2421 = vld [vmem:[%s2357 + $0x51] sm:$0xff]
        %v2422 = vld [vmem:[%s2357 + $0x69] sm:$0xff]
        %v2423 = vld [vmem:[%s2357 + $0x71] sm:$0xff]
        %v2424 = vld [vmem:[%s1823 + $0x2] sm:$0x1]
        %v2425 = vlaneseq
        %v2426 = vshrl.u32 %v2425, 7
        %v2427 = vsub.s32 0, %v2426
        %v2428 = vrot.slane %v2424, %v2427
        %v2429 = vmul.f32 %v2416, %v2428
        %v2430 = vmul.f32 %v2417, %v2428
        %v2431 = vmul.f32 %v2418, %v2428
        %v2432 = vmul.f32 %v2419, %v2428
        %v2433 = vmul.f32 %v2420, %v2428
        %v2434 = vmul.f32 %v2421, %v2428
        %v2435 = vmul.f32 %v2422, %v2428
        %v2436 = vmul.f32 %v2423, %v2428
        %v2437 = vadd.f32 %v2408, %v2429
        %v2438 = vadd.f32 %v2409, %v2430
        %v2439 = vadd.f32 %v2410, %v2431
        %v2440 = vadd.f32 %v2411, %v2432
        %v2441 = vadd.f32 %v2412, %v2433
        %v2442 = vadd.f32 %v2413, %v2434
        %v2443 = vadd.f32 %v2414, %v2435
        %v2444 = vadd.f32 %v2415, %v2436
        %2445 = vst.msk [vmem:[#allocation4 + $0x80] sm:$0xff] %vm925, %v2437
        %2446 = vst.msk [vmem:[#allocation4 + $0x88] sm:$0xff] %vm925, %v2438
        %2447 = vst.msk [vmem:[#allocation4 + $0x90] sm:$0xff] %vm925, %v2439
        %2448 = vst.msk [vmem:[#allocation4 + $0x98] sm:$0xff] %vm925, %v2440
        %2449 = vst.msk [vmem:[#allocation4 + $0xa0] sm:$0xff] %vm925, %v2441
        %2450 = vst.msk [vmem:[#allocation4 + $0xa8] sm:$0xff] %vm925, %v2442
        %2451 = vst.msk [vmem:[#allocation4 + $0xb0] sm:$0xff] %vm925, %v2443
        %2452 = vst.msk [vmem:[#allocation4 + $0xb8] sm:$0xff] %vm925, %v2444
        %s2453 = scalar_lea.vmem [#allocation2], 384
        %v2454 = vld [vmem:[%s2453 + $0x7] sm:$0xff]
        %v2455 = vld [vmem:[%s2453 + $0xf] sm:$0xff]
        %v2456 = vld [vmem:[%s2453 + $0x27] sm:$0xff]
        %v2457 = vld [vmem:[%s2453 + $0x2f] sm:$0xff]
        %v2458 = vld [vmem:[%s2453 + $0x47] sm:$0xff]
        %v2459 = vld [vmem:[%s2453 + $0x4f] sm:$0xff]
        %v2460 = vld [vmem:[%s2453 + $0x67] sm:$0xff]
        %v2461 = vld [vmem:[%s2453 + $0x6f] sm:$0xff]
        %v2462 = vld [vmem:[#allocation9] sm:$0x1]
        %v2463 = vlaneseq
        %v2464 = vshrl.u32 %v2463, 7
        %v2465 = vsub.s32 0, %v2464
        %v2466 = vrot.slane %v2462, %v2465
        %v2467 = vmul.f32 %v2454, %v2466
        %v2468 = vmul.f32 %v2455, %v2466
        %v2469 = vmul.f32 %v2456, %v2466
        %v2470 = vmul.f32 %v2457, %v2466
        %v2471 = vmul.f32 %v2458, %v2466
        %v2472 = vmul.f32 %v2459, %v2466
        %v2473 = vmul.f32 %v2460, %v2466
        %v2474 = vmul.f32 %v2461, %v2466
        %v2475 = vadd.f32 %v2467, 0.0
        %v2476 = vadd.f32 %v2468, 0.0
        %v2477 = vadd.f32 %v2469, 0.0
        %v2478 = vadd.f32 %v2470, 0.0
        %v2479 = vadd.f32 %v2471, 0.0
        %v2480 = vadd.f32 %v2472, 0.0
        %v2481 = vadd.f32 %v2473, 0.0
        %v2482 = vadd.f32 %v2474, 0.0
        %v2483 = vld [vmem:[%s2453 + $0x8] sm:$0xff]
        %v2484 = vld [vmem:[%s2453 + $0x10] sm:$0xff]
        %v2485 = vld [vmem:[%s2453 + $0x28] sm:$0xff]
        %v2486 = vld [vmem:[%s2453 + $0x30] sm:$0xff]
        %v2487 = vld [vmem:[%s2453 + $0x48] sm:$0xff]
        %v2488 = vld [vmem:[%s2453 + $0x50] sm:$0xff]
        %v2489 = vld [vmem:[%s2453 + $0x68] sm:$0xff]
        %v2490 = vld [vmem:[%s2453 + $0x70] sm:$0xff]
        %v2491 = vld [vmem:[#allocation9 + $0x1] sm:$0x1]
        %v2492 = vlaneseq
        %v2493 = vshrl.u32 %v2492, 7
        %v2494 = vsub.s32 0, %v2493
        %v2495 = vrot.slane %v2491, %v2494
        %v2496 = vmul.f32 %v2483, %v2495
        %v2497 = vmul.f32 %v2484, %v2495
        %v2498 = vmul.f32 %v2485, %v2495
        %v2499 = vmul.f32 %v2486, %v2495
        %v2500 = vmul.f32 %v2487, %v2495
        %v2501 = vmul.f32 %v2488, %v2495
        %v2502 = vmul.f32 %v2489, %v2495
        %v2503 = vmul.f32 %v2490, %v2495
        %v2504 = vadd.f32 %v2475, %v2496
        %v2505 = vadd.f32 %v2476, %v2497
        %v2506 = vadd.f32 %v2477, %v2498
        %v2507 = vadd.f32 %v2478, %v2499
        %v2508 = vadd.f32 %v2479, %v2500
        %v2509 = vadd.f32 %v2480, %v2501
        %v2510 = vadd.f32 %v2481, %v2502
        %v2511 = vadd.f32 %v2482, %v2503
        %v2512 = vld [vmem:[%s2453 + $0x9] sm:$0xff]
        %v2513 = vld [vmem:[%s2453 + $0x11] sm:$0xff]
        %v2514 = vld [vmem:[%s2453 + $0x29] sm:$0xff]
        %v2515 = vld [vmem:[%s2453 + $0x31] sm:$0xff]
        %v2516 = vld [vmem:[%s2453 + $0x49] sm:$0xff]
        %v2517 = vld [vmem:[%s2453 + $0x51] sm:$0xff]
        %v2518 = vld [vmem:[%s2453 + $0x69] sm:$0xff]
        %v2519 = vld [vmem:[%s2453 + $0x71] sm:$0xff]
        %v2520 = vld [vmem:[#allocation9 + $0x2] sm:$0x1]
        %v2521 = vlaneseq
        %v2522 = vshrl.u32 %v2521, 7
        %v2523 = vsub.s32 0, %v2522
        %v2524 = vrot.slane %v2520, %v2523
        %v2525 = vmul.f32 %v2512, %v2524
        %v2526 = vmul.f32 %v2513, %v2524
        %v2527 = vmul.f32 %v2514, %v2524
        %v2528 = vmul.f32 %v2515, %v2524
        %v2529 = vmul.f32 %v2516, %v2524
        %v2530 = vmul.f32 %v2517, %v2524
        %v2531 = vmul.f32 %v2518, %v2524
        %v2532 = vmul.f32 %v2519, %v2524
        %v2533 = vadd.f32 %v2504, %v2525
        %v2534 = vadd.f32 %v2505, %v2526
        %v2535 = vadd.f32 %v2506, %v2527
        %v2536 = vadd.f32 %v2507, %v2528
        %v2537 = vadd.f32 %v2508, %v2529
        %v2538 = vadd.f32 %v2509, %v2530
        %v2539 = vadd.f32 %v2510, %v2531
        %v2540 = vadd.f32 %v2511, %v2532
        %v2541 = vld [vmem:[%s1630 + $0x7] sm:$0xff]
        %v2542 = vld [vmem:[%s1630 + $0xf] sm:$0xff]
        %v2543 = vld [vmem:[%s1630 + $0x27] sm:$0xff]
        %v2544 = vld [vmem:[%s1630 + $0x2f] sm:$0xff]
        %v2545 = vld [vmem:[%s1630 + $0x47] sm:$0xff]
        %v2546 = vld [vmem:[%s1630 + $0x4f] sm:$0xff]
        %v2547 = vld [vmem:[%s1630 + $0x67] sm:$0xff]
        %v2548 = vld [vmem:[%s1630 + $0x6f] sm:$0xff]
        %v2549 = vld [vmem:[%s1734] sm:$0x1]
        %v2550 = vlaneseq
        %v2551 = vshrl.u32 %v2550, 7
        %v2552 = vsub.s32 0, %v2551
        %v2553 = vrot.slane %v2549, %v2552
        %v2554 = vmul.f32 %v2541, %v2553
        %v2555 = vmul.f32 %v2542, %v2553
        %v2556 = vmul.f32 %v2543, %v2553
        %v2557 = vmul.f32 %v2544, %v2553
        %v2558 = vmul.f32 %v2545, %v2553
        %v2559 = vmul.f32 %v2546, %v2553
        %v2560 = vmul.f32 %v2547, %v2553
        %v2561 = vmul.f32 %v2548, %v2553
        %v2562 = vadd.f32 %v2533, %v2554
        %v2563 = vadd.f32 %v2534, %v2555
        %v2564 = vadd.f32 %v2535, %v2556
        %v2565 = vadd.f32 %v2536, %v2557
        %v2566 = vadd.f32 %v2537, %v2558
        %v2567 = vadd.f32 %v2538, %v2559
        %v2568 = vadd.f32 %v2539, %v2560
        %v2569 = vadd.f32 %v2540, %v2561
        %v2570 = vld [vmem:[%s1630 + $0x8] sm:$0xff]
        %v2571 = vld [vmem:[%s1630 + $0x10] sm:$0xff]
        %v2572 = vld [vmem:[%s1630 + $0x28] sm:$0xff]
        %v2573 = vld [vmem:[%s1630 + $0x30] sm:$0xff]
        %v2574 = vld [vmem:[%s1630 + $0x48] sm:$0xff]
        %v2575 = vld [vmem:[%s1630 + $0x50] sm:$0xff]
        %v2576 = vld [vmem:[%s1630 + $0x68] sm:$0xff]
        %v2577 = vld [vmem:[%s1630 + $0x70] sm:$0xff]
        %v2578 = vld [vmem:[%s1734 + $0x1] sm:$0x1]
        %v2579 = vlaneseq
        %v2580 = vshrl.u32 %v2579, 7
        %v2581 = vsub.s32 0, %v2580
        %v2582 = vrot.slane %v2578, %v2581
        %v2583 = vmul.f32 %v2570, %v2582
        %v2584 = vmul.f32 %v2571, %v2582
        %v2585 = vmul.f32 %v2572, %v2582
        %v2586 = vmul.f32 %v2573, %v2582
        %v2587 = vmul.f32 %v2574, %v2582
        %v2588 = vmul.f32 %v2575, %v2582
        %v2589 = vmul.f32 %v2576, %v2582
        %v2590 = vmul.f32 %v2577, %v2582
        %v2591 = vadd.f32 %v2562, %v2583
        %v2592 = vadd.f32 %v2563, %v2584
        %v2593 = vadd.f32 %v2564, %v2585
        %v2594 = vadd.f32 %v2565, %v2586
        %v2595 = vadd.f32 %v2566, %v2587
        %v2596 = vadd.f32 %v2567, %v2588
        %v2597 = vadd.f32 %v2568, %v2589
        %v2598 = vadd.f32 %v2569, %v2590
        %v2599 = vld [vmem:[%s1630 + $0x9] sm:$0xff]
        %v2600 = vld [vmem:[%s1630 + $0x11] sm:$0xff]
        %v2601 = vld [vmem:[%s1630 + $0x29] sm:$0xff]
        %v2602 = vld [vmem:[%s1630 + $0x31] sm:$0xff]
        %v2603 = vld [vmem:[%s1630 + $0x49] sm:$0xff]
        %v2604 = vld [vmem:[%s1630 + $0x51] sm:$0xff]
        %v2605 = vld [vmem:[%s1630 + $0x69] sm:$0xff]
        %v2606 = vld [vmem:[%s1630 + $0x71] sm:$0xff]
        %v2607 = vld [vmem:[%s1734 + $0x2] sm:$0x1]
        %v2608 = vlaneseq
        %v2609 = vshrl.u32 %v2608, 7
        %v2610 = vsub.s32 0, %v2609
        %v2611 = vrot.slane %v2607, %v2610
        %v2612 = vmul.f32 %v2599, %v2611
        %v2613 = vmul.f32 %v2600, %v2611
        %v2614 = vmul.f32 %v2601, %v2611
        %v2615 = vmul.f32 %v2602, %v2611
        %v2616 = vmul.f32 %v2603, %v2611
        %v2617 = vmul.f32 %v2604, %v2611
        %v2618 = vmul.f32 %v2605, %v2611
        %v2619 = vmul.f32 %v2606, %v2611
        %v2620 = vadd.f32 %v2591, %v2612
        %v2621 = vadd.f32 %v2592, %v2613
        %v2622 = vadd.f32 %v2593, %v2614
        %v2623 = vadd.f32 %v2594, %v2615
        %v2624 = vadd.f32 %v2595, %v2616
        %v2625 = vadd.f32 %v2596, %v2617
        %v2626 = vadd.f32 %v2597, %v2618
        %v2627 = vadd.f32 %v2598, %v2619
        %s2628 = scalar_lea.vmem [#allocation2], 448
        %v2629 = vld [vmem:[%s2628 + $0x7] sm:$0xff]
        %v2630 = vld [vmem:[%s2628 + $0xf] sm:$0xff]
        %v2631 = vld [vmem:[%s2628 + $0x27] sm:$0xff]
        %v2632 = vld [vmem:[%s2628 + $0x2f] sm:$0xff]
        %v2633 = vld [vmem:[%s2628 + $0x47] sm:$0xff]
        %v2634 = vld [vmem:[%s2628 + $0x4f] sm:$0xff]
        %v2635 = vld [vmem:[%s2628 + $0x67] sm:$0xff]
        %v2636 = vld [vmem:[%s2628 + $0x6f] sm:$0xff]
        %v2637 = vld [vmem:[%s1823] sm:$0x1]
        %v2638 = vlaneseq
        %v2639 = vshrl.u32 %v2638, 7
        %v2640 = vsub.s32 0, %v2639
        %v2641 = vrot.slane %v2637, %v2640
        %v2642 = vmul.f32 %v2629, %v2641
        %v2643 = vmul.f32 %v2630, %v2641
        %v2644 = vmul.f32 %v2631, %v2641
        %v2645 = vmul.f32 %v2632, %v2641
        %v2646 = vmul.f32 %v2633, %v2641
        %v2647 = vmul.f32 %v2634, %v2641
        %v2648 = vmul.f32 %v2635, %v2641
        %v2649 = vmul.f32 %v2636, %v2641
        %v2650 = vadd.f32 %v2620, %v2642
        %v2651 = vadd.f32 %v2621, %v2643
        %v2652 = vadd.f32 %v2622, %v2644
        %v2653 = vadd.f32 %v2623, %v2645
        %v2654 = vadd.f32 %v2624, %v2646
        %v2655 = vadd.f32 %v2625, %v2647
        %v2656 = vadd.f32 %v2626, %v2648
        %v2657 = vadd.f32 %v2627, %v2649
        %v2658 = vld [vmem:[%s2628 + $0x8] sm:$0xff]
        %v2659 = vld [vmem:[%s2628 + $0x10] sm:$0xff]
        %v2660 = vld [vmem:[%s2628 + $0x28] sm:$0xff]
        %v2661 = vld [vmem:[%s2628 + $0x30] sm:$0xff]
        %v2662 = vld [vmem:[%s2628 + $0x48] sm:$0xff]
        %v2663 = vld [vmem:[%s2628 + $0x50] sm:$0xff]
        %v2664 = vld [vmem:[%s2628 + $0x68] sm:$0xff]
        %v2665 = vld [vmem:[%s2628 + $0x70] sm:$0xff]
        %v2666 = vld [vmem:[%s1823 + $0x1] sm:$0x1]
        %v2667 = vlaneseq
        %v2668 = vshrl.u32 %v2667, 7
        %v2669 = vsub.s32 0, %v2668
        %v2670 = vrot.slane %v2666, %v2669
        %v2671 = vmul.f32 %v2658, %v2670
        %v2672 = vmul.f32 %v2659, %v2670
        %v2673 = vmul.f32 %v2660, %v2670
        %v2674 = vmul.f32 %v2661, %v2670
        %v2675 = vmul.f32 %v2662, %v2670
        %v2676 = vmul.f32 %v2663, %v2670
        %v2677 = vmul.f32 %v2664, %v2670
        %v2678 = vmul.f32 %v2665, %v2670
        %v2679 = vadd.f32 %v2650, %v2671
        %v2680 = vadd.f32 %v2651, %v2672
        %v2681 = vadd.f32 %v2652, %v2673
        %v2682 = vadd.f32 %v2653, %v2674
        %v2683 = vadd.f32 %v2654, %v2675
        %v2684 = vadd.f32 %v2655, %v2676
        %v2685 = vadd.f32 %v2656, %v2677
        %v2686 = vadd.f32 %v2657, %v2678
        %v2687 = vld [vmem:[%s2628 + $0x9] sm:$0xff]
        %v2688 = vld [vmem:[%s2628 + $0x11] sm:$0xff]
        %v2689 = vld [vmem:[%s2628 + $0x29] sm:$0xff]
        %v2690 = vld [vmem:[%s2628 + $0x31] sm:$0xff]
        %v2691 = vld [vmem:[%s2628 + $0x49] sm:$0xff]
        %v2692 = vld [vmem:[%s2628 + $0x51] sm:$0xff]
        %v2693 = vld [vmem:[%s2628 + $0x69] sm:$0xff]
        %v2694 = vld [vmem:[%s2628 + $0x71] sm:$0xff]
        %v2695 = vld [vmem:[%s1823 + $0x2] sm:$0x1]
        %v2696 = vlaneseq
        %v2697 = vshrl.u32 %v2696, 7
        %v2698 = vsub.s32 0, %v2697
        %v2699 = vrot.slane %v2695, %v2698
        %v2700 = vmul.f32 %v2687, %v2699
        %v2701 = vmul.f32 %v2688, %v2699
        %v2702 = vmul.f32 %v2689, %v2699
        %v2703 = vmul.f32 %v2690, %v2699
        %v2704 = vmul.f32 %v2691, %v2699
        %v2705 = vmul.f32 %v2692, %v2699
        %v2706 = vmul.f32 %v2693, %v2699
        %v2707 = vmul.f32 %v2694, %v2699
        %v2708 = vadd.f32 %v2679, %v2700
        %v2709 = vadd.f32 %v2680, %v2701
        %v2710 = vadd.f32 %v2681, %v2702
        %v2711 = vadd.f32 %v2682, %v2703
        %v2712 = vadd.f32 %v2683, %v2704
        %v2713 = vadd.f32 %v2684, %v2705
        %v2714 = vadd.f32 %v2685, %v2706
        %v2715 = vadd.f32 %v2686, %v2707
        %2716 = vst.msk [vmem:[#allocation4 + $0xc0] sm:$0xff] %vm925, %v2708
        %2717 = vst.msk [vmem:[#allocation4 + $0xc8] sm:$0xff] %vm925, %v2709
        %2718 = vst.msk [vmem:[#allocation4 + $0xd0] sm:$0xff] %vm925, %v2710
        %2719 = vst.msk [vmem:[#allocation4 + $0xd8] sm:$0xff] %vm925, %v2711
        %2720 = vst.msk [vmem:[#allocation4 + $0xe0] sm:$0xff] %vm925, %v2712
        %2721 = vst.msk [vmem:[#allocation4 + $0xe8] sm:$0xff] %vm925, %v2713
        %2722 = vst.msk [vmem:[#allocation4 + $0xf0] sm:$0xff] %vm925, %v2714
        %2723 = vst.msk [vmem:[#allocation4 + $0xf8] sm:$0xff] %vm925, %v2715
        %v2724 = vld [vmem:[#allocation4] sm:$0xff]
        %v2725 = vld [vmem:[#allocation4 + $0x8] sm:$0xff]
        %v2726 = vld [vmem:[#allocation4 + $0x10] sm:$0xff]
        %v2727 = vld [vmem:[#allocation4 + $0x18] sm:$0xff]
        %v2728 = vld [vmem:[#allocation4 + $0x20] sm:$0xff]
        %v2729 = vld [vmem:[#allocation4 + $0x28] sm:$0xff]
        %v2730 = vld [vmem:[#allocation4 + $0x30] sm:$0xff]
        %v2731 = vld [vmem:[#allocation4 + $0x38] sm:$0xff]
        %v2732 = vld [vmem:[#allocation4 + $0x40] sm:$0xff]
        %v2733 = vld [vmem:[#allocation4 + $0x48] sm:$0xff]
        %v2734 = vld [vmem:[#allocation4 + $0x50] sm:$0xff]
        %v2735 = vld [vmem:[#allocation4 + $0x58] sm:$0xff]
        %v2736 = vld [vmem:[#allocation4 + $0x60] sm:$0xff]
        %v2737 = vld [vmem:[#allocation4 + $0x68] sm:$0xff]
        %v2738 = vld [vmem:[#allocation4 + $0x70] sm:$0xff]
        %v2739 = vld [vmem:[#allocation4 + $0x78] sm:$0xff]
        %v2740 = vld [vmem:[#allocation4 + $0x80] sm:$0xff]
        %v2741 = vld [vmem:[#allocation4 + $0x88] sm:$0xff]
        %v2742 = vld [vmem:[#allocation4 + $0x90] sm:$0xff]
        %v2743 = vld [vmem:[#allocation4 + $0x98] sm:$0xff]
        %v2744 = vld [vmem:[#allocation4 + $0xa0] sm:$0xff]
        %v2745 = vld [vmem:[#allocation4 + $0xa8] sm:$0xff]
        %v2746 = vld [vmem:[#allocation4 + $0xb0] sm:$0xff]
        %v2747 = vld [vmem:[#allocation4 + $0xb8] sm:$0xff]
        %v2748 = vld [vmem:[#allocation4 + $0xc0] sm:$0xff]
        %v2749 = vld [vmem:[#allocation4 + $0xc8] sm:$0xff]
        %v2750 = vld [vmem:[#allocation4 + $0xd0] sm:$0xff]
        %v2751 = vld [vmem:[#allocation4 + $0xd8] sm:$0xff]
        %v2752 = vld [vmem:[#allocation4 + $0xe0] sm:$0xff]
        %v2753 = vld [vmem:[#allocation4 + $0xe8] sm:$0xff]
        %v2754 = vld [vmem:[#allocation4 + $0xf0] sm:$0xff]
        %v2755 = vld [vmem:[#allocation4 + $0xf8] sm:$0xff]
        %v2756 = vmul.f32 %v2724, %v2724
        %v2757 = vmul.f32 %v2725, %v2725
        %v2758 = vmul.f32 %v2726, %v2726
        %v2759 = vmul.f32 %v2727, %v2727
        %v2760 = vmul.f32 %v2728, %v2728
        %v2761 = vmul.f32 %v2729, %v2729
        %v2762 = vmul.f32 %v2730, %v2730
        %v2763 = vmul.f32 %v2731, %v2731
        %v2764 = vmul.f32 %v2732, %v2732
        %v2765 = vmul.f32 %v2733, %v2733
        %v2766 = vmul.f32 %v2734, %v2734
        %v2767 = vmul.f32 %v2735, %v2735
        %v2768 = vmul.f32 %v2736, %v2736
        %v2769 = vmul.f32 %v2737, %v2737
        %v2770 = vmul.f32 %v2738, %v2738
        %v2771 = vmul.f32 %v2739, %v2739
        %v2772 = vmul.f32 %v2740, %v2740
        %v2773 = vmul.f32 %v2741, %v2741
        %v2774 = vmul.f32 %v2742, %v2742
        %v2775 = vmul.f32 %v2743, %v2743
        %v2776 = vmul.f32 %v2744, %v2744
        %v2777 = vmul.f32 %v2745, %v2745
        %v2778 = vmul.f32 %v2746, %v2746
        %v2779 = vmul.f32 %v2747, %v2747
        %v2780 = vmul.f32 %v2748, %v2748
        %v2781 = vmul.f32 %v2749, %v2749
        %v2782 = vmul.f32 %v2750, %v2750
        %v2783 = vmul.f32 %v2751, %v2751
        %v2784 = vmul.f32 %v2752, %v2752
        %v2785 = vmul.f32 %v2753, %v2753
        %v2786 = vmul.f32 %v2754, %v2754
        %v2787 = vmul.f32 %v2755, %v2755
        %v2788 = vsel %vm693, %v2756, 0.0
        %v2789 = vsel %vm693, %v2757, 0.0
        %v2790 = vadd.f32 %v2788, %v2789
        %v2791 = vsel %vm693, %v2758, 0.0
        %v2792 = vadd.f32 %v2790, %v2791
        %v2793 = vsel %vm693, %v2759, 0.0
        %v2794 = vadd.f32 %v2792, %v2793
        %v2795 = vsel %vm693, %v2760, 0.0
        %v2796 = vadd.f32 %v2794, %v2795
        %v2797 = vsel %vm693, %v2761, 0.0
        %v2798 = vadd.f32 %v2796, %v2797
        %v2799 = vsel %vm693, %v2762, 0.0
        %v2800 = vadd.f32 %v2798, %v2799
        %v2801 = vsel %vm693, %v2763, 0.0
        %v2802 = vadd.f32 %v2800, %v2801
        %v2803 = vsel %vm693, %v2764, 0.0
        %v2804 = vadd.f32 %v2802, %v2803
        %v2805 = vsel %vm693, %v2765, 0.0
        %v2806 = vadd.f32 %v2804, %v2805
        %v2807 = vsel %vm693, %v2766, 0.0
        %v2808 = vadd.f32 %v2806, %v2807
        %v2809 = vsel %vm693, %v2767, 0.0
        %v2810 = vadd.f32 %v2808, %v2809
        %v2811 = vsel %vm693, %v2768, 0.0
        %v2812 = vadd.f32 %v2810, %v2811
        %v2813 = vsel %vm693, %v2769, 0.0
        %v2814 = vadd.f32 %v2812, %v2813
        %v2815 = vsel %vm693, %v2770, 0.0
        %v2816 = vadd.f32 %v2814, %v2815
        %v2817 = vsel %vm693, %v2771, 0.0
        %v2818 = vadd.f32 %v2816, %v2817
        %v2819 = vsel %vm693, %v2772, 0.0
        %v2820 = vadd.f32 %v2818, %v2819
        %v2821 = vsel %vm693, %v2773, 0.0
        %v2822 = vadd.f32 %v2820, %v2821
        %v2823 = vsel %vm693, %v2774, 0.0
        %v2824 = vadd.f32 %v2822, %v2823
        %v2825 = vsel %vm693, %v2775, 0.0
        %v2826 = vadd.f32 %v2824, %v2825
        %v2827 = vsel %vm693, %v2776, 0.0
        %v2828 = vadd.f32 %v2826, %v2827
        %v2829 = vsel %vm693, %v2777, 0.0
        %v2830 = vadd.f32 %v2828, %v2829
        %v2831 = vsel %vm693, %v2778, 0.0
        %v2832 = vadd.f32 %v2830, %v2831
        %v2833 = vsel %vm693, %v2779, 0.0
        %v2834 = vadd.f32 %v2832, %v2833
        %v2835 = vsel %vm693, %v2780, 0.0
        %v2836 = vadd.f32 %v2834, %v2835
        %v2837 = vsel %vm693, %v2781, 0.0
        %v2838 = vadd.f32 %v2836, %v2837
        %v2839 = vsel %vm693, %v2782, 0.0
        %v2840 = vadd.f32 %v2838, %v2839
        %v2841 = vsel %vm693, %v2783, 0.0
        %v2842 = vadd.f32 %v2840, %v2841
        %v2843 = vsel %vm693, %v2784, 0.0
        %v2844 = vadd.f32 %v2842, %v2843
        %v2845 = vsel %vm693, %v2785, 0.0
        %v2846 = vadd.f32 %v2844, %v2845
        %v2847 = vsel %vm693, %v2786, 0.0
        %v2848 = vadd.f32 %v2846, %v2847
        %v2849 = vsel %vm693, %v2787, 0.0
        %v2850 = vadd.f32 %v2848, %v2849
        %v2851 = vrot.slane %v2850, 4
        %v2852 = vadd.f32 %v2850, %v2851
        %v2853 = vrot.slane %v2852, 2
        %v2854 = vadd.f32 %v2852, %v2853
        %v2855 = vrot.slane %v2854, 1
        %v2856 = vadd.f32 %v2854, %v2855
        %v2857 = vmax.f32 %v2856, 1e-24
        %v2858 = vrsqrt.pop %v2857
        %vm2859 = vcmask 523520
        %v2860 = vsel %vm2859, %v2756, 0.0
        %v2861 = vsel %vm2859, %v2757, 0.0
        %v2862 = vadd.f32 %v2860, %v2861
        %v2863 = vsel %vm2859, %v2758, 0.0
        %v2864 = vadd.f32 %v2862, %v2863
        %v2865 = vsel %vm2859, %v2759, 0.0
        %v2866 = vadd.f32 %v2864, %v2865
        %v2867 = vsel %vm2859, %v2760, 0.0
        %v2868 = vadd.f32 %v2866, %v2867
        %v2869 = vsel %vm2859, %v2761, 0.0
        %v2870 = vadd.f32 %v2868, %v2869
        %v2871 = vsel %vm2859, %v2762, 0.0
        %v2872 = vadd.f32 %v2870, %v2871
        %v2873 = vsel %vm2859, %v2763, 0.0
        %v2874 = vadd.f32 %v2872, %v2873
        %v2875 = vsel %vm2859, %v2764, 0.0
        %v2876 = vadd.f32 %v2874, %v2875
        %v2877 = vsel %vm2859, %v2765, 0.0
        %v2878 = vadd.f32 %v2876, %v2877
        %v2879 = vsel %vm2859, %v2766, 0.0
        %v2880 = vadd.f32 %v2878, %v2879
        %v2881 = vsel %vm2859, %v2767, 0.0
        %v2882 = vadd.f32 %v2880, %v2881
        %v2883 = vsel %vm2859, %v2768, 0.0
        %v2884 = vadd.f32 %v2882, %v2883
        %v2885 = vsel %vm2859, %v2769, 0.0
        %v2886 = vadd.f32 %v2884, %v2885
        %v2887 = vsel %vm2859, %v2770, 0.0
        %v2888 = vadd.f32 %v2886, %v2887
        %v2889 = vsel %vm2859, %v2771, 0.0
        %v2890 = vadd.f32 %v2888, %v2889
        %v2891 = vsel %vm2859, %v2772, 0.0
        %v2892 = vadd.f32 %v2890, %v2891
        %v2893 = vsel %vm2859, %v2773, 0.0
        %v2894 = vadd.f32 %v2892, %v2893
        %v2895 = vsel %vm2859, %v2774, 0.0
        %v2896 = vadd.f32 %v2894, %v2895
        %v2897 = vsel %vm2859, %v2775, 0.0
        %v2898 = vadd.f32 %v2896, %v2897
        %v2899 = vsel %vm2859, %v2776, 0.0
        %v2900 = vadd.f32 %v2898, %v2899
        %v2901 = vsel %vm2859, %v2777, 0.0
        %v2902 = vadd.f32 %v2900, %v2901
        %v2903 = vsel %vm2859, %v2778, 0.0
        %v2904 = vadd.f32 %v2902, %v2903
        %v2905 = vsel %vm2859, %v2779, 0.0
        %v2906 = vadd.f32 %v2904, %v2905
        %v2907 = vsel %vm2859, %v2780, 0.0
        %v2908 = vadd.f32 %v2906, %v2907
        %v2909 = vsel %vm2859, %v2781, 0.0
        %v2910 = vadd.f32 %v2908, %v2909
        %v2911 = vsel %vm2859, %v2782, 0.0
        %v2912 = vadd.f32 %v2910, %v2911
        %v2913 = vsel %vm2859, %v2783, 0.0
        %v2914 = vadd.f32 %v2912, %v2913
        %v2915 = vsel %vm2859, %v2784, 0.0
        %v2916 = vadd.f32 %v2914, %v2915
        %v2917 = vsel %vm2859, %v2785, 0.0
        %v2918 = vadd.f32 %v2916, %v2917
        %v2919 = vsel %vm2859, %v2786, 0.0
        %v2920 = vadd.f32 %v2918, %v2919
        %v2921 = vsel %vm2859, %v2787, 0.0
        %v2922 = vadd.f32 %v2920, %v2921
        %v2923 = vrot.slane %v2922, 4
        %v2924 = vadd.f32 %v2922, %v2923
        %v2925 = vrot.slane %v2924, 2
        %v2926 = vadd.f32 %v2924, %v2925
        %v2927 = vrot.slane %v2926, 1
        %v2928 = vadd.f32 %v2926, %v2927
        %v2929 = vmax.f32 %v2928, 1e-24
        %v2930 = vrsqrt.pop %v2929
        %v2931 = vmul.f32 %v2858, %v680
        %v2932 = vlaneseq
        %v2933 = vshrl.u32 %v2932, 7
        %v2934 = vsub.s32 0, %v2933
        %v2935 = vrot.slane %v2931, %v2934
        %v2936 = vmul.f32 %v2724, %v2935
        %v2937 = vmul.f32 %v2725, %v2935
        %v2938 = vmul.f32 %v2726, %v2935
        %v2939 = vmul.f32 %v2727, %v2935
        %v2940 = vmul.f32 %v2728, %v2935
        %v2941 = vmul.f32 %v2729, %v2935
        %v2942 = vmul.f32 %v2730, %v2935
        %v2943 = vmul.f32 %v2731, %v2935
        %v2944 = vmul.f32 %v2732, %v2935
        %v2945 = vmul.f32 %v2733, %v2935
        %v2946 = vmul.f32 %v2734, %v2935
        %v2947 = vmul.f32 %v2735, %v2935
        %v2948 = vmul.f32 %v2736, %v2935
        %v2949 = vmul.f32 %v2737, %v2935
        %v2950 = vmul.f32 %v2738, %v2935
        %v2951 = vmul.f32 %v2739, %v2935
        %v2952 = vmul.f32 %v2740, %v2935
        %v2953 = vmul.f32 %v2741, %v2935
        %v2954 = vmul.f32 %v2742, %v2935
        %v2955 = vmul.f32 %v2743, %v2935
        %v2956 = vmul.f32 %v2744, %v2935
        %v2957 = vmul.f32 %v2745, %v2935
        %v2958 = vmul.f32 %v2746, %v2935
        %v2959 = vmul.f32 %v2747, %v2935
        %v2960 = vmul.f32 %v2748, %v2935
        %v2961 = vmul.f32 %v2749, %v2935
        %v2962 = vmul.f32 %v2750, %v2935
        %v2963 = vmul.f32 %v2751, %v2935
        %v2964 = vmul.f32 %v2752, %v2935
        %v2965 = vmul.f32 %v2753, %v2935
        %v2966 = vmul.f32 %v2754, %v2935
        %v2967 = vmul.f32 %v2755, %v2935
        %v2968 = vpack.c.bf16 %v2937, %v2936
        %v2969 = vpack.c.bf16 %v2939, %v2938
        %v2970 = vpack.c.bf16 %v2941, %v2940
        %v2971 = vpack.c.bf16 %v2943, %v2942
        %v2972 = vpack.c.bf16 %v2945, %v2944
        %v2973 = vpack.c.bf16 %v2947, %v2946
        %v2974 = vpack.c.bf16 %v2949, %v2948
        %v2975 = vpack.c.bf16 %v2951, %v2950
        %v2976 = vpack.c.bf16 %v2953, %v2952
        %v2977 = vpack.c.bf16 %v2955, %v2954
        %v2978 = vpack.c.bf16 %v2957, %v2956
        %v2979 = vpack.c.bf16 %v2959, %v2958
        %v2980 = vpack.c.bf16 %v2961, %v2960
        %v2981 = vpack.c.bf16 %v2963, %v2962
        %v2982 = vpack.c.bf16 %v2965, %v2964
        %v2983 = vpack.c.bf16 %v2967, %v2966
        %v2984 = vmul.f32 %v2724, %v2930
        %v2985 = vmul.f32 %v2725, %v2930
        %v2986 = vmul.f32 %v2726, %v2930
        %v2987 = vmul.f32 %v2727, %v2930
        %v2988 = vmul.f32 %v2728, %v2930
        %v2989 = vmul.f32 %v2729, %v2930
        %v2990 = vmul.f32 %v2730, %v2930
        %v2991 = vmul.f32 %v2731, %v2930
        %v2992 = vmul.f32 %v2732, %v2930
        %v2993 = vmul.f32 %v2733, %v2930
        %v2994 = vmul.f32 %v2734, %v2930
        %v2995 = vmul.f32 %v2735, %v2930
        %v2996 = vmul.f32 %v2736, %v2930
        %v2997 = vmul.f32 %v2737, %v2930
        %v2998 = vmul.f32 %v2738, %v2930
        %v2999 = vmul.f32 %v2739, %v2930
        %v3000 = vmul.f32 %v2740, %v2930
        %v3001 = vmul.f32 %v2741, %v2930
        %v3002 = vmul.f32 %v2742, %v2930
        %v3003 = vmul.f32 %v2743, %v2930
        %v3004 = vmul.f32 %v2744, %v2930
        %v3005 = vmul.f32 %v2745, %v2930
        %v3006 = vmul.f32 %v2746, %v2930
        %v3007 = vmul.f32 %v2747, %v2930
        %v3008 = vmul.f32 %v2748, %v2930
        %v3009 = vmul.f32 %v2749, %v2930
        %v3010 = vmul.f32 %v2750, %v2930
        %v3011 = vmul.f32 %v2751, %v2930
        %v3012 = vmul.f32 %v2752, %v2930
        %v3013 = vmul.f32 %v2753, %v2930
        %v3014 = vmul.f32 %v2754, %v2930
        %v3015 = vmul.f32 %v2755, %v2930
        %v3016 = vpack.c.bf16 %v2985, %v2984
        %v3017 = vpack.c.bf16 %v2987, %v2986
        %v3018 = vpack.c.bf16 %v2989, %v2988
        %v3019 = vpack.c.bf16 %v2991, %v2990
        %v3020 = vpack.c.bf16 %v2993, %v2992
        %v3021 = vpack.c.bf16 %v2995, %v2994
        %v3022 = vpack.c.bf16 %v2997, %v2996
        %v3023 = vpack.c.bf16 %v2999, %v2998
        %v3024 = vpack.c.bf16 %v3001, %v3000
        %v3025 = vpack.c.bf16 %v3003, %v3002
        %v3026 = vpack.c.bf16 %v3005, %v3004
        %v3027 = vpack.c.bf16 %v3007, %v3006
        %v3028 = vpack.c.bf16 %v3009, %v3008
        %v3029 = vpack.c.bf16 %v3011, %v3010
        %v3030 = vpack.c.bf16 %v3013, %v3012
        %v3031 = vpack.c.bf16 %v3015, %v3014
        %3032 = vxpose.xlu0.c.b16.start [1/8] %v2968, 128
        %3033 = vxpose.xlu0.c.b16.cont [2/8] %v2969, 128
        %3034 = vxpose.xlu0.c.b16.cont [3/8] %v2970, 128
        %3035 = vxpose.xlu0.c.b16.cont [4/8] %v2971, 128
        %3036 = vxpose.xlu0.c.b16.cont [5/8] %v2972, 128
        %3037 = vxpose.xlu0.c.b16.cont [6/8] %v2973, 128
        %3038 = vxpose.xlu0.c.b16.cont [7/8] %v2974, 128
        %3039 = vxpose.xlu0.c.b16.end [8/8] %v2975, 128
        %v3040 = vpop.trf.xlu0
        %v3041 = vpop.trf.xlu0
        %v3042 = vpop.trf.xlu0
        %v3043 = vpop.trf.xlu0
        %v3044 = vpop.trf.xlu0
        %v3045 = vpop.trf.xlu0
        %v3046 = vpop.trf.xlu0
        %v3047 = vpop.trf.xlu0
        %3048 = vxpose.xlu0.c.b16.start [1/8] %v2976, 128
        %3049 = vxpose.xlu0.c.b16.cont [2/8] %v2977, 128
        %3050 = vxpose.xlu0.c.b16.cont [3/8] %v2978, 128
        %3051 = vxpose.xlu0.c.b16.cont [4/8] %v2979, 128
        %3052 = vxpose.xlu0.c.b16.cont [5/8] %v2980, 128
        %3053 = vxpose.xlu0.c.b16.cont [6/8] %v2981, 128
        %3054 = vxpose.xlu0.c.b16.cont [7/8] %v2982, 128
        %3055 = vxpose.xlu0.c.b16.end [8/8] %v2983, 128
        %v3056 = vpop.trf.xlu0
        %v3057 = vpop.trf.xlu0
        %v3058 = vpop.trf.xlu0
        %v3059 = vpop.trf.xlu0
        %v3060 = vpop.trf.xlu0
        %v3061 = vpop.trf.xlu0
        %v3062 = vpop.trf.xlu0
        %v3063 = vpop.trf.xlu0
        %3080 = vrot.lane.b32.xlu0 %v3016, 96
        %v3081 = vpop.permute.xlu0 %3080
        %3082 = vrot.lane.b32.xlu0 %v3017, 96
        %v3083 = vpop.permute.xlu0 %3082
        %3084 = vrot.lane.b32.xlu0 %v3018, 96
        %v3085 = vpop.permute.xlu0 %3084
        %3086 = vrot.lane.b32.xlu0 %v3019, 96
        %v3087 = vpop.permute.xlu0 %3086
        %3088 = vrot.lane.b32.xlu0 %v3020, 96
        %v3089 = vpop.permute.xlu0 %3088
        %3090 = vrot.lane.b32.xlu0 %v3021, 96
        %v3091 = vpop.permute.xlu0 %3090
        %3092 = vrot.lane.b32.xlu0 %v3022, 96
        %v3093 = vpop.permute.xlu0 %3092
        %3094 = vrot.lane.b32.xlu0 %v3023, 96
        %v3095 = vpop.permute.xlu0 %3094
        %3096 = vrot.lane.b32.xlu0 %v3024, 96
        %v3097 = vpop.permute.xlu0 %3096
        %3098 = vrot.lane.b32.xlu0 %v3025, 96
        %v3099 = vpop.permute.xlu0 %3098
        %3100 = vrot.lane.b32.xlu0 %v3026, 96
        %v3101 = vpop.permute.xlu0 %3100
        %3102 = vrot.lane.b32.xlu0 %v3027, 96
        %v3103 = vpop.permute.xlu0 %3102
        %3104 = vrot.lane.b32.xlu0 %v3028, 96
        %v3105 = vpop.permute.xlu0 %3104
        %3106 = vrot.lane.b32.xlu0 %v3029, 96
        %v3107 = vpop.permute.xlu0 %3106
        %3108 = vrot.lane.b32.xlu0 %v3030, 96
        %v3109 = vpop.permute.xlu0 %3108
        %3110 = vrot.lane.b32.xlu0 %v3031, 96
        %v3111 = vpop.permute.xlu0 %3110
        %3128 = vmatprep.subr.bf16.mxu0 0
        %3129 = vmatpush1.bf16.msra.mxu0 %v3081
        %3130 = vmatprep.subr.bf16.mxu0 0
        %3131 = vmatpush1.bf16.msra.mxu0 %v3083
        %3132 = vmatprep.subr.bf16.mxu0 0
        %3133 = vmatpush1.bf16.msra.mxu0 %v3085
        %3134 = vmatprep.subr.bf16.mxu0 0
        %3135 = vmatpush1.bf16.msra.mxu0 %v3087
        %3136 = vmatprep.subr.bf16.mxu0 0
        %3137 = vmatpush1.bf16.msra.mxu0 %v3089
        %3138 = vmatprep.subr.bf16.mxu0 0
        %3139 = vmatpush1.bf16.msra.mxu0 %v3091
        %3140 = vmatprep.subr.bf16.mxu0 0
        %3141 = vmatpush1.bf16.msra.mxu0 %v3093
        %3142 = vmatprep.subr.bf16.mxu0 0
        %3143 = vmatpush1.bf16.msra.mxu0 %v3095
        %3144 = vmatprep.subr.bf16.mxu0 0
        %3145 = vmatpush1.bf16.msra.mxu0 %v3097
        %3146 = vmatprep.subr.bf16.mxu0 0
        %3147 = vmatpush1.bf16.msra.mxu0 %v3099
        %3148 = vmatprep.subr.bf16.mxu0 0
        %3149 = vmatpush1.bf16.msra.mxu0 %v3101
        %3150 = vmatprep.subr.bf16.mxu0 0
        %3151 = vmatpush1.bf16.msra.mxu0 %v3103
        %3152 = vmatprep.subr.bf16.mxu0 0
        %3153 = vmatpush1.bf16.msra.mxu0 %v3105
        %3154 = vmatprep.subr.bf16.mxu0 0
        %3155 = vmatpush1.bf16.msra.mxu0 %v3107
        %3156 = vmatprep.subr.bf16.mxu0 0
        %3157 = vmatpush1.bf16.msra.mxu0 %v3109
        %3158 = vmatprep.subr.bf16.mxu0 0
        %3159 = vmatpush1.bf16.msra.mxu0 %v3111
        %3160 = vmatprep.mubr.bf16.mxu0 %v3056
        %3161 = vmatmul.mubr.bf16.gmra.mrb[0].mxu0 %v3040
        %v3162 = vpop.f32.mrb[0].mxu0
        %v3163 = vadd.f32 %v681, %v3162
        %v3164 = vpop.f32.mrb[0].mxu0
        %v3165 = vpop.f32.mrb[0].mxu0
        %v3166 = vadd.f32 %v682, %v3165
        %v3167 = vpop.f32.mrb[0].mxu0
        %3168 = vmatprep.mubr.bf16.mxu0 %v3057
        %3169 = vmatmul.mubr.bf16.gmra.mrb[0].mxu0 %v3041
        %v3170 = vpop.f32.mrb[0].mxu0
        %v3171 = vadd.f32 %v683, %v3170
        %v3172 = vpop.f32.mrb[0].mxu0
        %v3173 = vpop.f32.mrb[0].mxu0
        %v3174 = vadd.f32 %v684, %v3173
        %v3175 = vpop.f32.mrb[0].mxu0
        %3176 = vdwg.mxu0
        %v3177 = vsel %vm693, %v3163, -inf
        %3178 = vmax.xlane.f32.xlu0 %v3177
        %v3179 = vpop.xlane.xlu0 %3178
        %v3180 = vsel %vm693, %v3166, -inf
        %3181 = vmax.xlane.f32.xlu0 %v3180
        %v3182 = vpop.xlane.xlu0 %3181
        %v3183 = vsel %vm693, %v3171, -inf
        %3184 = vmax.xlane.f32.xlu0 %v3183
        %v3185 = vpop.xlane.xlu0 %3184
        %v3186 = vsel %vm693, %v3174, -inf
        %3187 = vmax.xlane.f32.xlu0 %v3186
        %v3188 = vpop.xlane.xlu0 %3187
        %v3189 = vsub.f32 %v3163, %v3179
        %v3190 = vsub.f32 %v3166, %v3182
        %v3191 = vsub.f32 %v3171, %v3185
        %v3192 = vsub.f32 %v3174, %v3188
        %v3193 = vmul.f32 %v3189, 1.442695
        %v3194 = vpow.pop %v3193
        %v3195 = vmul.f32 %v3190, 1.442695
        %v3196 = vpow.pop %v3195
        %v3197 = vmul.f32 %v3191, 1.442695
        %v3198 = vpow.pop %v3197
        %v3199 = vmul.f32 %v3192, 1.442695
        %v3200 = vpow.pop %v3199
        %v3201 = vsel %vm693, %v3194, 0.0
        %3202 = vadd.xlane.f32.xlu0 %v3201
        %v3203 = vpop.xlane.xlu0 %3202
        %v3204 = vsel %vm693, %v3196, 0.0
        %3205 = vadd.xlane.f32.xlu0 %v3204
        %v3206 = vpop.xlane.xlu0 %3205
        %v3207 = vsel %vm693, %v3198, 0.0
        %3208 = vadd.xlane.f32.xlu0 %v3207
        %v3209 = vpop.xlane.xlu0 %3208
        %v3210 = vsel %vm693, %v3200, 0.0
        %3211 = vadd.xlane.f32.xlu0 %v3210
        %v3212 = vpop.xlane.xlu0 %3211
        %v3213 = vrcp.pop %v3203
        %v3214 = vrcp.pop %v3206
        %v3215 = vrcp.pop %v3209
        %v3216 = vrcp.pop %v3212
        %v3217 = vmul.f32 %v3194, %v3213
        %v3218 = vmul.f32 %v3196, %v3214
        %v3219 = vmul.f32 %v3198, %v3215
        %v3220 = vmul.f32 %v3200, %v3216
        %v3221 = vpack.c.bf16 %v3218, %v3217
        %v3222 = vpack.c.bf16 %v3220, %v3219
        %v3223 = vpack.c.bf16 %v2725, %v2724
        %v3224 = vpack.c.bf16 %v2727, %v2726
        %v3225 = vpack.c.bf16 %v2729, %v2728
        %v3226 = vpack.c.bf16 %v2731, %v2730
        %v3227 = vpack.c.bf16 %v2733, %v2732
        %v3228 = vpack.c.bf16 %v2735, %v2734
        %v3229 = vpack.c.bf16 %v2737, %v2736
        %v3230 = vpack.c.bf16 %v2739, %v2738
        %v3231 = vpack.c.bf16 %v2741, %v2740
        %v3232 = vpack.c.bf16 %v2743, %v2742
        %v3233 = vpack.c.bf16 %v2745, %v2744
        %v3234 = vpack.c.bf16 %v2747, %v2746
        %v3235 = vpack.c.bf16 %v2749, %v2748
        %v3236 = vpack.c.bf16 %v2751, %v2750
        %v3237 = vpack.c.bf16 %v2753, %v2752
        %v3238 = vpack.c.bf16 %v2755, %v2754
        %3255 = vrot.lane.b32.xlu0 %v3223, 64
        %v3256 = vpop.permute.xlu0 %3255
        %3257 = vrot.lane.b32.xlu0 %v3224, 64
        %v3258 = vpop.permute.xlu0 %3257
        %3259 = vrot.lane.b32.xlu0 %v3225, 64
        %v3260 = vpop.permute.xlu0 %3259
        %3261 = vrot.lane.b32.xlu0 %v3226, 64
        %v3262 = vpop.permute.xlu0 %3261
        %3263 = vrot.lane.b32.xlu0 %v3227, 64
        %v3264 = vpop.permute.xlu0 %3263
        %3265 = vrot.lane.b32.xlu0 %v3228, 64
        %v3266 = vpop.permute.xlu0 %3265
        %3267 = vrot.lane.b32.xlu0 %v3229, 64
        %v3268 = vpop.permute.xlu0 %3267
        %3269 = vrot.lane.b32.xlu0 %v3230, 64
        %v3270 = vpop.permute.xlu0 %3269
        %3271 = vrot.lane.b32.xlu0 %v3231, 64
        %v3272 = vpop.permute.xlu0 %3271
        %3273 = vrot.lane.b32.xlu0 %v3232, 64
        %v3274 = vpop.permute.xlu0 %3273
        %3275 = vrot.lane.b32.xlu0 %v3233, 64
        %v3276 = vpop.permute.xlu0 %3275
        %3277 = vrot.lane.b32.xlu0 %v3234, 64
        %v3278 = vpop.permute.xlu0 %3277
        %3279 = vrot.lane.b32.xlu0 %v3235, 64
        %v3280 = vpop.permute.xlu0 %3279
        %3281 = vrot.lane.b32.xlu0 %v3236, 64
        %v3282 = vpop.permute.xlu0 %3281
        %3283 = vrot.lane.b32.xlu0 %v3237, 64
        %v3284 = vpop.permute.xlu0 %3283
        %3285 = vrot.lane.b32.xlu0 %v3238, 64
        %v3286 = vpop.permute.xlu0 %3285
        %v3288 = vsel %vm693, %v3256, 0
        %v3291 = vsel %vm693, %v3258, 0
        %v3294 = vsel %vm693, %v3260, 0
        %v3297 = vsel %vm693, %v3262, 0
        %v3300 = vsel %vm693, %v3264, 0
        %v3303 = vsel %vm693, %v3266, 0
        %v3306 = vsel %vm693, %v3268, 0
        %v3309 = vsel %vm693, %v3270, 0
        %v3312 = vsel %vm693, %v3272, 0
        %v3315 = vsel %vm693, %v3274, 0
        %v3318 = vsel %vm693, %v3276, 0
        %v3321 = vsel %vm693, %v3278, 0
        %v3324 = vsel %vm693, %v3280, 0
        %v3327 = vsel %vm693, %v3282, 0
        %v3330 = vsel %vm693, %v3284, 0
        %v3333 = vsel %vm693, %v3286, 0
        %v3336 = vsel %vm693, %v3221, 0
        %v3339 = vsel %vm693, %v3222, 0
        %3341 = vmatprep.subr.bf16.mxu0 0
        %3342 = vmatpush1.bf16.xpose.msra.mxu0 %v3336
        %3343 = vmatprep.subr.bf16.mxu0 0
        %3344 = vmatpush1.bf16.xpose.msra.mxu0 %v3339
        %3345 = vmatprep.subr.bf16.mxu0 0
        %3346 = vmatpush1.bf16.xpose.msra.mxu0 0
        %3347 = vmatprep.subr.bf16.mxu0 0
        %3348 = vmatpush1.bf16.xpose.msra.mxu0 0
        %3349 = vmatprep.subr.bf16.mxu0 0
        %3350 = vmatpush1.bf16.xpose.msra.mxu0 0
        %3351 = vmatprep.subr.bf16.mxu0 0
        %3352 = vmatpush1.bf16.xpose.msra.mxu0 0
        %3353 = vmatprep.subr.bf16.mxu0 0
        %3354 = vmatpush1.bf16.xpose.msra.mxu0 0
        %3355 = vmatprep.subr.bf16.mxu0 0
        %3356 = vmatpush1.bf16.xpose.msra.mxu0 0
        %3357 = vmatprep.subr.bf16.mxu0 0
        %3358 = vmatpush1.bf16.xpose.msra.mxu0 0
        %3359 = vmatprep.subr.bf16.mxu0 0
        %3360 = vmatpush1.bf16.xpose.msra.mxu0 0
        %3361 = vmatprep.subr.bf16.mxu0 0
        %3362 = vmatpush1.bf16.xpose.msra.mxu0 0
        %3363 = vmatprep.subr.bf16.mxu0 0
        %3364 = vmatpush1.bf16.xpose.msra.mxu0 0
        %3365 = vmatprep.subr.bf16.mxu0 0
        %3366 = vmatpush1.bf16.xpose.msra.mxu0 0
        %3367 = vmatprep.subr.bf16.mxu0 0
        %3368 = vmatpush1.bf16.xpose.msra.mxu0 0
        %3369 = vmatprep.subr.bf16.mxu0 0
        %3370 = vmatpush1.bf16.xpose.msra.mxu0 0
        %3371 = vmatprep.subr.bf16.mxu0 0
        %3372 = vmatpush1.bf16.xpose.msra.mxu0 0
        %3373 = vmatprep.mubr.bf16.mxu0 0
        %3374 = vmatmul.mubr.bf16.gmra.mrb[0].mxu0 %v3288
        %v3375 = vpop.f32.mrb[0].mxu0
        %v3376 = vadd.f32 0.0, %v3375
        %v3377 = vpop.f32.mrb[0].mxu0
        %v3378 = vpop.f32.mrb[0].mxu0
        %v3379 = vadd.f32 0.0, %v3378
        %v3380 = vpop.f32.mrb[0].mxu0
        %3381 = vmatprep.mubr.bf16.mxu0 0
        %3382 = vmatmul.mubr.bf16.gmra.mrb[0].mxu0 %v3291
        %v3383 = vpop.f32.mrb[0].mxu0
        %v3384 = vadd.f32 0.0, %v3383
        %v3385 = vpop.f32.mrb[0].mxu0
        %v3386 = vpop.f32.mrb[0].mxu0
        %v3387 = vadd.f32 0.0, %v3386
        %v3388 = vpop.f32.mrb[0].mxu0
        %3389 = vmatprep.mubr.bf16.mxu0 0
        %3390 = vmatmul.mubr.bf16.gmra.mrb[0].mxu0 %v3294
        %v3391 = vpop.f32.mrb[0].mxu0
        %v3392 = vadd.f32 0.0, %v3391
        %v3393 = vpop.f32.mrb[0].mxu0
        %v3394 = vpop.f32.mrb[0].mxu0
        %v3395 = vadd.f32 0.0, %v3394
        %v3396 = vpop.f32.mrb[0].mxu0
        %3397 = vmatprep.mubr.bf16.mxu0 0
        %3398 = vmatmul.mubr.bf16.gmra.mrb[0].mxu0 %v3297
        %v3399 = vpop.f32.mrb[0].mxu0
        %v3400 = vadd.f32 0.0, %v3399
        %v3401 = vpop.f32.mrb[0].mxu0
        %v3402 = vpop.f32.mrb[0].mxu0
        %v3403 = vadd.f32 0.0, %v3402
        %v3404 = vpop.f32.mrb[0].mxu0
        %3405 = vmatprep.mubr.bf16.mxu0 0
        %3406 = vmatmul.mubr.bf16.gmra.mrb[0].mxu0 %v3300
        %v3407 = vpop.f32.mrb[0].mxu0
        %v3408 = vadd.f32 0.0, %v3407
        %v3409 = vpop.f32.mrb[0].mxu0
        %v3410 = vpop.f32.mrb[0].mxu0
        %v3411 = vadd.f32 0.0, %v3410
        %v3412 = vpop.f32.mrb[0].mxu0
        %3413 = vmatprep.mubr.bf16.mxu0 0
        %3414 = vmatmul.mubr.bf16.gmra.mrb[0].mxu0 %v3303
        %v3415 = vpop.f32.mrb[0].mxu0
        %v3416 = vadd.f32 0.0, %v3415
        %v3417 = vpop.f32.mrb[0].mxu0
        %v3418 = vpop.f32.mrb[0].mxu0
        %v3419 = vadd.f32 0.0, %v3418
        %v3420 = vpop.f32.mrb[0].mxu0
        %3421 = vmatprep.mubr.bf16.mxu0 0
        %3422 = vmatmul.mubr.bf16.gmra.mrb[0].mxu0 %v3306
        %v3423 = vpop.f32.mrb[0].mxu0
        %v3424 = vadd.f32 0.0, %v3423
        %v3425 = vpop.f32.mrb[0].mxu0
        %v3426 = vpop.f32.mrb[0].mxu0
        %v3427 = vadd.f32 0.0, %v3426
        %v3428 = vpop.f32.mrb[0].mxu0
        %3429 = vmatprep.mubr.bf16.mxu0 0
        %3430 = vmatmul.mubr.bf16.gmra.mrb[0].mxu0 %v3309
        %v3431 = vpop.f32.mrb[0].mxu0
        %v3432 = vadd.f32 0.0, %v3431
        %v3433 = vpop.f32.mrb[0].mxu0
        %v3434 = vpop.f32.mrb[0].mxu0
        %v3435 = vadd.f32 0.0, %v3434
        %v3436 = vpop.f32.mrb[0].mxu0
        %3437 = vmatprep.mubr.bf16.mxu0 0
        %3438 = vmatmul.mubr.bf16.gmra.mrb[0].mxu0 %v3312
        %v3439 = vpop.f32.mrb[0].mxu0
        %v3440 = vadd.f32 0.0, %v3439
        %v3441 = vpop.f32.mrb[0].mxu0
        %v3442 = vpop.f32.mrb[0].mxu0
        %v3443 = vadd.f32 0.0, %v3442
        %v3444 = vpop.f32.mrb[0].mxu0
        %3445 = vmatprep.mubr.bf16.mxu0 0
        %3446 = vmatmul.mubr.bf16.gmra.mrb[0].mxu0 %v3315
        %v3447 = vpop.f32.mrb[0].mxu0
        %v3448 = vadd.f32 0.0, %v3447
        %v3449 = vpop.f32.mrb[0].mxu0
        %v3450 = vpop.f32.mrb[0].mxu0
        %v3451 = vadd.f32 0.0, %v3450
        %v3452 = vpop.f32.mrb[0].mxu0
        %3453 = vmatprep.mubr.bf16.mxu0 0
        %3454 = vmatmul.mubr.bf16.gmra.mrb[0].mxu0 %v3318
        %v3455 = vpop.f32.mrb[0].mxu0
        %v3456 = vadd.f32 0.0, %v3455
        %v3457 = vpop.f32.mrb[0].mxu0
        %v3458 = vpop.f32.mrb[0].mxu0
        %v3459 = vadd.f32 0.0, %v3458
        %v3460 = vpop.f32.mrb[0].mxu0
        %3461 = vmatprep.mubr.bf16.mxu0 0
        %3462 = vmatmul.mubr.bf16.gmra.mrb[0].mxu0 %v3321
        %v3463 = vpop.f32.mrb[0].mxu0
        %v3464 = vadd.f32 0.0, %v3463
        %v3465 = vpop.f32.mrb[0].mxu0
        %v3466 = vpop.f32.mrb[0].mxu0
        %v3467 = vadd.f32 0.0, %v3466
        %v3468 = vpop.f32.mrb[0].mxu0
        %3469 = vmatprep.mubr.bf16.mxu0 0
        %3470 = vmatmul.mubr.bf16.gmra.mrb[0].mxu0 %v3324
        %v3471 = vpop.f32.mrb[0].mxu0
        %v3472 = vadd.f32 0.0, %v3471
        %v3473 = vpop.f32.mrb[0].mxu0
        %v3474 = vpop.f32.mrb[0].mxu0
        %v3475 = vadd.f32 0.0, %v3474
        %v3476 = vpop.f32.mrb[0].mxu0
        %3477 = vmatprep.mubr.bf16.mxu0 0
        %3478 = vmatmul.mubr.bf16.gmra.mrb[0].mxu0 %v3327
        %v3479 = vpop.f32.mrb[0].mxu0
        %v3480 = vadd.f32 0.0, %v3479
        %v3481 = vpop.f32.mrb[0].mxu0
        %v3482 = vpop.f32.mrb[0].mxu0
        %v3483 = vadd.f32 0.0, %v3482
        %v3484 = vpop.f32.mrb[0].mxu0
        %3485 = vmatprep.mubr.bf16.mxu0 0
        %3486 = vmatmul.mubr.bf16.gmra.mrb[0].mxu0 %v3330
        %v3487 = vpop.f32.mrb[0].mxu0
        %v3488 = vadd.f32 0.0, %v3487
        %v3489 = vpop.f32.mrb[0].mxu0
        %v3490 = vpop.f32.mrb[0].mxu0
        %v3491 = vadd.f32 0.0, %v3490
        %v3492 = vpop.f32.mrb[0].mxu0
        %3493 = vmatprep.mubr.bf16.mxu0 0
        %3494 = vmatmul.mubr.bf16.gmra.mrb[0].mxu0 %v3333
        %v3495 = vpop.f32.mrb[0].mxu0
        %v3496 = vadd.f32 0.0, %v3495
        %v3497 = vpop.f32.mrb[0].mxu0
        %v3498 = vpop.f32.mrb[0].mxu0
        %v3499 = vadd.f32 0.0, %v3498
        %v3500 = vpop.f32.mrb[0].mxu0
        %3501 = vdwg.mxu0
        %v3502 = vpack.c.bf16 %v3379, %v3376
        %v3503 = vpack.c.bf16 %v3387, %v3384
        %v3504 = vpack.c.bf16 %v3395, %v3392
        %v3505 = vpack.c.bf16 %v3403, %v3400
        %v3506 = vpack.c.bf16 %v3411, %v3408
        %v3507 = vpack.c.bf16 %v3419, %v3416
        %v3508 = vpack.c.bf16 %v3427, %v3424
        %v3509 = vpack.c.bf16 %v3435, %v3432
        %v3510 = vpack.c.bf16 %v3443, %v3440
        %v3511 = vpack.c.bf16 %v3451, %v3448
        %v3512 = vpack.c.bf16 %v3459, %v3456
        %v3513 = vpack.c.bf16 %v3467, %v3464
        %v3514 = vpack.c.bf16 %v3475, %v3472
        %v3515 = vpack.c.bf16 %v3483, %v3480
        %v3516 = vpack.c.bf16 %v3491, %v3488
        %v3517 = vpack.c.bf16 %v3499, %v3496
        %v3518 = vld [vmem:[%s7] sm:$0xf]
        %v3519 = vld [vmem:[%s7 + $0x4] sm:$0xf]
        %v3520 = vld [vmem:[%s7 + $0x8] sm:$0xf]
        %v3521 = vld [vmem:[%s7 + $0xc] sm:$0xf]
        %v3526 = vunpack.c.l.b16 %v3518
        %v3527 = vunpack.c.l.b16 %v3519
        %v3528 = vunpack.c.l.b16 %v3520
        %v3529 = vunpack.c.l.b16 %v3521
        %v3530 = vpack.c.b16 %v3527, %v3526
        %v3531 = vpack.c.b16 %v3529, %v3528
        %v3535 = vsel %vm693, %v3502, 0
        %v3538 = vsel %vm693, %v3503, 0
        %v3541 = vsel %vm693, %v3504, 0
        %v3544 = vsel %vm693, %v3505, 0
        %v3547 = vsel %vm693, %v3506, 0
        %v3550 = vsel %vm693, %v3507, 0
        %v3553 = vsel %vm693, %v3508, 0
        %v3556 = vsel %vm693, %v3509, 0
        %v3559 = vsel %vm693, %v3510, 0
        %v3562 = vsel %vm693, %v3511, 0
        %v3565 = vsel %vm693, %v3512, 0
        %v3568 = vsel %vm693, %v3513, 0
        %v3571 = vsel %vm693, %v3514, 0
        %v3574 = vsel %vm693, %v3515, 0
        %v3577 = vsel %vm693, %v3516, 0
        %v3580 = vsel %vm693, %v3517, 0
        %3582 = vmatprep.subr.bf16.mxu0 0
        %3583 = vmatpush1.bf16.msra.mxu0 %v3530
        %3584 = vmatprep.subr.bf16.mxu0 0
        %3585 = vmatpush1.bf16.msra.mxu0 %v3531
        %3586 = vmatprep.subr.bf16.mxu0 0
        %3587 = vmatpush1.bf16.msra.mxu0 0
        %3588 = vmatprep.subr.bf16.mxu0 0
        %3589 = vmatpush1.bf16.msra.mxu0 0
        %3590 = vmatprep.subr.bf16.mxu0 0
        %3591 = vmatpush1.bf16.msra.mxu0 0
        %3592 = vmatprep.subr.bf16.mxu0 0
        %3593 = vmatpush1.bf16.msra.mxu0 0
        %3594 = vmatprep.subr.bf16.mxu0 0
        %3595 = vmatpush1.bf16.msra.mxu0 0
        %3596 = vmatprep.subr.bf16.mxu0 0
        %3597 = vmatpush1.bf16.msra.mxu0 0
        %3598 = vmatprep.subr.bf16.mxu0 0
        %3599 = vmatpush1.bf16.msra.mxu0 0
        %3600 = vmatprep.subr.bf16.mxu0 0
        %3601 = vmatpush1.bf16.msra.mxu0 0
        %3602 = vmatprep.subr.bf16.mxu0 0
        %3603 = vmatpush1.bf16.msra.mxu0 0
        %3604 = vmatprep.subr.bf16.mxu0 0
        %3605 = vmatpush1.bf16.msra.mxu0 0
        %3606 = vmatprep.subr.bf16.mxu0 0
        %3607 = vmatpush1.bf16.msra.mxu0 0
        %3608 = vmatprep.subr.bf16.mxu0 0
        %3609 = vmatpush1.bf16.msra.mxu0 0
        %3610 = vmatprep.subr.bf16.mxu0 0
        %3611 = vmatpush1.bf16.msra.mxu0 0
        %3612 = vmatprep.subr.bf16.mxu0 0
        %3613 = vmatpush1.bf16.msra.mxu0 0
        %3614 = vmatprep.mubr.bf16.mxu0 0
        %3615 = vmatmul.mubr.bf16.gmra.mrb[0].mxu0 %v3535
        %v3616 = vpop.f32.mrb[0].mxu0
        %v3617 = vadd.f32 0.0, %v3616
        %v3618 = vpop.f32.mrb[0].mxu0
        %v3619 = vpop.f32.mrb[0].mxu0
        %v3620 = vadd.f32 0.0, %v3619
        %v3621 = vpop.f32.mrb[0].mxu0
        %3622 = vmatprep.mubr.bf16.mxu0 0
        %3623 = vmatmul.mubr.bf16.gmra.mrb[0].mxu0 %v3538
        %v3624 = vpop.f32.mrb[0].mxu0
        %v3625 = vadd.f32 0.0, %v3624
        %v3626 = vpop.f32.mrb[0].mxu0
        %v3627 = vpop.f32.mrb[0].mxu0
        %v3628 = vadd.f32 0.0, %v3627
        %v3629 = vpop.f32.mrb[0].mxu0
        %3630 = vmatprep.mubr.bf16.mxu0 0
        %3631 = vmatmul.mubr.bf16.gmra.mrb[0].mxu0 %v3541
        %v3632 = vpop.f32.mrb[0].mxu0
        %v3633 = vadd.f32 0.0, %v3632
        %v3634 = vpop.f32.mrb[0].mxu0
        %v3635 = vpop.f32.mrb[0].mxu0
        %v3636 = vadd.f32 0.0, %v3635
        %v3637 = vpop.f32.mrb[0].mxu0
        %3638 = vmatprep.mubr.bf16.mxu0 0
        %3639 = vmatmul.mubr.bf16.gmra.mrb[0].mxu0 %v3544
        %v3640 = vpop.f32.mrb[0].mxu0
        %v3641 = vadd.f32 0.0, %v3640
        %v3642 = vpop.f32.mrb[0].mxu0
        %v3643 = vpop.f32.mrb[0].mxu0
        %v3644 = vadd.f32 0.0, %v3643
        %v3645 = vpop.f32.mrb[0].mxu0
        %3646 = vmatprep.mubr.bf16.mxu0 0
        %3647 = vmatmul.mubr.bf16.gmra.mrb[0].mxu0 %v3547
        %v3648 = vpop.f32.mrb[0].mxu0
        %v3649 = vadd.f32 0.0, %v3648
        %v3650 = vpop.f32.mrb[0].mxu0
        %v3651 = vpop.f32.mrb[0].mxu0
        %v3652 = vadd.f32 0.0, %v3651
        %v3653 = vpop.f32.mrb[0].mxu0
        %3654 = vmatprep.mubr.bf16.mxu0 0
        %3655 = vmatmul.mubr.bf16.gmra.mrb[0].mxu0 %v3550
        %v3656 = vpop.f32.mrb[0].mxu0
        %v3657 = vadd.f32 0.0, %v3656
        %v3658 = vpop.f32.mrb[0].mxu0
        %v3659 = vpop.f32.mrb[0].mxu0
        %v3660 = vadd.f32 0.0, %v3659
        %v3661 = vpop.f32.mrb[0].mxu0
        %3662 = vmatprep.mubr.bf16.mxu0 0
        %3663 = vmatmul.mubr.bf16.gmra.mrb[0].mxu0 %v3553
        %v3664 = vpop.f32.mrb[0].mxu0
        %v3665 = vadd.f32 0.0, %v3664
        %v3666 = vpop.f32.mrb[0].mxu0
        %v3667 = vpop.f32.mrb[0].mxu0
        %v3668 = vadd.f32 0.0, %v3667
        %v3669 = vpop.f32.mrb[0].mxu0
        %3670 = vmatprep.mubr.bf16.mxu0 0
        %3671 = vmatmul.mubr.bf16.gmra.mrb[0].mxu0 %v3556
        %v3672 = vpop.f32.mrb[0].mxu0
        %v3673 = vadd.f32 0.0, %v3672
        %v3674 = vpop.f32.mrb[0].mxu0
        %v3675 = vpop.f32.mrb[0].mxu0
        %v3676 = vadd.f32 0.0, %v3675
        %v3677 = vpop.f32.mrb[0].mxu0
        %3678 = vmatprep.mubr.bf16.mxu0 0
        %3679 = vmatmul.mubr.bf16.gmra.mrb[0].mxu0 %v3559
        %v3680 = vpop.f32.mrb[0].mxu0
        %v3681 = vadd.f32 0.0, %v3680
        %v3682 = vpop.f32.mrb[0].mxu0
        %v3683 = vpop.f32.mrb[0].mxu0
        %v3684 = vadd.f32 0.0, %v3683
        %v3685 = vpop.f32.mrb[0].mxu0
        %3686 = vmatprep.mubr.bf16.mxu0 0
        %3687 = vmatmul.mubr.bf16.gmra.mrb[0].mxu0 %v3562
        %v3688 = vpop.f32.mrb[0].mxu0
        %v3689 = vadd.f32 0.0, %v3688
        %v3690 = vpop.f32.mrb[0].mxu0
        %v3691 = vpop.f32.mrb[0].mxu0
        %v3692 = vadd.f32 0.0, %v3691
        %v3693 = vpop.f32.mrb[0].mxu0
        %3694 = vmatprep.mubr.bf16.mxu0 0
        %3695 = vmatmul.mubr.bf16.gmra.mrb[0].mxu0 %v3565
        %v3696 = vpop.f32.mrb[0].mxu0
        %v3697 = vadd.f32 0.0, %v3696
        %v3698 = vpop.f32.mrb[0].mxu0
        %v3699 = vpop.f32.mrb[0].mxu0
        %v3700 = vadd.f32 0.0, %v3699
        %v3701 = vpop.f32.mrb[0].mxu0
        %3702 = vmatprep.mubr.bf16.mxu0 0
        %3703 = vmatmul.mubr.bf16.gmra.mrb[0].mxu0 %v3568
        %v3704 = vpop.f32.mrb[0].mxu0
        %v3705 = vadd.f32 0.0, %v3704
        %v3706 = vpop.f32.mrb[0].mxu0
        %v3707 = vpop.f32.mrb[0].mxu0
        %v3708 = vadd.f32 0.0, %v3707
        %v3709 = vpop.f32.mrb[0].mxu0
        %3710 = vmatprep.mubr.bf16.mxu0 0
        %3711 = vmatmul.mubr.bf16.gmra.mrb[0].mxu0 %v3571
        %v3712 = vpop.f32.mrb[0].mxu0
        %v3713 = vadd.f32 0.0, %v3712
        %v3714 = vpop.f32.mrb[0].mxu0
        %v3715 = vpop.f32.mrb[0].mxu0
        %v3716 = vadd.f32 0.0, %v3715
        %v3717 = vpop.f32.mrb[0].mxu0
        %3718 = vmatprep.mubr.bf16.mxu0 0
        %3719 = vmatmul.mubr.bf16.gmra.mrb[0].mxu0 %v3574
        %v3720 = vpop.f32.mrb[0].mxu0
        %v3721 = vadd.f32 0.0, %v3720
        %v3722 = vpop.f32.mrb[0].mxu0
        %v3723 = vpop.f32.mrb[0].mxu0
        %v3724 = vadd.f32 0.0, %v3723
        %v3725 = vpop.f32.mrb[0].mxu0
        %3726 = vmatprep.mubr.bf16.mxu0 0
        %3727 = vmatmul.mubr.bf16.gmra.mrb[0].mxu0 %v3577
        %v3728 = vpop.f32.mrb[0].mxu0
        %v3729 = vadd.f32 0.0, %v3728
        %v3730 = vpop.f32.mrb[0].mxu0
        %v3731 = vpop.f32.mrb[0].mxu0
        %v3732 = vadd.f32 0.0, %v3731
        %v3733 = vpop.f32.mrb[0].mxu0
        %3734 = vmatprep.mubr.bf16.mxu0 0
        %3735 = vmatmul.mubr.bf16.gmra.mrb[0].mxu0 %v3580
        %v3736 = vpop.f32.mrb[0].mxu0
        %v3737 = vadd.f32 0.0, %v3736
        %v3738 = vpop.f32.mrb[0].mxu0
        %v3739 = vpop.f32.mrb[0].mxu0
        %v3740 = vadd.f32 0.0, %v3739
        %v3741 = vpop.f32.mrb[0].mxu0
        %3742 = vdwg.mxu0
        %v3743 = vld [vmem:[%s463] sm:$0xff]
        %v3744 = vld [vmem:[%s463 + $0x8] sm:$0xff]
        %v3745 = vld [vmem:[%s463 + $0x10] sm:$0xff]
        %v3746 = vld [vmem:[%s463 + $0x18] sm:$0xff]
        %v3747 = vld [vmem:[%s463 + $0x20] sm:$0xff]
        %v3748 = vld [vmem:[%s463 + $0x28] sm:$0xff]
        %v3749 = vld [vmem:[%s463 + $0x30] sm:$0xff]
        %v3750 = vld [vmem:[%s463 + $0x38] sm:$0xff]
        %v3751 = vld [vmem:[%s463 + $0x40] sm:$0xff]
        %v3752 = vld [vmem:[%s463 + $0x48] sm:$0xff]
        %v3753 = vld [vmem:[%s463 + $0x50] sm:$0xff]
        %v3754 = vld [vmem:[%s463 + $0x58] sm:$0xff]
        %v3755 = vld [vmem:[%s463 + $0x60] sm:$0xff]
        %v3756 = vld [vmem:[%s463 + $0x68] sm:$0xff]
        %v3757 = vld [vmem:[%s463 + $0x70] sm:$0xff]
        %v3758 = vld [vmem:[%s463 + $0x78] sm:$0xff]
        %v3759 = vld [vmem:[%s463 + $0x80] sm:$0xff]
        %v3760 = vld [vmem:[%s463 + $0x88] sm:$0xff]
        %v3761 = vld [vmem:[%s463 + $0x90] sm:$0xff]
        %v3762 = vld [vmem:[%s463 + $0x98] sm:$0xff]
        %v3763 = vld [vmem:[%s463 + $0xa0] sm:$0xff]
        %v3764 = vld [vmem:[%s463 + $0xa8] sm:$0xff]
        %v3765 = vld [vmem:[%s463 + $0xb0] sm:$0xff]
        %v3766 = vld [vmem:[%s463 + $0xb8] sm:$0xff]
        %v3767 = vld [vmem:[%s463 + $0xc0] sm:$0xff]
        %v3768 = vld [vmem:[%s463 + $0xc8] sm:$0xff]
        %v3769 = vld [vmem:[%s463 + $0xd0] sm:$0xff]
        %v3770 = vld [vmem:[%s463 + $0xd8] sm:$0xff]
        %v3771 = vld [vmem:[%s463 + $0xe0] sm:$0xff]
        %v3772 = vld [vmem:[%s463 + $0xe8] sm:$0xff]
        %v3773 = vld [vmem:[%s463 + $0xf0] sm:$0xff]
        %v3774 = vld [vmem:[%s463 + $0xf8] sm:$0xff]
        %v3775 = vadd.f32 %v3743, %v3617
        %v3776 = vadd.f32 %v3744, %v3620
        %v3777 = vadd.f32 %v3745, %v3625
        %v3778 = vadd.f32 %v3746, %v3628
        %v3779 = vadd.f32 %v3747, %v3633
        %v3780 = vadd.f32 %v3748, %v3636
        %v3781 = vadd.f32 %v3749, %v3641
        %v3782 = vadd.f32 %v3750, %v3644
        %v3783 = vadd.f32 %v3751, %v3649
        %v3784 = vadd.f32 %v3752, %v3652
        %v3785 = vadd.f32 %v3753, %v3657
        %v3786 = vadd.f32 %v3754, %v3660
        %v3787 = vadd.f32 %v3755, %v3665
        %v3788 = vadd.f32 %v3756, %v3668
        %v3789 = vadd.f32 %v3757, %v3673
        %v3790 = vadd.f32 %v3758, %v3676
        %v3791 = vadd.f32 %v3759, %v3681
        %v3792 = vadd.f32 %v3760, %v3684
        %v3793 = vadd.f32 %v3761, %v3689
        %v3794 = vadd.f32 %v3762, %v3692
        %v3795 = vadd.f32 %v3763, %v3697
        %v3796 = vadd.f32 %v3764, %v3700
        %v3797 = vadd.f32 %v3765, %v3705
        %v3798 = vadd.f32 %v3766, %v3708
        %v3799 = vadd.f32 %v3767, %v3713
        %v3800 = vadd.f32 %v3768, %v3716
        %v3801 = vadd.f32 %v3769, %v3721
        %v3802 = vadd.f32 %v3770, %v3724
        %v3803 = vadd.f32 %v3771, %v3729
        %v3804 = vadd.f32 %v3772, %v3732
        %v3805 = vadd.f32 %v3773, %v3737
        %v3806 = vadd.f32 %v3774, %v3740
        %3807 = vst.msk [vmem:[#allocation5] sm:$0xff] %vm693, %v3775
        %3808 = vst.msk [vmem:[#allocation5 + $0x8] sm:$0xff] %vm693, %v3776
        %3809 = vst.msk [vmem:[#allocation5 + $0x10] sm:$0xff] %vm693, %v3777
        %3810 = vst.msk [vmem:[#allocation5 + $0x18] sm:$0xff] %vm693, %v3778
        %3811 = vst.msk [vmem:[#allocation5 + $0x20] sm:$0xff] %vm693, %v3779
        %3812 = vst.msk [vmem:[#allocation5 + $0x28] sm:$0xff] %vm693, %v3780
        %3813 = vst.msk [vmem:[#allocation5 + $0x30] sm:$0xff] %vm693, %v3781
        %3814 = vst.msk [vmem:[#allocation5 + $0x38] sm:$0xff] %vm693, %v3782
        %3815 = vst.msk [vmem:[#allocation5 + $0x40] sm:$0xff] %vm693, %v3783
        %3816 = vst.msk [vmem:[#allocation5 + $0x48] sm:$0xff] %vm693, %v3784
        %3817 = vst.msk [vmem:[#allocation5 + $0x50] sm:$0xff] %vm693, %v3785
        %3818 = vst.msk [vmem:[#allocation5 + $0x58] sm:$0xff] %vm693, %v3786
        %3819 = vst.msk [vmem:[#allocation5 + $0x60] sm:$0xff] %vm693, %v3787
        %3820 = vst.msk [vmem:[#allocation5 + $0x68] sm:$0xff] %vm693, %v3788
        %3821 = vst.msk [vmem:[#allocation5 + $0x70] sm:$0xff] %vm693, %v3789
        %3822 = vst.msk [vmem:[#allocation5 + $0x78] sm:$0xff] %vm693, %v3790
        %3823 = vst.msk [vmem:[#allocation5 + $0x80] sm:$0xff] %vm693, %v3791
        %3824 = vst.msk [vmem:[#allocation5 + $0x88] sm:$0xff] %vm693, %v3792
        %3825 = vst.msk [vmem:[#allocation5 + $0x90] sm:$0xff] %vm693, %v3793
        %3826 = vst.msk [vmem:[#allocation5 + $0x98] sm:$0xff] %vm693, %v3794
        %3827 = vst.msk [vmem:[#allocation5 + $0xa0] sm:$0xff] %vm693, %v3795
        %3828 = vst.msk [vmem:[#allocation5 + $0xa8] sm:$0xff] %vm693, %v3796
        %3829 = vst.msk [vmem:[#allocation5 + $0xb0] sm:$0xff] %vm693, %v3797
        %3830 = vst.msk [vmem:[#allocation5 + $0xb8] sm:$0xff] %vm693, %v3798
        %3831 = vst.msk [vmem:[#allocation5 + $0xc0] sm:$0xff] %vm693, %v3799
        %3832 = vst.msk [vmem:[#allocation5 + $0xc8] sm:$0xff] %vm693, %v3800
        %3833 = vst.msk [vmem:[#allocation5 + $0xd0] sm:$0xff] %vm693, %v3801
        %3834 = vst.msk [vmem:[#allocation5 + $0xd8] sm:$0xff] %vm693, %v3802
        %3835 = vst.msk [vmem:[#allocation5 + $0xe0] sm:$0xff] %vm693, %v3803
        %3836 = vst.msk [vmem:[#allocation5 + $0xe8] sm:$0xff] %vm693, %v3804
        %3837 = vst.msk [vmem:[#allocation5 + $0xf0] sm:$0xff] %vm693, %v3805
        %3838 = vst.msk [vmem:[#allocation5 + $0xf8] sm:$0xff] %vm693, %v3806
        %v3839 = vld [vmem:[#allocation5] sm:$0xff]
        %v3840 = vld [vmem:[#allocation5 + $0x8] sm:$0xff]
        %v3841 = vld [vmem:[#allocation5 + $0x10] sm:$0xff]
        %v3842 = vld [vmem:[#allocation5 + $0x18] sm:$0xff]
        %v3843 = vld [vmem:[#allocation5 + $0x20] sm:$0xff]
        %v3844 = vld [vmem:[#allocation5 + $0x28] sm:$0xff]
        %v3845 = vld [vmem:[#allocation5 + $0x30] sm:$0xff]
        %v3846 = vld [vmem:[#allocation5 + $0x38] sm:$0xff]
        %v3847 = vsel %vm693, %v3839, 0.0
        %3848 = vadd.xlane.f32.xlu0 %v3847
        %v3849 = vpop.xlane.xlu0 %3848
        %v3850 = vsel %vm693, %v3840, 0.0
        %3851 = vadd.xlane.f32.xlu0 %v3850
        %v3852 = vpop.xlane.xlu0 %3851
        %v3853 = vsel %vm693, %v3841, 0.0
        %3854 = vadd.xlane.f32.xlu0 %v3853
        %v3855 = vpop.xlane.xlu0 %3854
        %v3856 = vsel %vm693, %v3842, 0.0
        %3857 = vadd.xlane.f32.xlu0 %v3856
        %v3858 = vpop.xlane.xlu0 %3857
        %v3859 = vsel %vm693, %v3843, 0.0
        %3860 = vadd.xlane.f32.xlu0 %v3859
        %v3861 = vpop.xlane.xlu0 %3860
        %v3862 = vsel %vm693, %v3844, 0.0
        %3863 = vadd.xlane.f32.xlu0 %v3862
        %v3864 = vpop.xlane.xlu0 %3863
        %v3865 = vsel %vm693, %v3845, 0.0
        %3866 = vadd.xlane.f32.xlu0 %v3865
        %v3867 = vpop.xlane.xlu0 %3866
        %v3868 = vsel %vm693, %v3846, 0.0
        %3869 = vadd.xlane.f32.xlu0 %v3868
        %v3870 = vpop.xlane.xlu0 %3869
        %v3871 = vmul.f32 %v3849, %v718
        %v3872 = vmul.f32 %v3852, %v718
        %v3873 = vmul.f32 %v3855, %v718
        %v3874 = vmul.f32 %v3858, %v718
        %v3875 = vmul.f32 %v3861, %v718
        %v3876 = vmul.f32 %v3864, %v718
        %v3877 = vmul.f32 %v3867, %v718
        %v3878 = vmul.f32 %v3870, %v718
        %v3879 = vsub.f32 %v3839, %v3871
        %v3880 = vsub.f32 %v3840, %v3872
        %v3881 = vsub.f32 %v3841, %v3873
        %v3882 = vsub.f32 %v3842, %v3874
        %v3883 = vsub.f32 %v3843, %v3875
        %v3884 = vsub.f32 %v3844, %v3876
        %v3885 = vsub.f32 %v3845, %v3877
        %v3886 = vsub.f32 %v3846, %v3878
        %v3887 = vmul.f32 %v3879, %v3879
        %v3888 = vmul.f32 %v3880, %v3880
        %v3889 = vmul.f32 %v3881, %v3881
        %v3890 = vmul.f32 %v3882, %v3882
        %v3891 = vmul.f32 %v3883, %v3883
        %v3892 = vmul.f32 %v3884, %v3884
        %v3893 = vmul.f32 %v3885, %v3885
        %v3894 = vmul.f32 %v3886, %v3886
        %v3895 = vsel %vm693, %v3887, 0.0
        %3896 = vadd.xlane.f32.xlu0 %v3895
        %v3897 = vpop.xlane.xlu0 %3896
        %v3898 = vsel %vm693, %v3888, 0.0
        %3899 = vadd.xlane.f32.xlu0 %v3898
        %v3900 = vpop.xlane.xlu0 %3899
        %v3901 = vsel %vm693, %v3889, 0.0
        %3902 = vadd.xlane.f32.xlu0 %v3901
        %v3903 = vpop.xlane.xlu0 %3902
        %v3904 = vsel %vm693, %v3890, 0.0
        %3905 = vadd.xlane.f32.xlu0 %v3904
        %v3906 = vpop.xlane.xlu0 %3905
        %v3907 = vsel %vm693, %v3891, 0.0
        %3908 = vadd.xlane.f32.xlu0 %v3907
        %v3909 = vpop.xlane.xlu0 %3908
        %v3910 = vsel %vm693, %v3892, 0.0
        %3911 = vadd.xlane.f32.xlu0 %v3910
        %v3912 = vpop.xlane.xlu0 %3911
        %v3913 = vsel %vm693, %v3893, 0.0
        %3914 = vadd.xlane.f32.xlu0 %v3913
        %v3915 = vpop.xlane.xlu0 %3914
        %v3916 = vsel %vm693, %v3894, 0.0
        %3917 = vadd.xlane.f32.xlu0 %v3916
        %v3918 = vpop.xlane.xlu0 %3917
        %v3919 = vmul.f32 %v3897, %v718
        %v3920 = vmul.f32 %v3900, %v718
        %v3921 = vmul.f32 %v3903, %v718
        %v3922 = vmul.f32 %v3906, %v718
        %v3923 = vmul.f32 %v3909, %v718
        %v3924 = vmul.f32 %v3912, %v718
        %v3925 = vmul.f32 %v3915, %v718
        %v3926 = vmul.f32 %v3918, %v718
        %v3927 = vadd.f32 %v3919, 1e-05
        %v3928 = vadd.f32 %v3920, 1e-05
        %v3929 = vadd.f32 %v3921, 1e-05
        %v3930 = vadd.f32 %v3922, 1e-05
        %v3931 = vadd.f32 %v3923, 1e-05
        %v3932 = vadd.f32 %v3924, 1e-05
        %v3933 = vadd.f32 %v3925, 1e-05
        %v3934 = vadd.f32 %v3926, 1e-05
        %v3935 = vrsqrt.pop %v3927
        %v3936 = vrsqrt.pop %v3928
        %v3937 = vrsqrt.pop %v3929
        %v3938 = vrsqrt.pop %v3930
        %v3939 = vrsqrt.pop %v3931
        %v3940 = vrsqrt.pop %v3932
        %v3941 = vrsqrt.pop %v3933
        %v3942 = vrsqrt.pop %v3934
        %v3943 = vmul.f32 %v3879, %v3935
        %v3944 = vmul.f32 %v3880, %v3936
        %v3945 = vmul.f32 %v3881, %v3937
        %v3946 = vmul.f32 %v3882, %v3938
        %v3947 = vmul.f32 %v3883, %v3939
        %v3948 = vmul.f32 %v3884, %v3940
        %v3949 = vmul.f32 %v3885, %v3941
        %v3950 = vmul.f32 %v3886, %v3942
        %v3952 = vlaneseq
        %v3953 = vshrl.u32 %v3952, 7
        %v3954 = vsub.s32 0, %v3953
        %v3955 = vrot.slane %v678, %v3954
        %v3957 = vmul.f32 %v3943, %v3955
        %v3958 = vmul.f32 %v3944, %v3955
        %v3959 = vmul.f32 %v3945, %v3955
        %v3960 = vmul.f32 %v3946, %v3955
        %v3961 = vmul.f32 %v3947, %v3955
        %v3962 = vmul.f32 %v3948, %v3955
        %v3963 = vmul.f32 %v3949, %v3955
        %v3964 = vmul.f32 %v3950, %v3955
        %v3966 = vlaneseq
        %v3967 = vshrl.u32 %v3966, 7
        %v3968 = vsub.s32 0, %v3967
        %v3969 = vrot.slane %v679, %v3968
        %v3971 = vadd.f32 %v3957, %v3969
        %v3972 = vadd.f32 %v3958, %v3969
        %v3973 = vadd.f32 %v3959, %v3969
        %v3974 = vadd.f32 %v3960, %v3969
        %v3975 = vadd.f32 %v3961, %v3969
        %v3976 = vadd.f32 %v3962, %v3969
        %v3977 = vadd.f32 %v3963, %v3969
        %v3978 = vadd.f32 %v3964, %v3969
        %v3979 = vpack.c.bf16 %v3972, %v3971
        %v3980 = vpack.c.bf16 %v3974, %v3973
        %v3981 = vpack.c.bf16 %v3976, %v3975
        %v3982 = vpack.c.bf16 %v3978, %v3977
        %v3983 = vld [vmem:[%s10] sm:$0xf]
        %v3984 = vld [vmem:[%s10 + $0x4] sm:$0xf]
        %v3985 = vld [vmem:[%s10 + $0x8] sm:$0xf]
        %v3986 = vld [vmem:[%s10 + $0xc] sm:$0xf]
        %v3991 = vunpack.c.l.b16 %v3983
        %v3992 = vunpack.c.l.b16 %v3984
        %v3993 = vunpack.c.l.b16 %v3985
        %v3994 = vunpack.c.l.b16 %v3986
        %v3995 = vpack.c.b16 %v3992, %v3991
        %v3996 = vpack.c.b16 %v3994, %v3993
        %v4000 = vsel %vm693, %v3979, 0
        %v4003 = vsel %vm693, %v3980, 0
        %v4006 = vsel %vm693, %v3981, 0
        %v4009 = vsel %vm693, %v3982, 0
        %4011 = vmatprep.subr.bf16.mxu0 0
        %4012 = vmatpush1.bf16.msra.mxu0 %v3995
        %4013 = vmatprep.subr.bf16.mxu0 0
        %4014 = vmatpush1.bf16.msra.mxu0 %v3996
        %4015 = vmatprep.subr.bf16.mxu0 0
        %4016 = vmatpush1.bf16.msra.mxu0 0
        %4017 = vmatprep.subr.bf16.mxu0 0
        %4018 = vmatpush1.bf16.msra.mxu0 0
        %4019 = vmatprep.subr.bf16.mxu0 0
        %4020 = vmatpush1.bf16.msra.mxu0 0
        %4021 = vmatprep.subr.bf16.mxu0 0
        %4022 = vmatpush1.bf16.msra.mxu0 0
        %4023 = vmatprep.subr.bf16.mxu0 0
        %4024 = vmatpush1.bf16.msra.mxu0 0
        %4025 = vmatprep.subr.bf16.mxu0 0
        %4026 = vmatpush1.bf16.msra.mxu0 0
        %4027 = vmatprep.subr.bf16.mxu0 0
        %4028 = vmatpush1.bf16.msra.mxu0 0
        %4029 = vmatprep.subr.bf16.mxu0 0
        %4030 = vmatpush1.bf16.msra.mxu0 0
        %4031 = vmatprep.subr.bf16.mxu0 0
        %4032 = vmatpush1.bf16.msra.mxu0 0
        %4033 = vmatprep.subr.bf16.mxu0 0
        %4034 = vmatpush1.bf16.msra.mxu0 0
        %4035 = vmatprep.subr.bf16.mxu0 0
        %4036 = vmatpush1.bf16.msra.mxu0 0
        %4037 = vmatprep.subr.bf16.mxu0 0
        %4038 = vmatpush1.bf16.msra.mxu0 0
        %4039 = vmatprep.subr.bf16.mxu0 0
        %4040 = vmatpush1.bf16.msra.mxu0 0
        %4041 = vmatprep.subr.bf16.mxu0 0
        %4042 = vmatpush1.bf16.msra.mxu0 0
        %4043 = vmatprep.mubr.bf16.mxu0 0
        %4044 = vmatmul.mubr.bf16.gmra.mrb[0].mxu0 %v4000
        %v4045 = vpop.f32.mrb[0].mxu0
        %v4046 = vadd.f32 0.0, %v4045
        %v4047 = vpop.f32.mrb[0].mxu0
        %v4048 = vpop.f32.mrb[0].mxu0
        %v4049 = vadd.f32 0.0, %v4048
        %v4050 = vpop.f32.mrb[0].mxu0
        %4051 = vmatprep.mubr.bf16.mxu0 0
        %4052 = vmatmul.mubr.bf16.gmra.mrb[0].mxu0 %v4003
        %v4053 = vpop.f32.mrb[0].mxu0
        %v4054 = vadd.f32 0.0, %v4053
        %v4055 = vpop.f32.mrb[0].mxu0
        %v4056 = vpop.f32.mrb[0].mxu0
        %v4057 = vadd.f32 0.0, %v4056
        %v4058 = vpop.f32.mrb[0].mxu0
        %4059 = vmatprep.mubr.bf16.mxu0 0
        %4060 = vmatmul.mubr.bf16.gmra.mrb[0].mxu0 %v4006
        %v4061 = vpop.f32.mrb[0].mxu0
        %v4062 = vadd.f32 0.0, %v4061
        %v4063 = vpop.f32.mrb[0].mxu0
        %v4064 = vpop.f32.mrb[0].mxu0
        %v4065 = vadd.f32 0.0, %v4064
        %v4066 = vpop.f32.mrb[0].mxu0
        %4067 = vmatprep.mubr.bf16.mxu0 0
        %4068 = vmatmul.mubr.bf16.gmra.mrb[0].mxu0 %v4009
        %v4069 = vpop.f32.mrb[0].mxu0
        %v4070 = vadd.f32 0.0, %v4069
        %v4071 = vpop.f32.mrb[0].mxu0
        %v4072 = vpop.f32.mrb[0].mxu0
        %v4073 = vadd.f32 0.0, %v4072
        %v4074 = vpop.f32.mrb[0].mxu0
        %4075 = vdwg.mxu0
        %s4076 = scalar_lea.vmem [#allocation3], 32
        %4077 = vst [vmem:[%s4076 + $0x8] sm:$0xff] %v4046
        %4078 = vst [vmem:[%s4076 + $0x10] sm:$0xff] %v4049
        %4079 = vst [vmem:[%s4076 + $0x28] sm:$0xff] %v4054
        %4080 = vst [vmem:[%s4076 + $0x30] sm:$0xff] %v4057
        %4081 = vst [vmem:[%s4076 + $0x48] sm:$0xff] %v4062
        %4082 = vst [vmem:[%s4076 + $0x50] sm:$0xff] %v4065
        %4083 = vst [vmem:[%s4076 + $0x68] sm:$0xff] %v4070
        %4084 = vst [vmem:[%s4076 + $0x70] sm:$0xff] %v4073
        %v4085 = vld [vmem:[#allocation5 + $0x40] sm:$0xff]
        %v4086 = vld [vmem:[#allocation5 + $0x48] sm:$0xff]
        %v4087 = vld [vmem:[#allocation5 + $0x50] sm:$0xff]
        %v4088 = vld [vmem:[#allocation5 + $0x58] sm:$0xff]
        %v4089 = vld [vmem:[#allocation5 + $0x60] sm:$0xff]
        %v4090 = vld [vmem:[#allocation5 + $0x68] sm:$0xff]
        %v4091 = vld [vmem:[#allocation5 + $0x70] sm:$0xff]
        %v4092 = vld [vmem:[#allocation5 + $0x78] sm:$0xff]
        %v4093 = vsel %vm693, %v4085, 0.0
        %4094 = vadd.xlane.f32.xlu0 %v4093
        %v4095 = vpop.xlane.xlu0 %4094
        %v4096 = vsel %vm693, %v4086, 0.0
        %4097 = vadd.xlane.f32.xlu0 %v4096
        %v4098 = vpop.xlane.xlu0 %4097
        %v4099 = vsel %vm693, %v4087, 0.0
        %4100 = vadd.xlane.f32.xlu0 %v4099
        %v4101 = vpop.xlane.xlu0 %4100
        %v4102 = vsel %vm693, %v4088, 0.0
        %4103 = vadd.xlane.f32.xlu0 %v4102
        %v4104 = vpop.xlane.xlu0 %4103
        %v4105 = vsel %vm693, %v4089, 0.0
        %4106 = vadd.xlane.f32.xlu0 %v4105
        %v4107 = vpop.xlane.xlu0 %4106
        %v4108 = vsel %vm693, %v4090, 0.0
        %4109 = vadd.xlane.f32.xlu0 %v4108
        %v4110 = vpop.xlane.xlu0 %4109
        %v4111 = vsel %vm693, %v4091, 0.0
        %4112 = vadd.xlane.f32.xlu0 %v4111
        %v4113 = vpop.xlane.xlu0 %4112
        %v4114 = vsel %vm693, %v4092, 0.0
        %4115 = vadd.xlane.f32.xlu0 %v4114
        %v4116 = vpop.xlane.xlu0 %4115
        %v4117 = vmul.f32 %v4095, %v718
        %v4118 = vmul.f32 %v4098, %v718
        %v4119 = vmul.f32 %v4101, %v718
        %v4120 = vmul.f32 %v4104, %v718
        %v4121 = vmul.f32 %v4107, %v718
        %v4122 = vmul.f32 %v4110, %v718
        %v4123 = vmul.f32 %v4113, %v718
        %v4124 = vmul.f32 %v4116, %v718
        %v4125 = vsub.f32 %v4085, %v4117
        %v4126 = vsub.f32 %v4086, %v4118
        %v4127 = vsub.f32 %v4087, %v4119
        %v4128 = vsub.f32 %v4088, %v4120
        %v4129 = vsub.f32 %v4089, %v4121
        %v4130 = vsub.f32 %v4090, %v4122
        %v4131 = vsub.f32 %v4091, %v4123
        %v4132 = vsub.f32 %v4092, %v4124
        %v4133 = vmul.f32 %v4125, %v4125
        %v4134 = vmul.f32 %v4126, %v4126
        %v4135 = vmul.f32 %v4127, %v4127
        %v4136 = vmul.f32 %v4128, %v4128
        %v4137 = vmul.f32 %v4129, %v4129
        %v4138 = vmul.f32 %v4130, %v4130
        %v4139 = vmul.f32 %v4131, %v4131
        %v4140 = vmul.f32 %v4132, %v4132
        %v4141 = vsel %vm693, %v4133, 0.0
        %4142 = vadd.xlane.f32.xlu0 %v4141
        %v4143 = vpop.xlane.xlu0 %4142
        %v4144 = vsel %vm693, %v4134, 0.0
        %4145 = vadd.xlane.f32.xlu0 %v4144
        %v4146 = vpop.xlane.xlu0 %4145
        %v4147 = vsel %vm693, %v4135, 0.0
        %4148 = vadd.xlane.f32.xlu0 %v4147
        %v4149 = vpop.xlane.xlu0 %4148
        %v4150 = vsel %vm693, %v4136, 0.0
        %4151 = vadd.xlane.f32.xlu0 %v4150
        %v4152 = vpop.xlane.xlu0 %4151
        %v4153 = vsel %vm693, %v4137, 0.0
        %4154 = vadd.xlane.f32.xlu0 %v4153
        %v4155 = vpop.xlane.xlu0 %4154
        %v4156 = vsel %vm693, %v4138, 0.0
        %4157 = vadd.xlane.f32.xlu0 %v4156
        %v4158 = vpop.xlane.xlu0 %4157
        %v4159 = vsel %vm693, %v4139, 0.0
        %4160 = vadd.xlane.f32.xlu0 %v4159
        %v4161 = vpop.xlane.xlu0 %4160
        %v4162 = vsel %vm693, %v4140, 0.0
        %4163 = vadd.xlane.f32.xlu0 %v4162
        %v4164 = vpop.xlane.xlu0 %4163
        %v4165 = vmul.f32 %v4143, %v718
        %v4166 = vmul.f32 %v4146, %v718
        %v4167 = vmul.f32 %v4149, %v718
        %v4168 = vmul.f32 %v4152, %v718
        %v4169 = vmul.f32 %v4155, %v718
        %v4170 = vmul.f32 %v4158, %v718
        %v4171 = vmul.f32 %v4161, %v718
        %v4172 = vmul.f32 %v4164, %v718
        %v4173 = vadd.f32 %v4165, 1e-05
        %v4174 = vadd.f32 %v4166, 1e-05
        %v4175 = vadd.f32 %v4167, 1e-05
        %v4176 = vadd.f32 %v4168, 1e-05
        %v4177 = vadd.f32 %v4169, 1e-05
        %v4178 = vadd.f32 %v4170, 1e-05
        %v4179 = vadd.f32 %v4171, 1e-05
        %v4180 = vadd.f32 %v4172, 1e-05
        %v4181 = vrsqrt.pop %v4173
        %v4182 = vrsqrt.pop %v4174
        %v4183 = vrsqrt.pop %v4175
        %v4184 = vrsqrt.pop %v4176
        %v4185 = vrsqrt.pop %v4177
        %v4186 = vrsqrt.pop %v4178
        %v4187 = vrsqrt.pop %v4179
        %v4188 = vrsqrt.pop %v4180
        %v4189 = vmul.f32 %v4125, %v4181
        %v4190 = vmul.f32 %v4126, %v4182
        %v4191 = vmul.f32 %v4127, %v4183
        %v4192 = vmul.f32 %v4128, %v4184
        %v4193 = vmul.f32 %v4129, %v4185
        %v4194 = vmul.f32 %v4130, %v4186
        %v4195 = vmul.f32 %v4131, %v4187
        %v4196 = vmul.f32 %v4132, %v4188
        %v4197 = vmul.f32 %v4189, %v3955
        %v4198 = vmul.f32 %v4190, %v3955
        %v4199 = vmul.f32 %v4191, %v3955
        %v4200 = vmul.f32 %v4192, %v3955
        %v4201 = vmul.f32 %v4193, %v3955
        %v4202 = vmul.f32 %v4194, %v3955
        %v4203 = vmul.f32 %v4195, %v3955
        %v4204 = vmul.f32 %v4196, %v3955
        %v4205 = vadd.f32 %v4197, %v3969
        %v4206 = vadd.f32 %v4198, %v3969
        %v4207 = vadd.f32 %v4199, %v3969
        %v4208 = vadd.f32 %v4200, %v3969
        %v4209 = vadd.f32 %v4201, %v3969
        %v4210 = vadd.f32 %v4202, %v3969
        %v4211 = vadd.f32 %v4203, %v3969
        %v4212 = vadd.f32 %v4204, %v3969
        %v4213 = vpack.c.bf16 %v4206, %v4205
        %v4214 = vpack.c.bf16 %v4208, %v4207
        %v4215 = vpack.c.bf16 %v4210, %v4209
        %v4216 = vpack.c.bf16 %v4212, %v4211
        %v4217 = vld [vmem:[%s10] sm:$0xf]
        %v4218 = vld [vmem:[%s10 + $0x4] sm:$0xf]
        %v4219 = vld [vmem:[%s10 + $0x8] sm:$0xf]
        %v4220 = vld [vmem:[%s10 + $0xc] sm:$0xf]
        %v4225 = vunpack.c.l.b16 %v4217
        %v4226 = vunpack.c.l.b16 %v4218
        %v4227 = vunpack.c.l.b16 %v4219
        %v4228 = vunpack.c.l.b16 %v4220
        %v4229 = vpack.c.b16 %v4226, %v4225
        %v4230 = vpack.c.b16 %v4228, %v4227
        %v4234 = vsel %vm693, %v4213, 0
        %v4237 = vsel %vm693, %v4214, 0
        %v4240 = vsel %vm693, %v4215, 0
        %v4243 = vsel %vm693, %v4216, 0
        %4245 = vmatprep.subr.bf16.mxu0 0
        %4246 = vmatpush1.bf16.msra.mxu0 %v4229
        %4247 = vmatprep.subr.bf16.mxu0 0
        %4248 = vmatpush1.bf16.msra.mxu0 %v4230
        %4249 = vmatprep.subr.bf16.mxu0 0
        %4250 = vmatpush1.bf16.msra.mxu0 0
        %4251 = vmatprep.subr.bf16.mxu0 0
        %4252 = vmatpush1.bf16.msra.mxu0 0
        %4253 = vmatprep.subr.bf16.mxu0 0
        %4254 = vmatpush1.bf16.msra.mxu0 0
        %4255 = vmatprep.subr.bf16.mxu0 0
        %4256 = vmatpush1.bf16.msra.mxu0 0
        %4257 = vmatprep.subr.bf16.mxu0 0
        %4258 = vmatpush1.bf16.msra.mxu0 0
        %4259 = vmatprep.subr.bf16.mxu0 0
        %4260 = vmatpush1.bf16.msra.mxu0 0
        %4261 = vmatprep.subr.bf16.mxu0 0
        %4262 = vmatpush1.bf16.msra.mxu0 0
        %4263 = vmatprep.subr.bf16.mxu0 0
        %4264 = vmatpush1.bf16.msra.mxu0 0
        %4265 = vmatprep.subr.bf16.mxu0 0
        %4266 = vmatpush1.bf16.msra.mxu0 0
        %4267 = vmatprep.subr.bf16.mxu0 0
        %4268 = vmatpush1.bf16.msra.mxu0 0
        %4269 = vmatprep.subr.bf16.mxu0 0
        %4270 = vmatpush1.bf16.msra.mxu0 0
        %4271 = vmatprep.subr.bf16.mxu0 0
        %4272 = vmatpush1.bf16.msra.mxu0 0
        %4273 = vmatprep.subr.bf16.mxu0 0
        %4274 = vmatpush1.bf16.msra.mxu0 0
        %4275 = vmatprep.subr.bf16.mxu0 0
        %4276 = vmatpush1.bf16.msra.mxu0 0
        %4277 = vmatprep.mubr.bf16.mxu0 0
        %4278 = vmatmul.mubr.bf16.gmra.mrb[0].mxu0 %v4234
        %v4279 = vpop.f32.mrb[0].mxu0
        %v4280 = vadd.f32 0.0, %v4279
        %v4281 = vpop.f32.mrb[0].mxu0
        %v4282 = vpop.f32.mrb[0].mxu0
        %v4283 = vadd.f32 0.0, %v4282
        %v4284 = vpop.f32.mrb[0].mxu0
        %4285 = vmatprep.mubr.bf16.mxu0 0
        %4286 = vmatmul.mubr.bf16.gmra.mrb[0].mxu0 %v4237
        %v4287 = vpop.f32.mrb[0].mxu0
        %v4288 = vadd.f32 0.0, %v4287
        %v4289 = vpop.f32.mrb[0].mxu0
        %v4290 = vpop.f32.mrb[0].mxu0
        %v4291 = vadd.f32 0.0, %v4290
        %v4292 = vpop.f32.mrb[0].mxu0
        %4293 = vmatprep.mubr.bf16.mxu0 0
        %4294 = vmatmul.mubr.bf16.gmra.mrb[0].mxu0 %v4240
        %v4295 = vpop.f32.mrb[0].mxu0
        %v4296 = vadd.f32 0.0, %v4295
        %v4297 = vpop.f32.mrb[0].mxu0
        %v4298 = vpop.f32.mrb[0].mxu0
        %v4299 = vadd.f32 0.0, %v4298
        %v4300 = vpop.f32.mrb[0].mxu0
        %4301 = vmatprep.mubr.bf16.mxu0 0
        %4302 = vmatmul.mubr.bf16.gmra.mrb[0].mxu0 %v4243
        %v4303 = vpop.f32.mrb[0].mxu0
        %v4304 = vadd.f32 0.0, %v4303
        %v4305 = vpop.f32.mrb[0].mxu0
        %v4306 = vpop.f32.mrb[0].mxu0
        %v4307 = vadd.f32 0.0, %v4306
        %v4308 = vpop.f32.mrb[0].mxu0
        %4309 = vdwg.mxu0
        %s4310 = scalar_lea.vmem [#allocation3], 160
        %4311 = vst [vmem:[%s4310 + $0x8] sm:$0xff] %v4280
        %4312 = vst [vmem:[%s4310 + $0x10] sm:$0xff] %v4283
        %4313 = vst [vmem:[%s4310 + $0x28] sm:$0xff] %v4288
        %4314 = vst [vmem:[%s4310 + $0x30] sm:$0xff] %v4291
        %4315 = vst [vmem:[%s4310 + $0x48] sm:$0xff] %v4296
        %4316 = vst [vmem:[%s4310 + $0x50] sm:$0xff] %v4299
        %4317 = vst [vmem:[%s4310 + $0x68] sm:$0xff] %v4304
        %4318 = vst [vmem:[%s4310 + $0x70] sm:$0xff] %v4307
        %v4319 = vld [vmem:[#allocation5 + $0x80] sm:$0xff]
        %v4320 = vld [vmem:[#allocation5 + $0x88] sm:$0xff]
        %v4321 = vld [vmem:[#allocation5 + $0x90] sm:$0xff]
        %v4322 = vld [vmem:[#allocation5 + $0x98] sm:$0xff]
        %v4323 = vld [vmem:[#allocation5 + $0xa0] sm:$0xff]
        %v4324 = vld [vmem:[#allocation5 + $0xa8] sm:$0xff]
        %v4325 = vld [vmem:[#allocation5 + $0xb0] sm:$0xff]
        %v4326 = vld [vmem:[#allocation5 + $0xb8] sm:$0xff]
        %v4327 = vsel %vm693, %v4319, 0.0
        %4328 = vadd.xlane.f32.xlu0 %v4327
        %v4329 = vpop.xlane.xlu0 %4328
        %v4330 = vsel %vm693, %v4320, 0.0
        %4331 = vadd.xlane.f32.xlu0 %v4330
        %v4332 = vpop.xlane.xlu0 %4331
        %v4333 = vsel %vm693, %v4321, 0.0
        %4334 = vadd.xlane.f32.xlu0 %v4333
        %v4335 = vpop.xlane.xlu0 %4334
        %v4336 = vsel %vm693, %v4322, 0.0
        %4337 = vadd.xlane.f32.xlu0 %v4336
        %v4338 = vpop.xlane.xlu0 %4337
        %v4339 = vsel %vm693, %v4323, 0.0
        %4340 = vadd.xlane.f32.xlu0 %v4339
        %v4341 = vpop.xlane.xlu0 %4340
        %v4342 = vsel %vm693, %v4324, 0.0
        %4343 = vadd.xlane.f32.xlu0 %v4342
        %v4344 = vpop.xlane.xlu0 %4343
        %v4345 = vsel %vm693, %v4325, 0.0
        %4346 = vadd.xlane.f32.xlu0 %v4345
        %v4347 = vpop.xlane.xlu0 %4346
        %v4348 = vsel %vm693, %v4326, 0.0
        %4349 = vadd.xlane.f32.xlu0 %v4348
        %v4350 = vpop.xlane.xlu0 %4349
        %v4351 = vmul.f32 %v4329, %v718
        %v4352 = vmul.f32 %v4332, %v718
        %v4353 = vmul.f32 %v4335, %v718
        %v4354 = vmul.f32 %v4338, %v718
        %v4355 = vmul.f32 %v4341, %v718
        %v4356 = vmul.f32 %v4344, %v718
        %v4357 = vmul.f32 %v4347, %v718
        %v4358 = vmul.f32 %v4350, %v718
        %v4359 = vsub.f32 %v4319, %v4351
        %v4360 = vsub.f32 %v4320, %v4352
        %v4361 = vsub.f32 %v4321, %v4353
        %v4362 = vsub.f32 %v4322, %v4354
        %v4363 = vsub.f32 %v4323, %v4355
        %v4364 = vsub.f32 %v4324, %v4356
        %v4365 = vsub.f32 %v4325, %v4357
        %v4366 = vsub.f32 %v4326, %v4358
        %v4367 = vmul.f32 %v4359, %v4359
        %v4368 = vmul.f32 %v4360, %v4360
        %v4369 = vmul.f32 %v4361, %v4361
        %v4370 = vmul.f32 %v4362, %v4362
        %v4371 = vmul.f32 %v4363, %v4363
        %v4372 = vmul.f32 %v4364, %v4364
        %v4373 = vmul.f32 %v4365, %v4365
        %v4374 = vmul.f32 %v4366, %v4366
        %v4375 = vsel %vm693, %v4367, 0.0
        %4376 = vadd.xlane.f32.xlu0 %v4375
        %v4377 = vpop.xlane.xlu0 %4376
        %v4378 = vsel %vm693, %v4368, 0.0
        %4379 = vadd.xlane.f32.xlu0 %v4378
        %v4380 = vpop.xlane.xlu0 %4379
        %v4381 = vsel %vm693, %v4369, 0.0
        %4382 = vadd.xlane.f32.xlu0 %v4381
        %v4383 = vpop.xlane.xlu0 %4382
        %v4384 = vsel %vm693, %v4370, 0.0
        %4385 = vadd.xlane.f32.xlu0 %v4384
        %v4386 = vpop.xlane.xlu0 %4385
        %v4387 = vsel %vm693, %v4371, 0.0
        %4388 = vadd.xlane.f32.xlu0 %v4387
        %v4389 = vpop.xlane.xlu0 %4388
        %v4390 = vsel %vm693, %v4372, 0.0
        %4391 = vadd.xlane.f32.xlu0 %v4390
        %v4392 = vpop.xlane.xlu0 %4391
        %v4393 = vsel %vm693, %v4373, 0.0
        %4394 = vadd.xlane.f32.xlu0 %v4393
        %v4395 = vpop.xlane.xlu0 %4394
        %v4396 = vsel %vm693, %v4374, 0.0
        %4397 = vadd.xlane.f32.xlu0 %v4396
        %v4398 = vpop.xlane.xlu0 %4397
        %v4399 = vmul.f32 %v4377, %v718
        %v4400 = vmul.f32 %v4380, %v718
        %v4401 = vmul.f32 %v4383, %v718
        %v4402 = vmul.f32 %v4386, %v718
        %v4403 = vmul.f32 %v4389, %v718
        %v4404 = vmul.f32 %v4392, %v718
        %v4405 = vmul.f32 %v4395, %v718
        %v4406 = vmul.f32 %v4398, %v718
        %v4407 = vadd.f32 %v4399, 1e-05
        %v4408 = vadd.f32 %v4400, 1e-05
        %v4409 = vadd.f32 %v4401, 1e-05
        %v4410 = vadd.f32 %v4402, 1e-05
        %v4411 = vadd.f32 %v4403, 1e-05
        %v4412 = vadd.f32 %v4404, 1e-05
        %v4413 = vadd.f32 %v4405, 1e-05
        %v4414 = vadd.f32 %v4406, 1e-05
        %v4415 = vrsqrt.pop %v4407
        %v4416 = vrsqrt.pop %v4408
        %v4417 = vrsqrt.pop %v4409
        %v4418 = vrsqrt.pop %v4410
        %v4419 = vrsqrt.pop %v4411
        %v4420 = vrsqrt.pop %v4412
        %v4421 = vrsqrt.pop %v4413
        %v4422 = vrsqrt.pop %v4414
        %v4423 = vmul.f32 %v4359, %v4415
        %v4424 = vmul.f32 %v4360, %v4416
        %v4425 = vmul.f32 %v4361, %v4417
        %v4426 = vmul.f32 %v4362, %v4418
        %v4427 = vmul.f32 %v4363, %v4419
        %v4428 = vmul.f32 %v4364, %v4420
        %v4429 = vmul.f32 %v4365, %v4421
        %v4430 = vmul.f32 %v4366, %v4422
        %v4431 = vmul.f32 %v4423, %v3955
        %v4432 = vmul.f32 %v4424, %v3955
        %v4433 = vmul.f32 %v4425, %v3955
        %v4434 = vmul.f32 %v4426, %v3955
        %v4435 = vmul.f32 %v4427, %v3955
        %v4436 = vmul.f32 %v4428, %v3955
        %v4437 = vmul.f32 %v4429, %v3955
        %v4438 = vmul.f32 %v4430, %v3955
        %v4439 = vadd.f32 %v4431, %v3969
        %v4440 = vadd.f32 %v4432, %v3969
        %v4441 = vadd.f32 %v4433, %v3969
        %v4442 = vadd.f32 %v4434, %v3969
        %v4443 = vadd.f32 %v4435, %v3969
        %v4444 = vadd.f32 %v4436, %v3969
        %v4445 = vadd.f32 %v4437, %v3969
        %v4446 = vadd.f32 %v4438, %v3969
        %v4447 = vpack.c.bf16 %v4440, %v4439
        %v4448 = vpack.c.bf16 %v4442, %v4441
        %v4449 = vpack.c.bf16 %v4444, %v4443
        %v4450 = vpack.c.bf16 %v4446, %v4445
        %v4451 = vld [vmem:[%s10] sm:$0xf]
        %v4452 = vld [vmem:[%s10 + $0x4] sm:$0xf]
        %v4453 = vld [vmem:[%s10 + $0x8] sm:$0xf]
        %v4454 = vld [vmem:[%s10 + $0xc] sm:$0xf]
        %v4459 = vunpack.c.l.b16 %v4451
        %v4460 = vunpack.c.l.b16 %v4452
        %v4461 = vunpack.c.l.b16 %v4453
        %v4462 = vunpack.c.l.b16 %v4454
        %v4463 = vpack.c.b16 %v4460, %v4459
        %v4464 = vpack.c.b16 %v4462, %v4461
        %v4468 = vsel %vm693, %v4447, 0
        %v4471 = vsel %vm693, %v4448, 0
        %v4474 = vsel %vm693, %v4449, 0
        %v4477 = vsel %vm693, %v4450, 0
        %4479 = vmatprep.subr.bf16.mxu0 0
        %4480 = vmatpush1.bf16.msra.mxu0 %v4463
        %4481 = vmatprep.subr.bf16.mxu0 0
        %4482 = vmatpush1.bf16.msra.mxu0 %v4464
        %4483 = vmatprep.subr.bf16.mxu0 0
        %4484 = vmatpush1.bf16.msra.mxu0 0
        %4485 = vmatprep.subr.bf16.mxu0 0
        %4486 = vmatpush1.bf16.msra.mxu0 0
        %4487 = vmatprep.subr.bf16.mxu0 0
        %4488 = vmatpush1.bf16.msra.mxu0 0
        %4489 = vmatprep.subr.bf16.mxu0 0
        %4490 = vmatpush1.bf16.msra.mxu0 0
        %4491 = vmatprep.subr.bf16.mxu0 0
        %4492 = vmatpush1.bf16.msra.mxu0 0
        %4493 = vmatprep.subr.bf16.mxu0 0
        %4494 = vmatpush1.bf16.msra.mxu0 0
        %4495 = vmatprep.subr.bf16.mxu0 0
        %4496 = vmatpush1.bf16.msra.mxu0 0
        %4497 = vmatprep.subr.bf16.mxu0 0
        %4498 = vmatpush1.bf16.msra.mxu0 0
        %4499 = vmatprep.subr.bf16.mxu0 0
        %4500 = vmatpush1.bf16.msra.mxu0 0
        %4501 = vmatprep.subr.bf16.mxu0 0
        %4502 = vmatpush1.bf16.msra.mxu0 0
        %4503 = vmatprep.subr.bf16.mxu0 0
        %4504 = vmatpush1.bf16.msra.mxu0 0
        %4505 = vmatprep.subr.bf16.mxu0 0
        %4506 = vmatpush1.bf16.msra.mxu0 0
        %4507 = vmatprep.subr.bf16.mxu0 0
        %4508 = vmatpush1.bf16.msra.mxu0 0
        %4509 = vmatprep.subr.bf16.mxu0 0
        %4510 = vmatpush1.bf16.msra.mxu0 0
        %4511 = vmatprep.mubr.bf16.mxu0 0
        %4512 = vmatmul.mubr.bf16.gmra.mrb[0].mxu0 %v4468
        %v4513 = vpop.f32.mrb[0].mxu0
        %v4514 = vadd.f32 0.0, %v4513
        %v4515 = vpop.f32.mrb[0].mxu0
        %v4516 = vpop.f32.mrb[0].mxu0
        %v4517 = vadd.f32 0.0, %v4516
        %v4518 = vpop.f32.mrb[0].mxu0
        %4519 = vmatprep.mubr.bf16.mxu0 0
        %4520 = vmatmul.mubr.bf16.gmra.mrb[0].mxu0 %v4471
        %v4521 = vpop.f32.mrb[0].mxu0
        %v4522 = vadd.f32 0.0, %v4521
        %v4523 = vpop.f32.mrb[0].mxu0
        %v4524 = vpop.f32.mrb[0].mxu0
        %v4525 = vadd.f32 0.0, %v4524
        %v4526 = vpop.f32.mrb[0].mxu0
        %4527 = vmatprep.mubr.bf16.mxu0 0
        %4528 = vmatmul.mubr.bf16.gmra.mrb[0].mxu0 %v4474
        %v4529 = vpop.f32.mrb[0].mxu0
        %v4530 = vadd.f32 0.0, %v4529
        %v4531 = vpop.f32.mrb[0].mxu0
        %v4532 = vpop.f32.mrb[0].mxu0
        %v4533 = vadd.f32 0.0, %v4532
        %v4534 = vpop.f32.mrb[0].mxu0
        %4535 = vmatprep.mubr.bf16.mxu0 0
        %4536 = vmatmul.mubr.bf16.gmra.mrb[0].mxu0 %v4477
        %v4537 = vpop.f32.mrb[0].mxu0
        %v4538 = vadd.f32 0.0, %v4537
        %v4539 = vpop.f32.mrb[0].mxu0
        %v4540 = vpop.f32.mrb[0].mxu0
        %v4541 = vadd.f32 0.0, %v4540
        %v4542 = vpop.f32.mrb[0].mxu0
        %4543 = vdwg.mxu0
        %s4544 = scalar_lea.vmem [#allocation3], 288
        %4545 = vst [vmem:[%s4544 + $0x8] sm:$0xff] %v4514
        %4546 = vst [vmem:[%s4544 + $0x10] sm:$0xff] %v4517
        %4547 = vst [vmem:[%s4544 + $0x28] sm:$0xff] %v4522
        %4548 = vst [vmem:[%s4544 + $0x30] sm:$0xff] %v4525
        %4549 = vst [vmem:[%s4544 + $0x48] sm:$0xff] %v4530
        %4550 = vst [vmem:[%s4544 + $0x50] sm:$0xff] %v4533
        %4551 = vst [vmem:[%s4544 + $0x68] sm:$0xff] %v4538
        %4552 = vst [vmem:[%s4544 + $0x70] sm:$0xff] %v4541
        %v4553 = vld [vmem:[#allocation5 + $0xc0] sm:$0xff]
        %v4554 = vld [vmem:[#allocation5 + $0xc8] sm:$0xff]
        %v4555 = vld [vmem:[#allocation5 + $0xd0] sm:$0xff]
        %v4556 = vld [vmem:[#allocation5 + $0xd8] sm:$0xff]
        %v4557 = vld [vmem:[#allocation5 + $0xe0] sm:$0xff]
        %v4558 = vld [vmem:[#allocation5 + $0xe8] sm:$0xff]
        %v4559 = vld [vmem:[#allocation5 + $0xf0] sm:$0xff]
        %v4560 = vld [vmem:[#allocation5 + $0xf8] sm:$0xff]
        %v4561 = vsel %vm693, %v4553, 0.0
        %4562 = vadd.xlane.f32.xlu0 %v4561
        %v4563 = vpop.xlane.xlu0 %4562
        %v4564 = vsel %vm693, %v4554, 0.0
        %4565 = vadd.xlane.f32.xlu0 %v4564
        %v4566 = vpop.xlane.xlu0 %4565
        %v4567 = vsel %vm693, %v4555, 0.0
        %4568 = vadd.xlane.f32.xlu0 %v4567
        %v4569 = vpop.xlane.xlu0 %4568
        %v4570 = vsel %vm693, %v4556, 0.0
        %4571 = vadd.xlane.f32.xlu0 %v4570
        %v4572 = vpop.xlane.xlu0 %4571
        %v4573 = vsel %vm693, %v4557, 0.0
        %4574 = vadd.xlane.f32.xlu0 %v4573
        %v4575 = vpop.xlane.xlu0 %4574
        %v4576 = vsel %vm693, %v4558, 0.0
        %4577 = vadd.xlane.f32.xlu0 %v4576
        %v4578 = vpop.xlane.xlu0 %4577
        %v4579 = vsel %vm693, %v4559, 0.0
        %4580 = vadd.xlane.f32.xlu0 %v4579
        %v4581 = vpop.xlane.xlu0 %4580
        %v4582 = vsel %vm693, %v4560, 0.0
        %4583 = vadd.xlane.f32.xlu0 %v4582
        %v4584 = vpop.xlane.xlu0 %4583
        %v4585 = vmul.f32 %v4563, %v718
        %v4586 = vmul.f32 %v4566, %v718
        %v4587 = vmul.f32 %v4569, %v718
        %v4588 = vmul.f32 %v4572, %v718
        %v4589 = vmul.f32 %v4575, %v718
        %v4590 = vmul.f32 %v4578, %v718
        %v4591 = vmul.f32 %v4581, %v718
        %v4592 = vmul.f32 %v4584, %v718
        %v4593 = vsub.f32 %v4553, %v4585
        %v4594 = vsub.f32 %v4554, %v4586
        %v4595 = vsub.f32 %v4555, %v4587
        %v4596 = vsub.f32 %v4556, %v4588
        %v4597 = vsub.f32 %v4557, %v4589
        %v4598 = vsub.f32 %v4558, %v4590
        %v4599 = vsub.f32 %v4559, %v4591
        %v4600 = vsub.f32 %v4560, %v4592
        %v4601 = vmul.f32 %v4593, %v4593
        %v4602 = vmul.f32 %v4594, %v4594
        %v4603 = vmul.f32 %v4595, %v4595
        %v4604 = vmul.f32 %v4596, %v4596
        %v4605 = vmul.f32 %v4597, %v4597
        %v4606 = vmul.f32 %v4598, %v4598
        %v4607 = vmul.f32 %v4599, %v4599
        %v4608 = vmul.f32 %v4600, %v4600
        %v4609 = vsel %vm693, %v4601, 0.0
        %4610 = vadd.xlane.f32.xlu0 %v4609
        %v4611 = vpop.xlane.xlu0 %4610
        %v4612 = vsel %vm693, %v4602, 0.0
        %4613 = vadd.xlane.f32.xlu0 %v4612
        %v4614 = vpop.xlane.xlu0 %4613
        %v4615 = vsel %vm693, %v4603, 0.0
        %4616 = vadd.xlane.f32.xlu0 %v4615
        %v4617 = vpop.xlane.xlu0 %4616
        %v4618 = vsel %vm693, %v4604, 0.0
        %4619 = vadd.xlane.f32.xlu0 %v4618
        %v4620 = vpop.xlane.xlu0 %4619
        %v4621 = vsel %vm693, %v4605, 0.0
        %4622 = vadd.xlane.f32.xlu0 %v4621
        %v4623 = vpop.xlane.xlu0 %4622
        %v4624 = vsel %vm693, %v4606, 0.0
        %4625 = vadd.xlane.f32.xlu0 %v4624
        %v4626 = vpop.xlane.xlu0 %4625
        %v4627 = vsel %vm693, %v4607, 0.0
        %4628 = vadd.xlane.f32.xlu0 %v4627
        %v4629 = vpop.xlane.xlu0 %4628
        %v4630 = vsel %vm693, %v4608, 0.0
        %4631 = vadd.xlane.f32.xlu0 %v4630
        %v4632 = vpop.xlane.xlu0 %4631
        %v4633 = vmul.f32 %v4611, %v718
        %v4634 = vmul.f32 %v4614, %v718
        %v4635 = vmul.f32 %v4617, %v718
        %v4636 = vmul.f32 %v4620, %v718
        %v4637 = vmul.f32 %v4623, %v718
        %v4638 = vmul.f32 %v4626, %v718
        %v4639 = vmul.f32 %v4629, %v718
        %v4640 = vmul.f32 %v4632, %v718
        %v4641 = vadd.f32 %v4633, 1e-05
        %v4642 = vadd.f32 %v4634, 1e-05
        %v4643 = vadd.f32 %v4635, 1e-05
        %v4644 = vadd.f32 %v4636, 1e-05
        %v4645 = vadd.f32 %v4637, 1e-05
        %v4646 = vadd.f32 %v4638, 1e-05
        %v4647 = vadd.f32 %v4639, 1e-05
        %v4648 = vadd.f32 %v4640, 1e-05
        %v4649 = vrsqrt.pop %v4641
        %v4650 = vrsqrt.pop %v4642
        %v4651 = vrsqrt.pop %v4643
        %v4652 = vrsqrt.pop %v4644
        %v4653 = vrsqrt.pop %v4645
        %v4654 = vrsqrt.pop %v4646
        %v4655 = vrsqrt.pop %v4647
        %v4656 = vrsqrt.pop %v4648
        %v4657 = vmul.f32 %v4593, %v4649
        %v4658 = vmul.f32 %v4594, %v4650
        %v4659 = vmul.f32 %v4595, %v4651
        %v4660 = vmul.f32 %v4596, %v4652
        %v4661 = vmul.f32 %v4597, %v4653
        %v4662 = vmul.f32 %v4598, %v4654
        %v4663 = vmul.f32 %v4599, %v4655
        %v4664 = vmul.f32 %v4600, %v4656
        %v4665 = vmul.f32 %v4657, %v3955
        %v4666 = vmul.f32 %v4658, %v3955
        %v4667 = vmul.f32 %v4659, %v3955
        %v4668 = vmul.f32 %v4660, %v3955
        %v4669 = vmul.f32 %v4661, %v3955
        %v4670 = vmul.f32 %v4662, %v3955
        %v4671 = vmul.f32 %v4663, %v3955
        %v4672 = vmul.f32 %v4664, %v3955
        %v4673 = vadd.f32 %v4665, %v3969
        %v4674 = vadd.f32 %v4666, %v3969
        %v4675 = vadd.f32 %v4667, %v3969
        %v4676 = vadd.f32 %v4668, %v3969
        %v4677 = vadd.f32 %v4669, %v3969
        %v4678 = vadd.f32 %v4670, %v3969
        %v4679 = vadd.f32 %v4671, %v3969
        %v4680 = vadd.f32 %v4672, %v3969
        %v4681 = vpack.c.bf16 %v4674, %v4673
        %v4682 = vpack.c.bf16 %v4676, %v4675
        %v4683 = vpack.c.bf16 %v4678, %v4677
        %v4684 = vpack.c.bf16 %v4680, %v4679
        %v4685 = vld [vmem:[%s10] sm:$0xf]
        %v4686 = vld [vmem:[%s10 + $0x4] sm:$0xf]
        %v4687 = vld [vmem:[%s10 + $0x8] sm:$0xf]
        %v4688 = vld [vmem:[%s10 + $0xc] sm:$0xf]
        %v4693 = vunpack.c.l.b16 %v4685
        %v4694 = vunpack.c.l.b16 %v4686
        %v4695 = vunpack.c.l.b16 %v4687
        %v4696 = vunpack.c.l.b16 %v4688
        %v4697 = vpack.c.b16 %v4694, %v4693
        %v4698 = vpack.c.b16 %v4696, %v4695
        %v4702 = vsel %vm693, %v4681, 0
        %v4705 = vsel %vm693, %v4682, 0
        %v4708 = vsel %vm693, %v4683, 0
        %v4711 = vsel %vm693, %v4684, 0
        %4713 = vmatprep.subr.bf16.mxu0 0
        %4714 = vmatpush1.bf16.msra.mxu0 %v4697
        %4715 = vmatprep.subr.bf16.mxu0 0
        %4716 = vmatpush1.bf16.msra.mxu0 %v4698
        %4717 = vmatprep.subr.bf16.mxu0 0
        %4718 = vmatpush1.bf16.msra.mxu0 0
        %4719 = vmatprep.subr.bf16.mxu0 0
        %4720 = vmatpush1.bf16.msra.mxu0 0
        %4721 = vmatprep.subr.bf16.mxu0 0
        %4722 = vmatpush1.bf16.msra.mxu0 0
        %4723 = vmatprep.subr.bf16.mxu0 0
        %4724 = vmatpush1.bf16.msra.mxu0 0
        %4725 = vmatprep.subr.bf16.mxu0 0
        %4726 = vmatpush1.bf16.msra.mxu0 0
        %4727 = vmatprep.subr.bf16.mxu0 0
        %4728 = vmatpush1.bf16.msra.mxu0 0
        %4729 = vmatprep.subr.bf16.mxu0 0
        %4730 = vmatpush1.bf16.msra.mxu0 0
        %4731 = vmatprep.subr.bf16.mxu0 0
        %4732 = vmatpush1.bf16.msra.mxu0 0
        %4733 = vmatprep.subr.bf16.mxu0 0
        %4734 = vmatpush1.bf16.msra.mxu0 0
        %4735 = vmatprep.subr.bf16.mxu0 0
        %4736 = vmatpush1.bf16.msra.mxu0 0
        %4737 = vmatprep.subr.bf16.mxu0 0
        %4738 = vmatpush1.bf16.msra.mxu0 0
        %4739 = vmatprep.subr.bf16.mxu0 0
        %4740 = vmatpush1.bf16.msra.mxu0 0
        %4741 = vmatprep.subr.bf16.mxu0 0
        %4742 = vmatpush1.bf16.msra.mxu0 0
        %4743 = vmatprep.subr.bf16.mxu0 0
        %4744 = vmatpush1.bf16.msra.mxu0 0
        %4745 = vmatprep.mubr.bf16.mxu0 0
        %4746 = vmatmul.mubr.bf16.gmra.mrb[0].mxu0 %v4702
        %v4747 = vpop.f32.mrb[0].mxu0
        %v4748 = vadd.f32 0.0, %v4747
        %v4749 = vpop.f32.mrb[0].mxu0
        %v4750 = vpop.f32.mrb[0].mxu0
        %v4751 = vadd.f32 0.0, %v4750
        %v4752 = vpop.f32.mrb[0].mxu0
        %4753 = vmatprep.mubr.bf16.mxu0 0
        %4754 = vmatmul.mubr.bf16.gmra.mrb[0].mxu0 %v4705
        %v4755 = vpop.f32.mrb[0].mxu0
        %v4756 = vadd.f32 0.0, %v4755
        %v4757 = vpop.f32.mrb[0].mxu0
        %v4758 = vpop.f32.mrb[0].mxu0
        %v4759 = vadd.f32 0.0, %v4758
        %v4760 = vpop.f32.mrb[0].mxu0
        %4761 = vmatprep.mubr.bf16.mxu0 0
        %4762 = vmatmul.mubr.bf16.gmra.mrb[0].mxu0 %v4708
        %v4763 = vpop.f32.mrb[0].mxu0
        %v4764 = vadd.f32 0.0, %v4763
        %v4765 = vpop.f32.mrb[0].mxu0
        %v4766 = vpop.f32.mrb[0].mxu0
        %v4767 = vadd.f32 0.0, %v4766
        %v4768 = vpop.f32.mrb[0].mxu0
        %4769 = vmatprep.mubr.bf16.mxu0 0
        %4770 = vmatmul.mubr.bf16.gmra.mrb[0].mxu0 %v4711
        %v4771 = vpop.f32.mrb[0].mxu0
        %v4772 = vadd.f32 0.0, %v4771
        %v4773 = vpop.f32.mrb[0].mxu0
        %v4774 = vpop.f32.mrb[0].mxu0
        %v4775 = vadd.f32 0.0, %v4774
        %v4776 = vpop.f32.mrb[0].mxu0
        %4777 = vdwg.mxu0
        %s4778 = scalar_lea.vmem [#allocation3], 416
        %4779 = vst [vmem:[%s4778 + $0x8] sm:$0xff] %v4748
        %4780 = vst [vmem:[%s4778 + $0x10] sm:$0xff] %v4751
        %4781 = vst [vmem:[%s4778 + $0x28] sm:$0xff] %v4756
        %4782 = vst [vmem:[%s4778 + $0x30] sm:$0xff] %v4759
        %4783 = vst [vmem:[%s4778 + $0x48] sm:$0xff] %v4764
        %4784 = vst [vmem:[%s4778 + $0x50] sm:$0xff] %v4767
        %4785 = vst [vmem:[%s4778 + $0x68] sm:$0xff] %v4772
        %4786 = vst [vmem:[%s4778 + $0x70] sm:$0xff] %v4775
        %v4787 = vld [vmem:[#allocation3 + $0x7] sm:$0xff]
        %v4788 = vld [vmem:[#allocation3 + $0xf] sm:$0xff]
        %v4789 = vld [vmem:[#allocation3 + $0x27] sm:$0xff]
        %v4790 = vld [vmem:[#allocation3 + $0x2f] sm:$0xff]
        %v4791 = vld [vmem:[#allocation3 + $0x47] sm:$0xff]
        %v4792 = vld [vmem:[#allocation3 + $0x4f] sm:$0xff]
        %v4793 = vld [vmem:[#allocation3 + $0x67] sm:$0xff]
        %v4794 = vld [vmem:[#allocation3 + $0x6f] sm:$0xff]
        %v4795 = vld [vmem:[#allocation15] sm:$0x1]
        %v4796 = vlaneseq
        %v4797 = vshrl.u32 %v4796, 7
        %v4798 = vsub.s32 0, %v4797
        %v4799 = vrot.slane %v4795, %v4798
        %v4800 = vmul.f32 %v4787, %v4799
        %v4801 = vmul.f32 %v4788, %v4799
        %v4802 = vmul.f32 %v4789, %v4799
        %v4803 = vmul.f32 %v4790, %v4799
        %v4804 = vmul.f32 %v4791, %v4799
        %v4805 = vmul.f32 %v4792, %v4799
        %v4806 = vmul.f32 %v4793, %v4799
        %v4807 = vmul.f32 %v4794, %v4799
        %v4808 = vadd.f32 %v4800, 0.0
        %v4809 = vadd.f32 %v4801, 0.0
        %v4810 = vadd.f32 %v4802, 0.0
        %v4811 = vadd.f32 %v4803, 0.0
        %v4812 = vadd.f32 %v4804, 0.0
        %v4813 = vadd.f32 %v4805, 0.0
        %v4814 = vadd.f32 %v4806, 0.0
        %v4815 = vadd.f32 %v4807, 0.0
        %v4816 = vld [vmem:[#allocation3 + $0x8] sm:$0xff]
        %v4817 = vld [vmem:[#allocation3 + $0x10] sm:$0xff]
        %v4818 = vld [vmem:[#allocation3 + $0x28] sm:$0xff]
        %v4819 = vld [vmem:[#allocation3 + $0x30] sm:$0xff]
        %v4820 = vld [vmem:[#allocation3 + $0x48] sm:$0xff]
        %v4821 = vld [vmem:[#allocation3 + $0x50] sm:$0xff]
        %v4822 = vld [vmem:[#allocation3 + $0x68] sm:$0xff]
        %v4823 = vld [vmem:[#allocation3 + $0x70] sm:$0xff]
        %v4824 = vld [vmem:[#allocation15 + $0x1] sm:$0x1]
        %v4825 = vlaneseq
        %v4826 = vshrl.u32 %v4825, 7
        %v4827 = vsub.s32 0, %v4826
        %v4828 = vrot.slane %v4824, %v4827
        %v4829 = vmul.f32 %v4816, %v4828
        %v4830 = vmul.f32 %v4817, %v4828
        %v4831 = vmul.f32 %v4818, %v4828
        %v4832 = vmul.f32 %v4819, %v4828
        %v4833 = vmul.f32 %v4820, %v4828
        %v4834 = vmul.f32 %v4821, %v4828
        %v4835 = vmul.f32 %v4822, %v4828
        %v4836 = vmul.f32 %v4823, %v4828
        %v4837 = vadd.f32 %v4808, %v4829
        %v4838 = vadd.f32 %v4809, %v4830
        %v4839 = vadd.f32 %v4810, %v4831
        %v4840 = vadd.f32 %v4811, %v4832
        %v4841 = vadd.f32 %v4812, %v4833
        %v4842 = vadd.f32 %v4813, %v4834
        %v4843 = vadd.f32 %v4814, %v4835
        %v4844 = vadd.f32 %v4815, %v4836
        %v4845 = vld [vmem:[#allocation3 + $0x9] sm:$0xff]
        %v4846 = vld [vmem:[#allocation3 + $0x11] sm:$0xff]
        %v4847 = vld [vmem:[#allocation3 + $0x29] sm:$0xff]
        %v4848 = vld [vmem:[#allocation3 + $0x31] sm:$0xff]
        %v4849 = vld [vmem:[#allocation3 + $0x49] sm:$0xff]
        %v4850 = vld [vmem:[#allocation3 + $0x51] sm:$0xff]
        %v4851 = vld [vmem:[#allocation3 + $0x69] sm:$0xff]
        %v4852 = vld [vmem:[#allocation3 + $0x71] sm:$0xff]
        %v4853 = vld [vmem:[#allocation15 + $0x2] sm:$0x1]
        %v4854 = vlaneseq
        %v4855 = vshrl.u32 %v4854, 7
        %v4856 = vsub.s32 0, %v4855
        %v4857 = vrot.slane %v4853, %v4856
        %v4858 = vmul.f32 %v4845, %v4857
        %v4859 = vmul.f32 %v4846, %v4857
        %v4860 = vmul.f32 %v4847, %v4857
        %v4861 = vmul.f32 %v4848, %v4857
        %v4862 = vmul.f32 %v4849, %v4857
        %v4863 = vmul.f32 %v4850, %v4857
        %v4864 = vmul.f32 %v4851, %v4857
        %v4865 = vmul.f32 %v4852, %v4857
        %v4866 = vadd.f32 %v4837, %v4858
        %v4867 = vadd.f32 %v4838, %v4859
        %v4868 = vadd.f32 %v4839, %v4860
        %v4869 = vadd.f32 %v4840, %v4861
        %v4870 = vadd.f32 %v4841, %v4862
        %v4871 = vadd.f32 %v4842, %v4863
        %v4872 = vadd.f32 %v4843, %v4864
        %v4873 = vadd.f32 %v4844, %v4865
        %v4874 = vld [vmem:[%s4076 + $0x7] sm:$0xff]
        %v4875 = vld [vmem:[%s4076 + $0xf] sm:$0xff]
        %v4876 = vld [vmem:[%s4076 + $0x27] sm:$0xff]
        %v4877 = vld [vmem:[%s4076 + $0x2f] sm:$0xff]
        %v4878 = vld [vmem:[%s4076 + $0x47] sm:$0xff]
        %v4879 = vld [vmem:[%s4076 + $0x4f] sm:$0xff]
        %v4880 = vld [vmem:[%s4076 + $0x67] sm:$0xff]
        %v4881 = vld [vmem:[%s4076 + $0x6f] sm:$0xff]
        %s4882 = scalar_lea.vmem [#allocation15], 4
        %v4883 = vld [vmem:[%s4882] sm:$0x1]
        %v4884 = vlaneseq
        %v4885 = vshrl.u32 %v4884, 7
        %v4886 = vsub.s32 0, %v4885
        %v4887 = vrot.slane %v4883, %v4886
        %v4888 = vmul.f32 %v4874, %v4887
        %v4889 = vmul.f32 %v4875, %v4887
        %v4890 = vmul.f32 %v4876, %v4887
        %v4891 = vmul.f32 %v4877, %v4887
        %v4892 = vmul.f32 %v4878, %v4887
        %v4893 = vmul.f32 %v4879, %v4887
        %v4894 = vmul.f32 %v4880, %v4887
        %v4895 = vmul.f32 %v4881, %v4887
        %v4896 = vadd.f32 %v4866, %v4888
        %v4897 = vadd.f32 %v4867, %v4889
        %v4898 = vadd.f32 %v4868, %v4890
        %v4899 = vadd.f32 %v4869, %v4891
        %v4900 = vadd.f32 %v4870, %v4892
        %v4901 = vadd.f32 %v4871, %v4893
        %v4902 = vadd.f32 %v4872, %v4894
        %v4903 = vadd.f32 %v4873, %v4895
        %v4904 = vld [vmem:[%s4076 + $0x8] sm:$0xff]
        %v4905 = vld [vmem:[%s4076 + $0x10] sm:$0xff]
        %v4906 = vld [vmem:[%s4076 + $0x28] sm:$0xff]
        %v4907 = vld [vmem:[%s4076 + $0x30] sm:$0xff]
        %v4908 = vld [vmem:[%s4076 + $0x48] sm:$0xff]
        %v4909 = vld [vmem:[%s4076 + $0x50] sm:$0xff]
        %v4910 = vld [vmem:[%s4076 + $0x68] sm:$0xff]
        %v4911 = vld [vmem:[%s4076 + $0x70] sm:$0xff]
        %v4912 = vld [vmem:[%s4882 + $0x1] sm:$0x1]
        %v4913 = vlaneseq
        %v4914 = vshrl.u32 %v4913, 7
        %v4915 = vsub.s32 0, %v4914
        %v4916 = vrot.slane %v4912, %v4915
        %v4917 = vmul.f32 %v4904, %v4916
        %v4918 = vmul.f32 %v4905, %v4916
        %v4919 = vmul.f32 %v4906, %v4916
        %v4920 = vmul.f32 %v4907, %v4916
        %v4921 = vmul.f32 %v4908, %v4916
        %v4922 = vmul.f32 %v4909, %v4916
        %v4923 = vmul.f32 %v4910, %v4916
        %v4924 = vmul.f32 %v4911, %v4916
        %v4925 = vadd.f32 %v4896, %v4917
        %v4926 = vadd.f32 %v4897, %v4918
        %v4927 = vadd.f32 %v4898, %v4919
        %v4928 = vadd.f32 %v4899, %v4920
        %v4929 = vadd.f32 %v4900, %v4921
        %v4930 = vadd.f32 %v4901, %v4922
        %v4931 = vadd.f32 %v4902, %v4923
        %v4932 = vadd.f32 %v4903, %v4924
        %v4933 = vld [vmem:[%s4076 + $0x9] sm:$0xff]
        %v4934 = vld [vmem:[%s4076 + $0x11] sm:$0xff]
        %v4935 = vld [vmem:[%s4076 + $0x29] sm:$0xff]
        %v4936 = vld [vmem:[%s4076 + $0x31] sm:$0xff]
        %v4937 = vld [vmem:[%s4076 + $0x49] sm:$0xff]
        %v4938 = vld [vmem:[%s4076 + $0x51] sm:$0xff]
        %v4939 = vld [vmem:[%s4076 + $0x69] sm:$0xff]
        %v4940 = vld [vmem:[%s4076 + $0x71] sm:$0xff]
        %v4941 = vld [vmem:[%s4882 + $0x2] sm:$0x1]
        %v4942 = vlaneseq
        %v4943 = vshrl.u32 %v4942, 7
        %v4944 = vsub.s32 0, %v4943
        %v4945 = vrot.slane %v4941, %v4944
        %v4946 = vmul.f32 %v4933, %v4945
        %v4947 = vmul.f32 %v4934, %v4945
        %v4948 = vmul.f32 %v4935, %v4945
        %v4949 = vmul.f32 %v4936, %v4945
        %v4950 = vmul.f32 %v4937, %v4945
        %v4951 = vmul.f32 %v4938, %v4945
        %v4952 = vmul.f32 %v4939, %v4945
        %v4953 = vmul.f32 %v4940, %v4945
        %v4954 = vadd.f32 %v4925, %v4946
        %v4955 = vadd.f32 %v4926, %v4947
        %v4956 = vadd.f32 %v4927, %v4948
        %v4957 = vadd.f32 %v4928, %v4949
        %v4958 = vadd.f32 %v4929, %v4950
        %v4959 = vadd.f32 %v4930, %v4951
        %v4960 = vadd.f32 %v4931, %v4952
        %v4961 = vadd.f32 %v4932, %v4953
        %s4962 = scalar_lea.vmem [#allocation3], 64
        %v4963 = vld [vmem:[%s4962 + $0x7] sm:$0xff]
        %v4964 = vld [vmem:[%s4962 + $0xf] sm:$0xff]
        %v4965 = vld [vmem:[%s4962 + $0x27] sm:$0xff]
        %v4966 = vld [vmem:[%s4962 + $0x2f] sm:$0xff]
        %v4967 = vld [vmem:[%s4962 + $0x47] sm:$0xff]
        %v4968 = vld [vmem:[%s4962 + $0x4f] sm:$0xff]
        %v4969 = vld [vmem:[%s4962 + $0x67] sm:$0xff]
        %v4970 = vld [vmem:[%s4962 + $0x6f] sm:$0xff]
        %s4971 = scalar_lea.vmem [#allocation15], 8
        %v4972 = vld [vmem:[%s4971] sm:$0x1]
        %v4973 = vlaneseq
        %v4974 = vshrl.u32 %v4973, 7
        %v4975 = vsub.s32 0, %v4974
        %v4976 = vrot.slane %v4972, %v4975
        %v4977 = vmul.f32 %v4963, %v4976
        %v4978 = vmul.f32 %v4964, %v4976
        %v4979 = vmul.f32 %v4965, %v4976
        %v4980 = vmul.f32 %v4966, %v4976
        %v4981 = vmul.f32 %v4967, %v4976
        %v4982 = vmul.f32 %v4968, %v4976
        %v4983 = vmul.f32 %v4969, %v4976
        %v4984 = vmul.f32 %v4970, %v4976
        %v4985 = vadd.f32 %v4954, %v4977
        %v4986 = vadd.f32 %v4955, %v4978
        %v4987 = vadd.f32 %v4956, %v4979
        %v4988 = vadd.f32 %v4957, %v4980
        %v4989 = vadd.f32 %v4958, %v4981
        %v4990 = vadd.f32 %v4959, %v4982
        %v4991 = vadd.f32 %v4960, %v4983
        %v4992 = vadd.f32 %v4961, %v4984
        %v4993 = vld [vmem:[%s4962 + $0x8] sm:$0xff]
        %v4994 = vld [vmem:[%s4962 + $0x10] sm:$0xff]
        %v4995 = vld [vmem:[%s4962 + $0x28] sm:$0xff]
        %v4996 = vld [vmem:[%s4962 + $0x30] sm:$0xff]
        %v4997 = vld [vmem:[%s4962 + $0x48] sm:$0xff]
        %v4998 = vld [vmem:[%s4962 + $0x50] sm:$0xff]
        %v4999 = vld [vmem:[%s4962 + $0x68] sm:$0xff]
        %v5000 = vld [vmem:[%s4962 + $0x70] sm:$0xff]
        %v5001 = vld [vmem:[%s4971 + $0x1] sm:$0x1]
        %v5002 = vlaneseq
        %v5003 = vshrl.u32 %v5002, 7
        %v5004 = vsub.s32 0, %v5003
        %v5005 = vrot.slane %v5001, %v5004
        %v5006 = vmul.f32 %v4993, %v5005
        %v5007 = vmul.f32 %v4994, %v5005
        %v5008 = vmul.f32 %v4995, %v5005
        %v5009 = vmul.f32 %v4996, %v5005
        %v5010 = vmul.f32 %v4997, %v5005
        %v5011 = vmul.f32 %v4998, %v5005
        %v5012 = vmul.f32 %v4999, %v5005
        %v5013 = vmul.f32 %v5000, %v5005
        %v5014 = vadd.f32 %v4985, %v5006
        %v5015 = vadd.f32 %v4986, %v5007
        %v5016 = vadd.f32 %v4987, %v5008
        %v5017 = vadd.f32 %v4988, %v5009
        %v5018 = vadd.f32 %v4989, %v5010
        %v5019 = vadd.f32 %v4990, %v5011
        %v5020 = vadd.f32 %v4991, %v5012
        %v5021 = vadd.f32 %v4992, %v5013
        %v5022 = vld [vmem:[%s4962 + $0x9] sm:$0xff]
        %v5023 = vld [vmem:[%s4962 + $0x11] sm:$0xff]
        %v5024 = vld [vmem:[%s4962 + $0x29] sm:$0xff]
        %v5025 = vld [vmem:[%s4962 + $0x31] sm:$0xff]
        %v5026 = vld [vmem:[%s4962 + $0x49] sm:$0xff]
        %v5027 = vld [vmem:[%s4962 + $0x51] sm:$0xff]
        %v5028 = vld [vmem:[%s4962 + $0x69] sm:$0xff]
        %v5029 = vld [vmem:[%s4962 + $0x71] sm:$0xff]
        %v5030 = vld [vmem:[%s4971 + $0x2] sm:$0x1]
        %v5031 = vlaneseq
        %v5032 = vshrl.u32 %v5031, 7
        %v5033 = vsub.s32 0, %v5032
        %v5034 = vrot.slane %v5030, %v5033
        %v5035 = vmul.f32 %v5022, %v5034
        %v5036 = vmul.f32 %v5023, %v5034
        %v5037 = vmul.f32 %v5024, %v5034
        %v5038 = vmul.f32 %v5025, %v5034
        %v5039 = vmul.f32 %v5026, %v5034
        %v5040 = vmul.f32 %v5027, %v5034
        %v5041 = vmul.f32 %v5028, %v5034
        %v5042 = vmul.f32 %v5029, %v5034
        %v5043 = vadd.f32 %v5014, %v5035
        %v5044 = vadd.f32 %v5015, %v5036
        %v5045 = vadd.f32 %v5016, %v5037
        %v5046 = vadd.f32 %v5017, %v5038
        %v5047 = vadd.f32 %v5018, %v5039
        %v5048 = vadd.f32 %v5019, %v5040
        %v5049 = vadd.f32 %v5020, %v5041
        %v5050 = vadd.f32 %v5021, %v5042
        %v5051 = vmul.f32 %v5043, 0.5
        %v5052 = vmul.f32 %v5044, 0.5
        %v5053 = vmul.f32 %v5045, 0.5
        %v5054 = vmul.f32 %v5046, 0.5
        %v5055 = vmul.f32 %v5047, 0.5
        %v5056 = vmul.f32 %v5048, 0.5
        %v5057 = vmul.f32 %v5049, 0.5
        %v5058 = vmul.f32 %v5050, 0.5
        %v5059 = vmul.f32 %v5043, 0.70710677
        %v5060 = vmul.f32 %v5044, 0.70710677
        %v5061 = vmul.f32 %v5045, 0.70710677
        %v5062 = vmul.f32 %v5046, 0.70710677
        %v5063 = vmul.f32 %v5047, 0.70710677
        %v5064 = vmul.f32 %v5048, 0.70710677
        %v5065 = vmul.f32 %v5049, 0.70710677
        %v5066 = vmul.f32 %v5050, 0.70710677
        %v5067 = vand.u32 2147483647, %v5059
        %v5068 = vand.u32 2147483647, %v5060
        %v5069 = vand.u32 2147483647, %v5061
        %v5070 = vand.u32 2147483647, %v5062
        %v5071 = vand.u32 2147483647, %v5063
        %v5072 = vand.u32 2147483647, %v5064
        %v5073 = vand.u32 2147483647, %v5065
        %v5074 = vand.u32 2147483647, %v5066
        %v5075 = vmul.f32 %v5067, 0.3275911
        %v5076 = vmul.f32 %v5068, 0.3275911
        %v5077 = vmul.f32 %v5069, 0.3275911
        %v5078 = vmul.f32 %v5070, 0.3275911
        %v5079 = vmul.f32 %v5071, 0.3275911
        %v5080 = vmul.f32 %v5072, 0.3275911
        %v5081 = vmul.f32 %v5073, 0.3275911
        %v5082 = vmul.f32 %v5074, 0.3275911
        %v5083 = vadd.f32 %v5075, 1.0
        %v5084 = vadd.f32 %v5076, 1.0
        %v5085 = vadd.f32 %v5077, 1.0
        %v5086 = vadd.f32 %v5078, 1.0
        %v5087 = vadd.f32 %v5079, 1.0
        %v5088 = vadd.f32 %v5080, 1.0
        %v5089 = vadd.f32 %v5081, 1.0
        %v5090 = vadd.f32 %v5082, 1.0
        %v5091 = vrcp.pop %v5083
        %v5092 = vrcp.pop %v5084
        %v5093 = vrcp.pop %v5085
        %v5094 = vrcp.pop %v5086
        %v5095 = vrcp.pop %v5087
        %v5096 = vrcp.pop %v5088
        %v5097 = vrcp.pop %v5089
        %v5098 = vrcp.pop %v5090
        %v5099 = vmul.f32 %v5091, 1.0614054
        %v5100 = vmul.f32 %v5092, 1.0614054
        %v5101 = vmul.f32 %v5093, 1.0614054
        %v5102 = vmul.f32 %v5094, 1.0614054
        %v5103 = vmul.f32 %v5095, 1.0614054
        %v5104 = vmul.f32 %v5096, 1.0614054
        %v5105 = vmul.f32 %v5097, 1.0614054
        %v5106 = vmul.f32 %v5098, 1.0614054
        %v5107 = vadd.f32 %v5099, -1.4531521
        %v5108 = vadd.f32 %v5100, -1.4531521
        %v5109 = vadd.f32 %v5101, -1.4531521
        %v5110 = vadd.f32 %v5102, -1.4531521
        %v5111 = vadd.f32 %v5103, -1.4531521
        %v5112 = vadd.f32 %v5104, -1.4531521
        %v5113 = vadd.f32 %v5105, -1.4531521
        %v5114 = vadd.f32 %v5106, -1.4531521
        %v5115 = vmul.f32 %v5107, %v5091
        %v5116 = vmul.f32 %v5108, %v5092
        %v5117 = vmul.f32 %v5109, %v5093
        %v5118 = vmul.f32 %v5110, %v5094
        %v5119 = vmul.f32 %v5111, %v5095
        %v5120 = vmul.f32 %v5112, %v5096
        %v5121 = vmul.f32 %v5113, %v5097
        %v5122 = vmul.f32 %v5114, %v5098
        %v5123 = vadd.f32 %v5115, 1.4214138
        %v5124 = vadd.f32 %v5116, 1.4214138
        %v5125 = vadd.f32 %v5117, 1.4214138
        %v5126 = vadd.f32 %v5118, 1.4214138
        %v5127 = vadd.f32 %v5119, 1.4214138
        %v5128 = vadd.f32 %v5120, 1.4214138
        %v5129 = vadd.f32 %v5121, 1.4214138
        %v5130 = vadd.f32 %v5122, 1.4214138
        %v5131 = vmul.f32 %v5123, %v5091
        %v5132 = vmul.f32 %v5124, %v5092
        %v5133 = vmul.f32 %v5125, %v5093
        %v5134 = vmul.f32 %v5126, %v5094
        %v5135 = vmul.f32 %v5127, %v5095
        %v5136 = vmul.f32 %v5128, %v5096
        %v5137 = vmul.f32 %v5129, %v5097
        %v5138 = vmul.f32 %v5130, %v5098
        %v5139 = vadd.f32 %v5131, -0.28449672
        %v5140 = vadd.f32 %v5132, -0.28449672
        %v5141 = vadd.f32 %v5133, -0.28449672
        %v5142 = vadd.f32 %v5134, -0.28449672
        %v5143 = vadd.f32 %v5135, -0.28449672
        %v5144 = vadd.f32 %v5136, -0.28449672
        %v5145 = vadd.f32 %v5137, -0.28449672
        %v5146 = vadd.f32 %v5138, -0.28449672
        %v5147 = vmul.f32 %v5139, %v5091
        %v5148 = vmul.f32 %v5140, %v5092
        %v5149 = vmul.f32 %v5141, %v5093
        %v5150 = vmul.f32 %v5142, %v5094
        %v5151 = vmul.f32 %v5143, %v5095
        %v5152 = vmul.f32 %v5144, %v5096
        %v5153 = vmul.f32 %v5145, %v5097
        %v5154 = vmul.f32 %v5146, %v5098
        %v5155 = vadd.f32 %v5147, 0.2548296
        %v5156 = vadd.f32 %v5148, 0.2548296
        %v5157 = vadd.f32 %v5149, 0.2548296
        %v5158 = vadd.f32 %v5150, 0.2548296
        %v5159 = vadd.f32 %v5151, 0.2548296
        %v5160 = vadd.f32 %v5152, 0.2548296
        %v5161 = vadd.f32 %v5153, 0.2548296
        %v5162 = vadd.f32 %v5154, 0.2548296
        %v5163 = vmul.f32 %v5155, %v5091
        %v5164 = vmul.f32 %v5156, %v5092
        %v5165 = vmul.f32 %v5157, %v5093
        %v5166 = vmul.f32 %v5158, %v5094
        %v5167 = vmul.f32 %v5159, %v5095
        %v5168 = vmul.f32 %v5160, %v5096
        %v5169 = vmul.f32 %v5161, %v5097
        %v5170 = vmul.f32 %v5162, %v5098
        %v5171 = vsub.f32 0.0, %v5067
        %v5172 = vsub.f32 0.0, %v5068
        %v5173 = vsub.f32 0.0, %v5069
        %v5174 = vsub.f32 0.0, %v5070
        %v5175 = vsub.f32 0.0, %v5071
        %v5176 = vsub.f32 0.0, %v5072
        %v5177 = vsub.f32 0.0, %v5073
        %v5178 = vsub.f32 0.0, %v5074
        %v5179 = vmul.f32 %v5171, %v5067
        %v5180 = vmul.f32 %v5172, %v5068
        %v5181 = vmul.f32 %v5173, %v5069
        %v5182 = vmul.f32 %v5174, %v5070
        %v5183 = vmul.f32 %v5175, %v5071
        %v5184 = vmul.f32 %v5176, %v5072
        %v5185 = vmul.f32 %v5177, %v5073
        %v5186 = vmul.f32 %v5178, %v5074
        %v5187 = vmul.f32 %v5179, 1.442695
        %v5188 = vpow.pop %v5187
        %v5189 = vmul.f32 %v5180, 1.442695
        %v5190 = vpow.pop %v5189
        %v5191 = vmul.f32 %v5181, 1.442695
        %v5192 = vpow.pop %v5191
        %v5193 = vmul.f32 %v5182, 1.442695
        %v5194 = vpow.pop %v5193
        %v5195 = vmul.f32 %v5183, 1.442695
        %v5196 = vpow.pop %v5195
        %v5197 = vmul.f32 %v5184, 1.442695
        %v5198 = vpow.pop %v5197
        %v5199 = vmul.f32 %v5185, 1.442695
        %v5200 = vpow.pop %v5199
        %v5201 = vmul.f32 %v5186, 1.442695
        %v5202 = vpow.pop %v5201
        %v5203 = vmul.f32 %v5163, %v5188
        %v5204 = vmul.f32 %v5164, %v5190
        %v5205 = vmul.f32 %v5165, %v5192
        %v5206 = vmul.f32 %v5166, %v5194
        %v5207 = vmul.f32 %v5167, %v5196
        %v5208 = vmul.f32 %v5168, %v5198
        %v5209 = vmul.f32 %v5169, %v5200
        %v5210 = vmul.f32 %v5170, %v5202
        %v5211 = vsub.f32 1.0, %v5203
        %v5212 = vsub.f32 1.0, %v5204
        %v5213 = vsub.f32 1.0, %v5205
        %v5214 = vsub.f32 1.0, %v5206
        %v5215 = vsub.f32 1.0, %v5207
        %v5216 = vsub.f32 1.0, %v5208
        %v5217 = vsub.f32 1.0, %v5209
        %v5218 = vsub.f32 1.0, %v5210
        %vm5219 = vcmp.lt.f32.partialorder %v5059, 0.0
        %vm5220 = vcmp.lt.f32.partialorder %v5060, 0.0
        %vm5221 = vcmp.lt.f32.partialorder %v5061, 0.0
        %vm5222 = vcmp.lt.f32.partialorder %v5062, 0.0
        %vm5223 = vcmp.lt.f32.partialorder %v5063, 0.0
        %vm5224 = vcmp.lt.f32.partialorder %v5064, 0.0
        %vm5225 = vcmp.lt.f32.partialorder %v5065, 0.0
        %vm5226 = vcmp.lt.f32.partialorder %v5066, 0.0
        %v5227 = vsub.f32 0.0, %v5211
        %v5228 = vsub.f32 0.0, %v5212
        %v5229 = vsub.f32 0.0, %v5213
        %v5230 = vsub.f32 0.0, %v5214
        %v5231 = vsub.f32 0.0, %v5215
        %v5232 = vsub.f32 0.0, %v5216
        %v5233 = vsub.f32 0.0, %v5217
        %v5234 = vsub.f32 0.0, %v5218
        %v5235 = vsel %vm5219, %v5227, %v5211
        %v5236 = vsel %vm5220, %v5228, %v5212
        %v5237 = vsel %vm5221, %v5229, %v5213
        %v5238 = vsel %vm5222, %v5230, %v5214
        %v5239 = vsel %vm5223, %v5231, %v5215
        %v5240 = vsel %vm5224, %v5232, %v5216
        %v5241 = vsel %vm5225, %v5233, %v5217
        %v5242 = vsel %vm5226, %v5234, %v5218
        %v5243 = vadd.f32 %v5235, 1.0
        %v5244 = vadd.f32 %v5236, 1.0
        %v5245 = vadd.f32 %v5237, 1.0
        %v5246 = vadd.f32 %v5238, 1.0
        %v5247 = vadd.f32 %v5239, 1.0
        %v5248 = vadd.f32 %v5240, 1.0
        %v5249 = vadd.f32 %v5241, 1.0
        %v5250 = vadd.f32 %v5242, 1.0
        %v5251 = vmul.f32 %v5051, %v5243
        %v5252 = vmul.f32 %v5052, %v5244
        %v5253 = vmul.f32 %v5053, %v5245
        %v5254 = vmul.f32 %v5054, %v5246
        %v5255 = vmul.f32 %v5055, %v5247
        %v5256 = vmul.f32 %v5056, %v5248
        %v5257 = vmul.f32 %v5057, %v5249
        %v5258 = vmul.f32 %v5058, %v5250
        %5267 = vrot.lane.b32.xlu0 %v5043, 64
        %v5268 = vpop.permute.xlu0 %5267
        %5269 = vrot.lane.b32.xlu0 %v5044, 64
        %v5270 = vpop.permute.xlu0 %5269
        %5271 = vrot.lane.b32.xlu0 %v5045, 64
        %v5272 = vpop.permute.xlu0 %5271
        %5273 = vrot.lane.b32.xlu0 %v5046, 64
        %v5274 = vpop.permute.xlu0 %5273
        %5275 = vrot.lane.b32.xlu0 %v5047, 64
        %v5276 = vpop.permute.xlu0 %5275
        %5277 = vrot.lane.b32.xlu0 %v5048, 64
        %v5278 = vpop.permute.xlu0 %5277
        %5279 = vrot.lane.b32.xlu0 %v5049, 64
        %v5280 = vpop.permute.xlu0 %5279
        %5281 = vrot.lane.b32.xlu0 %v5050, 64
        %v5282 = vpop.permute.xlu0 %5281
        %v5291 = vmul.f32 %v5251, %v5268
        %v5292 = vmul.f32 %v5252, %v5270
        %v5293 = vmul.f32 %v5253, %v5272
        %v5294 = vmul.f32 %v5254, %v5274
        %v5295 = vmul.f32 %v5255, %v5276
        %v5296 = vmul.f32 %v5256, %v5278
        %v5297 = vmul.f32 %v5257, %v5280
        %v5298 = vmul.f32 %v5258, %v5282
        %v5299 = vpack.c.bf16 %v5292, %v5291
        %v5300 = vpack.c.bf16 %v5294, %v5293
        %v5301 = vpack.c.bf16 %v5296, %v5295
        %v5302 = vpack.c.bf16 %v5298, %v5297
        %v5303 = vld [vmem:[%s12] sm:$0xf]
        %v5304 = vld [vmem:[%s12 + $0x4] sm:$0xf]
        %v5305 = vld [vmem:[%s12 + $0x8] sm:$0xf]
        %v5306 = vld [vmem:[%s12 + $0xc] sm:$0xf]
        %v5307 = vld [vmem:[%s12 + $0x10] sm:$0xf]
        %v5308 = vld [vmem:[%s12 + $0x14] sm:$0xf]
        %v5309 = vld [vmem:[%s12 + $0x18] sm:$0xf]
        %v5310 = vld [vmem:[%s12 + $0x1c] sm:$0xf]
        %v5319 = vunpack.c.l.b16 %v5303
        %v5320 = vunpack.c.l.b16 %v5304
        %v5321 = vunpack.c.l.b16 %v5305
        %v5322 = vunpack.c.l.b16 %v5306
        %v5323 = vunpack.c.l.b16 %v5307
        %v5324 = vunpack.c.l.b16 %v5308
        %v5325 = vunpack.c.l.b16 %v5309
        %v5326 = vunpack.c.l.b16 %v5310
        %v5327 = vpack.c.b16 %v5320, %v5319
        %v5328 = vpack.c.b16 %v5322, %v5321
        %v5329 = vpack.c.b16 %v5324, %v5323
        %v5330 = vpack.c.b16 %v5326, %v5325
        %vm5335 = vcmask 523264
        %v5337 = vsel %vm5335, %v5299, 0
        %v5340 = vsel %vm5335, %v5300, 0
        %v5343 = vsel %vm5335, %v5301, 0
        %v5346 = vsel %vm5335, %v5302, 0
        %5348 = vmatprep.subr.bf16.mxu0 0
        %5349 = vmatpush1.bf16.msra.mxu0 %v5327
        %5350 = vmatprep.subr.bf16.mxu0 0
        %5351 = vmatpush1.bf16.msra.mxu0 %v5328
        %5352 = vmatprep.subr.bf16.mxu0 0
        %5353 = vmatpush1.bf16.msra.mxu0 %v5329
        %5354 = vmatprep.subr.bf16.mxu0 0
        %5355 = vmatpush1.bf16.msra.mxu0 %v5330
        %5356 = vmatprep.subr.bf16.mxu0 0
        %5357 = vmatpush1.bf16.msra.mxu0 0
        %5358 = vmatprep.subr.bf16.mxu0 0
        %5359 = vmatpush1.bf16.msra.mxu0 0
        %5360 = vmatprep.subr.bf16.mxu0 0
        %5361 = vmatpush1.bf16.msra.mxu0 0
        %5362 = vmatprep.subr.bf16.mxu0 0
        %5363 = vmatpush1.bf16.msra.mxu0 0
        %5364 = vmatprep.subr.bf16.mxu0 0
        %5365 = vmatpush1.bf16.msra.mxu0 0
        %5366 = vmatprep.subr.bf16.mxu0 0
        %5367 = vmatpush1.bf16.msra.mxu0 0
        %5368 = vmatprep.subr.bf16.mxu0 0
        %5369 = vmatpush1.bf16.msra.mxu0 0
        %5370 = vmatprep.subr.bf16.mxu0 0
        %5371 = vmatpush1.bf16.msra.mxu0 0
        %5372 = vmatprep.subr.bf16.mxu0 0
        %5373 = vmatpush1.bf16.msra.mxu0 0
        %5374 = vmatprep.subr.bf16.mxu0 0
        %5375 = vmatpush1.bf16.msra.mxu0 0
        %5376 = vmatprep.subr.bf16.mxu0 0
        %5377 = vmatpush1.bf16.msra.mxu0 0
        %5378 = vmatprep.subr.bf16.mxu0 0
        %5379 = vmatpush1.bf16.msra.mxu0 0
        %5380 = vmatprep.mubr.bf16.mxu0 0
        %5381 = vmatmul.mubr.bf16.gmra.mrb[0].mxu0 %v5337
        %v5382 = vpop.f32.mrb[0].mxu0
        %v5383 = vadd.f32 0.0, %v5382
        %v5384 = vpop.f32.mrb[0].mxu0
        %v5385 = vpop.f32.mrb[0].mxu0
        %v5386 = vadd.f32 0.0, %v5385
        %v5387 = vpop.f32.mrb[0].mxu0
        %5388 = vmatprep.mubr.bf16.mxu0 0
        %5389 = vmatmul.mubr.bf16.gmra.mrb[0].mxu0 %v5340
        %v5390 = vpop.f32.mrb[0].mxu0
        %v5391 = vadd.f32 0.0, %v5390
        %v5392 = vpop.f32.mrb[0].mxu0
        %v5393 = vpop.f32.mrb[0].mxu0
        %v5394 = vadd.f32 0.0, %v5393
        %v5395 = vpop.f32.mrb[0].mxu0
        %5396 = vmatprep.mubr.bf16.mxu0 0
        %5397 = vmatmul.mubr.bf16.gmra.mrb[0].mxu0 %v5343
        %v5398 = vpop.f32.mrb[0].mxu0
        %v5399 = vadd.f32 0.0, %v5398
        %v5400 = vpop.f32.mrb[0].mxu0
        %v5401 = vpop.f32.mrb[0].mxu0
        %v5402 = vadd.f32 0.0, %v5401
        %v5403 = vpop.f32.mrb[0].mxu0
        %5404 = vmatprep.mubr.bf16.mxu0 0
        %5405 = vmatmul.mubr.bf16.gmra.mrb[0].mxu0 %v5346
        %v5406 = vpop.f32.mrb[0].mxu0
        %v5407 = vadd.f32 0.0, %v5406
        %v5408 = vpop.f32.mrb[0].mxu0
        %v5409 = vpop.f32.mrb[0].mxu0
        %v5410 = vadd.f32 0.0, %v5409
        %v5411 = vpop.f32.mrb[0].mxu0
        %5412 = vdwg.mxu0
        %v5413 = vld [vmem:[#allocation5] sm:$0xff]
        %v5414 = vld [vmem:[#allocation5 + $0x8] sm:$0xff]
        %v5415 = vld [vmem:[#allocation5 + $0x10] sm:$0xff]
        %v5416 = vld [vmem:[#allocation5 + $0x18] sm:$0xff]
        %v5417 = vld [vmem:[#allocation5 + $0x20] sm:$0xff]
        %v5418 = vld [vmem:[#allocation5 + $0x28] sm:$0xff]
        %v5419 = vld [vmem:[#allocation5 + $0x30] sm:$0xff]
        %v5420 = vld [vmem:[#allocation5 + $0x38] sm:$0xff]
        %v5421 = vadd.f32 %v5413, %v5383
        %v5422 = vadd.f32 %v5414, %v5386
        %v5423 = vadd.f32 %v5415, %v5391
        %v5424 = vadd.f32 %v5416, %v5394
        %v5425 = vadd.f32 %v5417, %v5399
        %v5426 = vadd.f32 %v5418, %v5402
        %v5427 = vadd.f32 %v5419, %v5407
        %v5428 = vadd.f32 %v5420, %v5410
        %5429 = vst.msk [vmem:[%s525] sm:$0xff] %vm693, %v5421
        %5430 = vst.msk [vmem:[%s525 + $0x8] sm:$0xff] %vm693, %v5422
        %5431 = vst.msk [vmem:[%s525 + $0x10] sm:$0xff] %vm693, %v5423
        %5432 = vst.msk [vmem:[%s525 + $0x18] sm:$0xff] %vm693, %v5424
        %5433 = vst.msk [vmem:[%s525 + $0x20] sm:$0xff] %vm693, %v5425
        %5434 = vst.msk [vmem:[%s525 + $0x28] sm:$0xff] %vm693, %v5426
        %5435 = vst.msk [vmem:[%s525 + $0x30] sm:$0xff] %vm693, %v5427
        %5436 = vst.msk [vmem:[%s525 + $0x38] sm:$0xff] %vm693, %v5428
        %s5437 = scalar_lea.vmem [#allocation3], 128
        %v5438 = vld [vmem:[%s5437 + $0x7] sm:$0xff]
        %v5439 = vld [vmem:[%s5437 + $0xf] sm:$0xff]
        %v5440 = vld [vmem:[%s5437 + $0x27] sm:$0xff]
        %v5441 = vld [vmem:[%s5437 + $0x2f] sm:$0xff]
        %v5442 = vld [vmem:[%s5437 + $0x47] sm:$0xff]
        %v5443 = vld [vmem:[%s5437 + $0x4f] sm:$0xff]
        %v5444 = vld [vmem:[%s5437 + $0x67] sm:$0xff]
        %v5445 = vld [vmem:[%s5437 + $0x6f] sm:$0xff]
        %v5446 = vld [vmem:[#allocation15] sm:$0x1]
        %v5447 = vlaneseq
        %v5448 = vshrl.u32 %v5447, 7
        %v5449 = vsub.s32 0, %v5448
        %v5450 = vrot.slane %v5446, %v5449
        %v5451 = vmul.f32 %v5438, %v5450
        %v5452 = vmul.f32 %v5439, %v5450
        %v5453 = vmul.f32 %v5440, %v5450
        %v5454 = vmul.f32 %v5441, %v5450
        %v5455 = vmul.f32 %v5442, %v5450
        %v5456 = vmul.f32 %v5443, %v5450
        %v5457 = vmul.f32 %v5444, %v5450
        %v5458 = vmul.f32 %v5445, %v5450
        %v5459 = vadd.f32 %v5451, 0.0
        %v5460 = vadd.f32 %v5452, 0.0
        %v5461 = vadd.f32 %v5453, 0.0
        %v5462 = vadd.f32 %v5454, 0.0
        %v5463 = vadd.f32 %v5455, 0.0
        %v5464 = vadd.f32 %v5456, 0.0
        %v5465 = vadd.f32 %v5457, 0.0
        %v5466 = vadd.f32 %v5458, 0.0
        %v5467 = vld [vmem:[%s5437 + $0x8] sm:$0xff]
        %v5468 = vld [vmem:[%s5437 + $0x10] sm:$0xff]
        %v5469 = vld [vmem:[%s5437 + $0x28] sm:$0xff]
        %v5470 = vld [vmem:[%s5437 + $0x30] sm:$0xff]
        %v5471 = vld [vmem:[%s5437 + $0x48] sm:$0xff]
        %v5472 = vld [vmem:[%s5437 + $0x50] sm:$0xff]
        %v5473 = vld [vmem:[%s5437 + $0x68] sm:$0xff]
        %v5474 = vld [vmem:[%s5437 + $0x70] sm:$0xff]
        %v5475 = vld [vmem:[#allocation15 + $0x1] sm:$0x1]
        %v5476 = vlaneseq
        %v5477 = vshrl.u32 %v5476, 7
        %v5478 = vsub.s32 0, %v5477
        %v5479 = vrot.slane %v5475, %v5478
        %v5480 = vmul.f32 %v5467, %v5479
        %v5481 = vmul.f32 %v5468, %v5479
        %v5482 = vmul.f32 %v5469, %v5479
        %v5483 = vmul.f32 %v5470, %v5479
        %v5484 = vmul.f32 %v5471, %v5479
        %v5485 = vmul.f32 %v5472, %v5479
        %v5486 = vmul.f32 %v5473, %v5479
        %v5487 = vmul.f32 %v5474, %v5479
        %v5488 = vadd.f32 %v5459, %v5480
        %v5489 = vadd.f32 %v5460, %v5481
        %v5490 = vadd.f32 %v5461, %v5482
        %v5491 = vadd.f32 %v5462, %v5483
        %v5492 = vadd.f32 %v5463, %v5484
        %v5493 = vadd.f32 %v5464, %v5485
        %v5494 = vadd.f32 %v5465, %v5486
        %v5495 = vadd.f32 %v5466, %v5487
        %v5496 = vld [vmem:[%s5437 + $0x9] sm:$0xff]
        %v5497 = vld [vmem:[%s5437 + $0x11] sm:$0xff]
        %v5498 = vld [vmem:[%s5437 + $0x29] sm:$0xff]
        %v5499 = vld [vmem:[%s5437 + $0x31] sm:$0xff]
        %v5500 = vld [vmem:[%s5437 + $0x49] sm:$0xff]
        %v5501 = vld [vmem:[%s5437 + $0x51] sm:$0xff]
        %v5502 = vld [vmem:[%s5437 + $0x69] sm:$0xff]
        %v5503 = vld [vmem:[%s5437 + $0x71] sm:$0xff]
        %v5504 = vld [vmem:[#allocation15 + $0x2] sm:$0x1]
        %v5505 = vlaneseq
        %v5506 = vshrl.u32 %v5505, 7
        %v5507 = vsub.s32 0, %v5506
        %v5508 = vrot.slane %v5504, %v5507
        %v5509 = vmul.f32 %v5496, %v5508
        %v5510 = vmul.f32 %v5497, %v5508
        %v5511 = vmul.f32 %v5498, %v5508
        %v5512 = vmul.f32 %v5499, %v5508
        %v5513 = vmul.f32 %v5500, %v5508
        %v5514 = vmul.f32 %v5501, %v5508
        %v5515 = vmul.f32 %v5502, %v5508
        %v5516 = vmul.f32 %v5503, %v5508
        %v5517 = vadd.f32 %v5488, %v5509
        %v5518 = vadd.f32 %v5489, %v5510
        %v5519 = vadd.f32 %v5490, %v5511
        %v5520 = vadd.f32 %v5491, %v5512
        %v5521 = vadd.f32 %v5492, %v5513
        %v5522 = vadd.f32 %v5493, %v5514
        %v5523 = vadd.f32 %v5494, %v5515
        %v5524 = vadd.f32 %v5495, %v5516
        %v5525 = vld [vmem:[%s4310 + $0x7] sm:$0xff]
        %v5526 = vld [vmem:[%s4310 + $0xf] sm:$0xff]
        %v5527 = vld [vmem:[%s4310 + $0x27] sm:$0xff]
        %v5528 = vld [vmem:[%s4310 + $0x2f] sm:$0xff]
        %v5529 = vld [vmem:[%s4310 + $0x47] sm:$0xff]
        %v5530 = vld [vmem:[%s4310 + $0x4f] sm:$0xff]
        %v5531 = vld [vmem:[%s4310 + $0x67] sm:$0xff]
        %v5532 = vld [vmem:[%s4310 + $0x6f] sm:$0xff]
        %v5533 = vld [vmem:[%s4882] sm:$0x1]
        %v5534 = vlaneseq
        %v5535 = vshrl.u32 %v5534, 7
        %v5536 = vsub.s32 0, %v5535
        %v5537 = vrot.slane %v5533, %v5536
        %v5538 = vmul.f32 %v5525, %v5537
        %v5539 = vmul.f32 %v5526, %v5537
        %v5540 = vmul.f32 %v5527, %v5537
        %v5541 = vmul.f32 %v5528, %v5537
        %v5542 = vmul.f32 %v5529, %v5537
        %v5543 = vmul.f32 %v5530, %v5537
        %v5544 = vmul.f32 %v5531, %v5537
        %v5545 = vmul.f32 %v5532, %v5537
        %v5546 = vadd.f32 %v5517, %v5538
        %v5547 = vadd.f32 %v5518, %v5539
        %v5548 = vadd.f32 %v5519, %v5540
        %v5549 = vadd.f32 %v5520, %v5541
        %v5550 = vadd.f32 %v5521, %v5542
        %v5551 = vadd.f32 %v5522, %v5543
        %v5552 = vadd.f32 %v5523, %v5544
        %v5553 = vadd.f32 %v5524, %v5545
        %v5554 = vld [vmem:[%s4310 + $0x8] sm:$0xff]
        %v5555 = vld [vmem:[%s4310 + $0x10] sm:$0xff]
        %v5556 = vld [vmem:[%s4310 + $0x28] sm:$0xff]
        %v5557 = vld [vmem:[%s4310 + $0x30] sm:$0xff]
        %v5558 = vld [vmem:[%s4310 + $0x48] sm:$0xff]
        %v5559 = vld [vmem:[%s4310 + $0x50] sm:$0xff]
        %v5560 = vld [vmem:[%s4310 + $0x68] sm:$0xff]
        %v5561 = vld [vmem:[%s4310 + $0x70] sm:$0xff]
        %v5562 = vld [vmem:[%s4882 + $0x1] sm:$0x1]
        %v5563 = vlaneseq
        %v5564 = vshrl.u32 %v5563, 7
        %v5565 = vsub.s32 0, %v5564
        %v5566 = vrot.slane %v5562, %v5565
        %v5567 = vmul.f32 %v5554, %v5566
        %v5568 = vmul.f32 %v5555, %v5566
        %v5569 = vmul.f32 %v5556, %v5566
        %v5570 = vmul.f32 %v5557, %v5566
        %v5571 = vmul.f32 %v5558, %v5566
        %v5572 = vmul.f32 %v5559, %v5566
        %v5573 = vmul.f32 %v5560, %v5566
        %v5574 = vmul.f32 %v5561, %v5566
        %v5575 = vadd.f32 %v5546, %v5567
        %v5576 = vadd.f32 %v5547, %v5568
        %v5577 = vadd.f32 %v5548, %v5569
        %v5578 = vadd.f32 %v5549, %v5570
        %v5579 = vadd.f32 %v5550, %v5571
        %v5580 = vadd.f32 %v5551, %v5572
        %v5581 = vadd.f32 %v5552, %v5573
        %v5582 = vadd.f32 %v5553, %v5574
        %v5583 = vld [vmem:[%s4310 + $0x9] sm:$0xff]
        %v5584 = vld [vmem:[%s4310 + $0x11] sm:$0xff]
        %v5585 = vld [vmem:[%s4310 + $0x29] sm:$0xff]
        %v5586 = vld [vmem:[%s4310 + $0x31] sm:$0xff]
        %v5587 = vld [vmem:[%s4310 + $0x49] sm:$0xff]
        %v5588 = vld [vmem:[%s4310 + $0x51] sm:$0xff]
        %v5589 = vld [vmem:[%s4310 + $0x69] sm:$0xff]
        %v5590 = vld [vmem:[%s4310 + $0x71] sm:$0xff]
        %v5591 = vld [vmem:[%s4882 + $0x2] sm:$0x1]
        %v5592 = vlaneseq
        %v5593 = vshrl.u32 %v5592, 7
        %v5594 = vsub.s32 0, %v5593
        %v5595 = vrot.slane %v5591, %v5594
        %v5596 = vmul.f32 %v5583, %v5595
        %v5597 = vmul.f32 %v5584, %v5595
        %v5598 = vmul.f32 %v5585, %v5595
        %v5599 = vmul.f32 %v5586, %v5595
        %v5600 = vmul.f32 %v5587, %v5595
        %v5601 = vmul.f32 %v5588, %v5595
        %v5602 = vmul.f32 %v5589, %v5595
        %v5603 = vmul.f32 %v5590, %v5595
        %v5604 = vadd.f32 %v5575, %v5596
        %v5605 = vadd.f32 %v5576, %v5597
        %v5606 = vadd.f32 %v5577, %v5598
        %v5607 = vadd.f32 %v5578, %v5599
        %v5608 = vadd.f32 %v5579, %v5600
        %v5609 = vadd.f32 %v5580, %v5601
        %v5610 = vadd.f32 %v5581, %v5602
        %v5611 = vadd.f32 %v5582, %v5603
        %s5612 = scalar_lea.vmem [#allocation3], 192
        %v5613 = vld [vmem:[%s5612 + $0x7] sm:$0xff]
        %v5614 = vld [vmem:[%s5612 + $0xf] sm:$0xff]
        %v5615 = vld [vmem:[%s5612 + $0x27] sm:$0xff]
        %v5616 = vld [vmem:[%s5612 + $0x2f] sm:$0xff]
        %v5617 = vld [vmem:[%s5612 + $0x47] sm:$0xff]
        %v5618 = vld [vmem:[%s5612 + $0x4f] sm:$0xff]
        %v5619 = vld [vmem:[%s5612 + $0x67] sm:$0xff]
        %v5620 = vld [vmem:[%s5612 + $0x6f] sm:$0xff]
        %v5621 = vld [vmem:[%s4971] sm:$0x1]
        %v5622 = vlaneseq
        %v5623 = vshrl.u32 %v5622, 7
        %v5624 = vsub.s32 0, %v5623
        %v5625 = vrot.slane %v5621, %v5624
        %v5626 = vmul.f32 %v5613, %v5625
        %v5627 = vmul.f32 %v5614, %v5625
        %v5628 = vmul.f32 %v5615, %v5625
        %v5629 = vmul.f32 %v5616, %v5625
        %v5630 = vmul.f32 %v5617, %v5625
        %v5631 = vmul.f32 %v5618, %v5625
        %v5632 = vmul.f32 %v5619, %v5625
        %v5633 = vmul.f32 %v5620, %v5625
        %v5634 = vadd.f32 %v5604, %v5626
        %v5635 = vadd.f32 %v5605, %v5627
        %v5636 = vadd.f32 %v5606, %v5628
        %v5637 = vadd.f32 %v5607, %v5629
        %v5638 = vadd.f32 %v5608, %v5630
        %v5639 = vadd.f32 %v5609, %v5631
        %v5640 = vadd.f32 %v5610, %v5632
        %v5641 = vadd.f32 %v5611, %v5633
        %v5642 = vld [vmem:[%s5612 + $0x8] sm:$0xff]
        %v5643 = vld [vmem:[%s5612 + $0x10] sm:$0xff]
        %v5644 = vld [vmem:[%s5612 + $0x28] sm:$0xff]
        %v5645 = vld [vmem:[%s5612 + $0x30] sm:$0xff]
        %v5646 = vld [vmem:[%s5612 + $0x48] sm:$0xff]
        %v5647 = vld [vmem:[%s5612 + $0x50] sm:$0xff]
        %v5648 = vld [vmem:[%s5612 + $0x68] sm:$0xff]
        %v5649 = vld [vmem:[%s5612 + $0x70] sm:$0xff]
        %v5650 = vld [vmem:[%s4971 + $0x1] sm:$0x1]
        %v5651 = vlaneseq
        %v5652 = vshrl.u32 %v5651, 7
        %v5653 = vsub.s32 0, %v5652
        %v5654 = vrot.slane %v5650, %v5653
        %v5655 = vmul.f32 %v5642, %v5654
        %v5656 = vmul.f32 %v5643, %v5654
        %v5657 = vmul.f32 %v5644, %v5654
        %v5658 = vmul.f32 %v5645, %v5654
        %v5659 = vmul.f32 %v5646, %v5654
        %v5660 = vmul.f32 %v5647, %v5654
        %v5661 = vmul.f32 %v5648, %v5654
        %v5662 = vmul.f32 %v5649, %v5654
        %v5663 = vadd.f32 %v5634, %v5655
        %v5664 = vadd.f32 %v5635, %v5656
        %v5665 = vadd.f32 %v5636, %v5657
        %v5666 = vadd.f32 %v5637, %v5658
        %v5667 = vadd.f32 %v5638, %v5659
        %v5668 = vadd.f32 %v5639, %v5660
        %v5669 = vadd.f32 %v5640, %v5661
        %v5670 = vadd.f32 %v5641, %v5662
        %v5671 = vld [vmem:[%s5612 + $0x9] sm:$0xff]
        %v5672 = vld [vmem:[%s5612 + $0x11] sm:$0xff]
        %v5673 = vld [vmem:[%s5612 + $0x29] sm:$0xff]
        %v5674 = vld [vmem:[%s5612 + $0x31] sm:$0xff]
        %v5675 = vld [vmem:[%s5612 + $0x49] sm:$0xff]
        %v5676 = vld [vmem:[%s5612 + $0x51] sm:$0xff]
        %v5677 = vld [vmem:[%s5612 + $0x69] sm:$0xff]
        %v5678 = vld [vmem:[%s5612 + $0x71] sm:$0xff]
        %v5679 = vld [vmem:[%s4971 + $0x2] sm:$0x1]
        %v5680 = vlaneseq
        %v5681 = vshrl.u32 %v5680, 7
        %v5682 = vsub.s32 0, %v5681
        %v5683 = vrot.slane %v5679, %v5682
        %v5684 = vmul.f32 %v5671, %v5683
        %v5685 = vmul.f32 %v5672, %v5683
        %v5686 = vmul.f32 %v5673, %v5683
        %v5687 = vmul.f32 %v5674, %v5683
        %v5688 = vmul.f32 %v5675, %v5683
        %v5689 = vmul.f32 %v5676, %v5683
        %v5690 = vmul.f32 %v5677, %v5683
        %v5691 = vmul.f32 %v5678, %v5683
        %v5692 = vadd.f32 %v5663, %v5684
        %v5693 = vadd.f32 %v5664, %v5685
        %v5694 = vadd.f32 %v5665, %v5686
        %v5695 = vadd.f32 %v5666, %v5687
        %v5696 = vadd.f32 %v5667, %v5688
        %v5697 = vadd.f32 %v5668, %v5689
        %v5698 = vadd.f32 %v5669, %v5690
        %v5699 = vadd.f32 %v5670, %v5691
        %v5700 = vmul.f32 %v5692, 0.5
        %v5701 = vmul.f32 %v5693, 0.5
        %v5702 = vmul.f32 %v5694, 0.5
        %v5703 = vmul.f32 %v5695, 0.5
        %v5704 = vmul.f32 %v5696, 0.5
        %v5705 = vmul.f32 %v5697, 0.5
        %v5706 = vmul.f32 %v5698, 0.5
        %v5707 = vmul.f32 %v5699, 0.5
        %v5708 = vmul.f32 %v5692, 0.70710677
        %v5709 = vmul.f32 %v5693, 0.70710677
        %v5710 = vmul.f32 %v5694, 0.70710677
        %v5711 = vmul.f32 %v5695, 0.70710677
        %v5712 = vmul.f32 %v5696, 0.70710677
        %v5713 = vmul.f32 %v5697, 0.70710677
        %v5714 = vmul.f32 %v5698, 0.70710677
        %v5715 = vmul.f32 %v5699, 0.70710677
        %v5716 = vand.u32 2147483647, %v5708
        %v5717 = vand.u32 2147483647, %v5709
        %v5718 = vand.u32 2147483647, %v5710
        %v5719 = vand.u32 2147483647, %v5711
        %v5720 = vand.u32 2147483647, %v5712
        %v5721 = vand.u32 2147483647, %v5713
        %v5722 = vand.u32 2147483647, %v5714
        %v5723 = vand.u32 2147483647, %v5715
        %v5724 = vmul.f32 %v5716, 0.3275911
        %v5725 = vmul.f32 %v5717, 0.3275911
        %v5726 = vmul.f32 %v5718, 0.3275911
        %v5727 = vmul.f32 %v5719, 0.3275911
        %v5728 = vmul.f32 %v5720, 0.3275911
        %v5729 = vmul.f32 %v5721, 0.3275911
        %v5730 = vmul.f32 %v5722, 0.3275911
        %v5731 = vmul.f32 %v5723, 0.3275911
        %v5732 = vadd.f32 %v5724, 1.0
        %v5733 = vadd.f32 %v5725, 1.0
        %v5734 = vadd.f32 %v5726, 1.0
        %v5735 = vadd.f32 %v5727, 1.0
        %v5736 = vadd.f32 %v5728, 1.0
        %v5737 = vadd.f32 %v5729, 1.0
        %v5738 = vadd.f32 %v5730, 1.0
        %v5739 = vadd.f32 %v5731, 1.0
        %v5740 = vrcp.pop %v5732
        %v5741 = vrcp.pop %v5733
        %v5742 = vrcp.pop %v5734
        %v5743 = vrcp.pop %v5735
        %v5744 = vrcp.pop %v5736
        %v5745 = vrcp.pop %v5737
        %v5746 = vrcp.pop %v5738
        %v5747 = vrcp.pop %v5739
        %v5748 = vmul.f32 %v5740, 1.0614054
        %v5749 = vmul.f32 %v5741, 1.0614054
        %v5750 = vmul.f32 %v5742, 1.0614054
        %v5751 = vmul.f32 %v5743, 1.0614054
        %v5752 = vmul.f32 %v5744, 1.0614054
        %v5753 = vmul.f32 %v5745, 1.0614054
        %v5754 = vmul.f32 %v5746, 1.0614054
        %v5755 = vmul.f32 %v5747, 1.0614054
        %v5756 = vadd.f32 %v5748, -1.4531521
        %v5757 = vadd.f32 %v5749, -1.4531521
        %v5758 = vadd.f32 %v5750, -1.4531521
        %v5759 = vadd.f32 %v5751, -1.4531521
        %v5760 = vadd.f32 %v5752, -1.4531521
        %v5761 = vadd.f32 %v5753, -1.4531521
        %v5762 = vadd.f32 %v5754, -1.4531521
        %v5763 = vadd.f32 %v5755, -1.4531521
        %v5764 = vmul.f32 %v5756, %v5740
        %v5765 = vmul.f32 %v5757, %v5741
        %v5766 = vmul.f32 %v5758, %v5742
        %v5767 = vmul.f32 %v5759, %v5743
        %v5768 = vmul.f32 %v5760, %v5744
        %v5769 = vmul.f32 %v5761, %v5745
        %v5770 = vmul.f32 %v5762, %v5746
        %v5771 = vmul.f32 %v5763, %v5747
        %v5772 = vadd.f32 %v5764, 1.4214138
        %v5773 = vadd.f32 %v5765, 1.4214138
        %v5774 = vadd.f32 %v5766, 1.4214138
        %v5775 = vadd.f32 %v5767, 1.4214138
        %v5776 = vadd.f32 %v5768, 1.4214138
        %v5777 = vadd.f32 %v5769, 1.4214138
        %v5778 = vadd.f32 %v5770, 1.4214138
        %v5779 = vadd.f32 %v5771, 1.4214138
        %v5780 = vmul.f32 %v5772, %v5740
        %v5781 = vmul.f32 %v5773, %v5741
        %v5782 = vmul.f32 %v5774, %v5742
        %v5783 = vmul.f32 %v5775, %v5743
        %v5784 = vmul.f32 %v5776, %v5744
        %v5785 = vmul.f32 %v5777, %v5745
        %v5786 = vmul.f32 %v5778, %v5746
        %v5787 = vmul.f32 %v5779, %v5747
        %v5788 = vadd.f32 %v5780, -0.28449672
        %v5789 = vadd.f32 %v5781, -0.28449672
        %v5790 = vadd.f32 %v5782, -0.28449672
        %v5791 = vadd.f32 %v5783, -0.28449672
        %v5792 = vadd.f32 %v5784, -0.28449672
        %v5793 = vadd.f32 %v5785, -0.28449672
        %v5794 = vadd.f32 %v5786, -0.28449672
        %v5795 = vadd.f32 %v5787, -0.28449672
        %v5796 = vmul.f32 %v5788, %v5740
        %v5797 = vmul.f32 %v5789, %v5741
        %v5798 = vmul.f32 %v5790, %v5742
        %v5799 = vmul.f32 %v5791, %v5743
        %v5800 = vmul.f32 %v5792, %v5744
        %v5801 = vmul.f32 %v5793, %v5745
        %v5802 = vmul.f32 %v5794, %v5746
        %v5803 = vmul.f32 %v5795, %v5747
        %v5804 = vadd.f32 %v5796, 0.2548296
        %v5805 = vadd.f32 %v5797, 0.2548296
        %v5806 = vadd.f32 %v5798, 0.2548296
        %v5807 = vadd.f32 %v5799, 0.2548296
        %v5808 = vadd.f32 %v5800, 0.2548296
        %v5809 = vadd.f32 %v5801, 0.2548296
        %v5810 = vadd.f32 %v5802, 0.2548296
        %v5811 = vadd.f32 %v5803, 0.2548296
        %v5812 = vmul.f32 %v5804, %v5740
        %v5813 = vmul.f32 %v5805, %v5741
        %v5814 = vmul.f32 %v5806, %v5742
        %v5815 = vmul.f32 %v5807, %v5743
        %v5816 = vmul.f32 %v5808, %v5744
        %v5817 = vmul.f32 %v5809, %v5745
        %v5818 = vmul.f32 %v5810, %v5746
        %v5819 = vmul.f32 %v5811, %v5747
        %v5820 = vsub.f32 0.0, %v5716
        %v5821 = vsub.f32 0.0, %v5717
        %v5822 = vsub.f32 0.0, %v5718
        %v5823 = vsub.f32 0.0, %v5719
        %v5824 = vsub.f32 0.0, %v5720
        %v5825 = vsub.f32 0.0, %v5721
        %v5826 = vsub.f32 0.0, %v5722
        %v5827 = vsub.f32 0.0, %v5723
        %v5828 = vmul.f32 %v5820, %v5716
        %v5829 = vmul.f32 %v5821, %v5717
        %v5830 = vmul.f32 %v5822, %v5718
        %v5831 = vmul.f32 %v5823, %v5719
        %v5832 = vmul.f32 %v5824, %v5720
        %v5833 = vmul.f32 %v5825, %v5721
        %v5834 = vmul.f32 %v5826, %v5722
        %v5835 = vmul.f32 %v5827, %v5723
        %v5836 = vmul.f32 %v5828, 1.442695
        %v5837 = vpow.pop %v5836
        %v5838 = vmul.f32 %v5829, 1.442695
        %v5839 = vpow.pop %v5838
        %v5840 = vmul.f32 %v5830, 1.442695
        %v5841 = vpow.pop %v5840
        %v5842 = vmul.f32 %v5831, 1.442695
        %v5843 = vpow.pop %v5842
        %v5844 = vmul.f32 %v5832, 1.442695
        %v5845 = vpow.pop %v5844
        %v5846 = vmul.f32 %v5833, 1.442695
        %v5847 = vpow.pop %v5846
        %v5848 = vmul.f32 %v5834, 1.442695
        %v5849 = vpow.pop %v5848
        %v5850 = vmul.f32 %v5835, 1.442695
        %v5851 = vpow.pop %v5850
        %v5852 = vmul.f32 %v5812, %v5837
        %v5853 = vmul.f32 %v5813, %v5839
        %v5854 = vmul.f32 %v5814, %v5841
        %v5855 = vmul.f32 %v5815, %v5843
        %v5856 = vmul.f32 %v5816, %v5845
        %v5857 = vmul.f32 %v5817, %v5847
        %v5858 = vmul.f32 %v5818, %v5849
        %v5859 = vmul.f32 %v5819, %v5851
        %v5860 = vsub.f32 1.0, %v5852
        %v5861 = vsub.f32 1.0, %v5853
        %v5862 = vsub.f32 1.0, %v5854
        %v5863 = vsub.f32 1.0, %v5855
        %v5864 = vsub.f32 1.0, %v5856
        %v5865 = vsub.f32 1.0, %v5857
        %v5866 = vsub.f32 1.0, %v5858
        %v5867 = vsub.f32 1.0, %v5859
        %vm5868 = vcmp.lt.f32.partialorder %v5708, 0.0
        %vm5869 = vcmp.lt.f32.partialorder %v5709, 0.0
        %vm5870 = vcmp.lt.f32.partialorder %v5710, 0.0
        %vm5871 = vcmp.lt.f32.partialorder %v5711, 0.0
        %vm5872 = vcmp.lt.f32.partialorder %v5712, 0.0
        %vm5873 = vcmp.lt.f32.partialorder %v5713, 0.0
        %vm5874 = vcmp.lt.f32.partialorder %v5714, 0.0
        %vm5875 = vcmp.lt.f32.partialorder %v5715, 0.0
        %v5876 = vsub.f32 0.0, %v5860
        %v5877 = vsub.f32 0.0, %v5861
        %v5878 = vsub.f32 0.0, %v5862
        %v5879 = vsub.f32 0.0, %v5863
        %v5880 = vsub.f32 0.0, %v5864
        %v5881 = vsub.f32 0.0, %v5865
        %v5882 = vsub.f32 0.0, %v5866
        %v5883 = vsub.f32 0.0, %v5867
        %v5884 = vsel %vm5868, %v5876, %v5860
        %v5885 = vsel %vm5869, %v5877, %v5861
        %v5886 = vsel %vm5870, %v5878, %v5862
        %v5887 = vsel %vm5871, %v5879, %v5863
        %v5888 = vsel %vm5872, %v5880, %v5864
        %v5889 = vsel %vm5873, %v5881, %v5865
        %v5890 = vsel %vm5874, %v5882, %v5866
        %v5891 = vsel %vm5875, %v5883, %v5867
        %v5892 = vadd.f32 %v5884, 1.0
        %v5893 = vadd.f32 %v5885, 1.0
        %v5894 = vadd.f32 %v5886, 1.0
        %v5895 = vadd.f32 %v5887, 1.0
        %v5896 = vadd.f32 %v5888, 1.0
        %v5897 = vadd.f32 %v5889, 1.0
        %v5898 = vadd.f32 %v5890, 1.0
        %v5899 = vadd.f32 %v5891, 1.0
        %v5900 = vmul.f32 %v5700, %v5892
        %v5901 = vmul.f32 %v5701, %v5893
        %v5902 = vmul.f32 %v5702, %v5894
        %v5903 = vmul.f32 %v5703, %v5895
        %v5904 = vmul.f32 %v5704, %v5896
        %v5905 = vmul.f32 %v5705, %v5897
        %v5906 = vmul.f32 %v5706, %v5898
        %v5907 = vmul.f32 %v5707, %v5899
        %5916 = vrot.lane.b32.xlu0 %v5692, 64
        %v5917 = vpop.permute.xlu0 %5916
        %5918 = vrot.lane.b32.xlu0 %v5693, 64
        %v5919 = vpop.permute.xlu0 %5918
        %5920 = vrot.lane.b32.xlu0 %v5694, 64
        %v5921 = vpop.permute.xlu0 %5920
        %5922 = vrot.lane.b32.xlu0 %v5695, 64
        %v5923 = vpop.permute.xlu0 %5922
        %5924 = vrot.lane.b32.xlu0 %v5696, 64
        %v5925 = vpop.permute.xlu0 %5924
        %5926 = vrot.lane.b32.xlu0 %v5697, 64
        %v5927 = vpop.permute.xlu0 %5926
        %5928 = vrot.lane.b32.xlu0 %v5698, 64
        %v5929 = vpop.permute.xlu0 %5928
        %5930 = vrot.lane.b32.xlu0 %v5699, 64
        %v5931 = vpop.permute.xlu0 %5930
        %v5940 = vmul.f32 %v5900, %v5917
        %v5941 = vmul.f32 %v5901, %v5919
        %v5942 = vmul.f32 %v5902, %v5921
        %v5943 = vmul.f32 %v5903, %v5923
        %v5944 = vmul.f32 %v5904, %v5925
        %v5945 = vmul.f32 %v5905, %v5927
        %v5946 = vmul.f32 %v5906, %v5929
        %v5947 = vmul.f32 %v5907, %v5931
        %v5948 = vpack.c.bf16 %v5941, %v5940
        %v5949 = vpack.c.bf16 %v5943, %v5942
        %v5950 = vpack.c.bf16 %v5945, %v5944
        %v5951 = vpack.c.bf16 %v5947, %v5946
        %v5952 = vld [vmem:[%s12] sm:$0xf]
        %v5953 = vld [vmem:[%s12 + $0x4] sm:$0xf]
        %v5954 = vld [vmem:[%s12 + $0x8] sm:$0xf]
        %v5955 = vld [vmem:[%s12 + $0xc] sm:$0xf]
        %v5956 = vld [vmem:[%s12 + $0x10] sm:$0xf]
        %v5957 = vld [vmem:[%s12 + $0x14] sm:$0xf]
        %v5958 = vld [vmem:[%s12 + $0x18] sm:$0xf]
        %v5959 = vld [vmem:[%s12 + $0x1c] sm:$0xf]
        %v5968 = vunpack.c.l.b16 %v5952
        %v5969 = vunpack.c.l.b16 %v5953
        %v5970 = vunpack.c.l.b16 %v5954
        %v5971 = vunpack.c.l.b16 %v5955
        %v5972 = vunpack.c.l.b16 %v5956
        %v5973 = vunpack.c.l.b16 %v5957
        %v5974 = vunpack.c.l.b16 %v5958
        %v5975 = vunpack.c.l.b16 %v5959
        %v5976 = vpack.c.b16 %v5969, %v5968
        %v5977 = vpack.c.b16 %v5971, %v5970
        %v5978 = vpack.c.b16 %v5973, %v5972
        %v5979 = vpack.c.b16 %v5975, %v5974
        %v5985 = vsel %vm5335, %v5948, 0
        %v5988 = vsel %vm5335, %v5949, 0
        %v5991 = vsel %vm5335, %v5950, 0
        %v5994 = vsel %vm5335, %v5951, 0
        %5996 = vmatprep.subr.bf16.mxu0 0
        %5997 = vmatpush1.bf16.msra.mxu0 %v5976
        %5998 = vmatprep.subr.bf16.mxu0 0
        %5999 = vmatpush1.bf16.msra.mxu0 %v5977
        %6000 = vmatprep.subr.bf16.mxu0 0
        %6001 = vmatpush1.bf16.msra.mxu0 %v5978
        %6002 = vmatprep.subr.bf16.mxu0 0
        %6003 = vmatpush1.bf16.msra.mxu0 %v5979
        %6004 = vmatprep.subr.bf16.mxu0 0
        %6005 = vmatpush1.bf16.msra.mxu0 0
        %6006 = vmatprep.subr.bf16.mxu0 0
        %6007 = vmatpush1.bf16.msra.mxu0 0
        %6008 = vmatprep.subr.bf16.mxu0 0
        %6009 = vmatpush1.bf16.msra.mxu0 0
        %6010 = vmatprep.subr.bf16.mxu0 0
        %6011 = vmatpush1.bf16.msra.mxu0 0
        %6012 = vmatprep.subr.bf16.mxu0 0
        %6013 = vmatpush1.bf16.msra.mxu0 0
        %6014 = vmatprep.subr.bf16.mxu0 0
        %6015 = vmatpush1.bf16.msra.mxu0 0
        %6016 = vmatprep.subr.bf16.mxu0 0
        %6017 = vmatpush1.bf16.msra.mxu0 0
        %6018 = vmatprep.subr.bf16.mxu0 0
        %6019 = vmatpush1.bf16.msra.mxu0 0
        %6020 = vmatprep.subr.bf16.mxu0 0
        %6021 = vmatpush1.bf16.msra.mxu0 0
        %6022 = vmatprep.subr.bf16.mxu0 0
        %6023 = vmatpush1.bf16.msra.mxu0 0
        %6024 = vmatprep.subr.bf16.mxu0 0
        %6025 = vmatpush1.bf16.msra.mxu0 0
        %6026 = vmatprep.subr.bf16.mxu0 0
        %6027 = vmatpush1.bf16.msra.mxu0 0
        %6028 = vmatprep.mubr.bf16.mxu0 0
        %6029 = vmatmul.mubr.bf16.gmra.mrb[0].mxu0 %v5985
        %v6030 = vpop.f32.mrb[0].mxu0
        %v6031 = vadd.f32 0.0, %v6030
        %v6032 = vpop.f32.mrb[0].mxu0
        %v6033 = vpop.f32.mrb[0].mxu0
        %v6034 = vadd.f32 0.0, %v6033
        %v6035 = vpop.f32.mrb[0].mxu0
        %6036 = vmatprep.mubr.bf16.mxu0 0
        %6037 = vmatmul.mubr.bf16.gmra.mrb[0].mxu0 %v5988
        %v6038 = vpop.f32.mrb[0].mxu0
        %v6039 = vadd.f32 0.0, %v6038
        %v6040 = vpop.f32.mrb[0].mxu0
        %v6041 = vpop.f32.mrb[0].mxu0
        %v6042 = vadd.f32 0.0, %v6041
        %v6043 = vpop.f32.mrb[0].mxu0
        %6044 = vmatprep.mubr.bf16.mxu0 0
        %6045 = vmatmul.mubr.bf16.gmra.mrb[0].mxu0 %v5991
        %v6046 = vpop.f32.mrb[0].mxu0
        %v6047 = vadd.f32 0.0, %v6046
        %v6048 = vpop.f32.mrb[0].mxu0
        %v6049 = vpop.f32.mrb[0].mxu0
        %v6050 = vadd.f32 0.0, %v6049
        %v6051 = vpop.f32.mrb[0].mxu0
        %6052 = vmatprep.mubr.bf16.mxu0 0
        %6053 = vmatmul.mubr.bf16.gmra.mrb[0].mxu0 %v5994
        %v6054 = vpop.f32.mrb[0].mxu0
        %v6055 = vadd.f32 0.0, %v6054
        %v6056 = vpop.f32.mrb[0].mxu0
        %v6057 = vpop.f32.mrb[0].mxu0
        %v6058 = vadd.f32 0.0, %v6057
        %v6059 = vpop.f32.mrb[0].mxu0
        %6060 = vdwg.mxu0
        %v6061 = vld [vmem:[#allocation5 + $0x40] sm:$0xff]
        %v6062 = vld [vmem:[#allocation5 + $0x48] sm:$0xff]
        %v6063 = vld [vmem:[#allocation5 + $0x50] sm:$0xff]
        %v6064 = vld [vmem:[#allocation5 + $0x58] sm:$0xff]
        %v6065 = vld [vmem:[#allocation5 + $0x60] sm:$0xff]
        %v6066 = vld [vmem:[#allocation5 + $0x68] sm:$0xff]
        %v6067 = vld [vmem:[#allocation5 + $0x70] sm:$0xff]
        %v6068 = vld [vmem:[#allocation5 + $0x78] sm:$0xff]
        %v6069 = vadd.f32 %v6061, %v6031
        %v6070 = vadd.f32 %v6062, %v6034
        %v6071 = vadd.f32 %v6063, %v6039
        %v6072 = vadd.f32 %v6064, %v6042
        %v6073 = vadd.f32 %v6065, %v6047
        %v6074 = vadd.f32 %v6066, %v6050
        %v6075 = vadd.f32 %v6067, %v6055
        %v6076 = vadd.f32 %v6068, %v6058
        %s6077 = scalar_lea.vmem %s525, 64 [#allocation17]
        %6078 = vst.msk [vmem:[%s6077] sm:$0xff] %vm693, %v6069
        %6079 = vst.msk [vmem:[%s6077 + $0x8] sm:$0xff] %vm693, %v6070
        %6080 = vst.msk [vmem:[%s6077 + $0x10] sm:$0xff] %vm693, %v6071
        %6081 = vst.msk [vmem:[%s6077 + $0x18] sm:$0xff] %vm693, %v6072
        %6082 = vst.msk [vmem:[%s6077 + $0x20] sm:$0xff] %vm693, %v6073
        %6083 = vst.msk [vmem:[%s6077 + $0x28] sm:$0xff] %vm693, %v6074
        %6084 = vst.msk [vmem:[%s6077 + $0x30] sm:$0xff] %vm693, %v6075
        %6085 = vst.msk [vmem:[%s6077 + $0x38] sm:$0xff] %vm693, %v6076
        %s6086 = scalar_lea.vmem [#allocation3], 256
        %v6087 = vld [vmem:[%s6086 + $0x7] sm:$0xff]
        %v6088 = vld [vmem:[%s6086 + $0xf] sm:$0xff]
        %v6089 = vld [vmem:[%s6086 + $0x27] sm:$0xff]
        %v6090 = vld [vmem:[%s6086 + $0x2f] sm:$0xff]
        %v6091 = vld [vmem:[%s6086 + $0x47] sm:$0xff]
        %v6092 = vld [vmem:[%s6086 + $0x4f] sm:$0xff]
        %v6093 = vld [vmem:[%s6086 + $0x67] sm:$0xff]
        %v6094 = vld [vmem:[%s6086 + $0x6f] sm:$0xff]
        %v6095 = vld [vmem:[#allocation15] sm:$0x1]
        %v6096 = vlaneseq
        %v6097 = vshrl.u32 %v6096, 7
        %v6098 = vsub.s32 0, %v6097
        %v6099 = vrot.slane %v6095, %v6098
        %v6100 = vmul.f32 %v6087, %v6099
        %v6101 = vmul.f32 %v6088, %v6099
        %v6102 = vmul.f32 %v6089, %v6099
        %v6103 = vmul.f32 %v6090, %v6099
        %v6104 = vmul.f32 %v6091, %v6099
        %v6105 = vmul.f32 %v6092, %v6099
        %v6106 = vmul.f32 %v6093, %v6099
        %v6107 = vmul.f32 %v6094, %v6099
        %v6108 = vadd.f32 %v6100, 0.0
        %v6109 = vadd.f32 %v6101, 0.0
        %v6110 = vadd.f32 %v6102, 0.0
        %v6111 = vadd.f32 %v6103, 0.0
        %v6112 = vadd.f32 %v6104, 0.0
        %v6113 = vadd.f32 %v6105, 0.0
        %v6114 = vadd.f32 %v6106, 0.0
        %v6115 = vadd.f32 %v6107, 0.0
        %v6116 = vld [vmem:[%s6086 + $0x8] sm:$0xff]
        %v6117 = vld [vmem:[%s6086 + $0x10] sm:$0xff]
        %v6118 = vld [vmem:[%s6086 + $0x28] sm:$0xff]
        %v6119 = vld [vmem:[%s6086 + $0x30] sm:$0xff]
        %v6120 = vld [vmem:[%s6086 + $0x48] sm:$0xff]
        %v6121 = vld [vmem:[%s6086 + $0x50] sm:$0xff]
        %v6122 = vld [vmem:[%s6086 + $0x68] sm:$0xff]
        %v6123 = vld [vmem:[%s6086 + $0x70] sm:$0xff]
        %v6124 = vld [vmem:[#allocation15 + $0x1] sm:$0x1]
        %v6125 = vlaneseq
        %v6126 = vshrl.u32 %v6125, 7
        %v6127 = vsub.s32 0, %v6126
        %v6128 = vrot.slane %v6124, %v6127
        %v6129 = vmul.f32 %v6116, %v6128
        %v6130 = vmul.f32 %v6117, %v6128
        %v6131 = vmul.f32 %v6118, %v6128
        %v6132 = vmul.f32 %v6119, %v6128
        %v6133 = vmul.f32 %v6120, %v6128
        %v6134 = vmul.f32 %v6121, %v6128
        %v6135 = vmul.f32 %v6122, %v6128
        %v6136 = vmul.f32 %v6123, %v6128
        %v6137 = vadd.f32 %v6108, %v6129
        %v6138 = vadd.f32 %v6109, %v6130
        %v6139 = vadd.f32 %v6110, %v6131
        %v6140 = vadd.f32 %v6111, %v6132
        %v6141 = vadd.f32 %v6112, %v6133
        %v6142 = vadd.f32 %v6113, %v6134
        %v6143 = vadd.f32 %v6114, %v6135
        %v6144 = vadd.f32 %v6115, %v6136
        %v6145 = vld [vmem:[%s6086 + $0x9] sm:$0xff]
        %v6146 = vld [vmem:[%s6086 + $0x11] sm:$0xff]
        %v6147 = vld [vmem:[%s6086 + $0x29] sm:$0xff]
        %v6148 = vld [vmem:[%s6086 + $0x31] sm:$0xff]
        %v6149 = vld [vmem:[%s6086 + $0x49] sm:$0xff]
        %v6150 = vld [vmem:[%s6086 + $0x51] sm:$0xff]
        %v6151 = vld [vmem:[%s6086 + $0x69] sm:$0xff]
        %v6152 = vld [vmem:[%s6086 + $0x71] sm:$0xff]
        %v6153 = vld [vmem:[#allocation15 + $0x2] sm:$0x1]
        %v6154 = vlaneseq
        %v6155 = vshrl.u32 %v6154, 7
        %v6156 = vsub.s32 0, %v6155
        %v6157 = vrot.slane %v6153, %v6156
        %v6158 = vmul.f32 %v6145, %v6157
        %v6159 = vmul.f32 %v6146, %v6157
        %v6160 = vmul.f32 %v6147, %v6157
        %v6161 = vmul.f32 %v6148, %v6157
        %v6162 = vmul.f32 %v6149, %v6157
        %v6163 = vmul.f32 %v6150, %v6157
        %v6164 = vmul.f32 %v6151, %v6157
        %v6165 = vmul.f32 %v6152, %v6157
        %v6166 = vadd.f32 %v6137, %v6158
        %v6167 = vadd.f32 %v6138, %v6159
        %v6168 = vadd.f32 %v6139, %v6160
        %v6169 = vadd.f32 %v6140, %v6161
        %v6170 = vadd.f32 %v6141, %v6162
        %v6171 = vadd.f32 %v6142, %v6163
        %v6172 = vadd.f32 %v6143, %v6164
        %v6173 = vadd.f32 %v6144, %v6165
        %v6174 = vld [vmem:[%s4544 + $0x7] sm:$0xff]
        %v6175 = vld [vmem:[%s4544 + $0xf] sm:$0xff]
        %v6176 = vld [vmem:[%s4544 + $0x27] sm:$0xff]
        %v6177 = vld [vmem:[%s4544 + $0x2f] sm:$0xff]
        %v6178 = vld [vmem:[%s4544 + $0x47] sm:$0xff]
        %v6179 = vld [vmem:[%s4544 + $0x4f] sm:$0xff]
        %v6180 = vld [vmem:[%s4544 + $0x67] sm:$0xff]
        %v6181 = vld [vmem:[%s4544 + $0x6f] sm:$0xff]
        %v6182 = vld [vmem:[%s4882] sm:$0x1]
        %v6183 = vlaneseq
        %v6184 = vshrl.u32 %v6183, 7
        %v6185 = vsub.s32 0, %v6184
        %v6186 = vrot.slane %v6182, %v6185
        %v6187 = vmul.f32 %v6174, %v6186
        %v6188 = vmul.f32 %v6175, %v6186
        %v6189 = vmul.f32 %v6176, %v6186
        %v6190 = vmul.f32 %v6177, %v6186
        %v6191 = vmul.f32 %v6178, %v6186
        %v6192 = vmul.f32 %v6179, %v6186
        %v6193 = vmul.f32 %v6180, %v6186
        %v6194 = vmul.f32 %v6181, %v6186
        %v6195 = vadd.f32 %v6166, %v6187
        %v6196 = vadd.f32 %v6167, %v6188
        %v6197 = vadd.f32 %v6168, %v6189
        %v6198 = vadd.f32 %v6169, %v6190
        %v6199 = vadd.f32 %v6170, %v6191
        %v6200 = vadd.f32 %v6171, %v6192
        %v6201 = vadd.f32 %v6172, %v6193
        %v6202 = vadd.f32 %v6173, %v6194
        %v6203 = vld [vmem:[%s4544 + $0x8] sm:$0xff]
        %v6204 = vld [vmem:[%s4544 + $0x10] sm:$0xff]
        %v6205 = vld [vmem:[%s4544 + $0x28] sm:$0xff]
        %v6206 = vld [vmem:[%s4544 + $0x30] sm:$0xff]
        %v6207 = vld [vmem:[%s4544 + $0x48] sm:$0xff]
        %v6208 = vld [vmem:[%s4544 + $0x50] sm:$0xff]
        %v6209 = vld [vmem:[%s4544 + $0x68] sm:$0xff]
        %v6210 = vld [vmem:[%s4544 + $0x70] sm:$0xff]
        %v6211 = vld [vmem:[%s4882 + $0x1] sm:$0x1]
        %v6212 = vlaneseq
        %v6213 = vshrl.u32 %v6212, 7
        %v6214 = vsub.s32 0, %v6213
        %v6215 = vrot.slane %v6211, %v6214
        %v6216 = vmul.f32 %v6203, %v6215
        %v6217 = vmul.f32 %v6204, %v6215
        %v6218 = vmul.f32 %v6205, %v6215
        %v6219 = vmul.f32 %v6206, %v6215
        %v6220 = vmul.f32 %v6207, %v6215
        %v6221 = vmul.f32 %v6208, %v6215
        %v6222 = vmul.f32 %v6209, %v6215
        %v6223 = vmul.f32 %v6210, %v6215
        %v6224 = vadd.f32 %v6195, %v6216
        %v6225 = vadd.f32 %v6196, %v6217
        %v6226 = vadd.f32 %v6197, %v6218
        %v6227 = vadd.f32 %v6198, %v6219
        %v6228 = vadd.f32 %v6199, %v6220
        %v6229 = vadd.f32 %v6200, %v6221
        %v6230 = vadd.f32 %v6201, %v6222
        %v6231 = vadd.f32 %v6202, %v6223
        %v6232 = vld [vmem:[%s4544 + $0x9] sm:$0xff]
        %v6233 = vld [vmem:[%s4544 + $0x11] sm:$0xff]
        %v6234 = vld [vmem:[%s4544 + $0x29] sm:$0xff]
        %v6235 = vld [vmem:[%s4544 + $0x31] sm:$0xff]
        %v6236 = vld [vmem:[%s4544 + $0x49] sm:$0xff]
        %v6237 = vld [vmem:[%s4544 + $0x51] sm:$0xff]
        %v6238 = vld [vmem:[%s4544 + $0x69] sm:$0xff]
        %v6239 = vld [vmem:[%s4544 + $0x71] sm:$0xff]
        %v6240 = vld [vmem:[%s4882 + $0x2] sm:$0x1]
        %v6241 = vlaneseq
        %v6242 = vshrl.u32 %v6241, 7
        %v6243 = vsub.s32 0, %v6242
        %v6244 = vrot.slane %v6240, %v6243
        %v6245 = vmul.f32 %v6232, %v6244
        %v6246 = vmul.f32 %v6233, %v6244
        %v6247 = vmul.f32 %v6234, %v6244
        %v6248 = vmul.f32 %v6235, %v6244
        %v6249 = vmul.f32 %v6236, %v6244
        %v6250 = vmul.f32 %v6237, %v6244
        %v6251 = vmul.f32 %v6238, %v6244
        %v6252 = vmul.f32 %v6239, %v6244
        %v6253 = vadd.f32 %v6224, %v6245
        %v6254 = vadd.f32 %v6225, %v6246
        %v6255 = vadd.f32 %v6226, %v6247
        %v6256 = vadd.f32 %v6227, %v6248
        %v6257 = vadd.f32 %v6228, %v6249
        %v6258 = vadd.f32 %v6229, %v6250
        %v6259 = vadd.f32 %v6230, %v6251
        %v6260 = vadd.f32 %v6231, %v6252
        %s6261 = scalar_lea.vmem [#allocation3], 320
        %v6262 = vld [vmem:[%s6261 + $0x7] sm:$0xff]
        %v6263 = vld [vmem:[%s6261 + $0xf] sm:$0xff]
        %v6264 = vld [vmem:[%s6261 + $0x27] sm:$0xff]
        %v6265 = vld [vmem:[%s6261 + $0x2f] sm:$0xff]
        %v6266 = vld [vmem:[%s6261 + $0x47] sm:$0xff]
        %v6267 = vld [vmem:[%s6261 + $0x4f] sm:$0xff]
        %v6268 = vld [vmem:[%s6261 + $0x67] sm:$0xff]
        %v6269 = vld [vmem:[%s6261 + $0x6f] sm:$0xff]
        %v6270 = vld [vmem:[%s4971] sm:$0x1]
        %v6271 = vlaneseq
        %v6272 = vshrl.u32 %v6271, 7
        %v6273 = vsub.s32 0, %v6272
        %v6274 = vrot.slane %v6270, %v6273
        %v6275 = vmul.f32 %v6262, %v6274
        %v6276 = vmul.f32 %v6263, %v6274
        %v6277 = vmul.f32 %v6264, %v6274
        %v6278 = vmul.f32 %v6265, %v6274
        %v6279 = vmul.f32 %v6266, %v6274
        %v6280 = vmul.f32 %v6267, %v6274
        %v6281 = vmul.f32 %v6268, %v6274
        %v6282 = vmul.f32 %v6269, %v6274
        %v6283 = vadd.f32 %v6253, %v6275
        %v6284 = vadd.f32 %v6254, %v6276
        %v6285 = vadd.f32 %v6255, %v6277
        %v6286 = vadd.f32 %v6256, %v6278
        %v6287 = vadd.f32 %v6257, %v6279
        %v6288 = vadd.f32 %v6258, %v6280
        %v6289 = vadd.f32 %v6259, %v6281
        %v6290 = vadd.f32 %v6260, %v6282
        %v6291 = vld [vmem:[%s6261 + $0x8] sm:$0xff]
        %v6292 = vld [vmem:[%s6261 + $0x10] sm:$0xff]
        %v6293 = vld [vmem:[%s6261 + $0x28] sm:$0xff]
        %v6294 = vld [vmem:[%s6261 + $0x30] sm:$0xff]
        %v6295 = vld [vmem:[%s6261 + $0x48] sm:$0xff]
        %v6296 = vld [vmem:[%s6261 + $0x50] sm:$0xff]
        %v6297 = vld [vmem:[%s6261 + $0x68] sm:$0xff]
        %v6298 = vld [vmem:[%s6261 + $0x70] sm:$0xff]
        %v6299 = vld [vmem:[%s4971 + $0x1] sm:$0x1]
        %v6300 = vlaneseq
        %v6301 = vshrl.u32 %v6300, 7
        %v6302 = vsub.s32 0, %v6301
        %v6303 = vrot.slane %v6299, %v6302
        %v6304 = vmul.f32 %v6291, %v6303
        %v6305 = vmul.f32 %v6292, %v6303
        %v6306 = vmul.f32 %v6293, %v6303
        %v6307 = vmul.f32 %v6294, %v6303
        %v6308 = vmul.f32 %v6295, %v6303
        %v6309 = vmul.f32 %v6296, %v6303
        %v6310 = vmul.f32 %v6297, %v6303
        %v6311 = vmul.f32 %v6298, %v6303
        %v6312 = vadd.f32 %v6283, %v6304
        %v6313 = vadd.f32 %v6284, %v6305
        %v6314 = vadd.f32 %v6285, %v6306
        %v6315 = vadd.f32 %v6286, %v6307
        %v6316 = vadd.f32 %v6287, %v6308
        %v6317 = vadd.f32 %v6288, %v6309
        %v6318 = vadd.f32 %v6289, %v6310
        %v6319 = vadd.f32 %v6290, %v6311
        %v6320 = vld [vmem:[%s6261 + $0x9] sm:$0xff]
        %v6321 = vld [vmem:[%s6261 + $0x11] sm:$0xff]
        %v6322 = vld [vmem:[%s6261 + $0x29] sm:$0xff]
        %v6323 = vld [vmem:[%s6261 + $0x31] sm:$0xff]
        %v6324 = vld [vmem:[%s6261 + $0x49] sm:$0xff]
        %v6325 = vld [vmem:[%s6261 + $0x51] sm:$0xff]
        %v6326 = vld [vmem:[%s6261 + $0x69] sm:$0xff]
        %v6327 = vld [vmem:[%s6261 + $0x71] sm:$0xff]
        %v6328 = vld [vmem:[%s4971 + $0x2] sm:$0x1]
        %v6329 = vlaneseq
        %v6330 = vshrl.u32 %v6329, 7
        %v6331 = vsub.s32 0, %v6330
        %v6332 = vrot.slane %v6328, %v6331
        %v6333 = vmul.f32 %v6320, %v6332
        %v6334 = vmul.f32 %v6321, %v6332
        %v6335 = vmul.f32 %v6322, %v6332
        %v6336 = vmul.f32 %v6323, %v6332
        %v6337 = vmul.f32 %v6324, %v6332
        %v6338 = vmul.f32 %v6325, %v6332
        %v6339 = vmul.f32 %v6326, %v6332
        %v6340 = vmul.f32 %v6327, %v6332
        %v6341 = vadd.f32 %v6312, %v6333
        %v6342 = vadd.f32 %v6313, %v6334
        %v6343 = vadd.f32 %v6314, %v6335
        %v6344 = vadd.f32 %v6315, %v6336
        %v6345 = vadd.f32 %v6316, %v6337
        %v6346 = vadd.f32 %v6317, %v6338
        %v6347 = vadd.f32 %v6318, %v6339
        %v6348 = vadd.f32 %v6319, %v6340
        %v6349 = vmul.f32 %v6341, 0.5
        %v6350 = vmul.f32 %v6342, 0.5
        %v6351 = vmul.f32 %v6343, 0.5
        %v6352 = vmul.f32 %v6344, 0.5
        %v6353 = vmul.f32 %v6345, 0.5
        %v6354 = vmul.f32 %v6346, 0.5
        %v6355 = vmul.f32 %v6347, 0.5
        %v6356 = vmul.f32 %v6348, 0.5
        %v6357 = vmul.f32 %v6341, 0.70710677
        %v6358 = vmul.f32 %v6342, 0.70710677
        %v6359 = vmul.f32 %v6343, 0.70710677
        %v6360 = vmul.f32 %v6344, 0.70710677
        %v6361 = vmul.f32 %v6345, 0.70710677
        %v6362 = vmul.f32 %v6346, 0.70710677
        %v6363 = vmul.f32 %v6347, 0.70710677
        %v6364 = vmul.f32 %v6348, 0.70710677
        %v6365 = vand.u32 2147483647, %v6357
        %v6366 = vand.u32 2147483647, %v6358
        %v6367 = vand.u32 2147483647, %v6359
        %v6368 = vand.u32 2147483647, %v6360
        %v6369 = vand.u32 2147483647, %v6361
        %v6370 = vand.u32 2147483647, %v6362
        %v6371 = vand.u32 2147483647, %v6363
        %v6372 = vand.u32 2147483647, %v6364
        %v6373 = vmul.f32 %v6365, 0.3275911
        %v6374 = vmul.f32 %v6366, 0.3275911
        %v6375 = vmul.f32 %v6367, 0.3275911
        %v6376 = vmul.f32 %v6368, 0.3275911
        %v6377 = vmul.f32 %v6369, 0.3275911
        %v6378 = vmul.f32 %v6370, 0.3275911
        %v6379 = vmul.f32 %v6371, 0.3275911
        %v6380 = vmul.f32 %v6372, 0.3275911
        %v6381 = vadd.f32 %v6373, 1.0
        %v6382 = vadd.f32 %v6374, 1.0
        %v6383 = vadd.f32 %v6375, 1.0
        %v6384 = vadd.f32 %v6376, 1.0
        %v6385 = vadd.f32 %v6377, 1.0
        %v6386 = vadd.f32 %v6378, 1.0
        %v6387 = vadd.f32 %v6379, 1.0
        %v6388 = vadd.f32 %v6380, 1.0
        %v6389 = vrcp.pop %v6381
        %v6390 = vrcp.pop %v6382
        %v6391 = vrcp.pop %v6383
        %v6392 = vrcp.pop %v6384
        %v6393 = vrcp.pop %v6385
        %v6394 = vrcp.pop %v6386
        %v6395 = vrcp.pop %v6387
        %v6396 = vrcp.pop %v6388
        %v6397 = vmul.f32 %v6389, 1.0614054
        %v6398 = vmul.f32 %v6390, 1.0614054
        %v6399 = vmul.f32 %v6391, 1.0614054
        %v6400 = vmul.f32 %v6392, 1.0614054
        %v6401 = vmul.f32 %v6393, 1.0614054
        %v6402 = vmul.f32 %v6394, 1.0614054
        %v6403 = vmul.f32 %v6395, 1.0614054
        %v6404 = vmul.f32 %v6396, 1.0614054
        %v6405 = vadd.f32 %v6397, -1.4531521
        %v6406 = vadd.f32 %v6398, -1.4531521
        %v6407 = vadd.f32 %v6399, -1.4531521
        %v6408 = vadd.f32 %v6400, -1.4531521
        %v6409 = vadd.f32 %v6401, -1.4531521
        %v6410 = vadd.f32 %v6402, -1.4531521
        %v6411 = vadd.f32 %v6403, -1.4531521
        %v6412 = vadd.f32 %v6404, -1.4531521
        %v6413 = vmul.f32 %v6405, %v6389
        %v6414 = vmul.f32 %v6406, %v6390
        %v6415 = vmul.f32 %v6407, %v6391
        %v6416 = vmul.f32 %v6408, %v6392
        %v6417 = vmul.f32 %v6409, %v6393
        %v6418 = vmul.f32 %v6410, %v6394
        %v6419 = vmul.f32 %v6411, %v6395
        %v6420 = vmul.f32 %v6412, %v6396
        %v6421 = vadd.f32 %v6413, 1.4214138
        %v6422 = vadd.f32 %v6414, 1.4214138
        %v6423 = vadd.f32 %v6415, 1.4214138
        %v6424 = vadd.f32 %v6416, 1.4214138
        %v6425 = vadd.f32 %v6417, 1.4214138
        %v6426 = vadd.f32 %v6418, 1.4214138
        %v6427 = vadd.f32 %v6419, 1.4214138
        %v6428 = vadd.f32 %v6420, 1.4214138
        %v6429 = vmul.f32 %v6421, %v6389
        %v6430 = vmul.f32 %v6422, %v6390
        %v6431 = vmul.f32 %v6423, %v6391
        %v6432 = vmul.f32 %v6424, %v6392
        %v6433 = vmul.f32 %v6425, %v6393
        %v6434 = vmul.f32 %v6426, %v6394
        %v6435 = vmul.f32 %v6427, %v6395
        %v6436 = vmul.f32 %v6428, %v6396
        %v6437 = vadd.f32 %v6429, -0.28449672
        %v6438 = vadd.f32 %v6430, -0.28449672
        %v6439 = vadd.f32 %v6431, -0.28449672
        %v6440 = vadd.f32 %v6432, -0.28449672
        %v6441 = vadd.f32 %v6433, -0.28449672
        %v6442 = vadd.f32 %v6434, -0.28449672
        %v6443 = vadd.f32 %v6435, -0.28449672
        %v6444 = vadd.f32 %v6436, -0.28449672
        %v6445 = vmul.f32 %v6437, %v6389
        %v6446 = vmul.f32 %v6438, %v6390
        %v6447 = vmul.f32 %v6439, %v6391
        %v6448 = vmul.f32 %v6440, %v6392
        %v6449 = vmul.f32 %v6441, %v6393
        %v6450 = vmul.f32 %v6442, %v6394
        %v6451 = vmul.f32 %v6443, %v6395
        %v6452 = vmul.f32 %v6444, %v6396
        %v6453 = vadd.f32 %v6445, 0.2548296
        %v6454 = vadd.f32 %v6446, 0.2548296
        %v6455 = vadd.f32 %v6447, 0.2548296
        %v6456 = vadd.f32 %v6448, 0.2548296
        %v6457 = vadd.f32 %v6449, 0.2548296
        %v6458 = vadd.f32 %v6450, 0.2548296
        %v6459 = vadd.f32 %v6451, 0.2548296
        %v6460 = vadd.f32 %v6452, 0.2548296
        %v6461 = vmul.f32 %v6453, %v6389
        %v6462 = vmul.f32 %v6454, %v6390
        %v6463 = vmul.f32 %v6455, %v6391
        %v6464 = vmul.f32 %v6456, %v6392
        %v6465 = vmul.f32 %v6457, %v6393
        %v6466 = vmul.f32 %v6458, %v6394
        %v6467 = vmul.f32 %v6459, %v6395
        %v6468 = vmul.f32 %v6460, %v6396
        %v6469 = vsub.f32 0.0, %v6365
        %v6470 = vsub.f32 0.0, %v6366
        %v6471 = vsub.f32 0.0, %v6367
        %v6472 = vsub.f32 0.0, %v6368
        %v6473 = vsub.f32 0.0, %v6369
        %v6474 = vsub.f32 0.0, %v6370
        %v6475 = vsub.f32 0.0, %v6371
        %v6476 = vsub.f32 0.0, %v6372
        %v6477 = vmul.f32 %v6469, %v6365
        %v6478 = vmul.f32 %v6470, %v6366
        %v6479 = vmul.f32 %v6471, %v6367
        %v6480 = vmul.f32 %v6472, %v6368
        %v6481 = vmul.f32 %v6473, %v6369
        %v6482 = vmul.f32 %v6474, %v6370
        %v6483 = vmul.f32 %v6475, %v6371
        %v6484 = vmul.f32 %v6476, %v6372
        %v6485 = vmul.f32 %v6477, 1.442695
        %v6486 = vpow.pop %v6485
        %v6487 = vmul.f32 %v6478, 1.442695
        %v6488 = vpow.pop %v6487
        %v6489 = vmul.f32 %v6479, 1.442695
        %v6490 = vpow.pop %v6489
        %v6491 = vmul.f32 %v6480, 1.442695
        %v6492 = vpow.pop %v6491
        %v6493 = vmul.f32 %v6481, 1.442695
        %v6494 = vpow.pop %v6493
        %v6495 = vmul.f32 %v6482, 1.442695
        %v6496 = vpow.pop %v6495
        %v6497 = vmul.f32 %v6483, 1.442695
        %v6498 = vpow.pop %v6497
        %v6499 = vmul.f32 %v6484, 1.442695
        %v6500 = vpow.pop %v6499
        %v6501 = vmul.f32 %v6461, %v6486
        %v6502 = vmul.f32 %v6462, %v6488
        %v6503 = vmul.f32 %v6463, %v6490
        %v6504 = vmul.f32 %v6464, %v6492
        %v6505 = vmul.f32 %v6465, %v6494
        %v6506 = vmul.f32 %v6466, %v6496
        %v6507 = vmul.f32 %v6467, %v6498
        %v6508 = vmul.f32 %v6468, %v6500
        %v6509 = vsub.f32 1.0, %v6501
        %v6510 = vsub.f32 1.0, %v6502
        %v6511 = vsub.f32 1.0, %v6503
        %v6512 = vsub.f32 1.0, %v6504
        %v6513 = vsub.f32 1.0, %v6505
        %v6514 = vsub.f32 1.0, %v6506
        %v6515 = vsub.f32 1.0, %v6507
        %v6516 = vsub.f32 1.0, %v6508
        %vm6517 = vcmp.lt.f32.partialorder %v6357, 0.0
        %vm6518 = vcmp.lt.f32.partialorder %v6358, 0.0
        %vm6519 = vcmp.lt.f32.partialorder %v6359, 0.0
        %vm6520 = vcmp.lt.f32.partialorder %v6360, 0.0
        %vm6521 = vcmp.lt.f32.partialorder %v6361, 0.0
        %vm6522 = vcmp.lt.f32.partialorder %v6362, 0.0
        %vm6523 = vcmp.lt.f32.partialorder %v6363, 0.0
        %vm6524 = vcmp.lt.f32.partialorder %v6364, 0.0
        %v6525 = vsub.f32 0.0, %v6509
        %v6526 = vsub.f32 0.0, %v6510
        %v6527 = vsub.f32 0.0, %v6511
        %v6528 = vsub.f32 0.0, %v6512
        %v6529 = vsub.f32 0.0, %v6513
        %v6530 = vsub.f32 0.0, %v6514
        %v6531 = vsub.f32 0.0, %v6515
        %v6532 = vsub.f32 0.0, %v6516
        %v6533 = vsel %vm6517, %v6525, %v6509
        %v6534 = vsel %vm6518, %v6526, %v6510
        %v6535 = vsel %vm6519, %v6527, %v6511
        %v6536 = vsel %vm6520, %v6528, %v6512
        %v6537 = vsel %vm6521, %v6529, %v6513
        %v6538 = vsel %vm6522, %v6530, %v6514
        %v6539 = vsel %vm6523, %v6531, %v6515
        %v6540 = vsel %vm6524, %v6532, %v6516
        %v6541 = vadd.f32 %v6533, 1.0
        %v6542 = vadd.f32 %v6534, 1.0
        %v6543 = vadd.f32 %v6535, 1.0
        %v6544 = vadd.f32 %v6536, 1.0
        %v6545 = vadd.f32 %v6537, 1.0
        %v6546 = vadd.f32 %v6538, 1.0
        %v6547 = vadd.f32 %v6539, 1.0
        %v6548 = vadd.f32 %v6540, 1.0
        %v6549 = vmul.f32 %v6349, %v6541
        %v6550 = vmul.f32 %v6350, %v6542
        %v6551 = vmul.f32 %v6351, %v6543
        %v6552 = vmul.f32 %v6352, %v6544
        %v6553 = vmul.f32 %v6353, %v6545
        %v6554 = vmul.f32 %v6354, %v6546
        %v6555 = vmul.f32 %v6355, %v6547
        %v6556 = vmul.f32 %v6356, %v6548
        %6565 = vrot.lane.b32.xlu0 %v6341, 64
        %v6566 = vpop.permute.xlu0 %6565
        %6567 = vrot.lane.b32.xlu0 %v6342, 64
        %v6568 = vpop.permute.xlu0 %6567
        %6569 = vrot.lane.b32.xlu0 %v6343, 64
        %v6570 = vpop.permute.xlu0 %6569
        %6571 = vrot.lane.b32.xlu0 %v6344, 64
        %v6572 = vpop.permute.xlu0 %6571
        %6573 = vrot.lane.b32.xlu0 %v6345, 64
        %v6574 = vpop.permute.xlu0 %6573
        %6575 = vrot.lane.b32.xlu0 %v6346, 64
        %v6576 = vpop.permute.xlu0 %6575
        %6577 = vrot.lane.b32.xlu0 %v6347, 64
        %v6578 = vpop.permute.xlu0 %6577
        %6579 = vrot.lane.b32.xlu0 %v6348, 64
        %v6580 = vpop.permute.xlu0 %6579
        %v6589 = vmul.f32 %v6549, %v6566
        %v6590 = vmul.f32 %v6550, %v6568
        %v6591 = vmul.f32 %v6551, %v6570
        %v6592 = vmul.f32 %v6552, %v6572
        %v6593 = vmul.f32 %v6553, %v6574
        %v6594 = vmul.f32 %v6554, %v6576
        %v6595 = vmul.f32 %v6555, %v6578
        %v6596 = vmul.f32 %v6556, %v6580
        %v6597 = vpack.c.bf16 %v6590, %v6589
        %v6598 = vpack.c.bf16 %v6592, %v6591
        %v6599 = vpack.c.bf16 %v6594, %v6593
        %v6600 = vpack.c.bf16 %v6596, %v6595
        %v6601 = vld [vmem:[%s12] sm:$0xf]
        %v6602 = vld [vmem:[%s12 + $0x4] sm:$0xf]
        %v6603 = vld [vmem:[%s12 + $0x8] sm:$0xf]
        %v6604 = vld [vmem:[%s12 + $0xc] sm:$0xf]
        %v6605 = vld [vmem:[%s12 + $0x10] sm:$0xf]
        %v6606 = vld [vmem:[%s12 + $0x14] sm:$0xf]
        %v6607 = vld [vmem:[%s12 + $0x18] sm:$0xf]
        %v6608 = vld [vmem:[%s12 + $0x1c] sm:$0xf]
        %v6617 = vunpack.c.l.b16 %v6601
        %v6618 = vunpack.c.l.b16 %v6602
        %v6619 = vunpack.c.l.b16 %v6603
        %v6620 = vunpack.c.l.b16 %v6604
        %v6621 = vunpack.c.l.b16 %v6605
        %v6622 = vunpack.c.l.b16 %v6606
        %v6623 = vunpack.c.l.b16 %v6607
        %v6624 = vunpack.c.l.b16 %v6608
        %v6625 = vpack.c.b16 %v6618, %v6617
        %v6626 = vpack.c.b16 %v6620, %v6619
        %v6627 = vpack.c.b16 %v6622, %v6621
        %v6628 = vpack.c.b16 %v6624, %v6623
        %v6634 = vsel %vm5335, %v6597, 0
        %v6637 = vsel %vm5335, %v6598, 0
        %v6640 = vsel %vm5335, %v6599, 0
        %v6643 = vsel %vm5335, %v6600, 0
        %6645 = vmatprep.subr.bf16.mxu0 0
        %6646 = vmatpush1.bf16.msra.mxu0 %v6625
        %6647 = vmatprep.subr.bf16.mxu0 0
        %6648 = vmatpush1.bf16.msra.mxu0 %v6626
        %6649 = vmatprep.subr.bf16.mxu0 0
        %6650 = vmatpush1.bf16.msra.mxu0 %v6627
        %6651 = vmatprep.subr.bf16.mxu0 0
        %6652 = vmatpush1.bf16.msra.mxu0 %v6628
        %6653 = vmatprep.subr.bf16.mxu0 0
        %6654 = vmatpush1.bf16.msra.mxu0 0
        %6655 = vmatprep.subr.bf16.mxu0 0
        %6656 = vmatpush1.bf16.msra.mxu0 0
        %6657 = vmatprep.subr.bf16.mxu0 0
        %6658 = vmatpush1.bf16.msra.mxu0 0
        %6659 = vmatprep.subr.bf16.mxu0 0
        %6660 = vmatpush1.bf16.msra.mxu0 0
        %6661 = vmatprep.subr.bf16.mxu0 0
        %6662 = vmatpush1.bf16.msra.mxu0 0
        %6663 = vmatprep.subr.bf16.mxu0 0
        %6664 = vmatpush1.bf16.msra.mxu0 0
        %6665 = vmatprep.subr.bf16.mxu0 0
        %6666 = vmatpush1.bf16.msra.mxu0 0
        %6667 = vmatprep.subr.bf16.mxu0 0
        %6668 = vmatpush1.bf16.msra.mxu0 0
        %6669 = vmatprep.subr.bf16.mxu0 0
        %6670 = vmatpush1.bf16.msra.mxu0 0
        %6671 = vmatprep.subr.bf16.mxu0 0
        %6672 = vmatpush1.bf16.msra.mxu0 0
        %6673 = vmatprep.subr.bf16.mxu0 0
        %6674 = vmatpush1.bf16.msra.mxu0 0
        %6675 = vmatprep.subr.bf16.mxu0 0
        %6676 = vmatpush1.bf16.msra.mxu0 0
        %6677 = vmatprep.mubr.bf16.mxu0 0
        %6678 = vmatmul.mubr.bf16.gmra.mrb[0].mxu0 %v6634
        %v6679 = vpop.f32.mrb[0].mxu0
        %v6680 = vadd.f32 0.0, %v6679
        %v6681 = vpop.f32.mrb[0].mxu0
        %v6682 = vpop.f32.mrb[0].mxu0
        %v6683 = vadd.f32 0.0, %v6682
        %v6684 = vpop.f32.mrb[0].mxu0
        %6685 = vmatprep.mubr.bf16.mxu0 0
        %6686 = vmatmul.mubr.bf16.gmra.mrb[0].mxu0 %v6637
        %v6687 = vpop.f32.mrb[0].mxu0
        %v6688 = vadd.f32 0.0, %v6687
        %v6689 = vpop.f32.mrb[0].mxu0
        %v6690 = vpop.f32.mrb[0].mxu0
        %v6691 = vadd.f32 0.0, %v6690
        %v6692 = vpop.f32.mrb[0].mxu0
        %6693 = vmatprep.mubr.bf16.mxu0 0
        %6694 = vmatmul.mubr.bf16.gmra.mrb[0].mxu0 %v6640
        %v6695 = vpop.f32.mrb[0].mxu0
        %v6696 = vadd.f32 0.0, %v6695
        %v6697 = vpop.f32.mrb[0].mxu0
        %v6698 = vpop.f32.mrb[0].mxu0
        %v6699 = vadd.f32 0.0, %v6698
        %v6700 = vpop.f32.mrb[0].mxu0
        %6701 = vmatprep.mubr.bf16.mxu0 0
        %6702 = vmatmul.mubr.bf16.gmra.mrb[0].mxu0 %v6643
        %v6703 = vpop.f32.mrb[0].mxu0
        %v6704 = vadd.f32 0.0, %v6703
        %v6705 = vpop.f32.mrb[0].mxu0
        %v6706 = vpop.f32.mrb[0].mxu0
        %v6707 = vadd.f32 0.0, %v6706
        %v6708 = vpop.f32.mrb[0].mxu0
        %6709 = vdwg.mxu0
        %v6710 = vld [vmem:[#allocation5 + $0x80] sm:$0xff]
        %v6711 = vld [vmem:[#allocation5 + $0x88] sm:$0xff]
        %v6712 = vld [vmem:[#allocation5 + $0x90] sm:$0xff]
        %v6713 = vld [vmem:[#allocation5 + $0x98] sm:$0xff]
        %v6714 = vld [vmem:[#allocation5 + $0xa0] sm:$0xff]
        %v6715 = vld [vmem:[#allocation5 + $0xa8] sm:$0xff]
        %v6716 = vld [vmem:[#allocation5 + $0xb0] sm:$0xff]
        %v6717 = vld [vmem:[#allocation5 + $0xb8] sm:$0xff]
        %v6718 = vadd.f32 %v6710, %v6680
        %v6719 = vadd.f32 %v6711, %v6683
        %v6720 = vadd.f32 %v6712, %v6688
        %v6721 = vadd.f32 %v6713, %v6691
        %v6722 = vadd.f32 %v6714, %v6696
        %v6723 = vadd.f32 %v6715, %v6699
        %v6724 = vadd.f32 %v6716, %v6704
        %v6725 = vadd.f32 %v6717, %v6707
        %s6726 = scalar_lea.vmem %s525, 128 [#allocation17]
        %6727 = vst.msk [vmem:[%s6726] sm:$0xff] %vm693, %v6718
        %6728 = vst.msk [vmem:[%s6726 + $0x8] sm:$0xff] %vm693, %v6719
        %6729 = vst.msk [vmem:[%s6726 + $0x10] sm:$0xff] %vm693, %v6720
        %6730 = vst.msk [vmem:[%s6726 + $0x18] sm:$0xff] %vm693, %v6721
        %6731 = vst.msk [vmem:[%s6726 + $0x20] sm:$0xff] %vm693, %v6722
        %6732 = vst.msk [vmem:[%s6726 + $0x28] sm:$0xff] %vm693, %v6723
        %6733 = vst.msk [vmem:[%s6726 + $0x30] sm:$0xff] %vm693, %v6724
        %6734 = vst.msk [vmem:[%s6726 + $0x38] sm:$0xff] %vm693, %v6725
        %s6735 = scalar_lea.vmem [#allocation3], 384
        %v6736 = vld [vmem:[%s6735 + $0x7] sm:$0xff]
        %v6737 = vld [vmem:[%s6735 + $0xf] sm:$0xff]
        %v6738 = vld [vmem:[%s6735 + $0x27] sm:$0xff]
        %v6739 = vld [vmem:[%s6735 + $0x2f] sm:$0xff]
        %v6740 = vld [vmem:[%s6735 + $0x47] sm:$0xff]
        %v6741 = vld [vmem:[%s6735 + $0x4f] sm:$0xff]
        %v6742 = vld [vmem:[%s6735 + $0x67] sm:$0xff]
        %v6743 = vld [vmem:[%s6735 + $0x6f] sm:$0xff]
        %v6744 = vld [vmem:[#allocation15] sm:$0x1]
        %v6745 = vlaneseq
        %v6746 = vshrl.u32 %v6745, 7
        %v6747 = vsub.s32 0, %v6746
        %v6748 = vrot.slane %v6744, %v6747
        %v6749 = vmul.f32 %v6736, %v6748
        %v6750 = vmul.f32 %v6737, %v6748
        %v6751 = vmul.f32 %v6738, %v6748
        %v6752 = vmul.f32 %v6739, %v6748
        %v6753 = vmul.f32 %v6740, %v6748
        %v6754 = vmul.f32 %v6741, %v6748
        %v6755 = vmul.f32 %v6742, %v6748
        %v6756 = vmul.f32 %v6743, %v6748
        %v6757 = vadd.f32 %v6749, 0.0
        %v6758 = vadd.f32 %v6750, 0.0
        %v6759 = vadd.f32 %v6751, 0.0
        %v6760 = vadd.f32 %v6752, 0.0
        %v6761 = vadd.f32 %v6753, 0.0
        %v6762 = vadd.f32 %v6754, 0.0
        %v6763 = vadd.f32 %v6755, 0.0
        %v6764 = vadd.f32 %v6756, 0.0
        %v6765 = vld [vmem:[%s6735 + $0x8] sm:$0xff]
        %v6766 = vld [vmem:[%s6735 + $0x10] sm:$0xff]
        %v6767 = vld [vmem:[%s6735 + $0x28] sm:$0xff]
        %v6768 = vld [vmem:[%s6735 + $0x30] sm:$0xff]
        %v6769 = vld [vmem:[%s6735 + $0x48] sm:$0xff]
        %v6770 = vld [vmem:[%s6735 + $0x50] sm:$0xff]
        %v6771 = vld [vmem:[%s6735 + $0x68] sm:$0xff]
        %v6772 = vld [vmem:[%s6735 + $0x70] sm:$0xff]
        %v6773 = vld [vmem:[#allocation15 + $0x1] sm:$0x1]
        %v6774 = vlaneseq
        %v6775 = vshrl.u32 %v6774, 7
        %v6776 = vsub.s32 0, %v6775
        %v6777 = vrot.slane %v6773, %v6776
        %v6778 = vmul.f32 %v6765, %v6777
        %v6779 = vmul.f32 %v6766, %v6777
        %v6780 = vmul.f32 %v6767, %v6777
        %v6781 = vmul.f32 %v6768, %v6777
        %v6782 = vmul.f32 %v6769, %v6777
        %v6783 = vmul.f32 %v6770, %v6777
        %v6784 = vmul.f32 %v6771, %v6777
        %v6785 = vmul.f32 %v6772, %v6777
        %v6786 = vadd.f32 %v6757, %v6778
        %v6787 = vadd.f32 %v6758, %v6779
        %v6788 = vadd.f32 %v6759, %v6780
        %v6789 = vadd.f32 %v6760, %v6781
        %v6790 = vadd.f32 %v6761, %v6782
        %v6791 = vadd.f32 %v6762, %v6783
        %v6792 = vadd.f32 %v6763, %v6784
        %v6793 = vadd.f32 %v6764, %v6785
        %v6794 = vld [vmem:[%s6735 + $0x9] sm:$0xff]
        %v6795 = vld [vmem:[%s6735 + $0x11] sm:$0xff]
        %v6796 = vld [vmem:[%s6735 + $0x29] sm:$0xff]
        %v6797 = vld [vmem:[%s6735 + $0x31] sm:$0xff]
        %v6798 = vld [vmem:[%s6735 + $0x49] sm:$0xff]
        %v6799 = vld [vmem:[%s6735 + $0x51] sm:$0xff]
        %v6800 = vld [vmem:[%s6735 + $0x69] sm:$0xff]
        %v6801 = vld [vmem:[%s6735 + $0x71] sm:$0xff]
        %v6802 = vld [vmem:[#allocation15 + $0x2] sm:$0x1]
        %v6803 = vlaneseq
        %v6804 = vshrl.u32 %v6803, 7
        %v6805 = vsub.s32 0, %v6804
        %v6806 = vrot.slane %v6802, %v6805
        %v6807 = vmul.f32 %v6794, %v6806
        %v6808 = vmul.f32 %v6795, %v6806
        %v6809 = vmul.f32 %v6796, %v6806
        %v6810 = vmul.f32 %v6797, %v6806
        %v6811 = vmul.f32 %v6798, %v6806
        %v6812 = vmul.f32 %v6799, %v6806
        %v6813 = vmul.f32 %v6800, %v6806
        %v6814 = vmul.f32 %v6801, %v6806
        %v6815 = vadd.f32 %v6786, %v6807
        %v6816 = vadd.f32 %v6787, %v6808
        %v6817 = vadd.f32 %v6788, %v6809
        %v6818 = vadd.f32 %v6789, %v6810
        %v6819 = vadd.f32 %v6790, %v6811
        %v6820 = vadd.f32 %v6791, %v6812
        %v6821 = vadd.f32 %v6792, %v6813
        %v6822 = vadd.f32 %v6793, %v6814
        %v6823 = vld [vmem:[%s4778 + $0x7] sm:$0xff]
        %v6824 = vld [vmem:[%s4778 + $0xf] sm:$0xff]
        %v6825 = vld [vmem:[%s4778 + $0x27] sm:$0xff]
        %v6826 = vld [vmem:[%s4778 + $0x2f] sm:$0xff]
        %v6827 = vld [vmem:[%s4778 + $0x47] sm:$0xff]
        %v6828 = vld [vmem:[%s4778 + $0x4f] sm:$0xff]
        %v6829 = vld [vmem:[%s4778 + $0x67] sm:$0xff]
        %v6830 = vld [vmem:[%s4778 + $0x6f] sm:$0xff]
        %v6831 = vld [vmem:[%s4882] sm:$0x1]
        %v6832 = vlaneseq
        %v6833 = vshrl.u32 %v6832, 7
        %v6834 = vsub.s32 0, %v6833
        %v6835 = vrot.slane %v6831, %v6834
        %v6836 = vmul.f32 %v6823, %v6835
        %v6837 = vmul.f32 %v6824, %v6835
        %v6838 = vmul.f32 %v6825, %v6835
        %v6839 = vmul.f32 %v6826, %v6835
        %v6840 = vmul.f32 %v6827, %v6835
        %v6841 = vmul.f32 %v6828, %v6835
        %v6842 = vmul.f32 %v6829, %v6835
        %v6843 = vmul.f32 %v6830, %v6835
        %v6844 = vadd.f32 %v6815, %v6836
        %v6845 = vadd.f32 %v6816, %v6837
        %v6846 = vadd.f32 %v6817, %v6838
        %v6847 = vadd.f32 %v6818, %v6839
        %v6848 = vadd.f32 %v6819, %v6840
        %v6849 = vadd.f32 %v6820, %v6841
        %v6850 = vadd.f32 %v6821, %v6842
        %v6851 = vadd.f32 %v6822, %v6843
        %v6852 = vld [vmem:[%s4778 + $0x8] sm:$0xff]
        %v6853 = vld [vmem:[%s4778 + $0x10] sm:$0xff]
        %v6854 = vld [vmem:[%s4778 + $0x28] sm:$0xff]
        %v6855 = vld [vmem:[%s4778 + $0x30] sm:$0xff]
        %v6856 = vld [vmem:[%s4778 + $0x48] sm:$0xff]
        %v6857 = vld [vmem:[%s4778 + $0x50] sm:$0xff]
        %v6858 = vld [vmem:[%s4778 + $0x68] sm:$0xff]
        %v6859 = vld [vmem:[%s4778 + $0x70] sm:$0xff]
        %v6860 = vld [vmem:[%s4882 + $0x1] sm:$0x1]
        %v6861 = vlaneseq
        %v6862 = vshrl.u32 %v6861, 7
        %v6863 = vsub.s32 0, %v6862
        %v6864 = vrot.slane %v6860, %v6863
        %v6865 = vmul.f32 %v6852, %v6864
        %v6866 = vmul.f32 %v6853, %v6864
        %v6867 = vmul.f32 %v6854, %v6864
        %v6868 = vmul.f32 %v6855, %v6864
        %v6869 = vmul.f32 %v6856, %v6864
        %v6870 = vmul.f32 %v6857, %v6864
        %v6871 = vmul.f32 %v6858, %v6864
        %v6872 = vmul.f32 %v6859, %v6864
        %v6873 = vadd.f32 %v6844, %v6865
        %v6874 = vadd.f32 %v6845, %v6866
        %v6875 = vadd.f32 %v6846, %v6867
        %v6876 = vadd.f32 %v6847, %v6868
        %v6877 = vadd.f32 %v6848, %v6869
        %v6878 = vadd.f32 %v6849, %v6870
        %v6879 = vadd.f32 %v6850, %v6871
        %v6880 = vadd.f32 %v6851, %v6872
        %v6881 = vld [vmem:[%s4778 + $0x9] sm:$0xff]
        %v6882 = vld [vmem:[%s4778 + $0x11] sm:$0xff]
        %v6883 = vld [vmem:[%s4778 + $0x29] sm:$0xff]
        %v6884 = vld [vmem:[%s4778 + $0x31] sm:$0xff]
        %v6885 = vld [vmem:[%s4778 + $0x49] sm:$0xff]
        %v6886 = vld [vmem:[%s4778 + $0x51] sm:$0xff]
        %v6887 = vld [vmem:[%s4778 + $0x69] sm:$0xff]
        %v6888 = vld [vmem:[%s4778 + $0x71] sm:$0xff]
        %v6889 = vld [vmem:[%s4882 + $0x2] sm:$0x1]
        %v6890 = vlaneseq
        %v6891 = vshrl.u32 %v6890, 7
        %v6892 = vsub.s32 0, %v6891
        %v6893 = vrot.slane %v6889, %v6892
        %v6894 = vmul.f32 %v6881, %v6893
        %v6895 = vmul.f32 %v6882, %v6893
        %v6896 = vmul.f32 %v6883, %v6893
        %v6897 = vmul.f32 %v6884, %v6893
        %v6898 = vmul.f32 %v6885, %v6893
        %v6899 = vmul.f32 %v6886, %v6893
        %v6900 = vmul.f32 %v6887, %v6893
        %v6901 = vmul.f32 %v6888, %v6893
        %v6902 = vadd.f32 %v6873, %v6894
        %v6903 = vadd.f32 %v6874, %v6895
        %v6904 = vadd.f32 %v6875, %v6896
        %v6905 = vadd.f32 %v6876, %v6897
        %v6906 = vadd.f32 %v6877, %v6898
        %v6907 = vadd.f32 %v6878, %v6899
        %v6908 = vadd.f32 %v6879, %v6900
        %v6909 = vadd.f32 %v6880, %v6901
        %s6910 = scalar_lea.vmem [#allocation3], 448
        %v6911 = vld [vmem:[%s6910 + $0x7] sm:$0xff]
        %v6912 = vld [vmem:[%s6910 + $0xf] sm:$0xff]
        %v6913 = vld [vmem:[%s6910 + $0x27] sm:$0xff]
        %v6914 = vld [vmem:[%s6910 + $0x2f] sm:$0xff]
        %v6915 = vld [vmem:[%s6910 + $0x47] sm:$0xff]
        %v6916 = vld [vmem:[%s6910 + $0x4f] sm:$0xff]
        %v6917 = vld [vmem:[%s6910 + $0x67] sm:$0xff]
        %v6918 = vld [vmem:[%s6910 + $0x6f] sm:$0xff]
        %v6919 = vld [vmem:[%s4971] sm:$0x1]
        %v6920 = vlaneseq
        %v6921 = vshrl.u32 %v6920, 7
        %v6922 = vsub.s32 0, %v6921
        %v6923 = vrot.slane %v6919, %v6922
        %v6924 = vmul.f32 %v6911, %v6923
        %v6925 = vmul.f32 %v6912, %v6923
        %v6926 = vmul.f32 %v6913, %v6923
        %v6927 = vmul.f32 %v6914, %v6923
        %v6928 = vmul.f32 %v6915, %v6923
        %v6929 = vmul.f32 %v6916, %v6923
        %v6930 = vmul.f32 %v6917, %v6923
        %v6931 = vmul.f32 %v6918, %v6923
        %v6932 = vadd.f32 %v6902, %v6924
        %v6933 = vadd.f32 %v6903, %v6925
        %v6934 = vadd.f32 %v6904, %v6926
        %v6935 = vadd.f32 %v6905, %v6927
        %v6936 = vadd.f32 %v6906, %v6928
        %v6937 = vadd.f32 %v6907, %v6929
        %v6938 = vadd.f32 %v6908, %v6930
        %v6939 = vadd.f32 %v6909, %v6931
        %v6940 = vld [vmem:[%s6910 + $0x8] sm:$0xff]
        %v6941 = vld [vmem:[%s6910 + $0x10] sm:$0xff]
        %v6942 = vld [vmem:[%s6910 + $0x28] sm:$0xff]
        %v6943 = vld [vmem:[%s6910 + $0x30] sm:$0xff]
        %v6944 = vld [vmem:[%s6910 + $0x48] sm:$0xff]
        %v6945 = vld [vmem:[%s6910 + $0x50] sm:$0xff]
        %v6946 = vld [vmem:[%s6910 + $0x68] sm:$0xff]
        %v6947 = vld [vmem:[%s6910 + $0x70] sm:$0xff]
        %v6948 = vld [vmem:[%s4971 + $0x1] sm:$0x1]
        %v6949 = vlaneseq
        %v6950 = vshrl.u32 %v6949, 7
        %v6951 = vsub.s32 0, %v6950
        %v6952 = vrot.slane %v6948, %v6951
        %v6953 = vmul.f32 %v6940, %v6952
        %v6954 = vmul.f32 %v6941, %v6952
        %v6955 = vmul.f32 %v6942, %v6952
        %v6956 = vmul.f32 %v6943, %v6952
        %v6957 = vmul.f32 %v6944, %v6952
        %v6958 = vmul.f32 %v6945, %v6952
        %v6959 = vmul.f32 %v6946, %v6952
        %v6960 = vmul.f32 %v6947, %v6952
        %v6961 = vadd.f32 %v6932, %v6953
        %v6962 = vadd.f32 %v6933, %v6954
        %v6963 = vadd.f32 %v6934, %v6955
        %v6964 = vadd.f32 %v6935, %v6956
        %v6965 = vadd.f32 %v6936, %v6957
        %v6966 = vadd.f32 %v6937, %v6958
        %v6967 = vadd.f32 %v6938, %v6959
        %v6968 = vadd.f32 %v6939, %v6960
        %v6969 = vld [vmem:[%s6910 + $0x9] sm:$0xff]
        %v6970 = vld [vmem:[%s6910 + $0x11] sm:$0xff]
        %v6971 = vld [vmem:[%s6910 + $0x29] sm:$0xff]
        %v6972 = vld [vmem:[%s6910 + $0x31] sm:$0xff]
        %v6973 = vld [vmem:[%s6910 + $0x49] sm:$0xff]
        %v6974 = vld [vmem:[%s6910 + $0x51] sm:$0xff]
        %v6975 = vld [vmem:[%s6910 + $0x69] sm:$0xff]
        %v6976 = vld [vmem:[%s6910 + $0x71] sm:$0xff]
        %v6977 = vld [vmem:[%s4971 + $0x2] sm:$0x1]
        %v6978 = vlaneseq
        %v6979 = vshrl.u32 %v6978, 7
        %v6980 = vsub.s32 0, %v6979
        %v6981 = vrot.slane %v6977, %v6980
        %v6982 = vmul.f32 %v6969, %v6981
        %v6983 = vmul.f32 %v6970, %v6981
        %v6984 = vmul.f32 %v6971, %v6981
        %v6985 = vmul.f32 %v6972, %v6981
        %v6986 = vmul.f32 %v6973, %v6981
        %v6987 = vmul.f32 %v6974, %v6981
        %v6988 = vmul.f32 %v6975, %v6981
        %v6989 = vmul.f32 %v6976, %v6981
        %v6990 = vadd.f32 %v6961, %v6982
        %v6991 = vadd.f32 %v6962, %v6983
        %v6992 = vadd.f32 %v6963, %v6984
        %v6993 = vadd.f32 %v6964, %v6985
        %v6994 = vadd.f32 %v6965, %v6986
        %v6995 = vadd.f32 %v6966, %v6987
        %v6996 = vadd.f32 %v6967, %v6988
        %v6997 = vadd.f32 %v6968, %v6989
        %v6998 = vmul.f32 %v6990, 0.5
        %v6999 = vmul.f32 %v6991, 0.5
        %v7000 = vmul.f32 %v6992, 0.5
        %v7001 = vmul.f32 %v6993, 0.5
        %v7002 = vmul.f32 %v6994, 0.5
        %v7003 = vmul.f32 %v6995, 0.5
        %v7004 = vmul.f32 %v6996, 0.5
        %v7005 = vmul.f32 %v6997, 0.5
        %v7006 = vmul.f32 %v6990, 0.70710677
        %v7007 = vmul.f32 %v6991, 0.70710677
        %v7008 = vmul.f32 %v6992, 0.70710677
        %v7009 = vmul.f32 %v6993, 0.70710677
        %v7010 = vmul.f32 %v6994, 0.70710677
        %v7011 = vmul.f32 %v6995, 0.70710677
        %v7012 = vmul.f32 %v6996, 0.70710677
        %v7013 = vmul.f32 %v6997, 0.70710677
        %v7014 = vand.u32 2147483647, %v7006
        %v7015 = vand.u32 2147483647, %v7007
        %v7016 = vand.u32 2147483647, %v7008
        %v7017 = vand.u32 2147483647, %v7009
        %v7018 = vand.u32 2147483647, %v7010
        %v7019 = vand.u32 2147483647, %v7011
        %v7020 = vand.u32 2147483647, %v7012
        %v7021 = vand.u32 2147483647, %v7013
        %v7022 = vmul.f32 %v7014, 0.3275911
        %v7023 = vmul.f32 %v7015, 0.3275911
        %v7024 = vmul.f32 %v7016, 0.3275911
        %v7025 = vmul.f32 %v7017, 0.3275911
        %v7026 = vmul.f32 %v7018, 0.3275911
        %v7027 = vmul.f32 %v7019, 0.3275911
        %v7028 = vmul.f32 %v7020, 0.3275911
        %v7029 = vmul.f32 %v7021, 0.3275911
        %v7030 = vadd.f32 %v7022, 1.0
        %v7031 = vadd.f32 %v7023, 1.0
        %v7032 = vadd.f32 %v7024, 1.0
        %v7033 = vadd.f32 %v7025, 1.0
        %v7034 = vadd.f32 %v7026, 1.0
        %v7035 = vadd.f32 %v7027, 1.0
        %v7036 = vadd.f32 %v7028, 1.0
        %v7037 = vadd.f32 %v7029, 1.0
        %v7038 = vrcp.pop %v7030
        %v7039 = vrcp.pop %v7031
        %v7040 = vrcp.pop %v7032
        %v7041 = vrcp.pop %v7033
        %v7042 = vrcp.pop %v7034
        %v7043 = vrcp.pop %v7035
        %v7044 = vrcp.pop %v7036
        %v7045 = vrcp.pop %v7037
        %v7046 = vmul.f32 %v7038, 1.0614054
        %v7047 = vmul.f32 %v7039, 1.0614054
        %v7048 = vmul.f32 %v7040, 1.0614054
        %v7049 = vmul.f32 %v7041, 1.0614054
        %v7050 = vmul.f32 %v7042, 1.0614054
        %v7051 = vmul.f32 %v7043, 1.0614054
        %v7052 = vmul.f32 %v7044, 1.0614054
        %v7053 = vmul.f32 %v7045, 1.0614054
        %v7054 = vadd.f32 %v7046, -1.4531521
        %v7055 = vadd.f32 %v7047, -1.4531521
        %v7056 = vadd.f32 %v7048, -1.4531521
        %v7057 = vadd.f32 %v7049, -1.4531521
        %v7058 = vadd.f32 %v7050, -1.4531521
        %v7059 = vadd.f32 %v7051, -1.4531521
        %v7060 = vadd.f32 %v7052, -1.4531521
        %v7061 = vadd.f32 %v7053, -1.4531521
        %v7062 = vmul.f32 %v7054, %v7038
        %v7063 = vmul.f32 %v7055, %v7039
        %v7064 = vmul.f32 %v7056, %v7040
        %v7065 = vmul.f32 %v7057, %v7041
        %v7066 = vmul.f32 %v7058, %v7042
        %v7067 = vmul.f32 %v7059, %v7043
        %v7068 = vmul.f32 %v7060, %v7044
        %v7069 = vmul.f32 %v7061, %v7045
        %v7070 = vadd.f32 %v7062, 1.4214138
        %v7071 = vadd.f32 %v7063, 1.4214138
        %v7072 = vadd.f32 %v7064, 1.4214138
        %v7073 = vadd.f32 %v7065, 1.4214138
        %v7074 = vadd.f32 %v7066, 1.4214138
        %v7075 = vadd.f32 %v7067, 1.4214138
        %v7076 = vadd.f32 %v7068, 1.4214138
        %v7077 = vadd.f32 %v7069, 1.4214138
        %v7078 = vmul.f32 %v7070, %v7038
        %v7079 = vmul.f32 %v7071, %v7039
        %v7080 = vmul.f32 %v7072, %v7040
        %v7081 = vmul.f32 %v7073, %v7041
        %v7082 = vmul.f32 %v7074, %v7042
        %v7083 = vmul.f32 %v7075, %v7043
        %v7084 = vmul.f32 %v7076, %v7044
        %v7085 = vmul.f32 %v7077, %v7045
        %v7086 = vadd.f32 %v7078, -0.28449672
        %v7087 = vadd.f32 %v7079, -0.28449672
        %v7088 = vadd.f32 %v7080, -0.28449672
        %v7089 = vadd.f32 %v7081, -0.28449672
        %v7090 = vadd.f32 %v7082, -0.28449672
        %v7091 = vadd.f32 %v7083, -0.28449672
        %v7092 = vadd.f32 %v7084, -0.28449672
        %v7093 = vadd.f32 %v7085, -0.28449672
        %v7094 = vmul.f32 %v7086, %v7038
        %v7095 = vmul.f32 %v7087, %v7039
        %v7096 = vmul.f32 %v7088, %v7040
        %v7097 = vmul.f32 %v7089, %v7041
        %v7098 = vmul.f32 %v7090, %v7042
        %v7099 = vmul.f32 %v7091, %v7043
        %v7100 = vmul.f32 %v7092, %v7044
        %v7101 = vmul.f32 %v7093, %v7045
        %v7102 = vadd.f32 %v7094, 0.2548296
        %v7103 = vadd.f32 %v7095, 0.2548296
        %v7104 = vadd.f32 %v7096, 0.2548296
        %v7105 = vadd.f32 %v7097, 0.2548296
        %v7106 = vadd.f32 %v7098, 0.2548296
        %v7107 = vadd.f32 %v7099, 0.2548296
        %v7108 = vadd.f32 %v7100, 0.2548296
        %v7109 = vadd.f32 %v7101, 0.2548296
        %v7110 = vmul.f32 %v7102, %v7038
        %v7111 = vmul.f32 %v7103, %v7039
        %v7112 = vmul.f32 %v7104, %v7040
        %v7113 = vmul.f32 %v7105, %v7041
        %v7114 = vmul.f32 %v7106, %v7042
        %v7115 = vmul.f32 %v7107, %v7043
        %v7116 = vmul.f32 %v7108, %v7044
        %v7117 = vmul.f32 %v7109, %v7045
        %v7118 = vsub.f32 0.0, %v7014
        %v7119 = vsub.f32 0.0, %v7015
        %v7120 = vsub.f32 0.0, %v7016
        %v7121 = vsub.f32 0.0, %v7017
        %v7122 = vsub.f32 0.0, %v7018
        %v7123 = vsub.f32 0.0, %v7019
        %v7124 = vsub.f32 0.0, %v7020
        %v7125 = vsub.f32 0.0, %v7021
        %v7126 = vmul.f32 %v7118, %v7014
        %v7127 = vmul.f32 %v7119, %v7015
        %v7128 = vmul.f32 %v7120, %v7016
        %v7129 = vmul.f32 %v7121, %v7017
        %v7130 = vmul.f32 %v7122, %v7018
        %v7131 = vmul.f32 %v7123, %v7019
        %v7132 = vmul.f32 %v7124, %v7020
        %v7133 = vmul.f32 %v7125, %v7021
        %v7134 = vmul.f32 %v7126, 1.442695
        %v7135 = vpow.pop %v7134
        %v7136 = vmul.f32 %v7127, 1.442695
        %v7137 = vpow.pop %v7136
        %v7138 = vmul.f32 %v7128, 1.442695
        %v7139 = vpow.pop %v7138
        %v7140 = vmul.f32 %v7129, 1.442695
        %v7141 = vpow.pop %v7140
        %v7142 = vmul.f32 %v7130, 1.442695
        %v7143 = vpow.pop %v7142
        %v7144 = vmul.f32 %v7131, 1.442695
        %v7145 = vpow.pop %v7144
        %v7146 = vmul.f32 %v7132, 1.442695
        %v7147 = vpow.pop %v7146
        %v7148 = vmul.f32 %v7133, 1.442695
        %v7149 = vpow.pop %v7148
        %v7150 = vmul.f32 %v7110, %v7135
        %v7151 = vmul.f32 %v7111, %v7137
        %v7152 = vmul.f32 %v7112, %v7139
        %v7153 = vmul.f32 %v7113, %v7141
        %v7154 = vmul.f32 %v7114, %v7143
        %v7155 = vmul.f32 %v7115, %v7145
        %v7156 = vmul.f32 %v7116, %v7147
        %v7157 = vmul.f32 %v7117, %v7149
        %v7158 = vsub.f32 1.0, %v7150
        %v7159 = vsub.f32 1.0, %v7151
        %v7160 = vsub.f32 1.0, %v7152
        %v7161 = vsub.f32 1.0, %v7153
        %v7162 = vsub.f32 1.0, %v7154
        %v7163 = vsub.f32 1.0, %v7155
        %v7164 = vsub.f32 1.0, %v7156
        %v7165 = vsub.f32 1.0, %v7157
        %vm7166 = vcmp.lt.f32.partialorder %v7006, 0.0
        %vm7167 = vcmp.lt.f32.partialorder %v7007, 0.0
        %vm7168 = vcmp.lt.f32.partialorder %v7008, 0.0
        %vm7169 = vcmp.lt.f32.partialorder %v7009, 0.0
        %vm7170 = vcmp.lt.f32.partialorder %v7010, 0.0
        %vm7171 = vcmp.lt.f32.partialorder %v7011, 0.0
        %vm7172 = vcmp.lt.f32.partialorder %v7012, 0.0
        %vm7173 = vcmp.lt.f32.partialorder %v7013, 0.0
        %v7174 = vsub.f32 0.0, %v7158
        %v7175 = vsub.f32 0.0, %v7159
        %v7176 = vsub.f32 0.0, %v7160
        %v7177 = vsub.f32 0.0, %v7161
        %v7178 = vsub.f32 0.0, %v7162
        %v7179 = vsub.f32 0.0, %v7163
        %v7180 = vsub.f32 0.0, %v7164
        %v7181 = vsub.f32 0.0, %v7165
        %v7182 = vsel %vm7166, %v7174, %v7158
        %v7183 = vsel %vm7167, %v7175, %v7159
        %v7184 = vsel %vm7168, %v7176, %v7160
        %v7185 = vsel %vm7169, %v7177, %v7161
        %v7186 = vsel %vm7170, %v7178, %v7162
        %v7187 = vsel %vm7171, %v7179, %v7163
        %v7188 = vsel %vm7172, %v7180, %v7164
        %v7189 = vsel %vm7173, %v7181, %v7165
        %v7190 = vadd.f32 %v7182, 1.0
        %v7191 = vadd.f32 %v7183, 1.0
        %v7192 = vadd.f32 %v7184, 1.0
        %v7193 = vadd.f32 %v7185, 1.0
        %v7194 = vadd.f32 %v7186, 1.0
        %v7195 = vadd.f32 %v7187, 1.0
        %v7196 = vadd.f32 %v7188, 1.0
        %v7197 = vadd.f32 %v7189, 1.0
        %v7198 = vmul.f32 %v6998, %v7190
        %v7199 = vmul.f32 %v6999, %v7191
        %v7200 = vmul.f32 %v7000, %v7192
        %v7201 = vmul.f32 %v7001, %v7193
        %v7202 = vmul.f32 %v7002, %v7194
        %v7203 = vmul.f32 %v7003, %v7195
        %v7204 = vmul.f32 %v7004, %v7196
        %v7205 = vmul.f32 %v7005, %v7197
        %7214 = vrot.lane.b32.xlu0 %v6990, 64
        %v7215 = vpop.permute.xlu0 %7214
        %7216 = vrot.lane.b32.xlu0 %v6991, 64
        %v7217 = vpop.permute.xlu0 %7216
        %7218 = vrot.lane.b32.xlu0 %v6992, 64
        %v7219 = vpop.permute.xlu0 %7218
        %7220 = vrot.lane.b32.xlu0 %v6993, 64
        %v7221 = vpop.permute.xlu0 %7220
        %7222 = vrot.lane.b32.xlu0 %v6994, 64
        %v7223 = vpop.permute.xlu0 %7222
        %7224 = vrot.lane.b32.xlu0 %v6995, 64
        %v7225 = vpop.permute.xlu0 %7224
        %7226 = vrot.lane.b32.xlu0 %v6996, 64
        %v7227 = vpop.permute.xlu0 %7226
        %7228 = vrot.lane.b32.xlu0 %v6997, 64
        %v7229 = vpop.permute.xlu0 %7228
        %v7238 = vmul.f32 %v7198, %v7215
        %v7239 = vmul.f32 %v7199, %v7217
        %v7240 = vmul.f32 %v7200, %v7219
        %v7241 = vmul.f32 %v7201, %v7221
        %v7242 = vmul.f32 %v7202, %v7223
        %v7243 = vmul.f32 %v7203, %v7225
        %v7244 = vmul.f32 %v7204, %v7227
        %v7245 = vmul.f32 %v7205, %v7229
        %v7246 = vpack.c.bf16 %v7239, %v7238
        %v7247 = vpack.c.bf16 %v7241, %v7240
        %v7248 = vpack.c.bf16 %v7243, %v7242
        %v7249 = vpack.c.bf16 %v7245, %v7244
        %v7250 = vld [vmem:[%s12] sm:$0xf]
        %v7251 = vld [vmem:[%s12 + $0x4] sm:$0xf]
        %v7252 = vld [vmem:[%s12 + $0x8] sm:$0xf]
        %v7253 = vld [vmem:[%s12 + $0xc] sm:$0xf]
        %v7254 = vld [vmem:[%s12 + $0x10] sm:$0xf]
        %v7255 = vld [vmem:[%s12 + $0x14] sm:$0xf]
        %v7256 = vld [vmem:[%s12 + $0x18] sm:$0xf]
        %v7257 = vld [vmem:[%s12 + $0x1c] sm:$0xf]
        %v7266 = vunpack.c.l.b16 %v7250
        %v7267 = vunpack.c.l.b16 %v7251
        %v7268 = vunpack.c.l.b16 %v7252
        %v7269 = vunpack.c.l.b16 %v7253
        %v7270 = vunpack.c.l.b16 %v7254
        %v7271 = vunpack.c.l.b16 %v7255
        %v7272 = vunpack.c.l.b16 %v7256
        %v7273 = vunpack.c.l.b16 %v7257
        %v7274 = vpack.c.b16 %v7267, %v7266
        %v7275 = vpack.c.b16 %v7269, %v7268
        %v7276 = vpack.c.b16 %v7271, %v7270
        %v7277 = vpack.c.b16 %v7273, %v7272
        %v7283 = vsel %vm5335, %v7246, 0
        %v7286 = vsel %vm5335, %v7247, 0
        %v7289 = vsel %vm5335, %v7248, 0
        %v7292 = vsel %vm5335, %v7249, 0
        %7294 = vmatprep.subr.bf16.mxu0 0
        %7295 = vmatpush1.bf16.msra.mxu0 %v7274
        %7296 = vmatprep.subr.bf16.mxu0 0
        %7297 = vmatpush1.bf16.msra.mxu0 %v7275
        %7298 = vmatprep.subr.bf16.mxu0 0
        %7299 = vmatpush1.bf16.msra.mxu0 %v7276
        %7300 = vmatprep.subr.bf16.mxu0 0
        %7301 = vmatpush1.bf16.msra.mxu0 %v7277
        %7302 = vmatprep.subr.bf16.mxu0 0
        %7303 = vmatpush1.bf16.msra.mxu0 0
        %7304 = vmatprep.subr.bf16.mxu0 0
        %7305 = vmatpush1.bf16.msra.mxu0 0
        %7306 = vmatprep.subr.bf16.mxu0 0
        %7307 = vmatpush1.bf16.msra.mxu0 0
        %7308 = vmatprep.subr.bf16.mxu0 0
        %7309 = vmatpush1.bf16.msra.mxu0 0
        %7310 = vmatprep.subr.bf16.mxu0 0
        %7311 = vmatpush1.bf16.msra.mxu0 0
        %7312 = vmatprep.subr.bf16.mxu0 0
        %7313 = vmatpush1.bf16.msra.mxu0 0
        %7314 = vmatprep.subr.bf16.mxu0 0
        %7315 = vmatpush1.bf16.msra.mxu0 0
        %7316 = vmatprep.subr.bf16.mxu0 0
        %7317 = vmatpush1.bf16.msra.mxu0 0
        %7318 = vmatprep.subr.bf16.mxu0 0
        %7319 = vmatpush1.bf16.msra.mxu0 0
        %7320 = vmatprep.subr.bf16.mxu0 0
        %7321 = vmatpush1.bf16.msra.mxu0 0
        %7322 = vmatprep.subr.bf16.mxu0 0
        %7323 = vmatpush1.bf16.msra.mxu0 0
        %7324 = vmatprep.subr.bf16.mxu0 0
        %7325 = vmatpush1.bf16.msra.mxu0 0
        %7326 = vmatprep.mubr.bf16.mxu0 0
        %7327 = vmatmul.mubr.bf16.gmra.mrb[0].mxu0 %v7283
        %v7328 = vpop.f32.mrb[0].mxu0
        %v7329 = vadd.f32 0.0, %v7328
        %v7330 = vpop.f32.mrb[0].mxu0
        %v7331 = vpop.f32.mrb[0].mxu0
        %v7332 = vadd.f32 0.0, %v7331
        %v7333 = vpop.f32.mrb[0].mxu0
        %7334 = vmatprep.mubr.bf16.mxu0 0
        %7335 = vmatmul.mubr.bf16.gmra.mrb[0].mxu0 %v7286
        %v7336 = vpop.f32.mrb[0].mxu0
        %v7337 = vadd.f32 0.0, %v7336
        %v7338 = vpop.f32.mrb[0].mxu0
        %v7339 = vpop.f32.mrb[0].mxu0
        %v7340 = vadd.f32 0.0, %v7339
        %v7341 = vpop.f32.mrb[0].mxu0
        %7342 = vmatprep.mubr.bf16.mxu0 0
        %7343 = vmatmul.mubr.bf16.gmra.mrb[0].mxu0 %v7289
        %v7344 = vpop.f32.mrb[0].mxu0
        %v7345 = vadd.f32 0.0, %v7344
        %v7346 = vpop.f32.mrb[0].mxu0
        %v7347 = vpop.f32.mrb[0].mxu0
        %v7348 = vadd.f32 0.0, %v7347
        %v7349 = vpop.f32.mrb[0].mxu0
        %7350 = vmatprep.mubr.bf16.mxu0 0
        %7351 = vmatmul.mubr.bf16.gmra.mrb[0].mxu0 %v7292
        %v7352 = vpop.f32.mrb[0].mxu0
        %v7353 = vadd.f32 0.0, %v7352
        %v7354 = vpop.f32.mrb[0].mxu0
        %v7355 = vpop.f32.mrb[0].mxu0
        %v7356 = vadd.f32 0.0, %v7355
        %v7357 = vpop.f32.mrb[0].mxu0
        %7358 = vdwg.mxu0
        %v7359 = vld [vmem:[#allocation5 + $0xc0] sm:$0xff]
        %v7360 = vld [vmem:[#allocation5 + $0xc8] sm:$0xff]
        %v7361 = vld [vmem:[#allocation5 + $0xd0] sm:$0xff]
        %v7362 = vld [vmem:[#allocation5 + $0xd8] sm:$0xff]
        %v7363 = vld [vmem:[#allocation5 + $0xe0] sm:$0xff]
        %v7364 = vld [vmem:[#allocation5 + $0xe8] sm:$0xff]
        %v7365 = vld [vmem:[#allocation5 + $0xf0] sm:$0xff]
        %v7366 = vld [vmem:[#allocation5 + $0xf8] sm:$0xff]
        %v7367 = vadd.f32 %v7359, %v7329
        %v7368 = vadd.f32 %v7360, %v7332
        %v7369 = vadd.f32 %v7361, %v7337
        %v7370 = vadd.f32 %v7362, %v7340
        %v7371 = vadd.f32 %v7363, %v7345
        %v7372 = vadd.f32 %v7364, %v7348
        %v7373 = vadd.f32 %v7365, %v7353
        %v7374 = vadd.f32 %v7366, %v7356
        %s7375 = scalar_lea.vmem %s525, 192 [#allocation17]
        %7376 = vst.msk [vmem:[%s7375] sm:$0xff] %vm693, %v7367
        %7377 = vst.msk [vmem:[%s7375 + $0x8] sm:$0xff] %vm693, %v7368
        %7378 = vst.msk [vmem:[%s7375 + $0x10] sm:$0xff] %vm693, %v7369
        %7379 = vst.msk [vmem:[%s7375 + $0x18] sm:$0xff] %vm693, %v7370
        %7380 = vst.msk [vmem:[%s7375 + $0x20] sm:$0xff] %vm693, %v7371
        %7381 = vst.msk [vmem:[%s7375 + $0x28] sm:$0xff] %vm693, %v7372
        %7382 = vst.msk [vmem:[%s7375 + $0x30] sm:$0xff] %vm693, %v7373
        %7383 = vst.msk [vmem:[%s7375 + $0x38] sm:$0xff] %vm693, %v7374
        %s7384 = sand.u32 %s319, 1
        %s7385 = scalar_lea.sflag [#allocation8], %s7384
        %s7386 = sand.u32 %s319, 1
        %s7387 = smul.addr %s7386, 256
        %s7388 = scalar_lea.vmem [#allocation17], %s7387
        // Predicated region
        $region101: #{tpu_custom_call.1} parent=71 // pred_check
          %p7389 = pneg %p329
        $region102: #{tpu_custom_call.1} parent=71 // pred_check_branch
          %7391 = sbr.rel (%p7389) target = $region104
        $region103: #{tpu_custom_call.1} parent=71 // pred_region
          %s7393 = ssub.s32 4096, 4096
          %7394 = vsyncadd %s7385, %s7393
          %s7395 = smul.addr %s33, 32
          %s7396 = smul.addr %s7395, 128
          %s7397 = scalar_lea.hbm %s13, %s7396
          %s7398 = sshll.u32 %s7388, 4
          %s7399 = int_to_ptr.vmem [resolvable:$true] %s7398
          %7404 = dma.vmem_to_hbm [thread:$0]  %s7399, 4096, %s7397, %s7385, 128, 128, 8
        $region104: #{tpu_custom_call.1} parent=71 // pred_fallthru
          _
      $region72: #{tpu_custom_call.1} parent=5 // pred_fallthru
        _
      %p7405 = scmp.le.s32.totalorder 2, %s28
      // Predicated region
      $region105: #{tpu_custom_call.1} parent=5 // pred_check
        %p7406 = pneg %p7405
      $region106: #{tpu_custom_call.1} parent=5 // pred_check_branch
        %7408 = sbr.rel (%p7406) target = $region108
      $region107: #{tpu_custom_call.1} parent=5 // pred_region
        %s7409 = ssub.s32 %s28, 2
        // Predicated region
        $region109: #{tpu_custom_call.1} parent=107 // pred_check
          %p7410 = pneg %p335
        $region110: #{tpu_custom_call.1} parent=107 // pred_check_branch
          %7412 = sbr.rel (%p7410) target = $region112
        $region111: #{tpu_custom_call.1} parent=107 // pred_region
          %s7413 = sand.u32 %s320, 1
          %s7414 = scalar_lea.sflag [#allocation8], %s7413
          %s7415 = sand.u32 %s320, 1
          %s7416 = smul.addr %s7415, 256
          %s7417 = scalar_lea.vmem [#allocation17], %s7416
          %7418 = dma.done %s7414, 4096
        $region112: #{tpu_custom_call.1} parent=107 // pred_fallthru
          _
      $region108: #{tpu_custom_call.1} parent=5 // pred_fallthru
        _
    $region6: #{tpu_custom_call.1} parent=1 // loop_footer
      %s32 = sadd.s32 1, %s28
    $region7: #{tpu_custom_call.1} parent=1 // loop_footer_branch
      %27 = sbr.rel target = $region3
    $region8: #{tpu_custom_call.1} parent=1 // loop_exit
      _
    %7419 = vsyncpa [#allocation7], 1
    %s7420 = scalar_lea.sflag [#allocation7], 1
    %7421 = vsyncpa %s7420, 1
    %7422 = vsyncpa [#allocation10], 1
    %7423 = vsyncpa [#allocation13], 1
    %7424 = vsyncpa [#allocation16], 1
    %7425 = vsyncpa [#allocation8], 1
    %s7426 = scalar_lea.sflag [#allocation8], 1
    %7427 = vsyncpa %s7426, 1

</llo_original>
